<compile_context>
chip_gen: v5e
topology: v5e:2x2
jax: 0.10.0
libtpu: 0.0.40
codegen_flags: <defaults>
</compile_context>

<pallas_src>
import functools

import jax
import jax.numpy as jnp
from jax.experimental import pallas as pl
from jax.experimental.pallas import tpu as pltpu


NEG_SLOPE = 0.01  # F.leaky_relu default

# Logical (PyTorch) dims and MXU-friendly padded dims.
D_IN = 64
H1, H2, N_OUT = 1200, 2000, 1
H1P, H2P, N_OUTP = 1280, 2048, 128

TM_MAX = 512  # v6e/v7x sweet spot; v5e users may prefer 256.


def _leaky_relu(x):
    # Exactly equivalent to leaky_relu for 0 < slope < 1; mul+max (2 VALU ops)
    # instead of cmp+mul+select (3).
    return jnp.maximum(x, NEG_SLOPE * x)


def _round_up(n, m):
    return ((n + m - 1) // m) * m


def disc_two_kernel(x_ref, w1_ref, b1_ref, w2_ref, b2_ref, w3_ref, b3_ref, o_ref):
    # fc1: bf16 MXU, f32 accumulate, f32 bias add, then one downcast to bf16
    # for the activation + next matmul (bf16-native VALU path on v6e/v7x).
    h1 = jnp.dot(x_ref[...], w1_ref[...], preferred_element_type=jnp.float32)
    h1 = _leaky_relu((h1 + b1_ref[...]).astype(jnp.bfloat16))
    # fc2
    h2 = jnp.dot(h1, w2_ref[...], preferred_element_type=jnp.float32)
    h2 = _leaky_relu((h2 + b2_ref[...]).astype(jnp.bfloat16))
    # fc3 (output padded to 128 lanes for an unmasked, lane-dense store) + sigmoid
    h3 = jnp.dot(h2, w3_ref[...], preferred_element_type=jnp.float32)
    h3 = h3 + b3_ref[...]
    o_ref[...] = jax.nn.sigmoid(h3).astype(o_ref.dtype)


def init_params(key):
    """Logical params mirroring nn.Linear's U(-1/sqrt(fan_in), +1/sqrt(fan_in)).
    Stored transposed as (in_features, out_features), f32, unpadded."""
    dims = [(D_IN, H1), (H1, H2), (H2, N_OUT)]
    params = []
    for (fan_in, fan_out) in dims:
        key, kw, kb = jax.random.split(key, 3)
        bound = 1.0 / jnp.sqrt(fan_in)
        w = jax.random.uniform(kw, (fan_in, fan_out), jnp.float32, -bound, bound)
        b = jax.random.uniform(kb, (1, fan_out), jnp.float32, -bound, bound)
        params += [w, b]
    return tuple(params)


def prepare_params(params):
    """Pack logical f32 (in,out) params into the kernel layout:
    zero-padded to MXU-friendly dims, bf16 weights, f32 biases."""
    w1, b1, w2, b2, w3, b3 = params
    w1p = jnp.pad(w1, ((0, 0), (0, H1P - H1))).astype(jnp.bfloat16)
    b1p = jnp.pad(b1, ((0, 0), (0, H1P - H1))).astype(jnp.float32)
    w2p = jnp.pad(w2, ((0, H1P - H1), (0, H2P - H2))).astype(jnp.bfloat16)
    b2p = jnp.pad(b2, ((0, 0), (0, H2P - H2))).astype(jnp.float32)
    w3p = jnp.pad(w3, ((0, H2P - H2), (0, N_OUTP - N_OUT))).astype(jnp.bfloat16)
    b3p = jnp.pad(b3, ((0, 0), (0, N_OUTP - N_OUT))).astype(jnp.float32)
    return (w1p, b1p, w2p, b2p, w3p, b3p)


@functools.partial(jax.jit, static_argnames=("tm_max",))
def disc_two_forward(x_nchw, packed_params, tm_max=TM_MAX):
    """x_nchw: (B, 1, 8, 8) float32.  Returns (B, 1) float32 in [0, 1]."""
    w1, b1, w2, b2, w3, b3 = packed_params
    B = x_nchw.shape[0]
    x = x_nchw.reshape(B, D_IN).astype(jnp.bfloat16)   # == x.view(-1, 64)

    # Tile-count balancing: minimize zero-row padding instead of padding B up
    # to a fixed tile.  For medium/large batches force >= 2 tiles so the
    # "parallel" grid axis can be sharded across both TensorCores (v7x).
    n_tiles = pl.cdiv(B, tm_max)
    if n_tiles == 1 and B >= 64:
        n_tiles = 2
    tm = _round_up(pl.cdiv(B, n_tiles), 8)
    bp = tm * n_tiles
    if bp != B:
        x = jnp.pad(x, ((0, bp - B), (0, 0)))

    # Weights/biases: full-array blocks, constant index_map (fetched once),
    # single-buffered -> no wasted second VMEM copy.
    def resident(a):
        return pl.BlockSpec(a.shape, lambda i: (0,) * a.ndim,
                            pipeline_mode=pl.Buffered(1))

    out = pl.pallas_call(
        disc_two_kernel,
        out_shape=jax.ShapeDtypeStruct((bp, N_OUTP), jnp.float32),
        grid=(n_tiles,),
        in_specs=[pl.BlockSpec((tm, D_IN), lambda i: (i, 0)),
                  resident(w1), resident(b1),
                  resident(w2), resident(b2),
                  resident(w3), resident(b3)],
        out_specs=pl.BlockSpec((tm, N_OUTP), lambda i: (i, 0)),
        compiler_params=pltpu.CompilerParams(
            dimension_semantics=("parallel",),
            vmem_limit_bytes=32 * 1024 * 1024),
    )(x, w1, b1, w2, b2, w3, b3)

    return out[:B, :N_OUT]


def reference_forward(x_nchw, params):
    """Plain-JAX reference, precision-matched to the kernel (bf16 matmul
    inputs, f32 accumulation, bf16 activations)."""
    w1, b1, w2, b2, w3, b3 = params
    x = x_nchw.reshape(x_nchw.shape[0], -1).astype(jnp.bfloat16)
    h = jnp.dot(x, w1.astype(jnp.bfloat16),
                preferred_element_type=jnp.float32) + b1
    h = _leaky_relu(h.astype(jnp.bfloat16))
    h = jnp.dot(h, w2.astype(jnp.bfloat16),
                preferred_element_type=jnp.float32) + b2
    h = _leaky_relu(h.astype(jnp.bfloat16))
    h = jnp.dot(h, w3.astype(jnp.bfloat16),
                preferred_element_type=jnp.float32) + b3
    return jax.nn.sigmoid(h)


if __name__ == "__main__":
    key = jax.random.PRNGKey(0)
    key, kx = jax.random.split(key)
    # Module implies 1x8x8 inputs; small batch of 2.
    x = jax.random.normal(kx, (2, 1, 8, 8), jnp.float32)
    params = init_params(key)
    packed = prepare_params(params)

    out = disc_two_forward(x, packed)
    out = jax.block_until_ready(out)

    ref = reference_forward(x, params)
    assert out.shape == (2, 1), out.shape
    assert jnp.allclose(out, ref, atol=1e-3, rtol=1e-3), (out, ref)

    print("KERNEL_OK")
</pallas_src>

<mosaic_0001>
module attributes {stable_mosaic.version = 11 : i64} {
  func.func @disc_two_kernel(%arg0: i32, %arg1: memref<8x64xbf16, #tpu.memory_space<vmem>>, %arg2: memref<64x1280xbf16, #tpu.memory_space<vmem>>, %arg3: memref<1x1280xf32, #tpu.memory_space<vmem>>, %arg4: memref<1280x2048xbf16, #tpu.memory_space<vmem>>, %arg5: memref<1x2048xf32, #tpu.memory_space<vmem>>, %arg6: memref<2048x128xbf16, #tpu.memory_space<vmem>>, %arg7: memref<1x128xf32, #tpu.memory_space<vmem>>, %arg8: memref<8x128xf32, #tpu.memory_space<vmem>>) attributes {dimension_semantics = [#tpu.dimension_semantics<parallel>], iteration_bounds = array<i64: 1>, scalar_prefetch = 0 : i64, scratch_operands = 0 : i64, tpu.core_type = #tpu.core_type<tc>, window_params = [{transform_indices = @transform_0, window_bounds = array<i64: 8, 64>}, {pipeline_mode = #tpu.pipeline_mode<synchronous>, transform_indices = @transform_1, window_bounds = array<i64: 64, 1280>}, {pipeline_mode = #tpu.pipeline_mode<synchronous>, transform_indices = @transform_2, window_bounds = array<i64: 1, 1280>}, {pipeline_mode = #tpu.pipeline_mode<synchronous>, transform_indices = @transform_3, window_bounds = array<i64: 1280, 2048>}, {pipeline_mode = #tpu.pipeline_mode<synchronous>, transform_indices = @transform_4, window_bounds = array<i64: 1, 2048>}, {pipeline_mode = #tpu.pipeline_mode<synchronous>, transform_indices = @transform_5, window_bounds = array<i64: 2048, 128>}, {pipeline_mode = #tpu.pipeline_mode<synchronous>, transform_indices = @transform_6, window_bounds = array<i64: 1, 128>}, {transform_indices = @transform_7, window_bounds = array<i64: 8, 128>}]} {
    %c0 = arith.constant 0 : index
    %c0_0 = arith.constant 0 : index
    %0 = vector.load %arg1[%c0, %c0_0] : memref<8x64xbf16, #tpu.memory_space<vmem>>, vector<8x64xbf16>
    %c0_1 = arith.constant 0 : index
    %c0_2 = arith.constant 0 : index
    %1 = vector.load %arg2[%c0_1, %c0_2] : memref<64x1280xbf16, #tpu.memory_space<vmem>>, vector<64x1280xbf16>
    %cst = arith.constant dense<0.000000e+00> : vector<8x1280xf32>
    %2 = tpu.matmul %0, %1, %cst {dimension_numbers = #tpu.dot_dimension_numbers<[1], [0], [0], [1], [0, 0, 1, 1], [], []>} : vector<8x64xbf16>, vector<64x1280xbf16>, vector<8x1280xf32> -> vector<8x1280xf32>
    %c0_3 = arith.constant 0 : index
    %c0_4 = arith.constant 0 : index
    %3 = vector.load %arg3[%c0_3, %c0_4] : memref<1x1280xf32, #tpu.memory_space<vmem>>, vector<1x1280xf32>
    %4 = vector.broadcast %3 : vector<1x1280xf32> to vector<8x1280xf32>
    %5 = arith.addf %2, %4 : vector<8x1280xf32>
    %6 = arith.truncf %5 : vector<8x1280xf32> to vector<8x1280xbf16>
    %cst_5 = arith.constant 1.000980e-02 : bf16
    %7 = vector.broadcast %cst_5 : bf16 to vector<8x1280xbf16>
    %8 = arith.mulf %7, %6 : vector<8x1280xbf16>
    %9 = arith.maximumf %6, %8 : vector<8x1280xbf16>
    %c0_6 = arith.constant 0 : index
    %c0_7 = arith.constant 0 : index
    %10 = vector.load %arg4[%c0_6, %c0_7] : memref<1280x2048xbf16, #tpu.memory_space<vmem>>, vector<1280x2048xbf16>
    %cst_8 = arith.constant dense<0.000000e+00> : vector<8x2048xf32>
    %11 = tpu.matmul %9, %10, %cst_8 {dimension_numbers = #tpu.dot_dimension_numbers<[1], [0], [0], [1], [0, 0, 1, 1], [], []>} : vector<8x1280xbf16>, vector<1280x2048xbf16>, vector<8x2048xf32> -> vector<8x2048xf32>
    %c0_9 = arith.constant 0 : index
    %c0_10 = arith.constant 0 : index
    %12 = vector.load %arg5[%c0_9, %c0_10] : memref<1x2048xf32, #tpu.memory_space<vmem>>, vector<1x2048xf32>
    %13 = vector.broadcast %12 : vector<1x2048xf32> to vector<8x2048xf32>
    %14 = arith.addf %11, %13 : vector<8x2048xf32>
    %15 = arith.truncf %14 : vector<8x2048xf32> to vector<8x2048xbf16>
    %cst_11 = arith.constant 1.000980e-02 : bf16
    %16 = vector.broadcast %cst_11 : bf16 to vector<8x2048xbf16>
    %17 = arith.mulf %16, %15 : vector<8x2048xbf16>
    %18 = arith.maximumf %15, %17 : vector<8x2048xbf16>
    %c0_12 = arith.constant 0 : index
    %c0_13 = arith.constant 0 : index
    %19 = vector.load %arg6[%c0_12, %c0_13] : memref<2048x128xbf16, #tpu.memory_space<vmem>>, vector<2048x128xbf16>
    %cst_14 = arith.constant dense<0.000000e+00> : vector<8x128xf32>
    %20 = tpu.matmul %18, %19, %cst_14 {dimension_numbers = #tpu.dot_dimension_numbers<[1], [0], [0], [1], [0, 0, 1, 1], [], []>} : vector<8x2048xbf16>, vector<2048x128xbf16>, vector<8x128xf32> -> vector<8x128xf32>
    %c0_15 = arith.constant 0 : index
    %c0_16 = arith.constant 0 : index
    %21 = vector.load %arg7[%c0_15, %c0_16] : memref<1x128xf32, #tpu.memory_space<vmem>>, vector<1x128xf32>
    %22 = vector.broadcast %21 : vector<1x128xf32> to vector<8x128xf32>
    %23 = arith.addf %20, %22 : vector<8x128xf32>
    %24 = arith.negf %23 : vector<8x128xf32>
    %25 = math.exp %24 : vector<8x128xf32>
    %cst_17 = arith.constant 1.000000e+00 : f32
    %26 = vector.broadcast %cst_17 : f32 to vector<8x128xf32>
    %27 = arith.addf %26, %25 : vector<8x128xf32>
    %28 = arith.divf %26, %27 : vector<8x128xf32>
    %c0_18 = arith.constant 0 : index
    %c0_19 = arith.constant 0 : index
    %29 = vector.load %arg8[%c0_18, %c0_19] : memref<8x128xf32, #tpu.memory_space<vmem>>, vector<8x128xf32>
    tpu.vector_store %arg8[%c0_18, %c0_19], %28 {strides = array<i32>} : memref<8x128xf32, #tpu.memory_space<vmem>>, vector<8x128xf32>,
    return
  }
  func.func @transform_0(%arg0: i32) -> (i32, i32) {
    %c0_i32 = arith.constant 0 : i32
    %c0_i32_0 = arith.constant 0 : i32
    return %arg0, %c0_i32 : i32, i32
  }
  func.func @transform_1(%arg0: i32) -> (i32, i32) {
    %c0_i32 = arith.constant 0 : i32
    %c0_i32_0 = arith.constant 0 : i32
    %c0_i32_1 = arith.constant 0 : i32
    return %c0_i32, %c0_i32_0 : i32, i32
  }
  func.func @transform_2(%arg0: i32) -> (i32, i32) {
    %c0_i32 = arith.constant 0 : i32
    %c0_i32_0 = arith.constant 0 : i32
    %c0_i32_1 = arith.constant 0 : i32
    return %c0_i32, %c0_i32_0 : i32, i32
  }
  func.func @transform_3(%arg0: i32) -> (i32, i32) {
    %c0_i32 = arith.constant 0 : i32
    %c0_i32_0 = arith.constant 0 : i32
    %c0_i32_1 = arith.constant 0 : i32
    return %c0_i32, %c0_i32_0 : i32, i32
  }
  func.func @transform_4(%arg0: i32) -> (i32, i32) {
    %c0_i32 = arith.constant 0 : i32
    %c0_i32_0 = arith.constant 0 : i32
    %c0_i32_1 = arith.constant 0 : i32
    return %c0_i32, %c0_i32_0 : i32, i32
  }
  func.func @transform_5(%arg0: i32) -> (i32, i32) {
    %c0_i32 = arith.constant 0 : i32
    %c0_i32_0 = arith.constant 0 : i32
    %c0_i32_1 = arith.constant 0 : i32
    return %c0_i32, %c0_i32_0 : i32, i32
  }
  func.func @transform_6(%arg0: i32) -> (i32, i32) {
    %c0_i32 = arith.constant 0 : i32
    %c0_i32_0 = arith.constant 0 : i32
    %c0_i32_1 = arith.constant 0 : i32
    return %c0_i32, %c0_i32_0 : i32, i32
  }
  func.func @transform_7(%arg0: i32) -> (i32, i32) {
    %c0_i32 = arith.constant 0 : i32
    %c0_i32_0 = arith.constant 0 : i32
    return %arg0, %c0_i32 : i32, i32
  }
}

</mosaic_0001>

<llo_original>
// kernel: disc_two_forward.1
$region0: #{disc_two_forward.1}
  #allocation0 [shape = 'u32[]', space=smem, size = 0x4, offset = 0x4, fixed_abs, tag = 'smem constant byte address 0x4 - core index']
  #allocation1 [shape = 'u32[72,128]{1,0:T(1,128)}', space=vmem, size = 0x9000, scoped, tag = 'internal scratch']
  %s0 = inlined_call_operand.vmem [shape: bf16[8,64], index: 0, kind: input, shape index: {}]
  %s1 = inlined_call_operand.hbm [shape: bf16[64,1280], index: 1, kind: input, shape index: {}]
  %s2 = inlined_call_operand.hbm [shape: f32[1,1280], index: 2, kind: input, shape index: {}]
  %s3 = inlined_call_operand.hbm [shape: bf16[1280,2048], index: 3, kind: input, shape index: {}]
  %s4 = inlined_call_operand.hbm [shape: f32[1,2048], index: 4, kind: input, shape index: {}]
  %s5 = inlined_call_operand.hbm [shape: bf16[2048,128], index: 5, kind: input, shape index: {}]
  %s6 = inlined_call_operand.hbm [shape: f32[1,128], index: 6, kind: input, shape index: {}]
  %s7 = inlined_call_operand.vmem [shape: f32[8,128], index: 7, kind: output, shape index: {}]
  %s8 = sld [smem:[#allocation0]]
  $region62: #{disc_two_forward.1} parent=0
    _
  %s10 = ssub.s32 1, %s8
  %s11 = scalar_select 0, %s10, %s8
  $region1: #{disc_two_forward.1} parent=0
    #allocation2 [shape = 'u8[163840]{0}', space=vmem, size = 0x28000, scoped, tag = 'input window, operand 1, single buffered']
    #allocation3 [shape = 's32[1]{0}', space=sflag, size = 0x4, scoped, tag = 'scoped memory for disc_two_forward.1']
    #allocation4 [shape = 'u8[5120]{0}', space=vmem, size = 0x1400, scoped, tag = 'input window, operand 2, single buffered']
    #allocation5 [shape = 's32[1]{0}', space=sflag, size = 0x4, scoped, tag = 'scoped memory for disc_two_forward.1']
    #allocation6 [shape = 'u8[5242880]{0}', space=vmem, size = 0x500000, scoped, tag = 'input window, operand 3, single buffered']
    #allocation7 [shape = 'u8[8192]{0}', space=vmem, size = 0x2000, scoped, tag = 'input window, operand 4, single buffered']
    #allocation8 [shape = 's32[1]{0}', space=sflag, size = 0x4, scoped, tag = 'scoped memory for disc_two_forward.1']
    #allocation9 [shape = 'u8[524288]{0}', space=vmem, size = 0x80000, scoped, tag = 'input window, operand 5, single buffered']
    #allocation10 [shape = 'u8[512]{0}', space=vmem, size = 0x400, scoped, tag = 'input window, operand 6, single buffered']
    #allocation11 [shape = 's32[1]{0}', space=sflag, size = 0x4, scoped, tag = 'scoped memory for disc_two_forward.1']
    %12 = vsyncpa [#allocation3], 0
    %13 = vsyncpa [#allocation5], 0
    %14 = vsyncpa [#allocation8], 0
    %15 = vsyncpa [#allocation11], 0
    // Predicated region
    $region2: #{disc_two_forward.1} parent=1 // pred_check
      _
    $region3: #{disc_two_forward.1} parent=1 // pred_check_branch
      %17 = sbr.rel (0) target = $region5
    $region4: #{disc_two_forward.1} parent=1 // pred_region
      _
    $region5: #{disc_two_forward.1} parent=1 // pred_fallthru
      _
    // Predicated region
    $region6: #{disc_two_forward.1} parent=1 // pred_check
      _
    $region7: #{disc_two_forward.1} parent=1 // pred_check_branch
      %19 = sbr.rel (0) target = $region9
    $region8: #{disc_two_forward.1} parent=1 // pred_region
      %21 = vsyncadd [#allocation3], 0
      %s22 = sshll.u32 %s1, 4
      %s23 = int_to_ptr.hbm [resolvable:$true] %s22
      %s24 = sshll.u32 [#allocation2], 4
      %s25 = int_to_ptr.vmem [resolvable:$true] %s24
      %30 = dma.hbm_to_vmem [thread:$0]  %s23, 5120, %s25, [#allocation3], 640, 640, 40
    $region9: #{disc_two_forward.1} parent=1 // pred_fallthru
      _
    // Predicated region
    $region10: #{disc_two_forward.1} parent=1 // pred_check
      _
    $region11: #{disc_two_forward.1} parent=1 // pred_check_branch
      %32 = sbr.rel (0) target = $region13
    $region12: #{disc_two_forward.1} parent=1 // pred_region
      %34 = vsyncadd [#allocation5], 0
      %s36 = sshll.u32 %s2, 4
      %s37 = int_to_ptr.hbm [resolvable:$true] %s36
      %s38 = sshll.u32 [#allocation4], 4
      %s39 = int_to_ptr.vmem [resolvable:$true] %s38
      %41 = dma.hbm_to_vmem [thread:$0]  %s37, 160, %s39, [#allocation5]
    $region13: #{disc_two_forward.1} parent=1 // pred_fallthru
      _
    // Predicated region
    $region14: #{disc_two_forward.1} parent=1 // pred_check
      _
    $region15: #{disc_two_forward.1} parent=1 // pred_check_branch
      %43 = sbr.rel (0) target = $region17
    $region16: #{disc_two_forward.1} parent=1 // pred_region
      %45 = vsyncadd [#allocation5], 0
      %s46 = sshll.u32 %s3, 4
      %s47 = int_to_ptr.hbm [resolvable:$true] %s46
      %s48 = sshll.u32 [#allocation6], 4
      %s49 = int_to_ptr.vmem [resolvable:$true] %s48
      %54 = dma.hbm_to_vmem [thread:$0]  %s47, 163840, %s49, [#allocation5], 1024, 1024, 64
    $region17: #{disc_two_forward.1} parent=1 // pred_fallthru
      _
    // Predicated region
    $region18: #{disc_two_forward.1} parent=1 // pred_check
      _
    $region19: #{disc_two_forward.1} parent=1 // pred_check_branch
      %56 = sbr.rel (0) target = $region21
    $region20: #{disc_two_forward.1} parent=1 // pred_region
      %58 = vsyncadd [#allocation8], 0
      %s60 = sshll.u32 %s4, 4
      %s61 = int_to_ptr.hbm [resolvable:$true] %s60
      %s62 = sshll.u32 [#allocation7], 4
      %s63 = int_to_ptr.vmem [resolvable:$true] %s62
      %65 = dma.hbm_to_vmem [thread:$0]  %s61, 256, %s63, [#allocation8]
    $region21: #{disc_two_forward.1} parent=1 // pred_fallthru
      _
    // Predicated region
    $region22: #{disc_two_forward.1} parent=1 // pred_check
      _
    $region23: #{disc_two_forward.1} parent=1 // pred_check_branch
      %67 = sbr.rel (0) target = $region25
    $region24: #{disc_two_forward.1} parent=1 // pred_region
      %69 = vsyncadd [#allocation8], 0
      %s70 = sshll.u32 %s5, 4
      %s71 = int_to_ptr.hbm [resolvable:$true] %s70
      %s72 = sshll.u32 [#allocation9], 4
      %s73 = int_to_ptr.vmem [resolvable:$true] %s72
      %78 = dma.hbm_to_vmem [thread:$0]  %s71, 16384, %s73, [#allocation8], 64, 64, 4
    $region25: #{disc_two_forward.1} parent=1 // pred_fallthru
      _
    // Predicated region
    $region26: #{disc_two_forward.1} parent=1 // pred_check
      _
    $region27: #{disc_two_forward.1} parent=1 // pred_check_branch
      %80 = sbr.rel (0) target = $region29
    $region28: #{disc_two_forward.1} parent=1 // pred_region
      %82 = vsyncadd [#allocation11], 0
      %s84 = sshll.u32 %s6, 4
      %s85 = int_to_ptr.hbm [resolvable:$true] %s84
      %s86 = sshll.u32 [#allocation10], 4
      %s87 = int_to_ptr.vmem [resolvable:$true] %s86
      %89 = dma.hbm_to_vmem [thread:$0]  %s85, 16, %s87, [#allocation11]
    $region29: #{disc_two_forward.1} parent=1 // pred_fallthru
      _
    // Predicated region
    $region30: #{disc_two_forward.1} parent=1 // pred_check
      _
    $region31: #{disc_two_forward.1} parent=1 // pred_check_branch
      %91 = sbr.rel (0) target = $region33
    $region32: #{disc_two_forward.1} parent=1 // pred_region
      %93 = dma.done [#allocation3], 5120
    $region33: #{disc_two_forward.1} parent=1 // pred_fallthru
      _
    // Predicated region
    $region34: #{disc_two_forward.1} parent=1 // pred_check
      _
    $region35: #{disc_two_forward.1} parent=1 // pred_check_branch
      %95 = sbr.rel (0) target = $region37
    $region36: #{disc_two_forward.1} parent=1 // pred_region
      %97 = dma.done [#allocation5], 160
    $region37: #{disc_two_forward.1} parent=1 // pred_fallthru
      _
    // Predicated region
    $region38: #{disc_two_forward.1} parent=1 // pred_check
      _
    $region39: #{disc_two_forward.1} parent=1 // pred_check_branch
      %99 = sbr.rel (0) target = $region41
    $region40: #{disc_two_forward.1} parent=1 // pred_region
      %101 = dma.done [#allocation5], 163840
    $region41: #{disc_two_forward.1} parent=1 // pred_fallthru
      _
    // Predicated region
    $region42: #{disc_two_forward.1} parent=1 // pred_check
      _
    $region43: #{disc_two_forward.1} parent=1 // pred_check_branch
      %103 = sbr.rel (0) target = $region45
    $region44: #{disc_two_forward.1} parent=1 // pred_region
      %105 = dma.done [#allocation8], 256
    $region45: #{disc_two_forward.1} parent=1 // pred_fallthru
      _
    // Predicated region
    $region46: #{disc_two_forward.1} parent=1 // pred_check
      _
    $region47: #{disc_two_forward.1} parent=1 // pred_check_branch
      %107 = sbr.rel (0) target = $region49
    $region48: #{disc_two_forward.1} parent=1 // pred_region
      %109 = dma.done [#allocation8], 16384
    $region49: #{disc_two_forward.1} parent=1 // pred_fallthru
      _
    // Predicated region
    $region50: #{disc_two_forward.1} parent=1 // pred_check
      _
    $region51: #{disc_two_forward.1} parent=1 // pred_check_branch
      %111 = sbr.rel (0) target = $region53
    $region52: #{disc_two_forward.1} parent=1 // pred_region
      %113 = dma.done [#allocation11], 16
    $region53: #{disc_two_forward.1} parent=1 // pred_fallthru
      _
    %v115 = vld [vmem:[%s0] sm:$0xf]
    %v116 = vld [vmem:[#allocation2] sm:$0xff]
    %v117 = vld [vmem:[#allocation2 + $0x8] sm:$0xff]
    %v118 = vld [vmem:[#allocation2 + $0x10] sm:$0xff]
    %v119 = vld [vmem:[#allocation2 + $0x18] sm:$0xff]
    %v120 = vld [vmem:[#allocation2 + $0x20] sm:$0xff]
    %v121 = vld [vmem:[#allocation2 + $0x28] sm:$0xff]
    %v122 = vld [vmem:[#allocation2 + $0x30] sm:$0xff]
    %v123 = vld [vmem:[#allocation2 + $0x38] sm:$0xff]
    %v124 = vld [vmem:[#allocation2 + $0x40] sm:$0xff]
    %v125 = vld [vmem:[#allocation2 + $0x48] sm:$0xff]
    %v126 = vld [vmem:[#allocation2 + $0x50] sm:$0xff]
    %v127 = vld [vmem:[#allocation2 + $0x58] sm:$0xff]
    %v128 = vld [vmem:[#allocation2 + $0x60] sm:$0xff]
    %v129 = vld [vmem:[#allocation2 + $0x68] sm:$0xff]
    %v130 = vld [vmem:[#allocation2 + $0x70] sm:$0xff]
    %v131 = vld [vmem:[#allocation2 + $0x78] sm:$0xff]
    %v132 = vld [vmem:[#allocation2 + $0x80] sm:$0xff]
    %v133 = vld [vmem:[#allocation2 + $0x88] sm:$0xff]
    %v134 = vld [vmem:[#allocation2 + $0x90] sm:$0xff]
    %v135 = vld [vmem:[#allocation2 + $0x98] sm:$0xff]
    %v136 = vld [vmem:[#allocation2 + $0xa0] sm:$0xff]
    %v137 = vld [vmem:[#allocation2 + $0xa8] sm:$0xff]
    %v138 = vld [vmem:[#allocation2 + $0xb0] sm:$0xff]
    %v139 = vld [vmem:[#allocation2 + $0xb8] sm:$0xff]
    %v140 = vld [vmem:[#allocation2 + $0xc0] sm:$0xff]
    %v141 = vld [vmem:[#allocation2 + $0xc8] sm:$0xff]
    %v142 = vld [vmem:[#allocation2 + $0xd0] sm:$0xff]
    %v143 = vld [vmem:[#allocation2 + $0xd8] sm:$0xff]
    %v144 = vld [vmem:[#allocation2 + $0xe0] sm:$0xff]
    %v145 = vld [vmem:[#allocation2 + $0xe8] sm:$0xff]
    %v146 = vld [vmem:[#allocation2 + $0xf0] sm:$0xff]
    %v147 = vld [vmem:[#allocation2 + $0xf8] sm:$0xff]
    %v148 = vld [vmem:[#allocation2 + $0x100] sm:$0xff]
    %v149 = vld [vmem:[#allocation2 + $0x108] sm:$0xff]
    %v150 = vld [vmem:[#allocation2 + $0x110] sm:$0xff]
    %v151 = vld [vmem:[#allocation2 + $0x118] sm:$0xff]
    %v152 = vld [vmem:[#allocation2 + $0x120] sm:$0xff]
    %v153 = vld [vmem:[#allocation2 + $0x128] sm:$0xff]
    %v154 = vld [vmem:[#allocation2 + $0x130] sm:$0xff]
    %v155 = vld [vmem:[#allocation2 + $0x138] sm:$0xff]
    %v156 = vld [vmem:[#allocation4] sm:$0xff]
    %v157 = vld [vmem:[#allocation4 + $0x8] sm:$0x3]
    %v160 = vperm.slane %v156, 0
    %v161 = vperm.slane %v156, 1
    %v162 = vperm.slane %v156, 2
    %v163 = vperm.slane %v156, 3
    %v164 = vperm.slane %v156, 4
    %v165 = vperm.slane %v156, 5
    %v166 = vperm.slane %v156, 6
    %v167 = vperm.slane %v156, 7
    %v168 = vperm.slane %v157, 0
    %v169 = vperm.slane %v157, 1
    %v220 = vunpack.c.l.b16 %v116
    %v221 = vunpack.c.h.b16 %v116
    %v222 = vunpack.c.l.b16 %v117
    %v223 = vunpack.c.h.b16 %v117
    %v224 = vunpack.c.l.b16 %v118
    %v225 = vunpack.c.h.b16 %v118
    %v226 = vunpack.c.l.b16 %v119
    %v227 = vunpack.c.h.b16 %v119
    %v228 = vunpack.c.l.b16 %v120
    %v229 = vunpack.c.h.b16 %v120
    %v230 = vunpack.c.l.b16 %v121
    %v231 = vunpack.c.h.b16 %v121
    %v232 = vunpack.c.l.b16 %v122
    %v233 = vunpack.c.h.b16 %v122
    %v234 = vunpack.c.l.b16 %v123
    %v235 = vunpack.c.h.b16 %v123
    %v236 = vunpack.c.l.b16 %v124
    %v237 = vunpack.c.h.b16 %v124
    %v238 = vunpack.c.l.b16 %v125
    %v239 = vunpack.c.h.b16 %v125
    %v240 = vunpack.c.l.b16 %v126
    %v241 = vunpack.c.h.b16 %v126
    %v242 = vunpack.c.l.b16 %v127
    %v243 = vunpack.c.h.b16 %v127
    %v244 = vunpack.c.l.b16 %v128
    %v245 = vunpack.c.h.b16 %v128
    %v246 = vunpack.c.l.b16 %v129
    %v247 = vunpack.c.h.b16 %v129
    %v248 = vunpack.c.l.b16 %v130
    %v249 = vunpack.c.h.b16 %v130
    %v250 = vunpack.c.l.b16 %v131
    %v251 = vunpack.c.h.b16 %v131
    %v252 = vunpack.c.l.b16 %v132
    %v253 = vunpack.c.h.b16 %v132
    %v254 = vunpack.c.l.b16 %v133
    %v255 = vunpack.c.h.b16 %v133
    %v256 = vunpack.c.l.b16 %v134
    %v257 = vunpack.c.h.b16 %v134
    %v258 = vunpack.c.l.b16 %v135
    %v259 = vunpack.c.h.b16 %v135
    %v260 = vunpack.c.l.b16 %v136
    %v261 = vunpack.c.h.b16 %v136
    %v262 = vunpack.c.l.b16 %v137
    %v263 = vunpack.c.h.b16 %v137
    %v264 = vunpack.c.l.b16 %v138
    %v265 = vunpack.c.h.b16 %v138
    %v266 = vunpack.c.l.b16 %v139
    %v267 = vunpack.c.h.b16 %v139
    %v268 = vunpack.c.l.b16 %v140
    %v269 = vunpack.c.h.b16 %v140
    %v270 = vunpack.c.l.b16 %v141
    %v271 = vunpack.c.h.b16 %v141
    %v272 = vunpack.c.l.b16 %v142
    %v273 = vunpack.c.h.b16 %v142
    %v274 = vunpack.c.l.b16 %v143
    %v275 = vunpack.c.h.b16 %v143
    %v276 = vunpack.c.l.b16 %v144
    %v277 = vunpack.c.h.b16 %v144
    %v278 = vunpack.c.l.b16 %v145
    %v279 = vunpack.c.h.b16 %v145
    %v280 = vunpack.c.l.b16 %v146
    %v281 = vunpack.c.h.b16 %v146
    %v282 = vunpack.c.l.b16 %v147
    %v283 = vunpack.c.h.b16 %v147
    %v284 = vunpack.c.l.b16 %v148
    %v285 = vunpack.c.h.b16 %v148
    %v286 = vunpack.c.l.b16 %v149
    %v287 = vunpack.c.h.b16 %v149
    %v288 = vunpack.c.l.b16 %v150
    %v289 = vunpack.c.h.b16 %v150
    %v290 = vunpack.c.l.b16 %v151
    %v291 = vunpack.c.h.b16 %v151
    %v292 = vunpack.c.l.b16 %v152
    %v293 = vunpack.c.h.b16 %v152
    %v294 = vunpack.c.l.b16 %v153
    %v295 = vunpack.c.h.b16 %v153
    %v296 = vunpack.c.l.b16 %v154
    %v297 = vunpack.c.h.b16 %v154
    %v298 = vunpack.c.l.b16 %v155
    %v299 = vunpack.c.h.b16 %v155
    %v300 = vpack.c.b16 %v230, %v220
    %v301 = vpack.c.b16 %v231, %v221
    %v302 = vpack.c.b16 %v232, %v222
    %v303 = vpack.c.b16 %v233, %v223
    %v304 = vpack.c.b16 %v234, %v224
    %v305 = vpack.c.b16 %v235, %v225
    %v306 = vpack.c.b16 %v236, %v226
    %v307 = vpack.c.b16 %v237, %v227
    %v308 = vpack.c.b16 %v238, %v228
    %v309 = vpack.c.b16 %v239, %v229
    %v310 = vpack.c.b16 %v250, %v240
    %v311 = vpack.c.b16 %v251, %v241
    %v312 = vpack.c.b16 %v252, %v242
    %v313 = vpack.c.b16 %v253, %v243
    %v314 = vpack.c.b16 %v254, %v244
    %v315 = vpack.c.b16 %v255, %v245
    %v316 = vpack.c.b16 %v256, %v246
    %v317 = vpack.c.b16 %v257, %v247
    %v318 = vpack.c.b16 %v258, %v248
    %v319 = vpack.c.b16 %v259, %v249
    %v320 = vpack.c.b16 %v270, %v260
    %v321 = vpack.c.b16 %v271, %v261
    %v322 = vpack.c.b16 %v272, %v262
    %v323 = vpack.c.b16 %v273, %v263
    %v324 = vpack.c.b16 %v274, %v264
    %v325 = vpack.c.b16 %v275, %v265
    %v326 = vpack.c.b16 %v276, %v266
    %v327 = vpack.c.b16 %v277, %v267
    %v328 = vpack.c.b16 %v278, %v268
    %v329 = vpack.c.b16 %v279, %v269
    %v330 = vpack.c.b16 %v290, %v280
    %v331 = vpack.c.b16 %v291, %v281
    %v332 = vpack.c.b16 %v292, %v282
    %v333 = vpack.c.b16 %v293, %v283
    %v334 = vpack.c.b16 %v294, %v284
    %v335 = vpack.c.b16 %v295, %v285
    %v336 = vpack.c.b16 %v296, %v286
    %v337 = vpack.c.b16 %v297, %v287
    %v338 = vpack.c.b16 %v298, %v288
    %v339 = vpack.c.b16 %v299, %v289
    %vm380 = vcmask 523264
    %v382 = vsel %vm380, %v115, 0
    %384 = vmatpush.bf16.msra.mxu0 0
    %385 = vmatpush.bf16.msra.mxu0 0
    %386 = vmatpush.bf16.msra.mxu0 0
    %387 = vmatpush.bf16.msra.mxu0 0
    %388 = vmatpush.bf16.msra.mxu0 %v330
    %389 = vmatpush.bf16.msra.mxu0 %v320
    %390 = vmatpush.bf16.msra.mxu0 %v310
    %391 = vmatpush.bf16.msra.mxu0 %v300
    %392 = vmatmul.bf16.gmra.mxu0 %v382
    %v393 = vpop.f32.mrf.mxu0
    %v394 = vadd.f32 %v160, %v393
    %v395 = vpop.f32.mrf.mxu0
    %396 = vdwg.mxu0
    %397 = vmatpush.bf16.msra.mxu0 0
    %398 = vmatpush.bf16.msra.mxu0 0
    %399 = vmatpush.bf16.msra.mxu0 0
    %400 = vmatpush.bf16.msra.mxu0 0
    %401 = vmatpush.bf16.msra.mxu0 %v331
    %402 = vmatpush.bf16.msra.mxu0 %v321
    %403 = vmatpush.bf16.msra.mxu0 %v311
    %404 = vmatpush.bf16.msra.mxu0 %v301
    %405 = vmatmul.bf16.gmra.mxu0 %v382
    %v406 = vpop.f32.mrf.mxu0
    %v407 = vadd.f32 %v161, %v406
    %v408 = vpop.f32.mrf.mxu0
    %409 = vdwg.mxu0
    %410 = vmatpush.bf16.msra.mxu0 0
    %411 = vmatpush.bf16.msra.mxu0 0
    %412 = vmatpush.bf16.msra.mxu0 0
    %413 = vmatpush.bf16.msra.mxu0 0
    %414 = vmatpush.bf16.msra.mxu0 %v332
    %415 = vmatpush.bf16.msra.mxu0 %v322
    %416 = vmatpush.bf16.msra.mxu0 %v312
    %417 = vmatpush.bf16.msra.mxu0 %v302
    %418 = vmatmul.bf16.gmra.mxu0 %v382
    %v419 = vpop.f32.mrf.mxu0
    %v420 = vadd.f32 %v162, %v419
    %v421 = vpop.f32.mrf.mxu0
    %422 = vdwg.mxu0
    %423 = vmatpush.bf16.msra.mxu0 0
    %424 = vmatpush.bf16.msra.mxu0 0
    %425 = vmatpush.bf16.msra.mxu0 0
    %426 = vmatpush.bf16.msra.mxu0 0
    %427 = vmatpush.bf16.msra.mxu0 %v333
    %428 = vmatpush.bf16.msra.mxu0 %v323
    %429 = vmatpush.bf16.msra.mxu0 %v313
    %430 = vmatpush.bf16.msra.mxu0 %v303
    %431 = vmatmul.bf16.gmra.mxu0 %v382
    %v432 = vpop.f32.mrf.mxu0
    %v433 = vadd.f32 %v163, %v432
    %v434 = vpop.f32.mrf.mxu0
    %435 = vdwg.mxu0
    %436 = vmatpush.bf16.msra.mxu0 0
    %437 = vmatpush.bf16.msra.mxu0 0
    %438 = vmatpush.bf16.msra.mxu0 0
    %439 = vmatpush.bf16.msra.mxu0 0
    %440 = vmatpush.bf16.msra.mxu0 %v334
    %441 = vmatpush.bf16.msra.mxu0 %v324
    %442 = vmatpush.bf16.msra.mxu0 %v314
    %443 = vmatpush.bf16.msra.mxu0 %v304
    %444 = vmatmul.bf16.gmra.mxu0 %v382
    %v445 = vpop.f32.mrf.mxu0
    %v446 = vadd.f32 %v164, %v445
    %v447 = vpop.f32.mrf.mxu0
    %448 = vdwg.mxu0
    %449 = vmatpush.bf16.msra.mxu0 0
    %450 = vmatpush.bf16.msra.mxu0 0
    %451 = vmatpush.bf16.msra.mxu0 0
    %452 = vmatpush.bf16.msra.mxu0 0
    %453 = vmatpush.bf16.msra.mxu0 %v335
    %454 = vmatpush.bf16.msra.mxu0 %v325
    %455 = vmatpush.bf16.msra.mxu0 %v315
    %456 = vmatpush.bf16.msra.mxu0 %v305
    %457 = vmatmul.bf16.gmra.mxu0 %v382
    %v458 = vpop.f32.mrf.mxu0
    %v459 = vadd.f32 %v165, %v458
    %v460 = vpop.f32.mrf.mxu0
    %461 = vdwg.mxu0
    %462 = vmatpush.bf16.msra.mxu0 0
    %463 = vmatpush.bf16.msra.mxu0 0
    %464 = vmatpush.bf16.msra.mxu0 0
    %465 = vmatpush.bf16.msra.mxu0 0
    %466 = vmatpush.bf16.msra.mxu0 %v336
    %467 = vmatpush.bf16.msra.mxu0 %v326
    %468 = vmatpush.bf16.msra.mxu0 %v316
    %469 = vmatpush.bf16.msra.mxu0 %v306
    %470 = vmatmul.bf16.gmra.mxu0 %v382
    %v471 = vpop.f32.mrf.mxu0
    %v472 = vadd.f32 %v166, %v471
    %v473 = vpop.f32.mrf.mxu0
    %474 = vdwg.mxu0
    %475 = vmatpush.bf16.msra.mxu0 0
    %476 = vmatpush.bf16.msra.mxu0 0
    %477 = vmatpush.bf16.msra.mxu0 0
    %478 = vmatpush.bf16.msra.mxu0 0
    %479 = vmatpush.bf16.msra.mxu0 %v337
    %480 = vmatpush.bf16.msra.mxu0 %v327
    %481 = vmatpush.bf16.msra.mxu0 %v317
    %482 = vmatpush.bf16.msra.mxu0 %v307
    %483 = vmatmul.bf16.gmra.mxu0 %v382
    %v484 = vpop.f32.mrf.mxu0
    %v485 = vadd.f32 %v167, %v484
    %v486 = vpop.f32.mrf.mxu0
    %487 = vdwg.mxu0
    %488 = vmatpush.bf16.msra.mxu0 0
    %489 = vmatpush.bf16.msra.mxu0 0
    %490 = vmatpush.bf16.msra.mxu0 0
    %491 = vmatpush.bf16.msra.mxu0 0
    %492 = vmatpush.bf16.msra.mxu0 %v338
    %493 = vmatpush.bf16.msra.mxu0 %v328
    %494 = vmatpush.bf16.msra.mxu0 %v318
    %495 = vmatpush.bf16.msra.mxu0 %v308
    %496 = vmatmul.bf16.gmra.mxu0 %v382
    %v497 = vpop.f32.mrf.mxu0
    %v498 = vadd.f32 %v168, %v497
    %v499 = vpop.f32.mrf.mxu0
    %500 = vdwg.mxu0
    %501 = vmatpush.bf16.msra.mxu0 0
    %502 = vmatpush.bf16.msra.mxu0 0
    %503 = vmatpush.bf16.msra.mxu0 0
    %504 = vmatpush.bf16.msra.mxu0 0
    %505 = vmatpush.bf16.msra.mxu0 %v339
    %506 = vmatpush.bf16.msra.mxu0 %v329
    %507 = vmatpush.bf16.msra.mxu0 %v319
    %508 = vmatpush.bf16.msra.mxu0 %v309
    %509 = vmatmul.bf16.gmra.mxu0 %v382
    %v510 = vpop.f32.mrf.mxu0
    %v511 = vadd.f32 %v169, %v510
    %v512 = vpop.f32.mrf.mxu0
    %513 = vdwg.mxu0
    %v514 = vpack.c.bf16 %v407, %v394
    %v515 = vpack.c.bf16 %v433, %v420
    %v516 = vpack.c.bf16 %v459, %v446
    %v517 = vpack.c.bf16 %v485, %v472
    %v518 = vpack.c.bf16 %v511, %v498
    %v519 = vunpack.c.l.bf16 %v514
    %v520 = vunpack.c.h.bf16 %v514
    %v521 = vunpack.c.l.bf16 %v515
    %v522 = vunpack.c.h.bf16 %v515
    %v523 = vunpack.c.l.bf16 %v516
    %v524 = vunpack.c.h.bf16 %v516
    %v525 = vunpack.c.l.bf16 %v517
    %v526 = vunpack.c.h.bf16 %v517
    %v527 = vunpack.c.l.bf16 %v518
    %v528 = vunpack.c.h.bf16 %v518
    %v529 = vmul.f32 %v519, 0.010009766
    %v530 = vmul.f32 %v520, 0.010009766
    %v531 = vmul.f32 %v521, 0.010009766
    %v532 = vmul.f32 %v522, 0.010009766
    %v533 = vmul.f32 %v523, 0.010009766
    %v534 = vmul.f32 %v524, 0.010009766
    %v535 = vmul.f32 %v525, 0.010009766
    %v536 = vmul.f32 %v526, 0.010009766
    %v537 = vmul.f32 %v527, 0.010009766
    %v538 = vmul.f32 %v528, 0.010009766
    %v539 = vpack.c.bf16 %v530, %v529
    %v540 = vpack.c.bf16 %v532, %v531
    %v541 = vpack.c.bf16 %v534, %v533
    %v542 = vpack.c.bf16 %v536, %v535
    %v543 = vpack.c.bf16 %v538, %v537
    %v544 = vunpack.c.l.bf16 %v539
    %v545 = vunpack.c.h.bf16 %v539
    %v546 = vunpack.c.l.bf16 %v540
    %v547 = vunpack.c.h.bf16 %v540
    %v548 = vunpack.c.l.bf16 %v541
    %v549 = vunpack.c.h.bf16 %v541
    %v550 = vunpack.c.l.bf16 %v542
    %v551 = vunpack.c.h.bf16 %v542
    %v552 = vunpack.c.l.bf16 %v543
    %v553 = vunpack.c.h.bf16 %v543
    %v554 = vmax.f32 %v519, %v544
    %v555 = vmax.f32 %v520, %v545
    %v556 = vmax.f32 %v521, %v546
    %v557 = vmax.f32 %v522, %v547
    %v558 = vmax.f32 %v523, %v548
    %v559 = vmax.f32 %v524, %v549
    %v560 = vmax.f32 %v525, %v550
    %v561 = vmax.f32 %v526, %v551
    %v562 = vmax.f32 %v527, %v552
    %v563 = vmax.f32 %v528, %v553
    %v564 = vpack.c.bf16 %v554, %v554
    %v565 = vpack.c.bf16 %v555, %v555
    %v566 = vpack.c.bf16 %v556, %v556
    %v567 = vpack.c.bf16 %v557, %v557
    %v568 = vpack.c.bf16 %v558, %v558
    %v569 = vpack.c.bf16 %v559, %v559
    %v570 = vpack.c.bf16 %v560, %v560
    %v571 = vpack.c.bf16 %v561, %v561
    %v572 = vpack.c.bf16 %v562, %v562
    %v573 = vpack.c.bf16 %v563, %v563
    %v574 = vld [vmem:[#allocation6] sm:$0xff]
    %v575 = vld [vmem:[#allocation6 + $0x8] sm:$0xff]
    %v576 = vld [vmem:[#allocation6 + $0x10] sm:$0xff]
    %v577 = vld [vmem:[#allocation6 + $0x18] sm:$0xff]
    %v578 = vld [vmem:[#allocation6 + $0x20] sm:$0xff]
    %v579 = vld [vmem:[#allocation6 + $0x28] sm:$0xff]
    %v580 = vld [vmem:[#allocation6 + $0x30] sm:$0xff]
    %v581 = vld [vmem:[#allocation6 + $0x38] sm:$0xff]
    %v582 = vld [vmem:[#allocation6 + $0x40] sm:$0xff]
    %v583 = vld [vmem:[#allocation6 + $0x48] sm:$0xff]
    %v584 = vld [vmem:[#allocation6 + $0x50] sm:$0xff]
    %v585 = vld [vmem:[#allocation6 + $0x58] sm:$0xff]
    %v586 = vld [vmem:[#allocation6 + $0x60] sm:$0xff]
    %v587 = vld [vmem:[#allocation6 + $0x68] sm:$0xff]
    %v588 = vld [vmem:[#allocation6 + $0x70] sm:$0xff]
    %v589 = vld [vmem:[#allocation6 + $0x78] sm:$0xff]
    %v590 = vld [vmem:[#allocation6 + $0x80] sm:$0xff]
    %v591 = vld [vmem:[#allocation6 + $0x88] sm:$0xff]
    %v592 = vld [vmem:[#allocation6 + $0x90] sm:$0xff]
    %v593 = vld [vmem:[#allocation6 + $0x98] sm:$0xff]
    %v594 = vld [vmem:[#allocation6 + $0xa0] sm:$0xff]
    %v595 = vld [vmem:[#allocation6 + $0xa8] sm:$0xff]
    %v596 = vld [vmem:[#allocation6 + $0xb0] sm:$0xff]
    %v597 = vld [vmem:[#allocation6 + $0xb8] sm:$0xff]
    %v598 = vld [vmem:[#allocation6 + $0xc0] sm:$0xff]
    %v599 = vld [vmem:[#allocation6 + $0xc8] sm:$0xff]
    %v600 = vld [vmem:[#allocation6 + $0xd0] sm:$0xff]
    %v601 = vld [vmem:[#allocation6 + $0xd8] sm:$0xff]
    %v602 = vld [vmem:[#allocation6 + $0xe0] sm:$0xff]
    %v603 = vld [vmem:[#allocation6 + $0xe8] sm:$0xff]
    %v604 = vld [vmem:[#allocation6 + $0xf0] sm:$0xff]
    %v605 = vld [vmem:[#allocation6 + $0xf8] sm:$0xff]
    %v606 = vld [vmem:[#allocation6 + $0x100] sm:$0xff]
    %v607 = vld [vmem:[#allocation6 + $0x108] sm:$0xff]
    %v608 = vld [vmem:[#allocation6 + $0x110] sm:$0xff]
    %v609 = vld [vmem:[#allocation6 + $0x118] sm:$0xff]
    %v610 = vld [vmem:[#allocation6 + $0x120] sm:$0xff]
    %v611 = vld [vmem:[#allocation6 + $0x128] sm:$0xff]
    %v612 = vld [vmem:[#allocation6 + $0x130] sm:$0xff]
    %v613 = vld [vmem:[#allocation6 + $0x138] sm:$0xff]
    %v614 = vld [vmem:[#allocation6 + $0x140] sm:$0xff]
    %v615 = vld [vmem:[#allocation6 + $0x148] sm:$0xff]
    %v616 = vld [vmem:[#allocation6 + $0x150] sm:$0xff]
    %v617 = vld [vmem:[#allocation6 + $0x158] sm:$0xff]
    %v618 = vld [vmem:[#allocation6 + $0x160] sm:$0xff]
    %v619 = vld [vmem:[#allocation6 + $0x168] sm:$0xff]
    %v620 = vld [vmem:[#allocation6 + $0x170] sm:$0xff]
    %v621 = vld [vmem:[#allocation6 + $0x178] sm:$0xff]
    %v622 = vld [vmem:[#allocation6 + $0x180] sm:$0xff]
    %v623 = vld [vmem:[#allocation6 + $0x188] sm:$0xff]
    %v624 = vld [vmem:[#allocation6 + $0x190] sm:$0xff]
    %v625 = vld [vmem:[#allocation6 + $0x198] sm:$0xff]
    %v626 = vld [vmem:[#allocation6 + $0x1a0] sm:$0xff]
    %v627 = vld [vmem:[#allocation6 + $0x1a8] sm:$0xff]
    %v628 = vld [vmem:[#allocation6 + $0x1b0] sm:$0xff]
    %v629 = vld [vmem:[#allocation6 + $0x1b8] sm:$0xff]
    %v630 = vld [vmem:[#allocation6 + $0x1c0] sm:$0xff]
    %v631 = vld [vmem:[#allocation6 + $0x1c8] sm:$0xff]
    %v632 = vld [vmem:[#allocation6 + $0x1d0] sm:$0xff]
    %v633 = vld [vmem:[#allocation6 + $0x1d8] sm:$0xff]
    %v634 = vld [vmem:[#allocation6 + $0x1e0] sm:$0xff]
    %v635 = vld [vmem:[#allocation6 + $0x1e8] sm:$0xff]
    %v636 = vld [vmem:[#allocation6 + $0x1f0] sm:$0xff]
    %v637 = vld [vmem:[#allocation6 + $0x1f8] sm:$0xff]
    %v638 = vld [vmem:[#allocation6 + $0x200] sm:$0xff]
    %v639 = vld [vmem:[#allocation6 + $0x208] sm:$0xff]
    %v640 = vld [vmem:[#allocation6 + $0x210] sm:$0xff]
    %v641 = vld [vmem:[#allocation6 + $0x218] sm:$0xff]
    %v642 = vld [vmem:[#allocation6 + $0x220] sm:$0xff]
    %v643 = vld [vmem:[#allocation6 + $0x228] sm:$0xff]
    %v644 = vld [vmem:[#allocation6 + $0x230] sm:$0xff]
    %v645 = vld [vmem:[#allocation6 + $0x238] sm:$0xff]
    %v646 = vld [vmem:[#allocation6 + $0x240] sm:$0xff]
    %v647 = vld [vmem:[#allocation6 + $0x248] sm:$0xff]
    %v648 = vld [vmem:[#allocation6 + $0x250] sm:$0xff]
    %v649 = vld [vmem:[#allocation6 + $0x258] sm:$0xff]
    %v650 = vld [vmem:[#allocation6 + $0x260] sm:$0xff]
    %v651 = vld [vmem:[#allocation6 + $0x268] sm:$0xff]
    %v652 = vld [vmem:[#allocation6 + $0x270] sm:$0xff]
    %v653 = vld [vmem:[#allocation6 + $0x278] sm:$0xff]
    %v654 = vld [vmem:[#allocation6 + $0x280] sm:$0xff]
    %v655 = vld [vmem:[#allocation6 + $0x288] sm:$0xff]
    %v656 = vld [vmem:[#allocation6 + $0x290] sm:$0xff]
    %v657 = vld [vmem:[#allocation6 + $0x298] sm:$0xff]
    %v658 = vld [vmem:[#allocation6 + $0x2a0] sm:$0xff]
    %v659 = vld [vmem:[#allocation6 + $0x2a8] sm:$0xff]
    %v660 = vld [vmem:[#allocation6 + $0x2b0] sm:$0xff]
    %v661 = vld [vmem:[#allocation6 + $0x2b8] sm:$0xff]
    %v662 = vld [vmem:[#allocation6 + $0x2c0] sm:$0xff]
    %v663 = vld [vmem:[#allocation6 + $0x2c8] sm:$0xff]
    %v664 = vld [vmem:[#allocation6 + $0x2d0] sm:$0xff]
    %v665 = vld [vmem:[#allocation6 + $0x2d8] sm:$0xff]
    %v666 = vld [vmem:[#allocation6 + $0x2e0] sm:$0xff]
    %v667 = vld [vmem:[#allocation6 + $0x2e8] sm:$0xff]
    %v668 = vld [vmem:[#allocation6 + $0x2f0] sm:$0xff]
    %v669 = vld [vmem:[#allocation6 + $0x2f8] sm:$0xff]
    %v670 = vld [vmem:[#allocation6 + $0x300] sm:$0xff]
    %v671 = vld [vmem:[#allocation6 + $0x308] sm:$0xff]
    %v672 = vld [vmem:[#allocation6 + $0x310] sm:$0xff]
    %v673 = vld [vmem:[#allocation6 + $0x318] sm:$0xff]
    %v674 = vld [vmem:[#allocation6 + $0x320] sm:$0xff]
    %v675 = vld [vmem:[#allocation6 + $0x328] sm:$0xff]
    %v676 = vld [vmem:[#allocation6 + $0x330] sm:$0xff]
    %v677 = vld [vmem:[#allocation6 + $0x338] sm:$0xff]
    %v678 = vld [vmem:[#allocation6 + $0x340] sm:$0xff]
    %v679 = vld [vmem:[#allocation6 + $0x348] sm:$0xff]
    %v680 = vld [vmem:[#allocation6 + $0x350] sm:$0xff]
    %v681 = vld [vmem:[#allocation6 + $0x358] sm:$0xff]
    %v682 = vld [vmem:[#allocation6 + $0x360] sm:$0xff]
    %v683 = vld [vmem:[#allocation6 + $0x368] sm:$0xff]
    %v684 = vld [vmem:[#allocation6 + $0x370] sm:$0xff]
    %v685 = vld [vmem:[#allocation6 + $0x378] sm:$0xff]
    %v686 = vld [vmem:[#allocation6 + $0x380] sm:$0xff]
    %v687 = vld [vmem:[#allocation6 + $0x388] sm:$0xff]
    %v688 = vld [vmem:[#allocation6 + $0x390] sm:$0xff]
    %v689 = vld [vmem:[#allocation6 + $0x398] sm:$0xff]
    %v690 = vld [vmem:[#allocation6 + $0x3a0] sm:$0xff]
    %v691 = vld [vmem:[#allocation6 + $0x3a8] sm:$0xff]
    %v692 = vld [vmem:[#allocation6 + $0x3b0] sm:$0xff]
    %v693 = vld [vmem:[#allocation6 + $0x3b8] sm:$0xff]
    %v694 = vld [vmem:[#allocation6 + $0x3c0] sm:$0xff]
    %v695 = vld [vmem:[#allocation6 + $0x3c8] sm:$0xff]
    %v696 = vld [vmem:[#allocation6 + $0x3d0] sm:$0xff]
    %v697 = vld [vmem:[#allocation6 + $0x3d8] sm:$0xff]
    %v698 = vld [vmem:[#allocation6 + $0x3e0] sm:$0xff]
    %v699 = vld [vmem:[#allocation6 + $0x3e8] sm:$0xff]
    %v700 = vld [vmem:[#allocation6 + $0x3f0] sm:$0xff]
    %v701 = vld [vmem:[#allocation6 + $0x3f8] sm:$0xff]
    %v702 = vld [vmem:[#allocation6 + $0x400] sm:$0xff]
    %v703 = vld [vmem:[#allocation6 + $0x408] sm:$0xff]
    %v704 = vld [vmem:[#allocation6 + $0x410] sm:$0xff]
    %v705 = vld [vmem:[#allocation6 + $0x418] sm:$0xff]
    %v706 = vld [vmem:[#allocation6 + $0x420] sm:$0xff]
    %v707 = vld [vmem:[#allocation6 + $0x428] sm:$0xff]
    %v708 = vld [vmem:[#allocation6 + $0x430] sm:$0xff]
    %v709 = vld [vmem:[#allocation6 + $0x438] sm:$0xff]
    %v710 = vld [vmem:[#allocation6 + $0x440] sm:$0xff]
    %v711 = vld [vmem:[#allocation6 + $0x448] sm:$0xff]
    %v712 = vld [vmem:[#allocation6 + $0x450] sm:$0xff]
    %v713 = vld [vmem:[#allocation6 + $0x458] sm:$0xff]
    %v714 = vld [vmem:[#allocation6 + $0x460] sm:$0xff]
    %v715 = vld [vmem:[#allocation6 + $0x468] sm:$0xff]
    %v716 = vld [vmem:[#allocation6 + $0x470] sm:$0xff]
    %v717 = vld [vmem:[#allocation6 + $0x478] sm:$0xff]
    %v718 = vld [vmem:[#allocation6 + $0x480] sm:$0xff]
    %v719 = vld [vmem:[#allocation6 + $0x488] sm:$0xff]
    %v720 = vld [vmem:[#allocation6 + $0x490] sm:$0xff]
    %v721 = vld [vmem:[#allocation6 + $0x498] sm:$0xff]
    %v722 = vld [vmem:[#allocation6 + $0x4a0] sm:$0xff]
    %v723 = vld [vmem:[#allocation6 + $0x4a8] sm:$0xff]
    %v724 = vld [vmem:[#allocation6 + $0x4b0] sm:$0xff]
    %v725 = vld [vmem:[#allocation6 + $0x4b8] sm:$0xff]
    %v726 = vld [vmem:[#allocation6 + $0x4c0] sm:$0xff]
    %v727 = vld [vmem:[#allocation6 + $0x4c8] sm:$0xff]
    %v728 = vld [vmem:[#allocation6 + $0x4d0] sm:$0xff]
    %v729 = vld [vmem:[#allocation6 + $0x4d8] sm:$0xff]
    %v730 = vld [vmem:[#allocation6 + $0x4e0] sm:$0xff]
    %v731 = vld [vmem:[#allocation6 + $0x4e8] sm:$0xff]
    %v732 = vld [vmem:[#allocation6 + $0x4f0] sm:$0xff]
    %v733 = vld [vmem:[#allocation6 + $0x4f8] sm:$0xff]
    %v734 = vld [vmem:[#allocation6 + $0x500] sm:$0xff]
    %v735 = vld [vmem:[#allocation6 + $0x508] sm:$0xff]
    %v736 = vld [vmem:[#allocation6 + $0x510] sm:$0xff]
    %v737 = vld [vmem:[#allocation6 + $0x518] sm:$0xff]
    %v738 = vld [vmem:[#allocation6 + $0x520] sm:$0xff]
    %v739 = vld [vmem:[#allocation6 + $0x528] sm:$0xff]
    %v740 = vld [vmem:[#allocation6 + $0x530] sm:$0xff]
    %v741 = vld [vmem:[#allocation6 + $0x538] sm:$0xff]
    %v742 = vld [vmem:[#allocation6 + $0x540] sm:$0xff]
    %v743 = vld [vmem:[#allocation6 + $0x548] sm:$0xff]
    %v744 = vld [vmem:[#allocation6 + $0x550] sm:$0xff]
    %v745 = vld [vmem:[#allocation6 + $0x558] sm:$0xff]
    %v746 = vld [vmem:[#allocation6 + $0x560] sm:$0xff]
    %v747 = vld [vmem:[#allocation6 + $0x568] sm:$0xff]
    %v748 = vld [vmem:[#allocation6 + $0x570] sm:$0xff]
    %v749 = vld [vmem:[#allocation6 + $0x578] sm:$0xff]
    %v750 = vld [vmem:[#allocation6 + $0x580] sm:$0xff]
    %v751 = vld [vmem:[#allocation6 + $0x588] sm:$0xff]
    %v752 = vld [vmem:[#allocation6 + $0x590] sm:$0xff]
    %v753 = vld [vmem:[#allocation6 + $0x598] sm:$0xff]
    %v754 = vld [vmem:[#allocation6 + $0x5a0] sm:$0xff]
    %v755 = vld [vmem:[#allocation6 + $0x5a8] sm:$0xff]
    %v756 = vld [vmem:[#allocation6 + $0x5b0] sm:$0xff]
    %v757 = vld [vmem:[#allocation6 + $0x5b8] sm:$0xff]
    %v758 = vld [vmem:[#allocation6 + $0x5c0] sm:$0xff]
    %v759 = vld [vmem:[#allocation6 + $0x5c8] sm:$0xff]
    %v760 = vld [vmem:[#allocation6 + $0x5d0] sm:$0xff]
    %v761 = vld [vmem:[#allocation6 + $0x5d8] sm:$0xff]
    %v762 = vld [vmem:[#allocation6 + $0x5e0] sm:$0xff]
    %v763 = vld [vmem:[#allocation6 + $0x5e8] sm:$0xff]
    %v764 = vld [vmem:[#allocation6 + $0x5f0] sm:$0xff]
    %v765 = vld [vmem:[#allocation6 + $0x5f8] sm:$0xff]
    %v766 = vld [vmem:[#allocation6 + $0x600] sm:$0xff]
    %v767 = vld [vmem:[#allocation6 + $0x608] sm:$0xff]
    %v768 = vld [vmem:[#allocation6 + $0x610] sm:$0xff]
    %v769 = vld [vmem:[#allocation6 + $0x618] sm:$0xff]
    %v770 = vld [vmem:[#allocation6 + $0x620] sm:$0xff]
    %v771 = vld [vmem:[#allocation6 + $0x628] sm:$0xff]
    %v772 = vld [vmem:[#allocation6 + $0x630] sm:$0xff]
    %v773 = vld [vmem:[#allocation6 + $0x638] sm:$0xff]
    %v774 = vld [vmem:[#allocation6 + $0x640] sm:$0xff]
    %v775 = vld [vmem:[#allocation6 + $0x648] sm:$0xff]
    %v776 = vld [vmem:[#allocation6 + $0x650] sm:$0xff]
    %v777 = vld [vmem:[#allocation6 + $0x658] sm:$0xff]
    %v778 = vld [vmem:[#allocation6 + $0x660] sm:$0xff]
    %v779 = vld [vmem:[#allocation6 + $0x668] sm:$0xff]
    %v780 = vld [vmem:[#allocation6 + $0x670] sm:$0xff]
    %v781 = vld [vmem:[#allocation6 + $0x678] sm:$0xff]
    %v782 = vld [vmem:[#allocation6 + $0x680] sm:$0xff]
    %v783 = vld [vmem:[#allocation6 + $0x688] sm:$0xff]
    %v784 = vld [vmem:[#allocation6 + $0x690] sm:$0xff]
    %v785 = vld [vmem:[#allocation6 + $0x698] sm:$0xff]
    %v786 = vld [vmem:[#allocation6 + $0x6a0] sm:$0xff]
    %v787 = vld [vmem:[#allocation6 + $0x6a8] sm:$0xff]
    %v788 = vld [vmem:[#allocation6 + $0x6b0] sm:$0xff]
    %v789 = vld [vmem:[#allocation6 + $0x6b8] sm:$0xff]
    %v790 = vld [vmem:[#allocation6 + $0x6c0] sm:$0xff]
    %v791 = vld [vmem:[#allocation6 + $0x6c8] sm:$0xff]
    %v792 = vld [vmem:[#allocation6 + $0x6d0] sm:$0xff]
    %v793 = vld [vmem:[#allocation6 + $0x6d8] sm:$0xff]
    %v794 = vld [vmem:[#allocation6 + $0x6e0] sm:$0xff]
    %v795 = vld [vmem:[#allocation6 + $0x6e8] sm:$0xff]
    %v796 = vld [vmem:[#allocation6 + $0x6f0] sm:$0xff]
    %v797 = vld [vmem:[#allocation6 + $0x6f8] sm:$0xff]
    %v798 = vld [vmem:[#allocation6 + $0x700] sm:$0xff]
    %v799 = vld [vmem:[#allocation6 + $0x708] sm:$0xff]
    %v800 = vld [vmem:[#allocation6 + $0x710] sm:$0xff]
    %v801 = vld [vmem:[#allocation6 + $0x718] sm:$0xff]
    %v802 = vld [vmem:[#allocation6 + $0x720] sm:$0xff]
    %v803 = vld [vmem:[#allocation6 + $0x728] sm:$0xff]
    %v804 = vld [vmem:[#allocation6 + $0x730] sm:$0xff]
    %v805 = vld [vmem:[#allocation6 + $0x738] sm:$0xff]
    %v806 = vld [vmem:[#allocation6 + $0x740] sm:$0xff]
    %v807 = vld [vmem:[#allocation6 + $0x748] sm:$0xff]
    %v808 = vld [vmem:[#allocation6 + $0x750] sm:$0xff]
    %v809 = vld [vmem:[#allocation6 + $0x758] sm:$0xff]
    %v810 = vld [vmem:[#allocation6 + $0x760] sm:$0xff]
    %v811 = vld [vmem:[#allocation6 + $0x768] sm:$0xff]
    %v812 = vld [vmem:[#allocation6 + $0x770] sm:$0xff]
    %v813 = vld [vmem:[#allocation6 + $0x778] sm:$0xff]
    %v814 = vld [vmem:[#allocation6 + $0x780] sm:$0xff]
    %v815 = vld [vmem:[#allocation6 + $0x788] sm:$0xff]
    %v816 = vld [vmem:[#allocation6 + $0x790] sm:$0xff]
    %v817 = vld [vmem:[#allocation6 + $0x798] sm:$0xff]
    %v818 = vld [vmem:[#allocation6 + $0x7a0] sm:$0xff]
    %v819 = vld [vmem:[#allocation6 + $0x7a8] sm:$0xff]
    %v820 = vld [vmem:[#allocation6 + $0x7b0] sm:$0xff]
    %v821 = vld [vmem:[#allocation6 + $0x7b8] sm:$0xff]
    %v822 = vld [vmem:[#allocation6 + $0x7c0] sm:$0xff]
    %v823 = vld [vmem:[#allocation6 + $0x7c8] sm:$0xff]
    %v824 = vld [vmem:[#allocation6 + $0x7d0] sm:$0xff]
    %v825 = vld [vmem:[#allocation6 + $0x7d8] sm:$0xff]
    %v826 = vld [vmem:[#allocation6 + $0x7e0] sm:$0xff]
    %v827 = vld [vmem:[#allocation6 + $0x7e8] sm:$0xff]
    %v828 = vld [vmem:[#allocation6 + $0x7f0] sm:$0xff]
    %v829 = vld [vmem:[#allocation6 + $0x7f8] sm:$0xff]
    %v830 = vld [vmem:[#allocation6 + $0x800] sm:$0xff]
    %v831 = vld [vmem:[#allocation6 + $0x808] sm:$0xff]
    %v832 = vld [vmem:[#allocation6 + $0x810] sm:$0xff]
    %v833 = vld [vmem:[#allocation6 + $0x818] sm:$0xff]
    %v834 = vld [vmem:[#allocation6 + $0x820] sm:$0xff]
    %v835 = vld [vmem:[#allocation6 + $0x828] sm:$0xff]
    %v836 = vld [vmem:[#allocation6 + $0x830] sm:$0xff]
    %v837 = vld [vmem:[#allocation6 + $0x838] sm:$0xff]
    %v838 = vld [vmem:[#allocation6 + $0x840] sm:$0xff]
    %v839 = vld [vmem:[#allocation6 + $0x848] sm:$0xff]
    %v840 = vld [vmem:[#allocation6 + $0x850] sm:$0xff]
    %v841 = vld [vmem:[#allocation6 + $0x858] sm:$0xff]
    %v842 = vld [vmem:[#allocation6 + $0x860] sm:$0xff]
    %v843 = vld [vmem:[#allocation6 + $0x868] sm:$0xff]
    %v844 = vld [vmem:[#allocation6 + $0x870] sm:$0xff]
    %v845 = vld [vmem:[#allocation6 + $0x878] sm:$0xff]
    %v846 = vld [vmem:[#allocation6 + $0x880] sm:$0xff]
    %v847 = vld [vmem:[#allocation6 + $0x888] sm:$0xff]
    %v848 = vld [vmem:[#allocation6 + $0x890] sm:$0xff]
    %v849 = vld [vmem:[#allocation6 + $0x898] sm:$0xff]
    %v850 = vld [vmem:[#allocation6 + $0x8a0] sm:$0xff]
    %v851 = vld [vmem:[#allocation6 + $0x8a8] sm:$0xff]
    %v852 = vld [vmem:[#allocation6 + $0x8b0] sm:$0xff]
    %v853 = vld [vmem:[#allocation6 + $0x8b8] sm:$0xff]
    %v854 = vld [vmem:[#allocation6 + $0x8c0] sm:$0xff]
    %v855 = vld [vmem:[#allocation6 + $0x8c8] sm:$0xff]
    %v856 = vld [vmem:[#allocation6 + $0x8d0] sm:$0xff]
    %v857 = vld [vmem:[#allocation6 + $0x8d8] sm:$0xff]
    %v858 = vld [vmem:[#allocation6 + $0x8e0] sm:$0xff]
    %v859 = vld [vmem:[#allocation6 + $0x8e8] sm:$0xff]
    %v860 = vld [vmem:[#allocation6 + $0x8f0] sm:$0xff]
    %v861 = vld [vmem:[#allocation6 + $0x8f8] sm:$0xff]
    %v862 = vld [vmem:[#allocation6 + $0x900] sm:$0xff]
    %v863 = vld [vmem:[#allocation6 + $0x908] sm:$0xff]
    %v864 = vld [vmem:[#allocation6 + $0x910] sm:$0xff]
    %v865 = vld [vmem:[#allocation6 + $0x918] sm:$0xff]
    %v866 = vld [vmem:[#allocation6 + $0x920] sm:$0xff]
    %v867 = vld [vmem:[#allocation6 + $0x928] sm:$0xff]
    %v868 = vld [vmem:[#allocation6 + $0x930] sm:$0xff]
    %v869 = vld [vmem:[#allocation6 + $0x938] sm:$0xff]
    %v870 = vld [vmem:[#allocation6 + $0x940] sm:$0xff]
    %v871 = vld [vmem:[#allocation6 + $0x948] sm:$0xff]
    %v872 = vld [vmem:[#allocation6 + $0x950] sm:$0xff]
    %v873 = vld [vmem:[#allocation6 + $0x958] sm:$0xff]
    %v874 = vld [vmem:[#allocation6 + $0x960] sm:$0xff]
    %v875 = vld [vmem:[#allocation6 + $0x968] sm:$0xff]
    %v876 = vld [vmem:[#allocation6 + $0x970] sm:$0xff]
    %v877 = vld [vmem:[#allocation6 + $0x978] sm:$0xff]
    %v878 = vld [vmem:[#allocation6 + $0x980] sm:$0xff]
    %v879 = vld [vmem:[#allocation6 + $0x988] sm:$0xff]
    %v880 = vld [vmem:[#allocation6 + $0x990] sm:$0xff]
    %v881 = vld [vmem:[#allocation6 + $0x998] sm:$0xff]
    %v882 = vld [vmem:[#allocation6 + $0x9a0] sm:$0xff]
    %v883 = vld [vmem:[#allocation6 + $0x9a8] sm:$0xff]
    %v884 = vld [vmem:[#allocation6 + $0x9b0] sm:$0xff]
    %v885 = vld [vmem:[#allocation6 + $0x9b8] sm:$0xff]
    %v886 = vld [vmem:[#allocation6 + $0x9c0] sm:$0xff]
    %v887 = vld [vmem:[#allocation6 + $0x9c8] sm:$0xff]
    %v888 = vld [vmem:[#allocation6 + $0x9d0] sm:$0xff]
    %v889 = vld [vmem:[#allocation6 + $0x9d8] sm:$0xff]
    %v890 = vld [vmem:[#allocation6 + $0x9e0] sm:$0xff]
    %v891 = vld [vmem:[#allocation6 + $0x9e8] sm:$0xff]
    %v892 = vld [vmem:[#allocation6 + $0x9f0] sm:$0xff]
    %v893 = vld [vmem:[#allocation6 + $0x9f8] sm:$0xff]
    %v894 = vld [vmem:[#allocation6 + $0xa00] sm:$0xff]
    %v895 = vld [vmem:[#allocation6 + $0xa08] sm:$0xff]
    %v896 = vld [vmem:[#allocation6 + $0xa10] sm:$0xff]
    %v897 = vld [vmem:[#allocation6 + $0xa18] sm:$0xff]
    %v898 = vld [vmem:[#allocation6 + $0xa20] sm:$0xff]
    %v899 = vld [vmem:[#allocation6 + $0xa28] sm:$0xff]
    %v900 = vld [vmem:[#allocation6 + $0xa30] sm:$0xff]
    %v901 = vld [vmem:[#allocation6 + $0xa38] sm:$0xff]
    %v902 = vld [vmem:[#allocation6 + $0xa40] sm:$0xff]
    %v903 = vld [vmem:[#allocation6 + $0xa48] sm:$0xff]
    %v904 = vld [vmem:[#allocation6 + $0xa50] sm:$0xff]
    %v905 = vld [vmem:[#allocation6 + $0xa58] sm:$0xff]
    %v906 = vld [vmem:[#allocation6 + $0xa60] sm:$0xff]
    %v907 = vld [vmem:[#allocation6 + $0xa68] sm:$0xff]
    %v908 = vld [vmem:[#allocation6 + $0xa70] sm:$0xff]
    %v909 = vld [vmem:[#allocation6 + $0xa78] sm:$0xff]
    %v910 = vld [vmem:[#allocation6 + $0xa80] sm:$0xff]
    %v911 = vld [vmem:[#allocation6 + $0xa88] sm:$0xff]
    %v912 = vld [vmem:[#allocation6 + $0xa90] sm:$0xff]
    %v913 = vld [vmem:[#allocation6 + $0xa98] sm:$0xff]
    %v914 = vld [vmem:[#allocation6 + $0xaa0] sm:$0xff]
    %v915 = vld [vmem:[#allocation6 + $0xaa8] sm:$0xff]
    %v916 = vld [vmem:[#allocation6 + $0xab0] sm:$0xff]
    %v917 = vld [vmem:[#allocation6 + $0xab8] sm:$0xff]
    %v918 = vld [vmem:[#allocation6 + $0xac0] sm:$0xff]
    %v919 = vld [vmem:[#allocation6 + $0xac8] sm:$0xff]
    %v920 = vld [vmem:[#allocation6 + $0xad0] sm:$0xff]
    %v921 = vld [vmem:[#allocation6 + $0xad8] sm:$0xff]
    %v922 = vld [vmem:[#allocation6 + $0xae0] sm:$0xff]
    %v923 = vld [vmem:[#allocation6 + $0xae8] sm:$0xff]
    %v924 = vld [vmem:[#allocation6 + $0xaf0] sm:$0xff]
    %v925 = vld [vmem:[#allocation6 + $0xaf8] sm:$0xff]
    %v926 = vld [vmem:[#allocation6 + $0xb00] sm:$0xff]
    %v927 = vld [vmem:[#allocation6 + $0xb08] sm:$0xff]
    %v928 = vld [vmem:[#allocation6 + $0xb10] sm:$0xff]
    %v929 = vld [vmem:[#allocation6 + $0xb18] sm:$0xff]
    %v930 = vld [vmem:[#allocation6 + $0xb20] sm:$0xff]
    %v931 = vld [vmem:[#allocation6 + $0xb28] sm:$0xff]
    %v932 = vld [vmem:[#allocation6 + $0xb30] sm:$0xff]
    %v933 = vld [vmem:[#allocation6 + $0xb38] sm:$0xff]
    %v934 = vld [vmem:[#allocation6 + $0xb40] sm:$0xff]
    %v935 = vld [vmem:[#allocation6 + $0xb48] sm:$0xff]
    %v936 = vld [vmem:[#allocation6 + $0xb50] sm:$0xff]
    %v937 = vld [vmem:[#allocation6 + $0xb58] sm:$0xff]
    %v938 = vld [vmem:[#allocation6 + $0xb60] sm:$0xff]
    %v939 = vld [vmem:[#allocation6 + $0xb68] sm:$0xff]
    %v940 = vld [vmem:[#allocation6 + $0xb70] sm:$0xff]
    %v941 = vld [vmem:[#allocation6 + $0xb78] sm:$0xff]
    %v942 = vld [vmem:[#allocation6 + $0xb80] sm:$0xff]
    %v943 = vld [vmem:[#allocation6 + $0xb88] sm:$0xff]
    %v944 = vld [vmem:[#allocation6 + $0xb90] sm:$0xff]
    %v945 = vld [vmem:[#allocation6 + $0xb98] sm:$0xff]
    %v946 = vld [vmem:[#allocation6 + $0xba0] sm:$0xff]
    %v947 = vld [vmem:[#allocation6 + $0xba8] sm:$0xff]
    %v948 = vld [vmem:[#allocation6 + $0xbb0] sm:$0xff]
    %v949 = vld [vmem:[#allocation6 + $0xbb8] sm:$0xff]
    %v950 = vld [vmem:[#allocation6 + $0xbc0] sm:$0xff]
    %v951 = vld [vmem:[#allocation6 + $0xbc8] sm:$0xff]
    %v952 = vld [vmem:[#allocation6 + $0xbd0] sm:$0xff]
    %v953 = vld [vmem:[#allocation6 + $0xbd8] sm:$0xff]
    %v954 = vld [vmem:[#allocation6 + $0xbe0] sm:$0xff]
    %v955 = vld [vmem:[#allocation6 + $0xbe8] sm:$0xff]
    %v956 = vld [vmem:[#allocation6 + $0xbf0] sm:$0xff]
    %v957 = vld [vmem:[#allocation6 + $0xbf8] sm:$0xff]
    %v958 = vld [vmem:[#allocation6 + $0xc00] sm:$0xff]
    %v959 = vld [vmem:[#allocation6 + $0xc08] sm:$0xff]
    %v960 = vld [vmem:[#allocation6 + $0xc10] sm:$0xff]
    %v961 = vld [vmem:[#allocation6 + $0xc18] sm:$0xff]
    %v962 = vld [vmem:[#allocation6 + $0xc20] sm:$0xff]
    %v963 = vld [vmem:[#allocation6 + $0xc28] sm:$0xff]
    %v964 = vld [vmem:[#allocation6 + $0xc30] sm:$0xff]
    %v965 = vld [vmem:[#allocation6 + $0xc38] sm:$0xff]
    %v966 = vld [vmem:[#allocation6 + $0xc40] sm:$0xff]
    %v967 = vld [vmem:[#allocation6 + $0xc48] sm:$0xff]
    %v968 = vld [vmem:[#allocation6 + $0xc50] sm:$0xff]
    %v969 = vld [vmem:[#allocation6 + $0xc58] sm:$0xff]
    %v970 = vld [vmem:[#allocation6 + $0xc60] sm:$0xff]
    %v971 = vld [vmem:[#allocation6 + $0xc68] sm:$0xff]
    %v972 = vld [vmem:[#allocation6 + $0xc70] sm:$0xff]
    %v973 = vld [vmem:[#allocation6 + $0xc78] sm:$0xff]
    %v974 = vld [vmem:[#allocation6 + $0xc80] sm:$0xff]
    %v975 = vld [vmem:[#allocation6 + $0xc88] sm:$0xff]
    %v976 = vld [vmem:[#allocation6 + $0xc90] sm:$0xff]
    %v977 = vld [vmem:[#allocation6 + $0xc98] sm:$0xff]
    %v978 = vld [vmem:[#allocation6 + $0xca0] sm:$0xff]
    %v979 = vld [vmem:[#allocation6 + $0xca8] sm:$0xff]
    %v980 = vld [vmem:[#allocation6 + $0xcb0] sm:$0xff]
    %v981 = vld [vmem:[#allocation6 + $0xcb8] sm:$0xff]
    %v982 = vld [vmem:[#allocation6 + $0xcc0] sm:$0xff]
    %v983 = vld [vmem:[#allocation6 + $0xcc8] sm:$0xff]
    %v984 = vld [vmem:[#allocation6 + $0xcd0] sm:$0xff]
    %v985 = vld [vmem:[#allocation6 + $0xcd8] sm:$0xff]
    %v986 = vld [vmem:[#allocation6 + $0xce0] sm:$0xff]
    %v987 = vld [vmem:[#allocation6 + $0xce8] sm:$0xff]
    %v988 = vld [vmem:[#allocation6 + $0xcf0] sm:$0xff]
    %v989 = vld [vmem:[#allocation6 + $0xcf8] sm:$0xff]
    %v990 = vld [vmem:[#allocation6 + $0xd00] sm:$0xff]
    %v991 = vld [vmem:[#allocation6 + $0xd08] sm:$0xff]
    %v992 = vld [vmem:[#allocation6 + $0xd10] sm:$0xff]
    %v993 = vld [vmem:[#allocation6 + $0xd18] sm:$0xff]
    %v994 = vld [vmem:[#allocation6 + $0xd20] sm:$0xff]
    %v995 = vld [vmem:[#allocation6 + $0xd28] sm:$0xff]
    %v996 = vld [vmem:[#allocation6 + $0xd30] sm:$0xff]
    %v997 = vld [vmem:[#allocation6 + $0xd38] sm:$0xff]
    %v998 = vld [vmem:[#allocation6 + $0xd40] sm:$0xff]
    %v999 = vld [vmem:[#allocation6 + $0xd48] sm:$0xff]
    %v1000 = vld [vmem:[#allocation6 + $0xd50] sm:$0xff]
    %v1001 = vld [vmem:[#allocation6 + $0xd58] sm:$0xff]
    %v1002 = vld [vmem:[#allocation6 + $0xd60] sm:$0xff]
    %v1003 = vld [vmem:[#allocation6 + $0xd68] sm:$0xff]
    %v1004 = vld [vmem:[#allocation6 + $0xd70] sm:$0xff]
    %v1005 = vld [vmem:[#allocation6 + $0xd78] sm:$0xff]
    %v1006 = vld [vmem:[#allocation6 + $0xd80] sm:$0xff]
    %v1007 = vld [vmem:[#allocation6 + $0xd88] sm:$0xff]
    %v1008 = vld [vmem:[#allocation6 + $0xd90] sm:$0xff]
    %v1009 = vld [vmem:[#allocation6 + $0xd98] sm:$0xff]
    %v1010 = vld [vmem:[#allocation6 + $0xda0] sm:$0xff]
    %v1011 = vld [vmem:[#allocation6 + $0xda8] sm:$0xff]
    %v1012 = vld [vmem:[#allocation6 + $0xdb0] sm:$0xff]
    %v1013 = vld [vmem:[#allocation6 + $0xdb8] sm:$0xff]
    %v1014 = vld [vmem:[#allocation6 + $0xdc0] sm:$0xff]
    %v1015 = vld [vmem:[#allocation6 + $0xdc8] sm:$0xff]
    %v1016 = vld [vmem:[#allocation6 + $0xdd0] sm:$0xff]
    %v1017 = vld [vmem:[#allocation6 + $0xdd8] sm:$0xff]
    %v1018 = vld [vmem:[#allocation6 + $0xde0] sm:$0xff]
    %v1019 = vld [vmem:[#allocation6 + $0xde8] sm:$0xff]
    %v1020 = vld [vmem:[#allocation6 + $0xdf0] sm:$0xff]
    %v1021 = vld [vmem:[#allocation6 + $0xdf8] sm:$0xff]
    %v1022 = vld [vmem:[#allocation6 + $0xe00] sm:$0xff]
    %v1023 = vld [vmem:[#allocation6 + $0xe08] sm:$0xff]
    %v1024 = vld [vmem:[#allocation6 + $0xe10] sm:$0xff]
    %v1025 = vld [vmem:[#allocation6 + $0xe18] sm:$0xff]
    %v1026 = vld [vmem:[#allocation6 + $0xe20] sm:$0xff]
    %v1027 = vld [vmem:[#allocation6 + $0xe28] sm:$0xff]
    %v1028 = vld [vmem:[#allocation6 + $0xe30] sm:$0xff]
    %v1029 = vld [vmem:[#allocation6 + $0xe38] sm:$0xff]
    %v1030 = vld [vmem:[#allocation6 + $0xe40] sm:$0xff]
    %v1031 = vld [vmem:[#allocation6 + $0xe48] sm:$0xff]
    %v1032 = vld [vmem:[#allocation6 + $0xe50] sm:$0xff]
    %v1033 = vld [vmem:[#allocation6 + $0xe58] sm:$0xff]
    %v1034 = vld [vmem:[#allocation6 + $0xe60] sm:$0xff]
    %v1035 = vld [vmem:[#allocation6 + $0xe68] sm:$0xff]
    %v1036 = vld [vmem:[#allocation6 + $0xe70] sm:$0xff]
    %v1037 = vld [vmem:[#allocation6 + $0xe78] sm:$0xff]
    %v1038 = vld [vmem:[#allocation6 + $0xe80] sm:$0xff]
    %v1039 = vld [vmem:[#allocation6 + $0xe88] sm:$0xff]
    %v1040 = vld [vmem:[#allocation6 + $0xe90] sm:$0xff]
    %v1041 = vld [vmem:[#allocation6 + $0xe98] sm:$0xff]
    %v1042 = vld [vmem:[#allocation6 + $0xea0] sm:$0xff]
    %v1043 = vld [vmem:[#allocation6 + $0xea8] sm:$0xff]
    %v1044 = vld [vmem:[#allocation6 + $0xeb0] sm:$0xff]
    %v1045 = vld [vmem:[#allocation6 + $0xeb8] sm:$0xff]
    %v1046 = vld [vmem:[#allocation6 + $0xec0] sm:$0xff]
    %v1047 = vld [vmem:[#allocation6 + $0xec8] sm:$0xff]
    %v1048 = vld [vmem:[#allocation6 + $0xed0] sm:$0xff]
    %v1049 = vld [vmem:[#allocation6 + $0xed8] sm:$0xff]
    %v1050 = vld [vmem:[#allocation6 + $0xee0] sm:$0xff]
    %v1051 = vld [vmem:[#allocation6 + $0xee8] sm:$0xff]
    %v1052 = vld [vmem:[#allocation6 + $0xef0] sm:$0xff]
    %v1053 = vld [vmem:[#allocation6 + $0xef8] sm:$0xff]
    %v1054 = vld [vmem:[#allocation6 + $0xf00] sm:$0xff]
    %v1055 = vld [vmem:[#allocation6 + $0xf08] sm:$0xff]
    %v1056 = vld [vmem:[#allocation6 + $0xf10] sm:$0xff]
    %v1057 = vld [vmem:[#allocation6 + $0xf18] sm:$0xff]
    %v1058 = vld [vmem:[#allocation6 + $0xf20] sm:$0xff]
    %v1059 = vld [vmem:[#allocation6 + $0xf28] sm:$0xff]
    %v1060 = vld [vmem:[#allocation6 + $0xf30] sm:$0xff]
    %v1061 = vld [vmem:[#allocation6 + $0xf38] sm:$0xff]
    %v1062 = vld [vmem:[#allocation6 + $0xf40] sm:$0xff]
    %v1063 = vld [vmem:[#allocation6 + $0xf48] sm:$0xff]
    %v1064 = vld [vmem:[#allocation6 + $0xf50] sm:$0xff]
    %v1065 = vld [vmem:[#allocation6 + $0xf58] sm:$0xff]
    %v1066 = vld [vmem:[#allocation6 + $0xf60] sm:$0xff]
    %v1067 = vld [vmem:[#allocation6 + $0xf68] sm:$0xff]
    %v1068 = vld [vmem:[#allocation6 + $0xf70] sm:$0xff]
    %v1069 = vld [vmem:[#allocation6 + $0xf78] sm:$0xff]
    %v1070 = vld [vmem:[#allocation6 + $0xf80] sm:$0xff]
    %v1071 = vld [vmem:[#allocation6 + $0xf88] sm:$0xff]
    %v1072 = vld [vmem:[#allocation6 + $0xf90] sm:$0xff]
    %v1073 = vld [vmem:[#allocation6 + $0xf98] sm:$0xff]
    %v1074 = vld [vmem:[#allocation6 + $0xfa0] sm:$0xff]
    %v1075 = vld [vmem:[#allocation6 + $0xfa8] sm:$0xff]
    %v1076 = vld [vmem:[#allocation6 + $0xfb0] sm:$0xff]
    %v1077 = vld [vmem:[#allocation6 + $0xfb8] sm:$0xff]
    %v1078 = vld [vmem:[#allocation6 + $0xfc0] sm:$0xff]
    %v1079 = vld [vmem:[#allocation6 + $0xfc8] sm:$0xff]
    %v1080 = vld [vmem:[#allocation6 + $0xfd0] sm:$0xff]
    %v1081 = vld [vmem:[#allocation6 + $0xfd8] sm:$0xff]
    %v1082 = vld [vmem:[#allocation6 + $0xfe0] sm:$0xff]
    %v1083 = vld [vmem:[#allocation6 + $0xfe8] sm:$0xff]
    %v1084 = vld [vmem:[#allocation6 + $0xff0] sm:$0xff]
    %v1085 = vld [vmem:[#allocation6 + $0xff8] sm:$0xff]
    %v1086 = vld [vmem:[#allocation6 + $0x1000] sm:$0xff]
    %v1087 = vld [vmem:[#allocation6 + $0x1008] sm:$0xff]
    %v1088 = vld [vmem:[#allocation6 + $0x1010] sm:$0xff]
    %v1089 = vld [vmem:[#allocation6 + $0x1018] sm:$0xff]
    %v1090 = vld [vmem:[#allocation6 + $0x1020] sm:$0xff]
    %v1091 = vld [vmem:[#allocation6 + $0x1028] sm:$0xff]
    %v1092 = vld [vmem:[#allocation6 + $0x1030] sm:$0xff]
    %v1093 = vld [vmem:[#allocation6 + $0x1038] sm:$0xff]
    %v1094 = vld [vmem:[#allocation6 + $0x1040] sm:$0xff]
    %v1095 = vld [vmem:[#allocation6 + $0x1048] sm:$0xff]
    %v1096 = vld [vmem:[#allocation6 + $0x1050] sm:$0xff]
    %v1097 = vld [vmem:[#allocation6 + $0x1058] sm:$0xff]
    %v1098 = vld [vmem:[#allocation6 + $0x1060] sm:$0xff]
    %v1099 = vld [vmem:[#allocation6 + $0x1068] sm:$0xff]
    %v1100 = vld [vmem:[#allocation6 + $0x1070] sm:$0xff]
    %v1101 = vld [vmem:[#allocation6 + $0x1078] sm:$0xff]
    %v1102 = vld [vmem:[#allocation6 + $0x1080] sm:$0xff]
    %v1103 = vld [vmem:[#allocation6 + $0x1088] sm:$0xff]
    %v1104 = vld [vmem:[#allocation6 + $0x1090] sm:$0xff]
    %v1105 = vld [vmem:[#allocation6 + $0x1098] sm:$0xff]
    %v1106 = vld [vmem:[#allocation6 + $0x10a0] sm:$0xff]
    %v1107 = vld [vmem:[#allocation6 + $0x10a8] sm:$0xff]
    %v1108 = vld [vmem:[#allocation6 + $0x10b0] sm:$0xff]
    %v1109 = vld [vmem:[#allocation6 + $0x10b8] sm:$0xff]
    %v1110 = vld [vmem:[#allocation6 + $0x10c0] sm:$0xff]
    %v1111 = vld [vmem:[#allocation6 + $0x10c8] sm:$0xff]
    %v1112 = vld [vmem:[#allocation6 + $0x10d0] sm:$0xff]
    %v1113 = vld [vmem:[#allocation6 + $0x10d8] sm:$0xff]
    %v1114 = vld [vmem:[#allocation6 + $0x10e0] sm:$0xff]
    %v1115 = vld [vmem:[#allocation6 + $0x10e8] sm:$0xff]
    %v1116 = vld [vmem:[#allocation6 + $0x10f0] sm:$0xff]
    %v1117 = vld [vmem:[#allocation6 + $0x10f8] sm:$0xff]
    %v1118 = vld [vmem:[#allocation6 + $0x1100] sm:$0xff]
    %v1119 = vld [vmem:[#allocation6 + $0x1108] sm:$0xff]
    %v1120 = vld [vmem:[#allocation6 + $0x1110] sm:$0xff]
    %v1121 = vld [vmem:[#allocation6 + $0x1118] sm:$0xff]
    %v1122 = vld [vmem:[#allocation6 + $0x1120] sm:$0xff]
    %v1123 = vld [vmem:[#allocation6 + $0x1128] sm:$0xff]
    %v1124 = vld [vmem:[#allocation6 + $0x1130] sm:$0xff]
    %v1125 = vld [vmem:[#allocation6 + $0x1138] sm:$0xff]
    %v1126 = vld [vmem:[#allocation6 + $0x1140] sm:$0xff]
    %v1127 = vld [vmem:[#allocation6 + $0x1148] sm:$0xff]
    %v1128 = vld [vmem:[#allocation6 + $0x1150] sm:$0xff]
    %v1129 = vld [vmem:[#allocation6 + $0x1158] sm:$0xff]
    %v1130 = vld [vmem:[#allocation6 + $0x1160] sm:$0xff]
    %v1131 = vld [vmem:[#allocation6 + $0x1168] sm:$0xff]
    %v1132 = vld [vmem:[#allocation6 + $0x1170] sm:$0xff]
    %v1133 = vld [vmem:[#allocation6 + $0x1178] sm:$0xff]
    %v1134 = vld [vmem:[#allocation6 + $0x1180] sm:$0xff]
    %v1135 = vld [vmem:[#allocation6 + $0x1188] sm:$0xff]
    %v1136 = vld [vmem:[#allocation6 + $0x1190] sm:$0xff]
    %v1137 = vld [vmem:[#allocation6 + $0x1198] sm:$0xff]
    %v1138 = vld [vmem:[#allocation6 + $0x11a0] sm:$0xff]
    %v1139 = vld [vmem:[#allocation6 + $0x11a8] sm:$0xff]
    %v1140 = vld [vmem:[#allocation6 + $0x11b0] sm:$0xff]
    %v1141 = vld [vmem:[#allocation6 + $0x11b8] sm:$0xff]
    %v1142 = vld [vmem:[#allocation6 + $0x11c0] sm:$0xff]
    %v1143 = vld [vmem:[#allocation6 + $0x11c8] sm:$0xff]
    %v1144 = vld [vmem:[#allocation6 + $0x11d0] sm:$0xff]
    %v1145 = vld [vmem:[#allocation6 + $0x11d8] sm:$0xff]
    %v1146 = vld [vmem:[#allocation6 + $0x11e0] sm:$0xff]
    %v1147 = vld [vmem:[#allocation6 + $0x11e8] sm:$0xff]
    %v1148 = vld [vmem:[#allocation6 + $0x11f0] sm:$0xff]
    %v1149 = vld [vmem:[#allocation6 + $0x11f8] sm:$0xff]
    %v1150 = vld [vmem:[#allocation6 + $0x1200] sm:$0xff]
    %v1151 = vld [vmem:[#allocation6 + $0x1208] sm:$0xff]
    %v1152 = vld [vmem:[#allocation6 + $0x1210] sm:$0xff]
    %v1153 = vld [vmem:[#allocation6 + $0x1218] sm:$0xff]
    %v1154 = vld [vmem:[#allocation6 + $0x1220] sm:$0xff]
    %v1155 = vld [vmem:[#allocation6 + $0x1228] sm:$0xff]
    %v1156 = vld [vmem:[#allocation6 + $0x1230] sm:$0xff]
    %v1157 = vld [vmem:[#allocation6 + $0x1238] sm:$0xff]
    %v1158 = vld [vmem:[#allocation6 + $0x1240] sm:$0xff]
    %v1159 = vld [vmem:[#allocation6 + $0x1248] sm:$0xff]
    %v1160 = vld [vmem:[#allocation6 + $0x1250] sm:$0xff]
    %v1161 = vld [vmem:[#allocation6 + $0x1258] sm:$0xff]
    %v1162 = vld [vmem:[#allocation6 + $0x1260] sm:$0xff]
    %v1163 = vld [vmem:[#allocation6 + $0x1268] sm:$0xff]
    %v1164 = vld [vmem:[#allocation6 + $0x1270] sm:$0xff]
    %v1165 = vld [vmem:[#allocation6 + $0x1278] sm:$0xff]
    %v1166 = vld [vmem:[#allocation6 + $0x1280] sm:$0xff]
    %v1167 = vld [vmem:[#allocation6 + $0x1288] sm:$0xff]
    %v1168 = vld [vmem:[#allocation6 + $0x1290] sm:$0xff]
    %v1169 = vld [vmem:[#allocation6 + $0x1298] sm:$0xff]
    %v1170 = vld [vmem:[#allocation6 + $0x12a0] sm:$0xff]
    %v1171 = vld [vmem:[#allocation6 + $0x12a8] sm:$0xff]
    %v1172 = vld [vmem:[#allocation6 + $0x12b0] sm:$0xff]
    %v1173 = vld [vmem:[#allocation6 + $0x12b8] sm:$0xff]
    %v1174 = vld [vmem:[#allocation6 + $0x12c0] sm:$0xff]
    %v1175 = vld [vmem:[#allocation6 + $0x12c8] sm:$0xff]
    %v1176 = vld [vmem:[#allocation6 + $0x12d0] sm:$0xff]
    %v1177 = vld [vmem:[#allocation6 + $0x12d8] sm:$0xff]
    %v1178 = vld [vmem:[#allocation6 + $0x12e0] sm:$0xff]
    %v1179 = vld [vmem:[#allocation6 + $0x12e8] sm:$0xff]
    %v1180 = vld [vmem:[#allocation6 + $0x12f0] sm:$0xff]
    %v1181 = vld [vmem:[#allocation6 + $0x12f8] sm:$0xff]
    %v1182 = vld [vmem:[#allocation6 + $0x1300] sm:$0xff]
    %v1183 = vld [vmem:[#allocation6 + $0x1308] sm:$0xff]
    %v1184 = vld [vmem:[#allocation6 + $0x1310] sm:$0xff]
    %v1185 = vld [vmem:[#allocation6 + $0x1318] sm:$0xff]
    %v1186 = vld [vmem:[#allocation6 + $0x1320] sm:$0xff]
    %v1187 = vld [vmem:[#allocation6 + $0x1328] sm:$0xff]
    %v1188 = vld [vmem:[#allocation6 + $0x1330] sm:$0xff]
    %v1189 = vld [vmem:[#allocation6 + $0x1338] sm:$0xff]
    %v1190 = vld [vmem:[#allocation6 + $0x1340] sm:$0xff]
    %v1191 = vld [vmem:[#allocation6 + $0x1348] sm:$0xff]
    %v1192 = vld [vmem:[#allocation6 + $0x1350] sm:$0xff]
    %v1193 = vld [vmem:[#allocation6 + $0x1358] sm:$0xff]
    %v1194 = vld [vmem:[#allocation6 + $0x1360] sm:$0xff]
    %v1195 = vld [vmem:[#allocation6 + $0x1368] sm:$0xff]
    %v1196 = vld [vmem:[#allocation6 + $0x1370] sm:$0xff]
    %v1197 = vld [vmem:[#allocation6 + $0x1378] sm:$0xff]
    %v1198 = vld [vmem:[#allocation6 + $0x1380] sm:$0xff]
    %v1199 = vld [vmem:[#allocation6 + $0x1388] sm:$0xff]
    %v1200 = vld [vmem:[#allocation6 + $0x1390] sm:$0xff]
    %v1201 = vld [vmem:[#allocation6 + $0x1398] sm:$0xff]
    %v1202 = vld [vmem:[#allocation6 + $0x13a0] sm:$0xff]
    %v1203 = vld [vmem:[#allocation6 + $0x13a8] sm:$0xff]
    %v1204 = vld [vmem:[#allocation6 + $0x13b0] sm:$0xff]
    %v1205 = vld [vmem:[#allocation6 + $0x13b8] sm:$0xff]
    %v1206 = vld [vmem:[#allocation6 + $0x13c0] sm:$0xff]
    %v1207 = vld [vmem:[#allocation6 + $0x13c8] sm:$0xff]
    %v1208 = vld [vmem:[#allocation6 + $0x13d0] sm:$0xff]
    %v1209 = vld [vmem:[#allocation6 + $0x13d8] sm:$0xff]
    %v1210 = vld [vmem:[#allocation6 + $0x13e0] sm:$0xff]
    %v1211 = vld [vmem:[#allocation6 + $0x13e8] sm:$0xff]
    %v1212 = vld [vmem:[#allocation6 + $0x13f0] sm:$0xff]
    %v1213 = vld [vmem:[#allocation6 + $0x13f8] sm:$0xff]
    %v1214 = vld [vmem:[#allocation6 + $0x1400] sm:$0xff]
    %v1215 = vld [vmem:[#allocation6 + $0x1408] sm:$0xff]
    %v1216 = vld [vmem:[#allocation6 + $0x1410] sm:$0xff]
    %v1217 = vld [vmem:[#allocation6 + $0x1418] sm:$0xff]
    %v1218 = vld [vmem:[#allocation6 + $0x1420] sm:$0xff]
    %v1219 = vld [vmem:[#allocation6 + $0x1428] sm:$0xff]
    %v1220 = vld [vmem:[#allocation6 + $0x1430] sm:$0xff]
    %v1221 = vld [vmem:[#allocation6 + $0x1438] sm:$0xff]
    %v1222 = vld [vmem:[#allocation6 + $0x1440] sm:$0xff]
    %v1223 = vld [vmem:[#allocation6 + $0x1448] sm:$0xff]
    %v1224 = vld [vmem:[#allocation6 + $0x1450] sm:$0xff]
    %v1225 = vld [vmem:[#allocation6 + $0x1458] sm:$0xff]
    %v1226 = vld [vmem:[#allocation6 + $0x1460] sm:$0xff]
    %v1227 = vld [vmem:[#allocation6 + $0x1468] sm:$0xff]
    %v1228 = vld [vmem:[#allocation6 + $0x1470] sm:$0xff]
    %v1229 = vld [vmem:[#allocation6 + $0x1478] sm:$0xff]
    %v1230 = vld [vmem:[#allocation6 + $0x1480] sm:$0xff]
    %v1231 = vld [vmem:[#allocation6 + $0x1488] sm:$0xff]
    %v1232 = vld [vmem:[#allocation6 + $0x1490] sm:$0xff]
    %v1233 = vld [vmem:[#allocation6 + $0x1498] sm:$0xff]
    %v1234 = vld [vmem:[#allocation6 + $0x14a0] sm:$0xff]
    %v1235 = vld [vmem:[#allocation6 + $0x14a8] sm:$0xff]
    %v1236 = vld [vmem:[#allocation6 + $0x14b0] sm:$0xff]
    %v1237 = vld [vmem:[#allocation6 + $0x14b8] sm:$0xff]
    %v1238 = vld [vmem:[#allocation6 + $0x14c0] sm:$0xff]
    %v1239 = vld [vmem:[#allocation6 + $0x14c8] sm:$0xff]
    %v1240 = vld [vmem:[#allocation6 + $0x14d0] sm:$0xff]
    %v1241 = vld [vmem:[#allocation6 + $0x14d8] sm:$0xff]
    %v1242 = vld [vmem:[#allocation6 + $0x14e0] sm:$0xff]
    %v1243 = vld [vmem:[#allocation6 + $0x14e8] sm:$0xff]
    %v1244 = vld [vmem:[#allocation6 + $0x14f0] sm:$0xff]
    %v1245 = vld [vmem:[#allocation6 + $0x14f8] sm:$0xff]
    %v1246 = vld [vmem:[#allocation6 + $0x1500] sm:$0xff]
    %v1247 = vld [vmem:[#allocation6 + $0x1508] sm:$0xff]
    %v1248 = vld [vmem:[#allocation6 + $0x1510] sm:$0xff]
    %v1249 = vld [vmem:[#allocation6 + $0x1518] sm:$0xff]
    %v1250 = vld [vmem:[#allocation6 + $0x1520] sm:$0xff]
    %v1251 = vld [vmem:[#allocation6 + $0x1528] sm:$0xff]
    %v1252 = vld [vmem:[#allocation6 + $0x1530] sm:$0xff]
    %v1253 = vld [vmem:[#allocation6 + $0x1538] sm:$0xff]
    %v1254 = vld [vmem:[#allocation6 + $0x1540] sm:$0xff]
    %v1255 = vld [vmem:[#allocation6 + $0x1548] sm:$0xff]
    %v1256 = vld [vmem:[#allocation6 + $0x1550] sm:$0xff]
    %v1257 = vld [vmem:[#allocation6 + $0x1558] sm:$0xff]
    %v1258 = vld [vmem:[#allocation6 + $0x1560] sm:$0xff]
    %v1259 = vld [vmem:[#allocation6 + $0x1568] sm:$0xff]
    %v1260 = vld [vmem:[#allocation6 + $0x1570] sm:$0xff]
    %v1261 = vld [vmem:[#allocation6 + $0x1578] sm:$0xff]
    %v1262 = vld [vmem:[#allocation6 + $0x1580] sm:$0xff]
    %v1263 = vld [vmem:[#allocation6 + $0x1588] sm:$0xff]
    %v1264 = vld [vmem:[#allocation6 + $0x1590] sm:$0xff]
    %v1265 = vld [vmem:[#allocation6 + $0x1598] sm:$0xff]
    %v1266 = vld [vmem:[#allocation6 + $0x15a0] sm:$0xff]
    %v1267 = vld [vmem:[#allocation6 + $0x15a8] sm:$0xff]
    %v1268 = vld [vmem:[#allocation6 + $0x15b0] sm:$0xff]
    %v1269 = vld [vmem:[#allocation6 + $0x15b8] sm:$0xff]
    %v1270 = vld [vmem:[#allocation6 + $0x15c0] sm:$0xff]
    %v1271 = vld [vmem:[#allocation6 + $0x15c8] sm:$0xff]
    %v1272 = vld [vmem:[#allocation6 + $0x15d0] sm:$0xff]
    %v1273 = vld [vmem:[#allocation6 + $0x15d8] sm:$0xff]
    %v1274 = vld [vmem:[#allocation6 + $0x15e0] sm:$0xff]
    %v1275 = vld [vmem:[#allocation6 + $0x15e8] sm:$0xff]
    %v1276 = vld [vmem:[#allocation6 + $0x15f0] sm:$0xff]
    %v1277 = vld [vmem:[#allocation6 + $0x15f8] sm:$0xff]
    %v1278 = vld [vmem:[#allocation6 + $0x1600] sm:$0xff]
    %v1279 = vld [vmem:[#allocation6 + $0x1608] sm:$0xff]
    %v1280 = vld [vmem:[#allocation6 + $0x1610] sm:$0xff]
    %v1281 = vld [vmem:[#allocation6 + $0x1618] sm:$0xff]
    %v1282 = vld [vmem:[#allocation6 + $0x1620] sm:$0xff]
    %v1283 = vld [vmem:[#allocation6 + $0x1628] sm:$0xff]
    %v1284 = vld [vmem:[#allocation6 + $0x1630] sm:$0xff]
    %v1285 = vld [vmem:[#allocation6 + $0x1638] sm:$0xff]
    %v1286 = vld [vmem:[#allocation6 + $0x1640] sm:$0xff]
    %v1287 = vld [vmem:[#allocation6 + $0x1648] sm:$0xff]
    %v1288 = vld [vmem:[#allocation6 + $0x1650] sm:$0xff]
    %v1289 = vld [vmem:[#allocation6 + $0x1658] sm:$0xff]
    %v1290 = vld [vmem:[#allocation6 + $0x1660] sm:$0xff]
    %v1291 = vld [vmem:[#allocation6 + $0x1668] sm:$0xff]
    %v1292 = vld [vmem:[#allocation6 + $0x1670] sm:$0xff]
    %v1293 = vld [vmem:[#allocation6 + $0x1678] sm:$0xff]
    %v1294 = vld [vmem:[#allocation6 + $0x1680] sm:$0xff]
    %v1295 = vld [vmem:[#allocation6 + $0x1688] sm:$0xff]
    %v1296 = vld [vmem:[#allocation6 + $0x1690] sm:$0xff]
    %v1297 = vld [vmem:[#allocation6 + $0x1698] sm:$0xff]
    %v1298 = vld [vmem:[#allocation6 + $0x16a0] sm:$0xff]
    %v1299 = vld [vmem:[#allocation6 + $0x16a8] sm:$0xff]
    %v1300 = vld [vmem:[#allocation6 + $0x16b0] sm:$0xff]
    %v1301 = vld [vmem:[#allocation6 + $0x16b8] sm:$0xff]
    %v1302 = vld [vmem:[#allocation6 + $0x16c0] sm:$0xff]
    %v1303 = vld [vmem:[#allocation6 + $0x16c8] sm:$0xff]
    %v1304 = vld [vmem:[#allocation6 + $0x16d0] sm:$0xff]
    %v1305 = vld [vmem:[#allocation6 + $0x16d8] sm:$0xff]
    %v1306 = vld [vmem:[#allocation6 + $0x16e0] sm:$0xff]
    %v1307 = vld [vmem:[#allocation6 + $0x16e8] sm:$0xff]
    %v1308 = vld [vmem:[#allocation6 + $0x16f0] sm:$0xff]
    %v1309 = vld [vmem:[#allocation6 + $0x16f8] sm:$0xff]
    %v1310 = vld [vmem:[#allocation6 + $0x1700] sm:$0xff]
    %v1311 = vld [vmem:[#allocation6 + $0x1708] sm:$0xff]
    %v1312 = vld [vmem:[#allocation6 + $0x1710] sm:$0xff]
    %v1313 = vld [vmem:[#allocation6 + $0x1718] sm:$0xff]
    %v1314 = vld [vmem:[#allocation6 + $0x1720] sm:$0xff]
    %v1315 = vld [vmem:[#allocation6 + $0x1728] sm:$0xff]
    %v1316 = vld [vmem:[#allocation6 + $0x1730] sm:$0xff]
    %v1317 = vld [vmem:[#allocation6 + $0x1738] sm:$0xff]
    %v1318 = vld [vmem:[#allocation6 + $0x1740] sm:$0xff]
    %v1319 = vld [vmem:[#allocation6 + $0x1748] sm:$0xff]
    %v1320 = vld [vmem:[#allocation6 + $0x1750] sm:$0xff]
    %v1321 = vld [vmem:[#allocation6 + $0x1758] sm:$0xff]
    %v1322 = vld [vmem:[#allocation6 + $0x1760] sm:$0xff]
    %v1323 = vld [vmem:[#allocation6 + $0x1768] sm:$0xff]
    %v1324 = vld [vmem:[#allocation6 + $0x1770] sm:$0xff]
    %v1325 = vld [vmem:[#allocation6 + $0x1778] sm:$0xff]
    %v1326 = vld [vmem:[#allocation6 + $0x1780] sm:$0xff]
    %v1327 = vld [vmem:[#allocation6 + $0x1788] sm:$0xff]
    %v1328 = vld [vmem:[#allocation6 + $0x1790] sm:$0xff]
    %v1329 = vld [vmem:[#allocation6 + $0x1798] sm:$0xff]
    %v1330 = vld [vmem:[#allocation6 + $0x17a0] sm:$0xff]
    %v1331 = vld [vmem:[#allocation6 + $0x17a8] sm:$0xff]
    %v1332 = vld [vmem:[#allocation6 + $0x17b0] sm:$0xff]
    %v1333 = vld [vmem:[#allocation6 + $0x17b8] sm:$0xff]
    %v1334 = vld [vmem:[#allocation6 + $0x17c0] sm:$0xff]
    %v1335 = vld [vmem:[#allocation6 + $0x17c8] sm:$0xff]
    %v1336 = vld [vmem:[#allocation6 + $0x17d0] sm:$0xff]
    %v1337 = vld [vmem:[#allocation6 + $0x17d8] sm:$0xff]
    %v1338 = vld [vmem:[#allocation6 + $0x17e0] sm:$0xff]
    %v1339 = vld [vmem:[#allocation6 + $0x17e8] sm:$0xff]
    %v1340 = vld [vmem:[#allocation6 + $0x17f0] sm:$0xff]
    %v1341 = vld [vmem:[#allocation6 + $0x17f8] sm:$0xff]
    %v1342 = vld [vmem:[#allocation6 + $0x1800] sm:$0xff]
    %v1343 = vld [vmem:[#allocation6 + $0x1808] sm:$0xff]
    %v1344 = vld [vmem:[#allocation6 + $0x1810] sm:$0xff]
    %v1345 = vld [vmem:[#allocation6 + $0x1818] sm:$0xff]
    %v1346 = vld [vmem:[#allocation6 + $0x1820] sm:$0xff]
    %v1347 = vld [vmem:[#allocation6 + $0x1828] sm:$0xff]
    %v1348 = vld [vmem:[#allocation6 + $0x1830] sm:$0xff]
    %v1349 = vld [vmem:[#allocation6 + $0x1838] sm:$0xff]
    %v1350 = vld [vmem:[#allocation6 + $0x1840] sm:$0xff]
    %v1351 = vld [vmem:[#allocation6 + $0x1848] sm:$0xff]
    %v1352 = vld [vmem:[#allocation6 + $0x1850] sm:$0xff]
    %v1353 = vld [vmem:[#allocation6 + $0x1858] sm:$0xff]
    %v1354 = vld [vmem:[#allocation6 + $0x1860] sm:$0xff]
    %v1355 = vld [vmem:[#allocation6 + $0x1868] sm:$0xff]
    %v1356 = vld [vmem:[#allocation6 + $0x1870] sm:$0xff]
    %v1357 = vld [vmem:[#allocation6 + $0x1878] sm:$0xff]
    %v1358 = vld [vmem:[#allocation6 + $0x1880] sm:$0xff]
    %v1359 = vld [vmem:[#allocation6 + $0x1888] sm:$0xff]
    %v1360 = vld [vmem:[#allocation6 + $0x1890] sm:$0xff]
    %v1361 = vld [vmem:[#allocation6 + $0x1898] sm:$0xff]
    %v1362 = vld [vmem:[#allocation6 + $0x18a0] sm:$0xff]
    %v1363 = vld [vmem:[#allocation6 + $0x18a8] sm:$0xff]
    %v1364 = vld [vmem:[#allocation6 + $0x18b0] sm:$0xff]
    %v1365 = vld [vmem:[#allocation6 + $0x18b8] sm:$0xff]
    %v1366 = vld [vmem:[#allocation6 + $0x18c0] sm:$0xff]
    %v1367 = vld [vmem:[#allocation6 + $0x18c8] sm:$0xff]
    %v1368 = vld [vmem:[#allocation6 + $0x18d0] sm:$0xff]
    %v1369 = vld [vmem:[#allocation6 + $0x18d8] sm:$0xff]
    %v1370 = vld [vmem:[#allocation6 + $0x18e0] sm:$0xff]
    %v1371 = vld [vmem:[#allocation6 + $0x18e8] sm:$0xff]
    %v1372 = vld [vmem:[#allocation6 + $0x18f0] sm:$0xff]
    %v1373 = vld [vmem:[#allocation6 + $0x18f8] sm:$0xff]
    %v1374 = vld [vmem:[#allocation6 + $0x1900] sm:$0xff]
    %v1375 = vld [vmem:[#allocation6 + $0x1908] sm:$0xff]
    %v1376 = vld [vmem:[#allocation6 + $0x1910] sm:$0xff]
    %v1377 = vld [vmem:[#allocation6 + $0x1918] sm:$0xff]
    %v1378 = vld [vmem:[#allocation6 + $0x1920] sm:$0xff]
    %v1379 = vld [vmem:[#allocation6 + $0x1928] sm:$0xff]
    %v1380 = vld [vmem:[#allocation6 + $0x1930] sm:$0xff]
    %v1381 = vld [vmem:[#allocation6 + $0x1938] sm:$0xff]
    %v1382 = vld [vmem:[#allocation6 + $0x1940] sm:$0xff]
    %v1383 = vld [vmem:[#allocation6 + $0x1948] sm:$0xff]
    %v1384 = vld [vmem:[#allocation6 + $0x1950] sm:$0xff]
    %v1385 = vld [vmem:[#allocation6 + $0x1958] sm:$0xff]
    %v1386 = vld [vmem:[#allocation6 + $0x1960] sm:$0xff]
    %v1387 = vld [vmem:[#allocation6 + $0x1968] sm:$0xff]
    %v1388 = vld [vmem:[#allocation6 + $0x1970] sm:$0xff]
    %v1389 = vld [vmem:[#allocation6 + $0x1978] sm:$0xff]
    %v1390 = vld [vmem:[#allocation6 + $0x1980] sm:$0xff]
    %v1391 = vld [vmem:[#allocation6 + $0x1988] sm:$0xff]
    %v1392 = vld [vmem:[#allocation6 + $0x1990] sm:$0xff]
    %v1393 = vld [vmem:[#allocation6 + $0x1998] sm:$0xff]
    %v1394 = vld [vmem:[#allocation6 + $0x19a0] sm:$0xff]
    %v1395 = vld [vmem:[#allocation6 + $0x19a8] sm:$0xff]
    %v1396 = vld [vmem:[#allocation6 + $0x19b0] sm:$0xff]
    %v1397 = vld [vmem:[#allocation6 + $0x19b8] sm:$0xff]
    %v1398 = vld [vmem:[#allocation6 + $0x19c0] sm:$0xff]
    %v1399 = vld [vmem:[#allocation6 + $0x19c8] sm:$0xff]
    %v1400 = vld [vmem:[#allocation6 + $0x19d0] sm:$0xff]
    %v1401 = vld [vmem:[#allocation6 + $0x19d8] sm:$0xff]
    %v1402 = vld [vmem:[#allocation6 + $0x19e0] sm:$0xff]
    %v1403 = vld [vmem:[#allocation6 + $0x19e8] sm:$0xff]
    %v1404 = vld [vmem:[#allocation6 + $0x19f0] sm:$0xff]
    %v1405 = vld [vmem:[#allocation6 + $0x19f8] sm:$0xff]
    %v1406 = vld [vmem:[#allocation6 + $0x1a00] sm:$0xff]
    %v1407 = vld [vmem:[#allocation6 + $0x1a08] sm:$0xff]
    %v1408 = vld [vmem:[#allocation6 + $0x1a10] sm:$0xff]
    %v1409 = vld [vmem:[#allocation6 + $0x1a18] sm:$0xff]
    %v1410 = vld [vmem:[#allocation6 + $0x1a20] sm:$0xff]
    %v1411 = vld [vmem:[#allocation6 + $0x1a28] sm:$0xff]
    %v1412 = vld [vmem:[#allocation6 + $0x1a30] sm:$0xff]
    %v1413 = vld [vmem:[#allocation6 + $0x1a38] sm:$0xff]
    %v1414 = vld [vmem:[#allocation6 + $0x1a40] sm:$0xff]
    %v1415 = vld [vmem:[#allocation6 + $0x1a48] sm:$0xff]
    %v1416 = vld [vmem:[#allocation6 + $0x1a50] sm:$0xff]
    %v1417 = vld [vmem:[#allocation6 + $0x1a58] sm:$0xff]
    %v1418 = vld [vmem:[#allocation6 + $0x1a60] sm:$0xff]
    %v1419 = vld [vmem:[#allocation6 + $0x1a68] sm:$0xff]
    %v1420 = vld [vmem:[#allocation6 + $0x1a70] sm:$0xff]
    %v1421 = vld [vmem:[#allocation6 + $0x1a78] sm:$0xff]
    %v1422 = vld [vmem:[#allocation6 + $0x1a80] sm:$0xff]
    %v1423 = vld [vmem:[#allocation6 + $0x1a88] sm:$0xff]
    %v1424 = vld [vmem:[#allocation6 + $0x1a90] sm:$0xff]
    %v1425 = vld [vmem:[#allocation6 + $0x1a98] sm:$0xff]
    %v1426 = vld [vmem:[#allocation6 + $0x1aa0] sm:$0xff]
    %v1427 = vld [vmem:[#allocation6 + $0x1aa8] sm:$0xff]
    %v1428 = vld [vmem:[#allocation6 + $0x1ab0] sm:$0xff]
    %v1429 = vld [vmem:[#allocation6 + $0x1ab8] sm:$0xff]
    %v1430 = vld [vmem:[#allocation6 + $0x1ac0] sm:$0xff]
    %v1431 = vld [vmem:[#allocation6 + $0x1ac8] sm:$0xff]
    %v1432 = vld [vmem:[#allocation6 + $0x1ad0] sm:$0xff]
    %v1433 = vld [vmem:[#allocation6 + $0x1ad8] sm:$0xff]
    %v1434 = vld [vmem:[#allocation6 + $0x1ae0] sm:$0xff]
    %v1435 = vld [vmem:[#allocation6 + $0x1ae8] sm:$0xff]
    %v1436 = vld [vmem:[#allocation6 + $0x1af0] sm:$0xff]
    %v1437 = vld [vmem:[#allocation6 + $0x1af8] sm:$0xff]
    %v1438 = vld [vmem:[#allocation6 + $0x1b00] sm:$0xff]
    %v1439 = vld [vmem:[#allocation6 + $0x1b08] sm:$0xff]
    %v1440 = vld [vmem:[#allocation6 + $0x1b10] sm:$0xff]
    %v1441 = vld [vmem:[#allocation6 + $0x1b18] sm:$0xff]
    %v1442 = vld [vmem:[#allocation6 + $0x1b20] sm:$0xff]
    %v1443 = vld [vmem:[#allocation6 + $0x1b28] sm:$0xff]
    %v1444 = vld [vmem:[#allocation6 + $0x1b30] sm:$0xff]
    %v1445 = vld [vmem:[#allocation6 + $0x1b38] sm:$0xff]
    %v1446 = vld [vmem:[#allocation6 + $0x1b40] sm:$0xff]
    %v1447 = vld [vmem:[#allocation6 + $0x1b48] sm:$0xff]
    %v1448 = vld [vmem:[#allocation6 + $0x1b50] sm:$0xff]
    %v1449 = vld [vmem:[#allocation6 + $0x1b58] sm:$0xff]
    %v1450 = vld [vmem:[#allocation6 + $0x1b60] sm:$0xff]
    %v1451 = vld [vmem:[#allocation6 + $0x1b68] sm:$0xff]
    %v1452 = vld [vmem:[#allocation6 + $0x1b70] sm:$0xff]
    %v1453 = vld [vmem:[#allocation6 + $0x1b78] sm:$0xff]
    %v1454 = vld [vmem:[#allocation6 + $0x1b80] sm:$0xff]
    %v1455 = vld [vmem:[#allocation6 + $0x1b88] sm:$0xff]
    %v1456 = vld [vmem:[#allocation6 + $0x1b90] sm:$0xff]
    %v1457 = vld [vmem:[#allocation6 + $0x1b98] sm:$0xff]
    %v1458 = vld [vmem:[#allocation6 + $0x1ba0] sm:$0xff]
    %v1459 = vld [vmem:[#allocation6 + $0x1ba8] sm:$0xff]
    %v1460 = vld [vmem:[#allocation6 + $0x1bb0] sm:$0xff]
    %v1461 = vld [vmem:[#allocation6 + $0x1bb8] sm:$0xff]
    %v1462 = vld [vmem:[#allocation6 + $0x1bc0] sm:$0xff]
    %v1463 = vld [vmem:[#allocation6 + $0x1bc8] sm:$0xff]
    %v1464 = vld [vmem:[#allocation6 + $0x1bd0] sm:$0xff]
    %v1465 = vld [vmem:[#allocation6 + $0x1bd8] sm:$0xff]
    %v1466 = vld [vmem:[#allocation6 + $0x1be0] sm:$0xff]
    %v1467 = vld [vmem:[#allocation6 + $0x1be8] sm:$0xff]
    %v1468 = vld [vmem:[#allocation6 + $0x1bf0] sm:$0xff]
    %v1469 = vld [vmem:[#allocation6 + $0x1bf8] sm:$0xff]
    %v1470 = vld [vmem:[#allocation6 + $0x1c00] sm:$0xff]
    %v1471 = vld [vmem:[#allocation6 + $0x1c08] sm:$0xff]
    %v1472 = vld [vmem:[#allocation6 + $0x1c10] sm:$0xff]
    %v1473 = vld [vmem:[#allocation6 + $0x1c18] sm:$0xff]
    %v1474 = vld [vmem:[#allocation6 + $0x1c20] sm:$0xff]
    %v1475 = vld [vmem:[#allocation6 + $0x1c28] sm:$0xff]
    %v1476 = vld [vmem:[#allocation6 + $0x1c30] sm:$0xff]
    %v1477 = vld [vmem:[#allocation6 + $0x1c38] sm:$0xff]
    %v1478 = vld [vmem:[#allocation6 + $0x1c40] sm:$0xff]
    %v1479 = vld [vmem:[#allocation6 + $0x1c48] sm:$0xff]
    %v1480 = vld [vmem:[#allocation6 + $0x1c50] sm:$0xff]
    %v1481 = vld [vmem:[#allocation6 + $0x1c58] sm:$0xff]
    %v1482 = vld [vmem:[#allocation6 + $0x1c60] sm:$0xff]
    %v1483 = vld [vmem:[#allocation6 + $0x1c68] sm:$0xff]
    %v1484 = vld [vmem:[#allocation6 + $0x1c70] sm:$0xff]
    %v1485 = vld [vmem:[#allocation6 + $0x1c78] sm:$0xff]
    %v1486 = vld [vmem:[#allocation6 + $0x1c80] sm:$0xff]
    %v1487 = vld [vmem:[#allocation6 + $0x1c88] sm:$0xff]
    %v1488 = vld [vmem:[#allocation6 + $0x1c90] sm:$0xff]
    %v1489 = vld [vmem:[#allocation6 + $0x1c98] sm:$0xff]
    %v1490 = vld [vmem:[#allocation6 + $0x1ca0] sm:$0xff]
    %v1491 = vld [vmem:[#allocation6 + $0x1ca8] sm:$0xff]
    %v1492 = vld [vmem:[#allocation6 + $0x1cb0] sm:$0xff]
    %v1493 = vld [vmem:[#allocation6 + $0x1cb8] sm:$0xff]
    %v1494 = vld [vmem:[#allocation6 + $0x1cc0] sm:$0xff]
    %v1495 = vld [vmem:[#allocation6 + $0x1cc8] sm:$0xff]
    %v1496 = vld [vmem:[#allocation6 + $0x1cd0] sm:$0xff]
    %v1497 = vld [vmem:[#allocation6 + $0x1cd8] sm:$0xff]
    %v1498 = vld [vmem:[#allocation6 + $0x1ce0] sm:$0xff]
    %v1499 = vld [vmem:[#allocation6 + $0x1ce8] sm:$0xff]
    %v1500 = vld [vmem:[#allocation6 + $0x1cf0] sm:$0xff]
    %v1501 = vld [vmem:[#allocation6 + $0x1cf8] sm:$0xff]
    %v1502 = vld [vmem:[#allocation6 + $0x1d00] sm:$0xff]
    %v1503 = vld [vmem:[#allocation6 + $0x1d08] sm:$0xff]
    %v1504 = vld [vmem:[#allocation6 + $0x1d10] sm:$0xff]
    %v1505 = vld [vmem:[#allocation6 + $0x1d18] sm:$0xff]
    %v1506 = vld [vmem:[#allocation6 + $0x1d20] sm:$0xff]
    %v1507 = vld [vmem:[#allocation6 + $0x1d28] sm:$0xff]
    %v1508 = vld [vmem:[#allocation6 + $0x1d30] sm:$0xff]
    %v1509 = vld [vmem:[#allocation6 + $0x1d38] sm:$0xff]
    %v1510 = vld [vmem:[#allocation6 + $0x1d40] sm:$0xff]
    %v1511 = vld [vmem:[#allocation6 + $0x1d48] sm:$0xff]
    %v1512 = vld [vmem:[#allocation6 + $0x1d50] sm:$0xff]
    %v1513 = vld [vmem:[#allocation6 + $0x1d58] sm:$0xff]
    %v1514 = vld [vmem:[#allocation6 + $0x1d60] sm:$0xff]
    %v1515 = vld [vmem:[#allocation6 + $0x1d68] sm:$0xff]
    %v1516 = vld [vmem:[#allocation6 + $0x1d70] sm:$0xff]
    %v1517 = vld [vmem:[#allocation6 + $0x1d78] sm:$0xff]
    %v1518 = vld [vmem:[#allocation6 + $0x1d80] sm:$0xff]
    %v1519 = vld [vmem:[#allocation6 + $0x1d88] sm:$0xff]
    %v1520 = vld [vmem:[#allocation6 + $0x1d90] sm:$0xff]
    %v1521 = vld [vmem:[#allocation6 + $0x1d98] sm:$0xff]
    %v1522 = vld [vmem:[#allocation6 + $0x1da0] sm:$0xff]
    %v1523 = vld [vmem:[#allocation6 + $0x1da8] sm:$0xff]
    %v1524 = vld [vmem:[#allocation6 + $0x1db0] sm:$0xff]
    %v1525 = vld [vmem:[#allocation6 + $0x1db8] sm:$0xff]
    %v1526 = vld [vmem:[#allocation6 + $0x1dc0] sm:$0xff]
    %v1527 = vld [vmem:[#allocation6 + $0x1dc8] sm:$0xff]
    %v1528 = vld [vmem:[#allocation6 + $0x1dd0] sm:$0xff]
    %v1529 = vld [vmem:[#allocation6 + $0x1dd8] sm:$0xff]
    %v1530 = vld [vmem:[#allocation6 + $0x1de0] sm:$0xff]
    %v1531 = vld [vmem:[#allocation6 + $0x1de8] sm:$0xff]
    %v1532 = vld [vmem:[#allocation6 + $0x1df0] sm:$0xff]
    %v1533 = vld [vmem:[#allocation6 + $0x1df8] sm:$0xff]
    %v1534 = vld [vmem:[#allocation6 + $0x1e00] sm:$0xff]
    %v1535 = vld [vmem:[#allocation6 + $0x1e08] sm:$0xff]
    %v1536 = vld [vmem:[#allocation6 + $0x1e10] sm:$0xff]
    %v1537 = vld [vmem:[#allocation6 + $0x1e18] sm:$0xff]
    %v1538 = vld [vmem:[#allocation6 + $0x1e20] sm:$0xff]
    %v1539 = vld [vmem:[#allocation6 + $0x1e28] sm:$0xff]
    %v1540 = vld [vmem:[#allocation6 + $0x1e30] sm:$0xff]
    %v1541 = vld [vmem:[#allocation6 + $0x1e38] sm:$0xff]
    %v1542 = vld [vmem:[#allocation6 + $0x1e40] sm:$0xff]
    %v1543 = vld [vmem:[#allocation6 + $0x1e48] sm:$0xff]
    %v1544 = vld [vmem:[#allocation6 + $0x1e50] sm:$0xff]
    %v1545 = vld [vmem:[#allocation6 + $0x1e58] sm:$0xff]
    %v1546 = vld [vmem:[#allocation6 + $0x1e60] sm:$0xff]
    %v1547 = vld [vmem:[#allocation6 + $0x1e68] sm:$0xff]
    %v1548 = vld [vmem:[#allocation6 + $0x1e70] sm:$0xff]
    %v1549 = vld [vmem:[#allocation6 + $0x1e78] sm:$0xff]
    %v1550 = vld [vmem:[#allocation6 + $0x1e80] sm:$0xff]
    %v1551 = vld [vmem:[#allocation6 + $0x1e88] sm:$0xff]
    %v1552 = vld [vmem:[#allocation6 + $0x1e90] sm:$0xff]
    %v1553 = vld [vmem:[#allocation6 + $0x1e98] sm:$0xff]
    %v1554 = vld [vmem:[#allocation6 + $0x1ea0] sm:$0xff]
    %v1555 = vld [vmem:[#allocation6 + $0x1ea8] sm:$0xff]
    %v1556 = vld [vmem:[#allocation6 + $0x1eb0] sm:$0xff]
    %v1557 = vld [vmem:[#allocation6 + $0x1eb8] sm:$0xff]
    %v1558 = vld [vmem:[#allocation6 + $0x1ec0] sm:$0xff]
    %v1559 = vld [vmem:[#allocation6 + $0x1ec8] sm:$0xff]
    %v1560 = vld [vmem:[#allocation6 + $0x1ed0] sm:$0xff]
    %v1561 = vld [vmem:[#allocation6 + $0x1ed8] sm:$0xff]
    %v1562 = vld [vmem:[#allocation6 + $0x1ee0] sm:$0xff]
    %v1563 = vld [vmem:[#allocation6 + $0x1ee8] sm:$0xff]
    %v1564 = vld [vmem:[#allocation6 + $0x1ef0] sm:$0xff]
    %v1565 = vld [vmem:[#allocation6 + $0x1ef8] sm:$0xff]
    %v1566 = vld [vmem:[#allocation6 + $0x1f00] sm:$0xff]
    %v1567 = vld [vmem:[#allocation6 + $0x1f08] sm:$0xff]
    %v1568 = vld [vmem:[#allocation6 + $0x1f10] sm:$0xff]
    %v1569 = vld [vmem:[#allocation6 + $0x1f18] sm:$0xff]
    %v1570 = vld [vmem:[#allocation6 + $0x1f20] sm:$0xff]
    %v1571 = vld [vmem:[#allocation6 + $0x1f28] sm:$0xff]
    %v1572 = vld [vmem:[#allocation6 + $0x1f30] sm:$0xff]
    %v1573 = vld [vmem:[#allocation6 + $0x1f38] sm:$0xff]
    %v1574 = vld [vmem:[#allocation6 + $0x1f40] sm:$0xff]
    %v1575 = vld [vmem:[#allocation6 + $0x1f48] sm:$0xff]
    %v1576 = vld [vmem:[#allocation6 + $0x1f50] sm:$0xff]
    %v1577 = vld [vmem:[#allocation6 + $0x1f58] sm:$0xff]
    %v1578 = vld [vmem:[#allocation6 + $0x1f60] sm:$0xff]
    %v1579 = vld [vmem:[#allocation6 + $0x1f68] sm:$0xff]
    %v1580 = vld [vmem:[#allocation6 + $0x1f70] sm:$0xff]
    %v1581 = vld [vmem:[#allocation6 + $0x1f78] sm:$0xff]
    %v1582 = vld [vmem:[#allocation6 + $0x1f80] sm:$0xff]
    %v1583 = vld [vmem:[#allocation6 + $0x1f88] sm:$0xff]
    %v1584 = vld [vmem:[#allocation6 + $0x1f90] sm:$0xff]
    %v1585 = vld [vmem:[#allocation6 + $0x1f98] sm:$0xff]
    %v1586 = vld [vmem:[#allocation6 + $0x1fa0] sm:$0xff]
    %v1587 = vld [vmem:[#allocation6 + $0x1fa8] sm:$0xff]
    %v1588 = vld [vmem:[#allocation6 + $0x1fb0] sm:$0xff]
    %v1589 = vld [vmem:[#allocation6 + $0x1fb8] sm:$0xff]
    %v1590 = vld [vmem:[#allocation6 + $0x1fc0] sm:$0xff]
    %v1591 = vld [vmem:[#allocation6 + $0x1fc8] sm:$0xff]
    %v1592 = vld [vmem:[#allocation6 + $0x1fd0] sm:$0xff]
    %v1593 = vld [vmem:[#allocation6 + $0x1fd8] sm:$0xff]
    %v1594 = vld [vmem:[#allocation6 + $0x1fe0] sm:$0xff]
    %v1595 = vld [vmem:[#allocation6 + $0x1fe8] sm:$0xff]
    %v1596 = vld [vmem:[#allocation6 + $0x1ff0] sm:$0xff]
    %v1597 = vld [vmem:[#allocation6 + $0x1ff8] sm:$0xff]
    %v1598 = vld [vmem:[#allocation6 + $0x2000] sm:$0xff]
    %v1599 = vld [vmem:[#allocation6 + $0x2008] sm:$0xff]
    %v1600 = vld [vmem:[#allocation6 + $0x2010] sm:$0xff]
    %v1601 = vld [vmem:[#allocation6 + $0x2018] sm:$0xff]
    %v1602 = vld [vmem:[#allocation6 + $0x2020] sm:$0xff]
    %v1603 = vld [vmem:[#allocation6 + $0x2028] sm:$0xff]
    %v1604 = vld [vmem:[#allocation6 + $0x2030] sm:$0xff]
    %v1605 = vld [vmem:[#allocation6 + $0x2038] sm:$0xff]
    %v1606 = vld [vmem:[#allocation6 + $0x2040] sm:$0xff]
    %v1607 = vld [vmem:[#allocation6 + $0x2048] sm:$0xff]
    %v1608 = vld [vmem:[#allocation6 + $0x2050] sm:$0xff]
    %v1609 = vld [vmem:[#allocation6 + $0x2058] sm:$0xff]
    %v1610 = vld [vmem:[#allocation6 + $0x2060] sm:$0xff]
    %v1611 = vld [vmem:[#allocation6 + $0x2068] sm:$0xff]
    %v1612 = vld [vmem:[#allocation6 + $0x2070] sm:$0xff]
    %v1613 = vld [vmem:[#allocation6 + $0x2078] sm:$0xff]
    %v1614 = vld [vmem:[#allocation6 + $0x2080] sm:$0xff]
    %v1615 = vld [vmem:[#allocation6 + $0x2088] sm:$0xff]
    %v1616 = vld [vmem:[#allocation6 + $0x2090] sm:$0xff]
    %v1617 = vld [vmem:[#allocation6 + $0x2098] sm:$0xff]
    %v1618 = vld [vmem:[#allocation6 + $0x20a0] sm:$0xff]
    %v1619 = vld [vmem:[#allocation6 + $0x20a8] sm:$0xff]
    %v1620 = vld [vmem:[#allocation6 + $0x20b0] sm:$0xff]
    %v1621 = vld [vmem:[#allocation6 + $0x20b8] sm:$0xff]
    %v1622 = vld [vmem:[#allocation6 + $0x20c0] sm:$0xff]
    %v1623 = vld [vmem:[#allocation6 + $0x20c8] sm:$0xff]
    %v1624 = vld [vmem:[#allocation6 + $0x20d0] sm:$0xff]
    %v1625 = vld [vmem:[#allocation6 + $0x20d8] sm:$0xff]
    %v1626 = vld [vmem:[#allocation6 + $0x20e0] sm:$0xff]
    %v1627 = vld [vmem:[#allocation6 + $0x20e8] sm:$0xff]
    %v1628 = vld [vmem:[#allocation6 + $0x20f0] sm:$0xff]
    %v1629 = vld [vmem:[#allocation6 + $0x20f8] sm:$0xff]
    %v1630 = vld [vmem:[#allocation6 + $0x2100] sm:$0xff]
    %v1631 = vld [vmem:[#allocation6 + $0x2108] sm:$0xff]
    %v1632 = vld [vmem:[#allocation6 + $0x2110] sm:$0xff]
    %v1633 = vld [vmem:[#allocation6 + $0x2118] sm:$0xff]
    %v1634 = vld [vmem:[#allocation6 + $0x2120] sm:$0xff]
    %v1635 = vld [vmem:[#allocation6 + $0x2128] sm:$0xff]
    %v1636 = vld [vmem:[#allocation6 + $0x2130] sm:$0xff]
    %v1637 = vld [vmem:[#allocation6 + $0x2138] sm:$0xff]
    %v1638 = vld [vmem:[#allocation6 + $0x2140] sm:$0xff]
    %v1639 = vld [vmem:[#allocation6 + $0x2148] sm:$0xff]
    %v1640 = vld [vmem:[#allocation6 + $0x2150] sm:$0xff]
    %v1641 = vld [vmem:[#allocation6 + $0x2158] sm:$0xff]
    %v1642 = vld [vmem:[#allocation6 + $0x2160] sm:$0xff]
    %v1643 = vld [vmem:[#allocation6 + $0x2168] sm:$0xff]
    %v1644 = vld [vmem:[#allocation6 + $0x2170] sm:$0xff]
    %v1645 = vld [vmem:[#allocation6 + $0x2178] sm:$0xff]
    %v1646 = vld [vmem:[#allocation6 + $0x2180] sm:$0xff]
    %v1647 = vld [vmem:[#allocation6 + $0x2188] sm:$0xff]
    %v1648 = vld [vmem:[#allocation6 + $0x2190] sm:$0xff]
    %v1649 = vld [vmem:[#allocation6 + $0x2198] sm:$0xff]
    %v1650 = vld [vmem:[#allocation6 + $0x21a0] sm:$0xff]
    %v1651 = vld [vmem:[#allocation6 + $0x21a8] sm:$0xff]
    %v1652 = vld [vmem:[#allocation6 + $0x21b0] sm:$0xff]
    %v1653 = vld [vmem:[#allocation6 + $0x21b8] sm:$0xff]
    %v1654 = vld [vmem:[#allocation6 + $0x21c0] sm:$0xff]
    %v1655 = vld [vmem:[#allocation6 + $0x21c8] sm:$0xff]
    %v1656 = vld [vmem:[#allocation6 + $0x21d0] sm:$0xff]
    %v1657 = vld [vmem:[#allocation6 + $0x21d8] sm:$0xff]
    %v1658 = vld [vmem:[#allocation6 + $0x21e0] sm:$0xff]
    %v1659 = vld [vmem:[#allocation6 + $0x21e8] sm:$0xff]
    %v1660 = vld [vmem:[#allocation6 + $0x21f0] sm:$0xff]
    %v1661 = vld [vmem:[#allocation6 + $0x21f8] sm:$0xff]
    %v1662 = vld [vmem:[#allocation6 + $0x2200] sm:$0xff]
    %v1663 = vld [vmem:[#allocation6 + $0x2208] sm:$0xff]
    %v1664 = vld [vmem:[#allocation6 + $0x2210] sm:$0xff]
    %v1665 = vld [vmem:[#allocation6 + $0x2218] sm:$0xff]
    %v1666 = vld [vmem:[#allocation6 + $0x2220] sm:$0xff]
    %v1667 = vld [vmem:[#allocation6 + $0x2228] sm:$0xff]
    %v1668 = vld [vmem:[#allocation6 + $0x2230] sm:$0xff]
    %v1669 = vld [vmem:[#allocation6 + $0x2238] sm:$0xff]
    %v1670 = vld [vmem:[#allocation6 + $0x2240] sm:$0xff]
    %v1671 = vld [vmem:[#allocation6 + $0x2248] sm:$0xff]
    %v1672 = vld [vmem:[#allocation6 + $0x2250] sm:$0xff]
    %v1673 = vld [vmem:[#allocation6 + $0x2258] sm:$0xff]
    %v1674 = vld [vmem:[#allocation6 + $0x2260] sm:$0xff]
    %v1675 = vld [vmem:[#allocation6 + $0x2268] sm:$0xff]
    %v1676 = vld [vmem:[#allocation6 + $0x2270] sm:$0xff]
    %v1677 = vld [vmem:[#allocation6 + $0x2278] sm:$0xff]
    %v1678 = vld [vmem:[#allocation6 + $0x2280] sm:$0xff]
    %v1679 = vld [vmem:[#allocation6 + $0x2288] sm:$0xff]
    %v1680 = vld [vmem:[#allocation6 + $0x2290] sm:$0xff]
    %v1681 = vld [vmem:[#allocation6 + $0x2298] sm:$0xff]
    %v1682 = vld [vmem:[#allocation6 + $0x22a0] sm:$0xff]
    %v1683 = vld [vmem:[#allocation6 + $0x22a8] sm:$0xff]
    %v1684 = vld [vmem:[#allocation6 + $0x22b0] sm:$0xff]
    %v1685 = vld [vmem:[#allocation6 + $0x22b8] sm:$0xff]
    %v1686 = vld [vmem:[#allocation6 + $0x22c0] sm:$0xff]
    %v1687 = vld [vmem:[#allocation6 + $0x22c8] sm:$0xff]
    %v1688 = vld [vmem:[#allocation6 + $0x22d0] sm:$0xff]
    %v1689 = vld [vmem:[#allocation6 + $0x22d8] sm:$0xff]
    %v1690 = vld [vmem:[#allocation6 + $0x22e0] sm:$0xff]
    %v1691 = vld [vmem:[#allocation6 + $0x22e8] sm:$0xff]
    %v1692 = vld [vmem:[#allocation6 + $0x22f0] sm:$0xff]
    %v1693 = vld [vmem:[#allocation6 + $0x22f8] sm:$0xff]
    %v1694 = vld [vmem:[#allocation6 + $0x2300] sm:$0xff]
    %v1695 = vld [vmem:[#allocation6 + $0x2308] sm:$0xff]
    %v1696 = vld [vmem:[#allocation6 + $0x2310] sm:$0xff]
    %v1697 = vld [vmem:[#allocation6 + $0x2318] sm:$0xff]
    %v1698 = vld [vmem:[#allocation6 + $0x2320] sm:$0xff]
    %v1699 = vld [vmem:[#allocation6 + $0x2328] sm:$0xff]
    %v1700 = vld [vmem:[#allocation6 + $0x2330] sm:$0xff]
    %v1701 = vld [vmem:[#allocation6 + $0x2338] sm:$0xff]
    %v1702 = vld [vmem:[#allocation6 + $0x2340] sm:$0xff]
    %v1703 = vld [vmem:[#allocation6 + $0x2348] sm:$0xff]
    %v1704 = vld [vmem:[#allocation6 + $0x2350] sm:$0xff]
    %v1705 = vld [vmem:[#allocation6 + $0x2358] sm:$0xff]
    %v1706 = vld [vmem:[#allocation6 + $0x2360] sm:$0xff]
    %v1707 = vld [vmem:[#allocation6 + $0x2368] sm:$0xff]
    %v1708 = vld [vmem:[#allocation6 + $0x2370] sm:$0xff]
    %v1709 = vld [vmem:[#allocation6 + $0x2378] sm:$0xff]
    %v1710 = vld [vmem:[#allocation6 + $0x2380] sm:$0xff]
    %v1711 = vld [vmem:[#allocation6 + $0x2388] sm:$0xff]
    %v1712 = vld [vmem:[#allocation6 + $0x2390] sm:$0xff]
    %v1713 = vld [vmem:[#allocation6 + $0x2398] sm:$0xff]
    %v1714 = vld [vmem:[#allocation6 + $0x23a0] sm:$0xff]
    %v1715 = vld [vmem:[#allocation6 + $0x23a8] sm:$0xff]
    %v1716 = vld [vmem:[#allocation6 + $0x23b0] sm:$0xff]
    %v1717 = vld [vmem:[#allocation6 + $0x23b8] sm:$0xff]
    %v1718 = vld [vmem:[#allocation6 + $0x23c0] sm:$0xff]
    %v1719 = vld [vmem:[#allocation6 + $0x23c8] sm:$0xff]
    %v1720 = vld [vmem:[#allocation6 + $0x23d0] sm:$0xff]
    %v1721 = vld [vmem:[#allocation6 + $0x23d8] sm:$0xff]
    %v1722 = vld [vmem:[#allocation6 + $0x23e0] sm:$0xff]
    %v1723 = vld [vmem:[#allocation6 + $0x23e8] sm:$0xff]
    %v1724 = vld [vmem:[#allocation6 + $0x23f0] sm:$0xff]
    %v1725 = vld [vmem:[#allocation6 + $0x23f8] sm:$0xff]
    %v1726 = vld [vmem:[#allocation6 + $0x2400] sm:$0xff]
    %v1727 = vld [vmem:[#allocation6 + $0x2408] sm:$0xff]
    %v1728 = vld [vmem:[#allocation6 + $0x2410] sm:$0xff]
    %v1729 = vld [vmem:[#allocation6 + $0x2418] sm:$0xff]
    %v1730 = vld [vmem:[#allocation6 + $0x2420] sm:$0xff]
    %v1731 = vld [vmem:[#allocation6 + $0x2428] sm:$0xff]
    %v1732 = vld [vmem:[#allocation6 + $0x2430] sm:$0xff]
    %v1733 = vld [vmem:[#allocation6 + $0x2438] sm:$0xff]
    %v1734 = vld [vmem:[#allocation6 + $0x2440] sm:$0xff]
    %v1735 = vld [vmem:[#allocation6 + $0x2448] sm:$0xff]
    %v1736 = vld [vmem:[#allocation6 + $0x2450] sm:$0xff]
    %v1737 = vld [vmem:[#allocation6 + $0x2458] sm:$0xff]
    %v1738 = vld [vmem:[#allocation6 + $0x2460] sm:$0xff]
    %v1739 = vld [vmem:[#allocation6 + $0x2468] sm:$0xff]
    %v1740 = vld [vmem:[#allocation6 + $0x2470] sm:$0xff]
    %v1741 = vld [vmem:[#allocation6 + $0x2478] sm:$0xff]
    %v1742 = vld [vmem:[#allocation6 + $0x2480] sm:$0xff]
    %v1743 = vld [vmem:[#allocation6 + $0x2488] sm:$0xff]
    %v1744 = vld [vmem:[#allocation6 + $0x2490] sm:$0xff]
    %v1745 = vld [vmem:[#allocation6 + $0x2498] sm:$0xff]
    %v1746 = vld [vmem:[#allocation6 + $0x24a0] sm:$0xff]
    %v1747 = vld [vmem:[#allocation6 + $0x24a8] sm:$0xff]
    %v1748 = vld [vmem:[#allocation6 + $0x24b0] sm:$0xff]
    %v1749 = vld [vmem:[#allocation6 + $0x24b8] sm:$0xff]
    %v1750 = vld [vmem:[#allocation6 + $0x24c0] sm:$0xff]
    %v1751 = vld [vmem:[#allocation6 + $0x24c8] sm:$0xff]
    %v1752 = vld [vmem:[#allocation6 + $0x24d0] sm:$0xff]
    %v1753 = vld [vmem:[#allocation6 + $0x24d8] sm:$0xff]
    %v1754 = vld [vmem:[#allocation6 + $0x24e0] sm:$0xff]
    %v1755 = vld [vmem:[#allocation6 + $0x24e8] sm:$0xff]
    %v1756 = vld [vmem:[#allocation6 + $0x24f0] sm:$0xff]
    %v1757 = vld [vmem:[#allocation6 + $0x24f8] sm:$0xff]
    %v1758 = vld [vmem:[#allocation6 + $0x2500] sm:$0xff]
    %v1759 = vld [vmem:[#allocation6 + $0x2508] sm:$0xff]
    %v1760 = vld [vmem:[#allocation6 + $0x2510] sm:$0xff]
    %v1761 = vld [vmem:[#allocation6 + $0x2518] sm:$0xff]
    %v1762 = vld [vmem:[#allocation6 + $0x2520] sm:$0xff]
    %v1763 = vld [vmem:[#allocation6 + $0x2528] sm:$0xff]
    %v1764 = vld [vmem:[#allocation6 + $0x2530] sm:$0xff]
    %v1765 = vld [vmem:[#allocation6 + $0x2538] sm:$0xff]
    %v1766 = vld [vmem:[#allocation6 + $0x2540] sm:$0xff]
    %v1767 = vld [vmem:[#allocation6 + $0x2548] sm:$0xff]
    %v1768 = vld [vmem:[#allocation6 + $0x2550] sm:$0xff]
    %v1769 = vld [vmem:[#allocation6 + $0x2558] sm:$0xff]
    %v1770 = vld [vmem:[#allocation6 + $0x2560] sm:$0xff]
    %v1771 = vld [vmem:[#allocation6 + $0x2568] sm:$0xff]
    %v1772 = vld [vmem:[#allocation6 + $0x2570] sm:$0xff]
    %v1773 = vld [vmem:[#allocation6 + $0x2578] sm:$0xff]
    %v1774 = vld [vmem:[#allocation6 + $0x2580] sm:$0xff]
    %v1775 = vld [vmem:[#allocation6 + $0x2588] sm:$0xff]
    %v1776 = vld [vmem:[#allocation6 + $0x2590] sm:$0xff]
    %v1777 = vld [vmem:[#allocation6 + $0x2598] sm:$0xff]
    %v1778 = vld [vmem:[#allocation6 + $0x25a0] sm:$0xff]
    %v1779 = vld [vmem:[#allocation6 + $0x25a8] sm:$0xff]
    %v1780 = vld [vmem:[#allocation6 + $0x25b0] sm:$0xff]
    %v1781 = vld [vmem:[#allocation6 + $0x25b8] sm:$0xff]
    %v1782 = vld [vmem:[#allocation6 + $0x25c0] sm:$0xff]
    %v1783 = vld [vmem:[#allocation6 + $0x25c8] sm:$0xff]
    %v1784 = vld [vmem:[#allocation6 + $0x25d0] sm:$0xff]
    %v1785 = vld [vmem:[#allocation6 + $0x25d8] sm:$0xff]
    %v1786 = vld [vmem:[#allocation6 + $0x25e0] sm:$0xff]
    %v1787 = vld [vmem:[#allocation6 + $0x25e8] sm:$0xff]
    %v1788 = vld [vmem:[#allocation6 + $0x25f0] sm:$0xff]
    %v1789 = vld [vmem:[#allocation6 + $0x25f8] sm:$0xff]
    %v1790 = vld [vmem:[#allocation6 + $0x2600] sm:$0xff]
    %v1791 = vld [vmem:[#allocation6 + $0x2608] sm:$0xff]
    %v1792 = vld [vmem:[#allocation6 + $0x2610] sm:$0xff]
    %v1793 = vld [vmem:[#allocation6 + $0x2618] sm:$0xff]
    %v1794 = vld [vmem:[#allocation6 + $0x2620] sm:$0xff]
    %v1795 = vld [vmem:[#allocation6 + $0x2628] sm:$0xff]
    %v1796 = vld [vmem:[#allocation6 + $0x2630] sm:$0xff]
    %v1797 = vld [vmem:[#allocation6 + $0x2638] sm:$0xff]
    %v1798 = vld [vmem:[#allocation6 + $0x2640] sm:$0xff]
    %v1799 = vld [vmem:[#allocation6 + $0x2648] sm:$0xff]
    %v1800 = vld [vmem:[#allocation6 + $0x2650] sm:$0xff]
    %v1801 = vld [vmem:[#allocation6 + $0x2658] sm:$0xff]
    %v1802 = vld [vmem:[#allocation6 + $0x2660] sm:$0xff]
    %v1803 = vld [vmem:[#allocation6 + $0x2668] sm:$0xff]
    %v1804 = vld [vmem:[#allocation6 + $0x2670] sm:$0xff]
    %v1805 = vld [vmem:[#allocation6 + $0x2678] sm:$0xff]
    %v1806 = vld [vmem:[#allocation6 + $0x2680] sm:$0xff]
    %v1807 = vld [vmem:[#allocation6 + $0x2688] sm:$0xff]
    %v1808 = vld [vmem:[#allocation6 + $0x2690] sm:$0xff]
    %v1809 = vld [vmem:[#allocation6 + $0x2698] sm:$0xff]
    %v1810 = vld [vmem:[#allocation6 + $0x26a0] sm:$0xff]
    %v1811 = vld [vmem:[#allocation6 + $0x26a8] sm:$0xff]
    %v1812 = vld [vmem:[#allocation6 + $0x26b0] sm:$0xff]
    %v1813 = vld [vmem:[#allocation6 + $0x26b8] sm:$0xff]
    %v1814 = vld [vmem:[#allocation6 + $0x26c0] sm:$0xff]
    %v1815 = vld [vmem:[#allocation6 + $0x26c8] sm:$0xff]
    %v1816 = vld [vmem:[#allocation6 + $0x26d0] sm:$0xff]
    %v1817 = vld [vmem:[#allocation6 + $0x26d8] sm:$0xff]
    %v1818 = vld [vmem:[#allocation6 + $0x26e0] sm:$0xff]
    %v1819 = vld [vmem:[#allocation6 + $0x26e8] sm:$0xff]
    %v1820 = vld [vmem:[#allocation6 + $0x26f0] sm:$0xff]
    %v1821 = vld [vmem:[#allocation6 + $0x26f8] sm:$0xff]
    %v1822 = vld [vmem:[#allocation6 + $0x2700] sm:$0xff]
    %v1823 = vld [vmem:[#allocation6 + $0x2708] sm:$0xff]
    %v1824 = vld [vmem:[#allocation6 + $0x2710] sm:$0xff]
    %v1825 = vld [vmem:[#allocation6 + $0x2718] sm:$0xff]
    %v1826 = vld [vmem:[#allocation6 + $0x2720] sm:$0xff]
    %v1827 = vld [vmem:[#allocation6 + $0x2728] sm:$0xff]
    %v1828 = vld [vmem:[#allocation6 + $0x2730] sm:$0xff]
    %v1829 = vld [vmem:[#allocation6 + $0x2738] sm:$0xff]
    %v1830 = vld [vmem:[#allocation6 + $0x2740] sm:$0xff]
    %v1831 = vld [vmem:[#allocation6 + $0x2748] sm:$0xff]
    %v1832 = vld [vmem:[#allocation6 + $0x2750] sm:$0xff]
    %v1833 = vld [vmem:[#allocation6 + $0x2758] sm:$0xff]
    %v1834 = vld [vmem:[#allocation6 + $0x2760] sm:$0xff]
    %v1835 = vld [vmem:[#allocation6 + $0x2768] sm:$0xff]
    %v1836 = vld [vmem:[#allocation6 + $0x2770] sm:$0xff]
    %v1837 = vld [vmem:[#allocation6 + $0x2778] sm:$0xff]
    %v1838 = vld [vmem:[#allocation6 + $0x2780] sm:$0xff]
    %v1839 = vld [vmem:[#allocation6 + $0x2788] sm:$0xff]
    %v1840 = vld [vmem:[#allocation6 + $0x2790] sm:$0xff]
    %v1841 = vld [vmem:[#allocation6 + $0x2798] sm:$0xff]
    %v1842 = vld [vmem:[#allocation6 + $0x27a0] sm:$0xff]
    %v1843 = vld [vmem:[#allocation6 + $0x27a8] sm:$0xff]
    %v1844 = vld [vmem:[#allocation6 + $0x27b0] sm:$0xff]
    %v1845 = vld [vmem:[#allocation6 + $0x27b8] sm:$0xff]
    %v1846 = vld [vmem:[#allocation6 + $0x27c0] sm:$0xff]
    %v1847 = vld [vmem:[#allocation6 + $0x27c8] sm:$0xff]
    %v1848 = vld [vmem:[#allocation6 + $0x27d0] sm:$0xff]
    %v1849 = vld [vmem:[#allocation6 + $0x27d8] sm:$0xff]
    %v1850 = vld [vmem:[#allocation6 + $0x27e0] sm:$0xff]
    %v1851 = vld [vmem:[#allocation6 + $0x27e8] sm:$0xff]
    %v1852 = vld [vmem:[#allocation6 + $0x27f0] sm:$0xff]
    %v1853 = vld [vmem:[#allocation6 + $0x27f8] sm:$0xff]
    %v1854 = vld [vmem:[#allocation7] sm:$0xff]
    %v1855 = vld [vmem:[#allocation7 + $0x8] sm:$0xff]
    %v1858 = vperm.slane %v1854, 0
    %v1859 = vperm.slane %v1854, 1
    %v1860 = vperm.slane %v1854, 2
    %v1861 = vperm.slane %v1854, 3
    %v1862 = vperm.slane %v1854, 4
    %v1863 = vperm.slane %v1854, 5
    %v1864 = vperm.slane %v1854, 6
    %v1865 = vperm.slane %v1854, 7
    %v1866 = vperm.slane %v1855, 0
    %v1867 = vperm.slane %v1855, 1
    %v1868 = vperm.slane %v1855, 2
    %v1869 = vperm.slane %v1855, 3
    %v1870 = vperm.slane %v1855, 4
    %v1871 = vperm.slane %v1855, 5
    %v1872 = vperm.slane %v1855, 6
    %v1873 = vperm.slane %v1855, 7
    %v3170 = vunpack.c.l.b16 %v574
    %v3171 = vunpack.c.h.b16 %v574
    %v3172 = vunpack.c.l.b16 %v575
    %v3173 = vunpack.c.h.b16 %v575
    %v3174 = vunpack.c.l.b16 %v576
    %v3175 = vunpack.c.h.b16 %v576
    %v3176 = vunpack.c.l.b16 %v577
    %v3177 = vunpack.c.h.b16 %v577
    %v3178 = vunpack.c.l.b16 %v578
    %v3179 = vunpack.c.h.b16 %v578
    %v3180 = vunpack.c.l.b16 %v579
    %v3181 = vunpack.c.h.b16 %v579
    %v3182 = vunpack.c.l.b16 %v580
    %v3183 = vunpack.c.h.b16 %v580
    %v3184 = vunpack.c.l.b16 %v581
    %v3185 = vunpack.c.h.b16 %v581
    %v3186 = vunpack.c.l.b16 %v582
    %v3187 = vunpack.c.h.b16 %v582
    %v3188 = vunpack.c.l.b16 %v583
    %v3189 = vunpack.c.h.b16 %v583
    %v3190 = vunpack.c.l.b16 %v584
    %v3191 = vunpack.c.h.b16 %v584
    %v3192 = vunpack.c.l.b16 %v585
    %v3193 = vunpack.c.h.b16 %v585
    %v3194 = vunpack.c.l.b16 %v586
    %v3195 = vunpack.c.h.b16 %v586
    %v3196 = vunpack.c.l.b16 %v587
    %v3197 = vunpack.c.h.b16 %v587
    %v3198 = vunpack.c.l.b16 %v588
    %v3199 = vunpack.c.h.b16 %v588
    %v3200 = vunpack.c.l.b16 %v589
    %v3201 = vunpack.c.h.b16 %v589
    %v3202 = vunpack.c.l.b16 %v590
    %v3203 = vunpack.c.h.b16 %v590
    %v3204 = vunpack.c.l.b16 %v591
    %v3205 = vunpack.c.h.b16 %v591
    %v3206 = vunpack.c.l.b16 %v592
    %v3207 = vunpack.c.h.b16 %v592
    %v3208 = vunpack.c.l.b16 %v593
    %v3209 = vunpack.c.h.b16 %v593
    %v3210 = vunpack.c.l.b16 %v594
    %v3211 = vunpack.c.h.b16 %v594
    %v3212 = vunpack.c.l.b16 %v595
    %v3213 = vunpack.c.h.b16 %v595
    %v3214 = vunpack.c.l.b16 %v596
    %v3215 = vunpack.c.h.b16 %v596
    %v3216 = vunpack.c.l.b16 %v597
    %v3217 = vunpack.c.h.b16 %v597
    %v3218 = vunpack.c.l.b16 %v598
    %v3219 = vunpack.c.h.b16 %v598
    %v3220 = vunpack.c.l.b16 %v599
    %v3221 = vunpack.c.h.b16 %v599
    %v3222 = vunpack.c.l.b16 %v600
    %v3223 = vunpack.c.h.b16 %v600
    %v3224 = vunpack.c.l.b16 %v601
    %v3225 = vunpack.c.h.b16 %v601
    %v3226 = vunpack.c.l.b16 %v602
    %v3227 = vunpack.c.h.b16 %v602
    %v3228 = vunpack.c.l.b16 %v603
    %v3229 = vunpack.c.h.b16 %v603
    %v3230 = vunpack.c.l.b16 %v604
    %v3231 = vunpack.c.h.b16 %v604
    %v3232 = vunpack.c.l.b16 %v605
    %v3233 = vunpack.c.h.b16 %v605
    %v3234 = vunpack.c.l.b16 %v606
    %v3235 = vunpack.c.h.b16 %v606
    %v3236 = vunpack.c.l.b16 %v607
    %v3237 = vunpack.c.h.b16 %v607
    %v3238 = vunpack.c.l.b16 %v608
    %v3239 = vunpack.c.h.b16 %v608
    %v3240 = vunpack.c.l.b16 %v609
    %v3241 = vunpack.c.h.b16 %v609
    %v3242 = vunpack.c.l.b16 %v610
    %v3243 = vunpack.c.h.b16 %v610
    %v3244 = vunpack.c.l.b16 %v611
    %v3245 = vunpack.c.h.b16 %v611
    %v3246 = vunpack.c.l.b16 %v612
    %v3247 = vunpack.c.h.b16 %v612
    %v3248 = vunpack.c.l.b16 %v613
    %v3249 = vunpack.c.h.b16 %v613
    %v3250 = vunpack.c.l.b16 %v614
    %v3251 = vunpack.c.h.b16 %v614
    %v3252 = vunpack.c.l.b16 %v615
    %v3253 = vunpack.c.h.b16 %v615
    %v3254 = vunpack.c.l.b16 %v616
    %v3255 = vunpack.c.h.b16 %v616
    %v3256 = vunpack.c.l.b16 %v617
    %v3257 = vunpack.c.h.b16 %v617
    %v3258 = vunpack.c.l.b16 %v618
    %v3259 = vunpack.c.h.b16 %v618
    %v3260 = vunpack.c.l.b16 %v619
    %v3261 = vunpack.c.h.b16 %v619
    %v3262 = vunpack.c.l.b16 %v620
    %v3263 = vunpack.c.h.b16 %v620
    %v3264 = vunpack.c.l.b16 %v621
    %v3265 = vunpack.c.h.b16 %v621
    %v3266 = vunpack.c.l.b16 %v622
    %v3267 = vunpack.c.h.b16 %v622
    %v3268 = vunpack.c.l.b16 %v623
    %v3269 = vunpack.c.h.b16 %v623
    %v3270 = vunpack.c.l.b16 %v624
    %v3271 = vunpack.c.h.b16 %v624
    %v3272 = vunpack.c.l.b16 %v625
    %v3273 = vunpack.c.h.b16 %v625
    %v3274 = vunpack.c.l.b16 %v626
    %v3275 = vunpack.c.h.b16 %v626
    %v3276 = vunpack.c.l.b16 %v627
    %v3277 = vunpack.c.h.b16 %v627
    %v3278 = vunpack.c.l.b16 %v628
    %v3279 = vunpack.c.h.b16 %v628
    %v3280 = vunpack.c.l.b16 %v629
    %v3281 = vunpack.c.h.b16 %v629
    %v3282 = vunpack.c.l.b16 %v630
    %v3283 = vunpack.c.h.b16 %v630
    %v3284 = vunpack.c.l.b16 %v631
    %v3285 = vunpack.c.h.b16 %v631
    %v3286 = vunpack.c.l.b16 %v632
    %v3287 = vunpack.c.h.b16 %v632
    %v3288 = vunpack.c.l.b16 %v633
    %v3289 = vunpack.c.h.b16 %v633
    %v3290 = vunpack.c.l.b16 %v634
    %v3291 = vunpack.c.h.b16 %v634
    %v3292 = vunpack.c.l.b16 %v635
    %v3293 = vunpack.c.h.b16 %v635
    %v3294 = vunpack.c.l.b16 %v636
    %v3295 = vunpack.c.h.b16 %v636
    %v3296 = vunpack.c.l.b16 %v637
    %v3297 = vunpack.c.h.b16 %v637
    %v3298 = vunpack.c.l.b16 %v638
    %v3299 = vunpack.c.h.b16 %v638
    %v3300 = vunpack.c.l.b16 %v639
    %v3301 = vunpack.c.h.b16 %v639
    %v3302 = vunpack.c.l.b16 %v640
    %v3303 = vunpack.c.h.b16 %v640
    %v3304 = vunpack.c.l.b16 %v641
    %v3305 = vunpack.c.h.b16 %v641
    %v3306 = vunpack.c.l.b16 %v642
    %v3307 = vunpack.c.h.b16 %v642
    %v3308 = vunpack.c.l.b16 %v643
    %v3309 = vunpack.c.h.b16 %v643
    %v3310 = vunpack.c.l.b16 %v644
    %v3311 = vunpack.c.h.b16 %v644
    %v3312 = vunpack.c.l.b16 %v645
    %v3313 = vunpack.c.h.b16 %v645
    %v3314 = vunpack.c.l.b16 %v646
    %v3315 = vunpack.c.h.b16 %v646
    %v3316 = vunpack.c.l.b16 %v647
    %v3317 = vunpack.c.h.b16 %v647
    %v3318 = vunpack.c.l.b16 %v648
    %v3319 = vunpack.c.h.b16 %v648
    %v3320 = vunpack.c.l.b16 %v649
    %v3321 = vunpack.c.h.b16 %v649
    %v3322 = vunpack.c.l.b16 %v650
    %v3323 = vunpack.c.h.b16 %v650
    %v3324 = vunpack.c.l.b16 %v651
    %v3325 = vunpack.c.h.b16 %v651
    %v3326 = vunpack.c.l.b16 %v652
    %v3327 = vunpack.c.h.b16 %v652
    %v3328 = vunpack.c.l.b16 %v653
    %v3329 = vunpack.c.h.b16 %v653
    %v3330 = vunpack.c.l.b16 %v654
    %v3331 = vunpack.c.h.b16 %v654
    %v3332 = vunpack.c.l.b16 %v655
    %v3333 = vunpack.c.h.b16 %v655
    %v3334 = vunpack.c.l.b16 %v656
    %v3335 = vunpack.c.h.b16 %v656
    %v3336 = vunpack.c.l.b16 %v657
    %v3337 = vunpack.c.h.b16 %v657
    %v3338 = vunpack.c.l.b16 %v658
    %v3339 = vunpack.c.h.b16 %v658
    %v3340 = vunpack.c.l.b16 %v659
    %v3341 = vunpack.c.h.b16 %v659
    %v3342 = vunpack.c.l.b16 %v660
    %v3343 = vunpack.c.h.b16 %v660
    %v3344 = vunpack.c.l.b16 %v661
    %v3345 = vunpack.c.h.b16 %v661
    %v3346 = vunpack.c.l.b16 %v662
    %v3347 = vunpack.c.h.b16 %v662
    %v3348 = vunpack.c.l.b16 %v663
    %v3349 = vunpack.c.h.b16 %v663
    %v3350 = vunpack.c.l.b16 %v664
    %v3351 = vunpack.c.h.b16 %v664
    %v3352 = vunpack.c.l.b16 %v665
    %v3353 = vunpack.c.h.b16 %v665
    %v3354 = vunpack.c.l.b16 %v666
    %v3355 = vunpack.c.h.b16 %v666
    %v3356 = vunpack.c.l.b16 %v667
    %v3357 = vunpack.c.h.b16 %v667
    %v3358 = vunpack.c.l.b16 %v668
    %v3359 = vunpack.c.h.b16 %v668
    %v3360 = vunpack.c.l.b16 %v669
    %v3361 = vunpack.c.h.b16 %v669
    %v3362 = vunpack.c.l.b16 %v670
    %v3363 = vunpack.c.h.b16 %v670
    %v3364 = vunpack.c.l.b16 %v671
    %v3365 = vunpack.c.h.b16 %v671
    %v3366 = vunpack.c.l.b16 %v672
    %v3367 = vunpack.c.h.b16 %v672
    %v3368 = vunpack.c.l.b16 %v673
    %v3369 = vunpack.c.h.b16 %v673
    %v3370 = vunpack.c.l.b16 %v674
    %v3371 = vunpack.c.h.b16 %v674
    %v3372 = vunpack.c.l.b16 %v675
    %v3373 = vunpack.c.h.b16 %v675
    %v3374 = vunpack.c.l.b16 %v676
    %v3375 = vunpack.c.h.b16 %v676
    %v3376 = vunpack.c.l.b16 %v677
    %v3377 = vunpack.c.h.b16 %v677
    %v3378 = vunpack.c.l.b16 %v678
    %v3379 = vunpack.c.h.b16 %v678
    %v3380 = vunpack.c.l.b16 %v679
    %v3381 = vunpack.c.h.b16 %v679
    %v3382 = vunpack.c.l.b16 %v680
    %v3383 = vunpack.c.h.b16 %v680
    %v3384 = vunpack.c.l.b16 %v681
    %v3385 = vunpack.c.h.b16 %v681
    %v3386 = vunpack.c.l.b16 %v682
    %v3387 = vunpack.c.h.b16 %v682
    %v3388 = vunpack.c.l.b16 %v683
    %v3389 = vunpack.c.h.b16 %v683
    %v3390 = vunpack.c.l.b16 %v684
    %v3391 = vunpack.c.h.b16 %v684
    %v3392 = vunpack.c.l.b16 %v685
    %v3393 = vunpack.c.h.b16 %v685
    %v3394 = vunpack.c.l.b16 %v686
    %v3395 = vunpack.c.h.b16 %v686
    %v3396 = vunpack.c.l.b16 %v687
    %v3397 = vunpack.c.h.b16 %v687
    %v3398 = vunpack.c.l.b16 %v688
    %v3399 = vunpack.c.h.b16 %v688
    %v3400 = vunpack.c.l.b16 %v689
    %v3401 = vunpack.c.h.b16 %v689
    %v3402 = vunpack.c.l.b16 %v690
    %v3403 = vunpack.c.h.b16 %v690
    %v3404 = vunpack.c.l.b16 %v691
    %v3405 = vunpack.c.h.b16 %v691
    %v3406 = vunpack.c.l.b16 %v692
    %v3407 = vunpack.c.h.b16 %v692
    %v3408 = vunpack.c.l.b16 %v693
    %v3409 = vunpack.c.h.b16 %v693
    %v3410 = vunpack.c.l.b16 %v694
    %v3411 = vunpack.c.h.b16 %v694
    %v3412 = vunpack.c.l.b16 %v695
    %v3413 = vunpack.c.h.b16 %v695
    %v3414 = vunpack.c.l.b16 %v696
    %v3415 = vunpack.c.h.b16 %v696
    %v3416 = vunpack.c.l.b16 %v697
    %v3417 = vunpack.c.h.b16 %v697
    %v3418 = vunpack.c.l.b16 %v698
    %v3419 = vunpack.c.h.b16 %v698
    %v3420 = vunpack.c.l.b16 %v699
    %v3421 = vunpack.c.h.b16 %v699
    %v3422 = vunpack.c.l.b16 %v700
    %v3423 = vunpack.c.h.b16 %v700
    %v3424 = vunpack.c.l.b16 %v701
    %v3425 = vunpack.c.h.b16 %v701
    %v3426 = vunpack.c.l.b16 %v702
    %v3427 = vunpack.c.h.b16 %v702
    %v3428 = vunpack.c.l.b16 %v703
    %v3429 = vunpack.c.h.b16 %v703
    %v3430 = vunpack.c.l.b16 %v704
    %v3431 = vunpack.c.h.b16 %v704
    %v3432 = vunpack.c.l.b16 %v705
    %v3433 = vunpack.c.h.b16 %v705
    %v3434 = vunpack.c.l.b16 %v706
    %v3435 = vunpack.c.h.b16 %v706
    %v3436 = vunpack.c.l.b16 %v707
    %v3437 = vunpack.c.h.b16 %v707
    %v3438 = vunpack.c.l.b16 %v708
    %v3439 = vunpack.c.h.b16 %v708
    %v3440 = vunpack.c.l.b16 %v709
    %v3441 = vunpack.c.h.b16 %v709
    %v3442 = vunpack.c.l.b16 %v710
    %v3443 = vunpack.c.h.b16 %v710
    %v3444 = vunpack.c.l.b16 %v711
    %v3445 = vunpack.c.h.b16 %v711
    %v3446 = vunpack.c.l.b16 %v712
    %v3447 = vunpack.c.h.b16 %v712
    %v3448 = vunpack.c.l.b16 %v713
    %v3449 = vunpack.c.h.b16 %v713
    %v3450 = vunpack.c.l.b16 %v714
    %v3451 = vunpack.c.h.b16 %v714
    %v3452 = vunpack.c.l.b16 %v715
    %v3453 = vunpack.c.h.b16 %v715
    %v3454 = vunpack.c.l.b16 %v716
    %v3455 = vunpack.c.h.b16 %v716
    %v3456 = vunpack.c.l.b16 %v717
    %v3457 = vunpack.c.h.b16 %v717
    %v3458 = vunpack.c.l.b16 %v718
    %v3459 = vunpack.c.h.b16 %v718
    %v3460 = vunpack.c.l.b16 %v719
    %v3461 = vunpack.c.h.b16 %v719
    %v3462 = vunpack.c.l.b16 %v720
    %v3463 = vunpack.c.h.b16 %v720
    %v3464 = vunpack.c.l.b16 %v721
    %v3465 = vunpack.c.h.b16 %v721
    %v3466 = vunpack.c.l.b16 %v722
    %v3467 = vunpack.c.h.b16 %v722
    %v3468 = vunpack.c.l.b16 %v723
    %v3469 = vunpack.c.h.b16 %v723
    %v3470 = vunpack.c.l.b16 %v724
    %v3471 = vunpack.c.h.b16 %v724
    %v3472 = vunpack.c.l.b16 %v725
    %v3473 = vunpack.c.h.b16 %v725
    %v3474 = vunpack.c.l.b16 %v726
    %v3475 = vunpack.c.h.b16 %v726
    %v3476 = vunpack.c.l.b16 %v727
    %v3477 = vunpack.c.h.b16 %v727
    %v3478 = vunpack.c.l.b16 %v728
    %v3479 = vunpack.c.h.b16 %v728
    %v3480 = vunpack.c.l.b16 %v729
    %v3481 = vunpack.c.h.b16 %v729
    %v3482 = vunpack.c.l.b16 %v730
    %v3483 = vunpack.c.h.b16 %v730
    %v3484 = vunpack.c.l.b16 %v731
    %v3485 = vunpack.c.h.b16 %v731
    %v3486 = vunpack.c.l.b16 %v732
    %v3487 = vunpack.c.h.b16 %v732
    %v3488 = vunpack.c.l.b16 %v733
    %v3489 = vunpack.c.h.b16 %v733
    %v3490 = vunpack.c.l.b16 %v734
    %v3491 = vunpack.c.h.b16 %v734
    %v3492 = vunpack.c.l.b16 %v735
    %v3493 = vunpack.c.h.b16 %v735
    %v3494 = vunpack.c.l.b16 %v736
    %v3495 = vunpack.c.h.b16 %v736
    %v3496 = vunpack.c.l.b16 %v737
    %v3497 = vunpack.c.h.b16 %v737
    %v3498 = vunpack.c.l.b16 %v738
    %v3499 = vunpack.c.h.b16 %v738
    %v3500 = vunpack.c.l.b16 %v739
    %v3501 = vunpack.c.h.b16 %v739
    %v3502 = vunpack.c.l.b16 %v740
    %v3503 = vunpack.c.h.b16 %v740
    %v3504 = vunpack.c.l.b16 %v741
    %v3505 = vunpack.c.h.b16 %v741
    %v3506 = vunpack.c.l.b16 %v742
    %v3507 = vunpack.c.h.b16 %v742
    %v3508 = vunpack.c.l.b16 %v743
    %v3509 = vunpack.c.h.b16 %v743
    %v3510 = vunpack.c.l.b16 %v744
    %v3511 = vunpack.c.h.b16 %v744
    %v3512 = vunpack.c.l.b16 %v745
    %v3513 = vunpack.c.h.b16 %v745
    %v3514 = vunpack.c.l.b16 %v746
    %v3515 = vunpack.c.h.b16 %v746
    %v3516 = vunpack.c.l.b16 %v747
    %v3517 = vunpack.c.h.b16 %v747
    %v3518 = vunpack.c.l.b16 %v748
    %v3519 = vunpack.c.h.b16 %v748
    %v3520 = vunpack.c.l.b16 %v749
    %v3521 = vunpack.c.h.b16 %v749
    %v3522 = vunpack.c.l.b16 %v750
    %v3523 = vunpack.c.h.b16 %v750
    %v3524 = vunpack.c.l.b16 %v751
    %v3525 = vunpack.c.h.b16 %v751
    %v3526 = vunpack.c.l.b16 %v752
    %v3527 = vunpack.c.h.b16 %v752
    %v3528 = vunpack.c.l.b16 %v753
    %v3529 = vunpack.c.h.b16 %v753
    %v3530 = vunpack.c.l.b16 %v754
    %v3531 = vunpack.c.h.b16 %v754
    %v3532 = vunpack.c.l.b16 %v755
    %v3533 = vunpack.c.h.b16 %v755
    %v3534 = vunpack.c.l.b16 %v756
    %v3535 = vunpack.c.h.b16 %v756
    %v3536 = vunpack.c.l.b16 %v757
    %v3537 = vunpack.c.h.b16 %v757
    %v3538 = vunpack.c.l.b16 %v758
    %v3539 = vunpack.c.h.b16 %v758
    %v3540 = vunpack.c.l.b16 %v759
    %v3541 = vunpack.c.h.b16 %v759
    %v3542 = vunpack.c.l.b16 %v760
    %v3543 = vunpack.c.h.b16 %v760
    %v3544 = vunpack.c.l.b16 %v761
    %v3545 = vunpack.c.h.b16 %v761
    %v3546 = vunpack.c.l.b16 %v762
    %v3547 = vunpack.c.h.b16 %v762
    %v3548 = vunpack.c.l.b16 %v763
    %v3549 = vunpack.c.h.b16 %v763
    %v3550 = vunpack.c.l.b16 %v764
    %v3551 = vunpack.c.h.b16 %v764
    %v3552 = vunpack.c.l.b16 %v765
    %v3553 = vunpack.c.h.b16 %v765
    %v3554 = vunpack.c.l.b16 %v766
    %v3555 = vunpack.c.h.b16 %v766
    %v3556 = vunpack.c.l.b16 %v767
    %v3557 = vunpack.c.h.b16 %v767
    %v3558 = vunpack.c.l.b16 %v768
    %v3559 = vunpack.c.h.b16 %v768
    %v3560 = vunpack.c.l.b16 %v769
    %v3561 = vunpack.c.h.b16 %v769
    %v3562 = vunpack.c.l.b16 %v770
    %v3563 = vunpack.c.h.b16 %v770
    %v3564 = vunpack.c.l.b16 %v771
    %v3565 = vunpack.c.h.b16 %v771
    %v3566 = vunpack.c.l.b16 %v772
    %v3567 = vunpack.c.h.b16 %v772
    %v3568 = vunpack.c.l.b16 %v773
    %v3569 = vunpack.c.h.b16 %v773
    %v3570 = vunpack.c.l.b16 %v774
    %v3571 = vunpack.c.h.b16 %v774
    %v3572 = vunpack.c.l.b16 %v775
    %v3573 = vunpack.c.h.b16 %v775
    %v3574 = vunpack.c.l.b16 %v776
    %v3575 = vunpack.c.h.b16 %v776
    %v3576 = vunpack.c.l.b16 %v777
    %v3577 = vunpack.c.h.b16 %v777
    %v3578 = vunpack.c.l.b16 %v778
    %v3579 = vunpack.c.h.b16 %v778
    %v3580 = vunpack.c.l.b16 %v779
    %v3581 = vunpack.c.h.b16 %v779
    %v3582 = vunpack.c.l.b16 %v780
    %v3583 = vunpack.c.h.b16 %v780
    %v3584 = vunpack.c.l.b16 %v781
    %v3585 = vunpack.c.h.b16 %v781
    %v3586 = vunpack.c.l.b16 %v782
    %v3587 = vunpack.c.h.b16 %v782
    %v3588 = vunpack.c.l.b16 %v783
    %v3589 = vunpack.c.h.b16 %v783
    %v3590 = vunpack.c.l.b16 %v784
    %v3591 = vunpack.c.h.b16 %v784
    %v3592 = vunpack.c.l.b16 %v785
    %v3593 = vunpack.c.h.b16 %v785
    %v3594 = vunpack.c.l.b16 %v786
    %v3595 = vunpack.c.h.b16 %v786
    %v3596 = vunpack.c.l.b16 %v787
    %v3597 = vunpack.c.h.b16 %v787
    %v3598 = vunpack.c.l.b16 %v788
    %v3599 = vunpack.c.h.b16 %v788
    %v3600 = vunpack.c.l.b16 %v789
    %v3601 = vunpack.c.h.b16 %v789
    %v3602 = vunpack.c.l.b16 %v790
    %v3603 = vunpack.c.h.b16 %v790
    %v3604 = vunpack.c.l.b16 %v791
    %v3605 = vunpack.c.h.b16 %v791
    %v3606 = vunpack.c.l.b16 %v792
    %v3607 = vunpack.c.h.b16 %v792
    %v3608 = vunpack.c.l.b16 %v793
    %v3609 = vunpack.c.h.b16 %v793
    %v3610 = vunpack.c.l.b16 %v794
    %v3611 = vunpack.c.h.b16 %v794
    %v3612 = vunpack.c.l.b16 %v795
    %v3613 = vunpack.c.h.b16 %v795
    %v3614 = vunpack.c.l.b16 %v796
    %v3615 = vunpack.c.h.b16 %v796
    %v3616 = vunpack.c.l.b16 %v797
    %v3617 = vunpack.c.h.b16 %v797
    %v3618 = vunpack.c.l.b16 %v798
    %v3619 = vunpack.c.h.b16 %v798
    %v3620 = vunpack.c.l.b16 %v799
    %v3621 = vunpack.c.h.b16 %v799
    %v3622 = vunpack.c.l.b16 %v800
    %v3623 = vunpack.c.h.b16 %v800
    %v3624 = vunpack.c.l.b16 %v801
    %v3625 = vunpack.c.h.b16 %v801
    %v3626 = vunpack.c.l.b16 %v802
    %v3627 = vunpack.c.h.b16 %v802
    %v3628 = vunpack.c.l.b16 %v803
    %v3629 = vunpack.c.h.b16 %v803
    %v3630 = vunpack.c.l.b16 %v804
    %v3631 = vunpack.c.h.b16 %v804
    %v3632 = vunpack.c.l.b16 %v805
    %v3633 = vunpack.c.h.b16 %v805
    %v3634 = vunpack.c.l.b16 %v806
    %v3635 = vunpack.c.h.b16 %v806
    %v3636 = vunpack.c.l.b16 %v807
    %v3637 = vunpack.c.h.b16 %v807
    %v3638 = vunpack.c.l.b16 %v808
    %v3639 = vunpack.c.h.b16 %v808
    %v3640 = vunpack.c.l.b16 %v809
    %v3641 = vunpack.c.h.b16 %v809
    %v3642 = vunpack.c.l.b16 %v810
    %v3643 = vunpack.c.h.b16 %v810
    %v3644 = vunpack.c.l.b16 %v811
    %v3645 = vunpack.c.h.b16 %v811
    %v3646 = vunpack.c.l.b16 %v812
    %v3647 = vunpack.c.h.b16 %v812
    %v3648 = vunpack.c.l.b16 %v813
    %v3649 = vunpack.c.h.b16 %v813
    %v3650 = vunpack.c.l.b16 %v814
    %v3651 = vunpack.c.h.b16 %v814
    %v3652 = vunpack.c.l.b16 %v815
    %v3653 = vunpack.c.h.b16 %v815
    %v3654 = vunpack.c.l.b16 %v816
    %v3655 = vunpack.c.h.b16 %v816
    %v3656 = vunpack.c.l.b16 %v817
    %v3657 = vunpack.c.h.b16 %v817
    %v3658 = vunpack.c.l.b16 %v818
    %v3659 = vunpack.c.h.b16 %v818
    %v3660 = vunpack.c.l.b16 %v819
    %v3661 = vunpack.c.h.b16 %v819
    %v3662 = vunpack.c.l.b16 %v820
    %v3663 = vunpack.c.h.b16 %v820
    %v3664 = vunpack.c.l.b16 %v821
    %v3665 = vunpack.c.h.b16 %v821
    %v3666 = vunpack.c.l.b16 %v822
    %v3667 = vunpack.c.h.b16 %v822
    %v3668 = vunpack.c.l.b16 %v823
    %v3669 = vunpack.c.h.b16 %v823
    %v3670 = vunpack.c.l.b16 %v824
    %v3671 = vunpack.c.h.b16 %v824
    %v3672 = vunpack.c.l.b16 %v825
    %v3673 = vunpack.c.h.b16 %v825
    %v3674 = vunpack.c.l.b16 %v826
    %v3675 = vunpack.c.h.b16 %v826
    %v3676 = vunpack.c.l.b16 %v827
    %v3677 = vunpack.c.h.b16 %v827
    %v3678 = vunpack.c.l.b16 %v828
    %v3679 = vunpack.c.h.b16 %v828
    %v3680 = vunpack.c.l.b16 %v829
    %v3681 = vunpack.c.h.b16 %v829
    %v3682 = vunpack.c.l.b16 %v830
    %v3683 = vunpack.c.h.b16 %v830
    %v3684 = vunpack.c.l.b16 %v831
    %v3685 = vunpack.c.h.b16 %v831
    %v3686 = vunpack.c.l.b16 %v832
    %v3687 = vunpack.c.h.b16 %v832
    %v3688 = vunpack.c.l.b16 %v833
    %v3689 = vunpack.c.h.b16 %v833
    %v3690 = vunpack.c.l.b16 %v834
    %v3691 = vunpack.c.h.b16 %v834
    %v3692 = vunpack.c.l.b16 %v835
    %v3693 = vunpack.c.h.b16 %v835
    %v3694 = vunpack.c.l.b16 %v836
    %v3695 = vunpack.c.h.b16 %v836
    %v3696 = vunpack.c.l.b16 %v837
    %v3697 = vunpack.c.h.b16 %v837
    %v3698 = vunpack.c.l.b16 %v838
    %v3699 = vunpack.c.h.b16 %v838
    %v3700 = vunpack.c.l.b16 %v839
    %v3701 = vunpack.c.h.b16 %v839
    %v3702 = vunpack.c.l.b16 %v840
    %v3703 = vunpack.c.h.b16 %v840
    %v3704 = vunpack.c.l.b16 %v841
    %v3705 = vunpack.c.h.b16 %v841
    %v3706 = vunpack.c.l.b16 %v842
    %v3707 = vunpack.c.h.b16 %v842
    %v3708 = vunpack.c.l.b16 %v843
    %v3709 = vunpack.c.h.b16 %v843
    %v3710 = vunpack.c.l.b16 %v844
    %v3711 = vunpack.c.h.b16 %v844
    %v3712 = vunpack.c.l.b16 %v845
    %v3713 = vunpack.c.h.b16 %v845
    %v3714 = vunpack.c.l.b16 %v846
    %v3715 = vunpack.c.h.b16 %v846
    %v3716 = vunpack.c.l.b16 %v847
    %v3717 = vunpack.c.h.b16 %v847
    %v3718 = vunpack.c.l.b16 %v848
    %v3719 = vunpack.c.h.b16 %v848
    %v3720 = vunpack.c.l.b16 %v849
    %v3721 = vunpack.c.h.b16 %v849
    %v3722 = vunpack.c.l.b16 %v850
    %v3723 = vunpack.c.h.b16 %v850
    %v3724 = vunpack.c.l.b16 %v851
    %v3725 = vunpack.c.h.b16 %v851
    %v3726 = vunpack.c.l.b16 %v852
    %v3727 = vunpack.c.h.b16 %v852
    %v3728 = vunpack.c.l.b16 %v853
    %v3729 = vunpack.c.h.b16 %v853
    %v3730 = vunpack.c.l.b16 %v854
    %v3731 = vunpack.c.h.b16 %v854
    %v3732 = vunpack.c.l.b16 %v855
    %v3733 = vunpack.c.h.b16 %v855
    %v3734 = vunpack.c.l.b16 %v856
    %v3735 = vunpack.c.h.b16 %v856
    %v3736 = vunpack.c.l.b16 %v857
    %v3737 = vunpack.c.h.b16 %v857
    %v3738 = vunpack.c.l.b16 %v858
    %v3739 = vunpack.c.h.b16 %v858
    %v3740 = vunpack.c.l.b16 %v859
    %v3741 = vunpack.c.h.b16 %v859
    %v3742 = vunpack.c.l.b16 %v860
    %v3743 = vunpack.c.h.b16 %v860
    %v3744 = vunpack.c.l.b16 %v861
    %v3745 = vunpack.c.h.b16 %v861
    %v3746 = vunpack.c.l.b16 %v862
    %v3747 = vunpack.c.h.b16 %v862
    %v3748 = vunpack.c.l.b16 %v863
    %v3749 = vunpack.c.h.b16 %v863
    %v3750 = vunpack.c.l.b16 %v864
    %v3751 = vunpack.c.h.b16 %v864
    %v3752 = vunpack.c.l.b16 %v865
    %v3753 = vunpack.c.h.b16 %v865
    %v3754 = vunpack.c.l.b16 %v866
    %v3755 = vunpack.c.h.b16 %v866
    %v3756 = vunpack.c.l.b16 %v867
    %v3757 = vunpack.c.h.b16 %v867
    %v3758 = vunpack.c.l.b16 %v868
    %v3759 = vunpack.c.h.b16 %v868
    %v3760 = vunpack.c.l.b16 %v869
    %v3761 = vunpack.c.h.b16 %v869
    %v3762 = vunpack.c.l.b16 %v870
    %v3763 = vunpack.c.h.b16 %v870
    %v3764 = vunpack.c.l.b16 %v871
    %v3765 = vunpack.c.h.b16 %v871
    %v3766 = vunpack.c.l.b16 %v872
    %v3767 = vunpack.c.h.b16 %v872
    %v3768 = vunpack.c.l.b16 %v873
    %v3769 = vunpack.c.h.b16 %v873
    %v3770 = vunpack.c.l.b16 %v874
    %v3771 = vunpack.c.h.b16 %v874
    %v3772 = vunpack.c.l.b16 %v875
    %v3773 = vunpack.c.h.b16 %v875
    %v3774 = vunpack.c.l.b16 %v876
    %v3775 = vunpack.c.h.b16 %v876
    %v3776 = vunpack.c.l.b16 %v877
    %v3777 = vunpack.c.h.b16 %v877
    %v3778 = vunpack.c.l.b16 %v878
    %v3779 = vunpack.c.h.b16 %v878
    %v3780 = vunpack.c.l.b16 %v879
    %v3781 = vunpack.c.h.b16 %v879
    %v3782 = vunpack.c.l.b16 %v880
    %v3783 = vunpack.c.h.b16 %v880
    %v3784 = vunpack.c.l.b16 %v881
    %v3785 = vunpack.c.h.b16 %v881
    %v3786 = vunpack.c.l.b16 %v882
    %v3787 = vunpack.c.h.b16 %v882
    %v3788 = vunpack.c.l.b16 %v883
    %v3789 = vunpack.c.h.b16 %v883
    %v3790 = vunpack.c.l.b16 %v884
    %v3791 = vunpack.c.h.b16 %v884
    %v3792 = vunpack.c.l.b16 %v885
    %v3793 = vunpack.c.h.b16 %v885
    %v3794 = vunpack.c.l.b16 %v886
    %v3795 = vunpack.c.h.b16 %v886
    %v3796 = vunpack.c.l.b16 %v887
    %v3797 = vunpack.c.h.b16 %v887
    %v3798 = vunpack.c.l.b16 %v888
    %v3799 = vunpack.c.h.b16 %v888
    %v3800 = vunpack.c.l.b16 %v889
    %v3801 = vunpack.c.h.b16 %v889
    %v3802 = vunpack.c.l.b16 %v890
    %v3803 = vunpack.c.h.b16 %v890
    %v3804 = vunpack.c.l.b16 %v891
    %v3805 = vunpack.c.h.b16 %v891
    %v3806 = vunpack.c.l.b16 %v892
    %v3807 = vunpack.c.h.b16 %v892
    %v3808 = vunpack.c.l.b16 %v893
    %v3809 = vunpack.c.h.b16 %v893
    %v3810 = vunpack.c.l.b16 %v894
    %v3811 = vunpack.c.h.b16 %v894
    %v3812 = vunpack.c.l.b16 %v895
    %v3813 = vunpack.c.h.b16 %v895
    %v3814 = vunpack.c.l.b16 %v896
    %v3815 = vunpack.c.h.b16 %v896
    %v3816 = vunpack.c.l.b16 %v897
    %v3817 = vunpack.c.h.b16 %v897
    %v3818 = vunpack.c.l.b16 %v898
    %v3819 = vunpack.c.h.b16 %v898
    %v3820 = vunpack.c.l.b16 %v899
    %v3821 = vunpack.c.h.b16 %v899
    %v3822 = vunpack.c.l.b16 %v900
    %v3823 = vunpack.c.h.b16 %v900
    %v3824 = vunpack.c.l.b16 %v901
    %v3825 = vunpack.c.h.b16 %v901
    %v3826 = vunpack.c.l.b16 %v902
    %v3827 = vunpack.c.h.b16 %v902
    %v3828 = vunpack.c.l.b16 %v903
    %v3829 = vunpack.c.h.b16 %v903
    %v3830 = vunpack.c.l.b16 %v904
    %v3831 = vunpack.c.h.b16 %v904
    %v3832 = vunpack.c.l.b16 %v905
    %v3833 = vunpack.c.h.b16 %v905
    %v3834 = vunpack.c.l.b16 %v906
    %v3835 = vunpack.c.h.b16 %v906
    %v3836 = vunpack.c.l.b16 %v907
    %v3837 = vunpack.c.h.b16 %v907
    %v3838 = vunpack.c.l.b16 %v908
    %v3839 = vunpack.c.h.b16 %v908
    %v3840 = vunpack.c.l.b16 %v909
    %v3841 = vunpack.c.h.b16 %v909
    %v3842 = vunpack.c.l.b16 %v910
    %v3843 = vunpack.c.h.b16 %v910
    %v3844 = vunpack.c.l.b16 %v911
    %v3845 = vunpack.c.h.b16 %v911
    %v3846 = vunpack.c.l.b16 %v912
    %v3847 = vunpack.c.h.b16 %v912
    %v3848 = vunpack.c.l.b16 %v913
    %v3849 = vunpack.c.h.b16 %v913
    %v3850 = vunpack.c.l.b16 %v914
    %v3851 = vunpack.c.h.b16 %v914
    %v3852 = vunpack.c.l.b16 %v915
    %v3853 = vunpack.c.h.b16 %v915
    %v3854 = vunpack.c.l.b16 %v916
    %v3855 = vunpack.c.h.b16 %v916
    %v3856 = vunpack.c.l.b16 %v917
    %v3857 = vunpack.c.h.b16 %v917
    %v3858 = vunpack.c.l.b16 %v918
    %v3859 = vunpack.c.h.b16 %v918
    %v3860 = vunpack.c.l.b16 %v919
    %v3861 = vunpack.c.h.b16 %v919
    %v3862 = vunpack.c.l.b16 %v920
    %v3863 = vunpack.c.h.b16 %v920
    %v3864 = vunpack.c.l.b16 %v921
    %v3865 = vunpack.c.h.b16 %v921
    %v3866 = vunpack.c.l.b16 %v922
    %v3867 = vunpack.c.h.b16 %v922
    %v3868 = vunpack.c.l.b16 %v923
    %v3869 = vunpack.c.h.b16 %v923
    %v3870 = vunpack.c.l.b16 %v924
    %v3871 = vunpack.c.h.b16 %v924
    %v3872 = vunpack.c.l.b16 %v925
    %v3873 = vunpack.c.h.b16 %v925
    %v3874 = vunpack.c.l.b16 %v926
    %v3875 = vunpack.c.h.b16 %v926
    %v3876 = vunpack.c.l.b16 %v927
    %v3877 = vunpack.c.h.b16 %v927
    %v3878 = vunpack.c.l.b16 %v928
    %v3879 = vunpack.c.h.b16 %v928
    %v3880 = vunpack.c.l.b16 %v929
    %v3881 = vunpack.c.h.b16 %v929
    %v3882 = vunpack.c.l.b16 %v930
    %v3883 = vunpack.c.h.b16 %v930
    %v3884 = vunpack.c.l.b16 %v931
    %v3885 = vunpack.c.h.b16 %v931
    %v3886 = vunpack.c.l.b16 %v932
    %v3887 = vunpack.c.h.b16 %v932
    %v3888 = vunpack.c.l.b16 %v933
    %v3889 = vunpack.c.h.b16 %v933
    %v3890 = vunpack.c.l.b16 %v934
    %v3891 = vunpack.c.h.b16 %v934
    %v3892 = vunpack.c.l.b16 %v935
    %v3893 = vunpack.c.h.b16 %v935
    %v3894 = vunpack.c.l.b16 %v936
    %v3895 = vunpack.c.h.b16 %v936
    %v3896 = vunpack.c.l.b16 %v937
    %v3897 = vunpack.c.h.b16 %v937
    %v3898 = vunpack.c.l.b16 %v938
    %v3899 = vunpack.c.h.b16 %v938
    %v3900 = vunpack.c.l.b16 %v939
    %v3901 = vunpack.c.h.b16 %v939
    %v3902 = vunpack.c.l.b16 %v940
    %v3903 = vunpack.c.h.b16 %v940
    %v3904 = vunpack.c.l.b16 %v941
    %v3905 = vunpack.c.h.b16 %v941
    %v3906 = vunpack.c.l.b16 %v942
    %v3907 = vunpack.c.h.b16 %v942
    %v3908 = vunpack.c.l.b16 %v943
    %v3909 = vunpack.c.h.b16 %v943
    %v3910 = vunpack.c.l.b16 %v944
    %v3911 = vunpack.c.h.b16 %v944
    %v3912 = vunpack.c.l.b16 %v945
    %v3913 = vunpack.c.h.b16 %v945
    %v3914 = vunpack.c.l.b16 %v946
    %v3915 = vunpack.c.h.b16 %v946
    %v3916 = vunpack.c.l.b16 %v947
    %v3917 = vunpack.c.h.b16 %v947
    %v3918 = vunpack.c.l.b16 %v948
    %v3919 = vunpack.c.h.b16 %v948
    %v3920 = vunpack.c.l.b16 %v949
    %v3921 = vunpack.c.h.b16 %v949
    %v3922 = vunpack.c.l.b16 %v950
    %v3923 = vunpack.c.h.b16 %v950
    %v3924 = vunpack.c.l.b16 %v951
    %v3925 = vunpack.c.h.b16 %v951
    %v3926 = vunpack.c.l.b16 %v952
    %v3927 = vunpack.c.h.b16 %v952
    %v3928 = vunpack.c.l.b16 %v953
    %v3929 = vunpack.c.h.b16 %v953
    %v3930 = vunpack.c.l.b16 %v954
    %v3931 = vunpack.c.h.b16 %v954
    %v3932 = vunpack.c.l.b16 %v955
    %v3933 = vunpack.c.h.b16 %v955
    %v3934 = vunpack.c.l.b16 %v956
    %v3935 = vunpack.c.h.b16 %v956
    %v3936 = vunpack.c.l.b16 %v957
    %v3937 = vunpack.c.h.b16 %v957
    %v3938 = vunpack.c.l.b16 %v958
    %v3939 = vunpack.c.h.b16 %v958
    %v3940 = vunpack.c.l.b16 %v959
    %v3941 = vunpack.c.h.b16 %v959
    %v3942 = vunpack.c.l.b16 %v960
    %v3943 = vunpack.c.h.b16 %v960
    %v3944 = vunpack.c.l.b16 %v961
    %v3945 = vunpack.c.h.b16 %v961
    %v3946 = vunpack.c.l.b16 %v962
    %v3947 = vunpack.c.h.b16 %v962
    %v3948 = vunpack.c.l.b16 %v963
    %v3949 = vunpack.c.h.b16 %v963
    %v3950 = vunpack.c.l.b16 %v964
    %v3951 = vunpack.c.h.b16 %v964
    %v3952 = vunpack.c.l.b16 %v965
    %v3953 = vunpack.c.h.b16 %v965
    %v3954 = vunpack.c.l.b16 %v966
    %v3955 = vunpack.c.h.b16 %v966
    %v3956 = vunpack.c.l.b16 %v967
    %v3957 = vunpack.c.h.b16 %v967
    %v3958 = vunpack.c.l.b16 %v968
    %v3959 = vunpack.c.h.b16 %v968
    %v3960 = vunpack.c.l.b16 %v969
    %v3961 = vunpack.c.h.b16 %v969
    %v3962 = vunpack.c.l.b16 %v970
    %v3963 = vunpack.c.h.b16 %v970
    %v3964 = vunpack.c.l.b16 %v971
    %v3965 = vunpack.c.h.b16 %v971
    %v3966 = vunpack.c.l.b16 %v972
    %v3967 = vunpack.c.h.b16 %v972
    %v3968 = vunpack.c.l.b16 %v973
    %v3969 = vunpack.c.h.b16 %v973
    %v3970 = vunpack.c.l.b16 %v974
    %v3971 = vunpack.c.h.b16 %v974
    %v3972 = vunpack.c.l.b16 %v975
    %v3973 = vunpack.c.h.b16 %v975
    %v3974 = vunpack.c.l.b16 %v976
    %v3975 = vunpack.c.h.b16 %v976
    %v3976 = vunpack.c.l.b16 %v977
    %v3977 = vunpack.c.h.b16 %v977
    %v3978 = vunpack.c.l.b16 %v978
    %v3979 = vunpack.c.h.b16 %v978
    %v3980 = vunpack.c.l.b16 %v979
    %v3981 = vunpack.c.h.b16 %v979
    %v3982 = vunpack.c.l.b16 %v980
    %v3983 = vunpack.c.h.b16 %v980
    %v3984 = vunpack.c.l.b16 %v981
    %v3985 = vunpack.c.h.b16 %v981
    %v3986 = vunpack.c.l.b16 %v982
    %v3987 = vunpack.c.h.b16 %v982
    %v3988 = vunpack.c.l.b16 %v983
    %v3989 = vunpack.c.h.b16 %v983
    %v3990 = vunpack.c.l.b16 %v984
    %v3991 = vunpack.c.h.b16 %v984
    %v3992 = vunpack.c.l.b16 %v985
    %v3993 = vunpack.c.h.b16 %v985
    %v3994 = vunpack.c.l.b16 %v986
    %v3995 = vunpack.c.h.b16 %v986
    %v3996 = vunpack.c.l.b16 %v987
    %v3997 = vunpack.c.h.b16 %v987
    %v3998 = vunpack.c.l.b16 %v988
    %v3999 = vunpack.c.h.b16 %v988
    %v4000 = vunpack.c.l.b16 %v989
    %v4001 = vunpack.c.h.b16 %v989
    %v4002 = vunpack.c.l.b16 %v990
    %v4003 = vunpack.c.h.b16 %v990
    %v4004 = vunpack.c.l.b16 %v991
    %v4005 = vunpack.c.h.b16 %v991
    %v4006 = vunpack.c.l.b16 %v992
    %v4007 = vunpack.c.h.b16 %v992
    %v4008 = vunpack.c.l.b16 %v993
    %v4009 = vunpack.c.h.b16 %v993
    %v4010 = vunpack.c.l.b16 %v994
    %v4011 = vunpack.c.h.b16 %v994
    %v4012 = vunpack.c.l.b16 %v995
    %v4013 = vunpack.c.h.b16 %v995
    %v4014 = vunpack.c.l.b16 %v996
    %v4015 = vunpack.c.h.b16 %v996
    %v4016 = vunpack.c.l.b16 %v997
    %v4017 = vunpack.c.h.b16 %v997
    %v4018 = vunpack.c.l.b16 %v998
    %v4019 = vunpack.c.h.b16 %v998
    %v4020 = vunpack.c.l.b16 %v999
    %v4021 = vunpack.c.h.b16 %v999
    %v4022 = vunpack.c.l.b16 %v1000
    %v4023 = vunpack.c.h.b16 %v1000
    %v4024 = vunpack.c.l.b16 %v1001
    %v4025 = vunpack.c.h.b16 %v1001
    %v4026 = vunpack.c.l.b16 %v1002
    %v4027 = vunpack.c.h.b16 %v1002
    %v4028 = vunpack.c.l.b16 %v1003
    %v4029 = vunpack.c.h.b16 %v1003
    %v4030 = vunpack.c.l.b16 %v1004
    %v4031 = vunpack.c.h.b16 %v1004
    %v4032 = vunpack.c.l.b16 %v1005
    %v4033 = vunpack.c.h.b16 %v1005
    %v4034 = vunpack.c.l.b16 %v1006
    %v4035 = vunpack.c.h.b16 %v1006
    %v4036 = vunpack.c.l.b16 %v1007
    %v4037 = vunpack.c.h.b16 %v1007
    %v4038 = vunpack.c.l.b16 %v1008
    %v4039 = vunpack.c.h.b16 %v1008
    %v4040 = vunpack.c.l.b16 %v1009
    %v4041 = vunpack.c.h.b16 %v1009
    %v4042 = vunpack.c.l.b16 %v1010
    %v4043 = vunpack.c.h.b16 %v1010
    %v4044 = vunpack.c.l.b16 %v1011
    %v4045 = vunpack.c.h.b16 %v1011
    %v4046 = vunpack.c.l.b16 %v1012
    %v4047 = vunpack.c.h.b16 %v1012
    %v4048 = vunpack.c.l.b16 %v1013
    %v4049 = vunpack.c.h.b16 %v1013
    %v4050 = vunpack.c.l.b16 %v1014
    %v4051 = vunpack.c.h.b16 %v1014
    %v4052 = vunpack.c.l.b16 %v1015
    %v4053 = vunpack.c.h.b16 %v1015
    %v4054 = vunpack.c.l.b16 %v1016
    %v4055 = vunpack.c.h.b16 %v1016
    %v4056 = vunpack.c.l.b16 %v1017
    %v4057 = vunpack.c.h.b16 %v1017
    %v4058 = vunpack.c.l.b16 %v1018
    %v4059 = vunpack.c.h.b16 %v1018
    %v4060 = vunpack.c.l.b16 %v1019
    %v4061 = vunpack.c.h.b16 %v1019
    %v4062 = vunpack.c.l.b16 %v1020
    %v4063 = vunpack.c.h.b16 %v1020
    %v4064 = vunpack.c.l.b16 %v1021
    %v4065 = vunpack.c.h.b16 %v1021
    %v4066 = vunpack.c.l.b16 %v1022
    %v4067 = vunpack.c.h.b16 %v1022
    %v4068 = vunpack.c.l.b16 %v1023
    %v4069 = vunpack.c.h.b16 %v1023
    %v4070 = vunpack.c.l.b16 %v1024
    %v4071 = vunpack.c.h.b16 %v1024
    %v4072 = vunpack.c.l.b16 %v1025
    %v4073 = vunpack.c.h.b16 %v1025
    %v4074 = vunpack.c.l.b16 %v1026
    %v4075 = vunpack.c.h.b16 %v1026
    %v4076 = vunpack.c.l.b16 %v1027
    %v4077 = vunpack.c.h.b16 %v1027
    %v4078 = vunpack.c.l.b16 %v1028
    %v4079 = vunpack.c.h.b16 %v1028
    %v4080 = vunpack.c.l.b16 %v1029
    %v4081 = vunpack.c.h.b16 %v1029
    %v4082 = vunpack.c.l.b16 %v1030
    %v4083 = vunpack.c.h.b16 %v1030
    %v4084 = vunpack.c.l.b16 %v1031
    %v4085 = vunpack.c.h.b16 %v1031
    %v4086 = vunpack.c.l.b16 %v1032
    %v4087 = vunpack.c.h.b16 %v1032
    %v4088 = vunpack.c.l.b16 %v1033
    %v4089 = vunpack.c.h.b16 %v1033
    %v4090 = vunpack.c.l.b16 %v1034
    %v4091 = vunpack.c.h.b16 %v1034
    %v4092 = vunpack.c.l.b16 %v1035
    %v4093 = vunpack.c.h.b16 %v1035
    %v4094 = vunpack.c.l.b16 %v1036
    %v4095 = vunpack.c.h.b16 %v1036
    %v4096 = vunpack.c.l.b16 %v1037
    %v4097 = vunpack.c.h.b16 %v1037
    %v4098 = vunpack.c.l.b16 %v1038
    %v4099 = vunpack.c.h.b16 %v1038
    %v4100 = vunpack.c.l.b16 %v1039
    %v4101 = vunpack.c.h.b16 %v1039
    %v4102 = vunpack.c.l.b16 %v1040
    %v4103 = vunpack.c.h.b16 %v1040
    %v4104 = vunpack.c.l.b16 %v1041
    %v4105 = vunpack.c.h.b16 %v1041
    %v4106 = vunpack.c.l.b16 %v1042
    %v4107 = vunpack.c.h.b16 %v1042
    %v4108 = vunpack.c.l.b16 %v1043
    %v4109 = vunpack.c.h.b16 %v1043
    %v4110 = vunpack.c.l.b16 %v1044
    %v4111 = vunpack.c.h.b16 %v1044
    %v4112 = vunpack.c.l.b16 %v1045
    %v4113 = vunpack.c.h.b16 %v1045
    %v4114 = vunpack.c.l.b16 %v1046
    %v4115 = vunpack.c.h.b16 %v1046
    %v4116 = vunpack.c.l.b16 %v1047
    %v4117 = vunpack.c.h.b16 %v1047
    %v4118 = vunpack.c.l.b16 %v1048
    %v4119 = vunpack.c.h.b16 %v1048
    %v4120 = vunpack.c.l.b16 %v1049
    %v4121 = vunpack.c.h.b16 %v1049
    %v4122 = vunpack.c.l.b16 %v1050
    %v4123 = vunpack.c.h.b16 %v1050
    %v4124 = vunpack.c.l.b16 %v1051
    %v4125 = vunpack.c.h.b16 %v1051
    %v4126 = vunpack.c.l.b16 %v1052
    %v4127 = vunpack.c.h.b16 %v1052
    %v4128 = vunpack.c.l.b16 %v1053
    %v4129 = vunpack.c.h.b16 %v1053
    %v4130 = vunpack.c.l.b16 %v1054
    %v4131 = vunpack.c.h.b16 %v1054
    %v4132 = vunpack.c.l.b16 %v1055
    %v4133 = vunpack.c.h.b16 %v1055
    %v4134 = vunpack.c.l.b16 %v1056
    %v4135 = vunpack.c.h.b16 %v1056
    %v4136 = vunpack.c.l.b16 %v1057
    %v4137 = vunpack.c.h.b16 %v1057
    %v4138 = vunpack.c.l.b16 %v1058
    %v4139 = vunpack.c.h.b16 %v1058
    %v4140 = vunpack.c.l.b16 %v1059
    %v4141 = vunpack.c.h.b16 %v1059
    %v4142 = vunpack.c.l.b16 %v1060
    %v4143 = vunpack.c.h.b16 %v1060
    %v4144 = vunpack.c.l.b16 %v1061
    %v4145 = vunpack.c.h.b16 %v1061
    %v4146 = vunpack.c.l.b16 %v1062
    %v4147 = vunpack.c.h.b16 %v1062
    %v4148 = vunpack.c.l.b16 %v1063
    %v4149 = vunpack.c.h.b16 %v1063
    %v4150 = vunpack.c.l.b16 %v1064
    %v4151 = vunpack.c.h.b16 %v1064
    %v4152 = vunpack.c.l.b16 %v1065
    %v4153 = vunpack.c.h.b16 %v1065
    %v4154 = vunpack.c.l.b16 %v1066
    %v4155 = vunpack.c.h.b16 %v1066
    %v4156 = vunpack.c.l.b16 %v1067
    %v4157 = vunpack.c.h.b16 %v1067
    %v4158 = vunpack.c.l.b16 %v1068
    %v4159 = vunpack.c.h.b16 %v1068
    %v4160 = vunpack.c.l.b16 %v1069
    %v4161 = vunpack.c.h.b16 %v1069
    %v4162 = vunpack.c.l.b16 %v1070
    %v4163 = vunpack.c.h.b16 %v1070
    %v4164 = vunpack.c.l.b16 %v1071
    %v4165 = vunpack.c.h.b16 %v1071
    %v4166 = vunpack.c.l.b16 %v1072
    %v4167 = vunpack.c.h.b16 %v1072
    %v4168 = vunpack.c.l.b16 %v1073
    %v4169 = vunpack.c.h.b16 %v1073
    %v4170 = vunpack.c.l.b16 %v1074
    %v4171 = vunpack.c.h.b16 %v1074
    %v4172 = vunpack.c.l.b16 %v1075
    %v4173 = vunpack.c.h.b16 %v1075
    %v4174 = vunpack.c.l.b16 %v1076
    %v4175 = vunpack.c.h.b16 %v1076
    %v4176 = vunpack.c.l.b16 %v1077
    %v4177 = vunpack.c.h.b16 %v1077
    %v4178 = vunpack.c.l.b16 %v1078
    %v4179 = vunpack.c.h.b16 %v1078
    %v4180 = vunpack.c.l.b16 %v1079
    %v4181 = vunpack.c.h.b16 %v1079
    %v4182 = vunpack.c.l.b16 %v1080
    %v4183 = vunpack.c.h.b16 %v1080
    %v4184 = vunpack.c.l.b16 %v1081
    %v4185 = vunpack.c.h.b16 %v1081
    %v4186 = vunpack.c.l.b16 %v1082
    %v4187 = vunpack.c.h.b16 %v1082
    %v4188 = vunpack.c.l.b16 %v1083
    %v4189 = vunpack.c.h.b16 %v1083
    %v4190 = vunpack.c.l.b16 %v1084
    %v4191 = vunpack.c.h.b16 %v1084
    %v4192 = vunpack.c.l.b16 %v1085
    %v4193 = vunpack.c.h.b16 %v1085
    %v4194 = vunpack.c.l.b16 %v1086
    %v4195 = vunpack.c.h.b16 %v1086
    %v4196 = vunpack.c.l.b16 %v1087
    %v4197 = vunpack.c.h.b16 %v1087
    %v4198 = vunpack.c.l.b16 %v1088
    %v4199 = vunpack.c.h.b16 %v1088
    %v4200 = vunpack.c.l.b16 %v1089
    %v4201 = vunpack.c.h.b16 %v1089
    %v4202 = vunpack.c.l.b16 %v1090
    %v4203 = vunpack.c.h.b16 %v1090
    %v4204 = vunpack.c.l.b16 %v1091
    %v4205 = vunpack.c.h.b16 %v1091
    %v4206 = vunpack.c.l.b16 %v1092
    %v4207 = vunpack.c.h.b16 %v1092
    %v4208 = vunpack.c.l.b16 %v1093
    %v4209 = vunpack.c.h.b16 %v1093
    %v4210 = vunpack.c.l.b16 %v1094
    %v4211 = vunpack.c.h.b16 %v1094
    %v4212 = vunpack.c.l.b16 %v1095
    %v4213 = vunpack.c.h.b16 %v1095
    %v4214 = vunpack.c.l.b16 %v1096
    %v4215 = vunpack.c.h.b16 %v1096
    %v4216 = vunpack.c.l.b16 %v1097
    %v4217 = vunpack.c.h.b16 %v1097
    %v4218 = vunpack.c.l.b16 %v1098
    %v4219 = vunpack.c.h.b16 %v1098
    %v4220 = vunpack.c.l.b16 %v1099
    %v4221 = vunpack.c.h.b16 %v1099
    %v4222 = vunpack.c.l.b16 %v1100
    %v4223 = vunpack.c.h.b16 %v1100
    %v4224 = vunpack.c.l.b16 %v1101
    %v4225 = vunpack.c.h.b16 %v1101
    %v4226 = vunpack.c.l.b16 %v1102
    %v4227 = vunpack.c.h.b16 %v1102
    %v4228 = vunpack.c.l.b16 %v1103
    %v4229 = vunpack.c.h.b16 %v1103
    %v4230 = vunpack.c.l.b16 %v1104
    %v4231 = vunpack.c.h.b16 %v1104
    %v4232 = vunpack.c.l.b16 %v1105
    %v4233 = vunpack.c.h.b16 %v1105
    %v4234 = vunpack.c.l.b16 %v1106
    %v4235 = vunpack.c.h.b16 %v1106
    %v4236 = vunpack.c.l.b16 %v1107
    %v4237 = vunpack.c.h.b16 %v1107
    %v4238 = vunpack.c.l.b16 %v1108
    %v4239 = vunpack.c.h.b16 %v1108
    %v4240 = vunpack.c.l.b16 %v1109
    %v4241 = vunpack.c.h.b16 %v1109
    %v4242 = vunpack.c.l.b16 %v1110
    %v4243 = vunpack.c.h.b16 %v1110
    %v4244 = vunpack.c.l.b16 %v1111
    %v4245 = vunpack.c.h.b16 %v1111
    %v4246 = vunpack.c.l.b16 %v1112
    %v4247 = vunpack.c.h.b16 %v1112
    %v4248 = vunpack.c.l.b16 %v1113
    %v4249 = vunpack.c.h.b16 %v1113
    %v4250 = vunpack.c.l.b16 %v1114
    %v4251 = vunpack.c.h.b16 %v1114
    %v4252 = vunpack.c.l.b16 %v1115
    %v4253 = vunpack.c.h.b16 %v1115
    %v4254 = vunpack.c.l.b16 %v1116
    %v4255 = vunpack.c.h.b16 %v1116
    %v4256 = vunpack.c.l.b16 %v1117
    %v4257 = vunpack.c.h.b16 %v1117
    %v4258 = vunpack.c.l.b16 %v1118
    %v4259 = vunpack.c.h.b16 %v1118
    %v4260 = vunpack.c.l.b16 %v1119
    %v4261 = vunpack.c.h.b16 %v1119
    %v4262 = vunpack.c.l.b16 %v1120
    %v4263 = vunpack.c.h.b16 %v1120
    %v4264 = vunpack.c.l.b16 %v1121
    %v4265 = vunpack.c.h.b16 %v1121
    %v4266 = vunpack.c.l.b16 %v1122
    %v4267 = vunpack.c.h.b16 %v1122
    %v4268 = vunpack.c.l.b16 %v1123
    %v4269 = vunpack.c.h.b16 %v1123
    %v4270 = vunpack.c.l.b16 %v1124
    %v4271 = vunpack.c.h.b16 %v1124
    %v4272 = vunpack.c.l.b16 %v1125
    %v4273 = vunpack.c.h.b16 %v1125
    %v4274 = vunpack.c.l.b16 %v1126
    %v4275 = vunpack.c.h.b16 %v1126
    %v4276 = vunpack.c.l.b16 %v1127
    %v4277 = vunpack.c.h.b16 %v1127
    %v4278 = vunpack.c.l.b16 %v1128
    %v4279 = vunpack.c.h.b16 %v1128
    %v4280 = vunpack.c.l.b16 %v1129
    %v4281 = vunpack.c.h.b16 %v1129
    %v4282 = vunpack.c.l.b16 %v1130
    %v4283 = vunpack.c.h.b16 %v1130
    %v4284 = vunpack.c.l.b16 %v1131
    %v4285 = vunpack.c.h.b16 %v1131
    %v4286 = vunpack.c.l.b16 %v1132
    %v4287 = vunpack.c.h.b16 %v1132
    %v4288 = vunpack.c.l.b16 %v1133
    %v4289 = vunpack.c.h.b16 %v1133
    %v4290 = vunpack.c.l.b16 %v1134
    %v4291 = vunpack.c.h.b16 %v1134
    %v4292 = vunpack.c.l.b16 %v1135
    %v4293 = vunpack.c.h.b16 %v1135
    %v4294 = vunpack.c.l.b16 %v1136
    %v4295 = vunpack.c.h.b16 %v1136
    %v4296 = vunpack.c.l.b16 %v1137
    %v4297 = vunpack.c.h.b16 %v1137
    %v4298 = vunpack.c.l.b16 %v1138
    %v4299 = vunpack.c.h.b16 %v1138
    %v4300 = vunpack.c.l.b16 %v1139
    %v4301 = vunpack.c.h.b16 %v1139
    %v4302 = vunpack.c.l.b16 %v1140
    %v4303 = vunpack.c.h.b16 %v1140
    %v4304 = vunpack.c.l.b16 %v1141
    %v4305 = vunpack.c.h.b16 %v1141
    %v4306 = vunpack.c.l.b16 %v1142
    %v4307 = vunpack.c.h.b16 %v1142
    %v4308 = vunpack.c.l.b16 %v1143
    %v4309 = vunpack.c.h.b16 %v1143
    %v4310 = vunpack.c.l.b16 %v1144
    %v4311 = vunpack.c.h.b16 %v1144
    %v4312 = vunpack.c.l.b16 %v1145
    %v4313 = vunpack.c.h.b16 %v1145
    %v4314 = vunpack.c.l.b16 %v1146
    %v4315 = vunpack.c.h.b16 %v1146
    %v4316 = vunpack.c.l.b16 %v1147
    %v4317 = vunpack.c.h.b16 %v1147
    %v4318 = vunpack.c.l.b16 %v1148
    %v4319 = vunpack.c.h.b16 %v1148
    %v4320 = vunpack.c.l.b16 %v1149
    %v4321 = vunpack.c.h.b16 %v1149
    %v4322 = vunpack.c.l.b16 %v1150
    %v4323 = vunpack.c.h.b16 %v1150
    %v4324 = vunpack.c.l.b16 %v1151
    %v4325 = vunpack.c.h.b16 %v1151
    %v4326 = vunpack.c.l.b16 %v1152
    %v4327 = vunpack.c.h.b16 %v1152
    %v4328 = vunpack.c.l.b16 %v1153
    %v4329 = vunpack.c.h.b16 %v1153
    %v4330 = vunpack.c.l.b16 %v1154
    %v4331 = vunpack.c.h.b16 %v1154
    %v4332 = vunpack.c.l.b16 %v1155
    %v4333 = vunpack.c.h.b16 %v1155
    %v4334 = vunpack.c.l.b16 %v1156
    %v4335 = vunpack.c.h.b16 %v1156
    %v4336 = vunpack.c.l.b16 %v1157
    %v4337 = vunpack.c.h.b16 %v1157
    %v4338 = vunpack.c.l.b16 %v1158
    %v4339 = vunpack.c.h.b16 %v1158
    %v4340 = vunpack.c.l.b16 %v1159
    %v4341 = vunpack.c.h.b16 %v1159
    %v4342 = vunpack.c.l.b16 %v1160
    %v4343 = vunpack.c.h.b16 %v1160
    %v4344 = vunpack.c.l.b16 %v1161
    %v4345 = vunpack.c.h.b16 %v1161
    %v4346 = vunpack.c.l.b16 %v1162
    %v4347 = vunpack.c.h.b16 %v1162
    %v4348 = vunpack.c.l.b16 %v1163
    %v4349 = vunpack.c.h.b16 %v1163
    %v4350 = vunpack.c.l.b16 %v1164
    %v4351 = vunpack.c.h.b16 %v1164
    %v4352 = vunpack.c.l.b16 %v1165
    %v4353 = vunpack.c.h.b16 %v1165
    %v4354 = vunpack.c.l.b16 %v1166
    %v4355 = vunpack.c.h.b16 %v1166
    %v4356 = vunpack.c.l.b16 %v1167
    %v4357 = vunpack.c.h.b16 %v1167
    %v4358 = vunpack.c.l.b16 %v1168
    %v4359 = vunpack.c.h.b16 %v1168
    %v4360 = vunpack.c.l.b16 %v1169
    %v4361 = vunpack.c.h.b16 %v1169
    %v4362 = vunpack.c.l.b16 %v1170
    %v4363 = vunpack.c.h.b16 %v1170
    %v4364 = vunpack.c.l.b16 %v1171
    %v4365 = vunpack.c.h.b16 %v1171
    %v4366 = vunpack.c.l.b16 %v1172
    %v4367 = vunpack.c.h.b16 %v1172
    %v4368 = vunpack.c.l.b16 %v1173
    %v4369 = vunpack.c.h.b16 %v1173
    %v4370 = vunpack.c.l.b16 %v1174
    %v4371 = vunpack.c.h.b16 %v1174
    %v4372 = vunpack.c.l.b16 %v1175
    %v4373 = vunpack.c.h.b16 %v1175
    %v4374 = vunpack.c.l.b16 %v1176
    %v4375 = vunpack.c.h.b16 %v1176
    %v4376 = vunpack.c.l.b16 %v1177
    %v4377 = vunpack.c.h.b16 %v1177
    %v4378 = vunpack.c.l.b16 %v1178
    %v4379 = vunpack.c.h.b16 %v1178
    %v4380 = vunpack.c.l.b16 %v1179
    %v4381 = vunpack.c.h.b16 %v1179
    %v4382 = vunpack.c.l.b16 %v1180
    %v4383 = vunpack.c.h.b16 %v1180
    %v4384 = vunpack.c.l.b16 %v1181
    %v4385 = vunpack.c.h.b16 %v1181
    %v4386 = vunpack.c.l.b16 %v1182
    %v4387 = vunpack.c.h.b16 %v1182
    %v4388 = vunpack.c.l.b16 %v1183
    %v4389 = vunpack.c.h.b16 %v1183
    %v4390 = vunpack.c.l.b16 %v1184
    %v4391 = vunpack.c.h.b16 %v1184
    %v4392 = vunpack.c.l.b16 %v1185
    %v4393 = vunpack.c.h.b16 %v1185
    %v4394 = vunpack.c.l.b16 %v1186
    %v4395 = vunpack.c.h.b16 %v1186
    %v4396 = vunpack.c.l.b16 %v1187
    %v4397 = vunpack.c.h.b16 %v1187
    %v4398 = vunpack.c.l.b16 %v1188
    %v4399 = vunpack.c.h.b16 %v1188
    %v4400 = vunpack.c.l.b16 %v1189
    %v4401 = vunpack.c.h.b16 %v1189
    %v4402 = vunpack.c.l.b16 %v1190
    %v4403 = vunpack.c.h.b16 %v1190
    %v4404 = vunpack.c.l.b16 %v1191
    %v4405 = vunpack.c.h.b16 %v1191
    %v4406 = vunpack.c.l.b16 %v1192
    %v4407 = vunpack.c.h.b16 %v1192
    %v4408 = vunpack.c.l.b16 %v1193
    %v4409 = vunpack.c.h.b16 %v1193
    %v4410 = vunpack.c.l.b16 %v1194
    %v4411 = vunpack.c.h.b16 %v1194
    %v4412 = vunpack.c.l.b16 %v1195
    %v4413 = vunpack.c.h.b16 %v1195
    %v4414 = vunpack.c.l.b16 %v1196
    %v4415 = vunpack.c.h.b16 %v1196
    %v4416 = vunpack.c.l.b16 %v1197
    %v4417 = vunpack.c.h.b16 %v1197
    %v4418 = vunpack.c.l.b16 %v1198
    %v4419 = vunpack.c.h.b16 %v1198
    %v4420 = vunpack.c.l.b16 %v1199
    %v4421 = vunpack.c.h.b16 %v1199
    %v4422 = vunpack.c.l.b16 %v1200
    %v4423 = vunpack.c.h.b16 %v1200
    %v4424 = vunpack.c.l.b16 %v1201
    %v4425 = vunpack.c.h.b16 %v1201
    %v4426 = vunpack.c.l.b16 %v1202
    %v4427 = vunpack.c.h.b16 %v1202
    %v4428 = vunpack.c.l.b16 %v1203
    %v4429 = vunpack.c.h.b16 %v1203
    %v4430 = vunpack.c.l.b16 %v1204
    %v4431 = vunpack.c.h.b16 %v1204
    %v4432 = vunpack.c.l.b16 %v1205
    %v4433 = vunpack.c.h.b16 %v1205
    %v4434 = vunpack.c.l.b16 %v1206
    %v4435 = vunpack.c.h.b16 %v1206
    %v4436 = vunpack.c.l.b16 %v1207
    %v4437 = vunpack.c.h.b16 %v1207
    %v4438 = vunpack.c.l.b16 %v1208
    %v4439 = vunpack.c.h.b16 %v1208
    %v4440 = vunpack.c.l.b16 %v1209
    %v4441 = vunpack.c.h.b16 %v1209
    %v4442 = vunpack.c.l.b16 %v1210
    %v4443 = vunpack.c.h.b16 %v1210
    %v4444 = vunpack.c.l.b16 %v1211
    %v4445 = vunpack.c.h.b16 %v1211
    %v4446 = vunpack.c.l.b16 %v1212
    %v4447 = vunpack.c.h.b16 %v1212
    %v4448 = vunpack.c.l.b16 %v1213
    %v4449 = vunpack.c.h.b16 %v1213
    %v4450 = vunpack.c.l.b16 %v1214
    %v4451 = vunpack.c.h.b16 %v1214
    %v4452 = vunpack.c.l.b16 %v1215
    %v4453 = vunpack.c.h.b16 %v1215
    %v4454 = vunpack.c.l.b16 %v1216
    %v4455 = vunpack.c.h.b16 %v1216
    %v4456 = vunpack.c.l.b16 %v1217
    %v4457 = vunpack.c.h.b16 %v1217
    %v4458 = vunpack.c.l.b16 %v1218
    %v4459 = vunpack.c.h.b16 %v1218
    %v4460 = vunpack.c.l.b16 %v1219
    %v4461 = vunpack.c.h.b16 %v1219
    %v4462 = vunpack.c.l.b16 %v1220
    %v4463 = vunpack.c.h.b16 %v1220
    %v4464 = vunpack.c.l.b16 %v1221
    %v4465 = vunpack.c.h.b16 %v1221
    %v4466 = vunpack.c.l.b16 %v1222
    %v4467 = vunpack.c.h.b16 %v1222
    %v4468 = vunpack.c.l.b16 %v1223
    %v4469 = vunpack.c.h.b16 %v1223
    %v4470 = vunpack.c.l.b16 %v1224
    %v4471 = vunpack.c.h.b16 %v1224
    %v4472 = vunpack.c.l.b16 %v1225
    %v4473 = vunpack.c.h.b16 %v1225
    %v4474 = vunpack.c.l.b16 %v1226
    %v4475 = vunpack.c.h.b16 %v1226
    %v4476 = vunpack.c.l.b16 %v1227
    %v4477 = vunpack.c.h.b16 %v1227
    %v4478 = vunpack.c.l.b16 %v1228
    %v4479 = vunpack.c.h.b16 %v1228
    %v4480 = vunpack.c.l.b16 %v1229
    %v4481 = vunpack.c.h.b16 %v1229
    %v4482 = vunpack.c.l.b16 %v1230
    %v4483 = vunpack.c.h.b16 %v1230
    %v4484 = vunpack.c.l.b16 %v1231
    %v4485 = vunpack.c.h.b16 %v1231
    %v4486 = vunpack.c.l.b16 %v1232
    %v4487 = vunpack.c.h.b16 %v1232
    %v4488 = vunpack.c.l.b16 %v1233
    %v4489 = vunpack.c.h.b16 %v1233
    %v4490 = vunpack.c.l.b16 %v1234
    %v4491 = vunpack.c.h.b16 %v1234
    %v4492 = vunpack.c.l.b16 %v1235
    %v4493 = vunpack.c.h.b16 %v1235
    %v4494 = vunpack.c.l.b16 %v1236
    %v4495 = vunpack.c.h.b16 %v1236
    %v4496 = vunpack.c.l.b16 %v1237
    %v4497 = vunpack.c.h.b16 %v1237
    %v4498 = vunpack.c.l.b16 %v1238
    %v4499 = vunpack.c.h.b16 %v1238
    %v4500 = vunpack.c.l.b16 %v1239
    %v4501 = vunpack.c.h.b16 %v1239
    %v4502 = vunpack.c.l.b16 %v1240
    %v4503 = vunpack.c.h.b16 %v1240
    %v4504 = vunpack.c.l.b16 %v1241
    %v4505 = vunpack.c.h.b16 %v1241
    %v4506 = vunpack.c.l.b16 %v1242
    %v4507 = vunpack.c.h.b16 %v1242
    %v4508 = vunpack.c.l.b16 %v1243
    %v4509 = vunpack.c.h.b16 %v1243
    %v4510 = vunpack.c.l.b16 %v1244
    %v4511 = vunpack.c.h.b16 %v1244
    %v4512 = vunpack.c.l.b16 %v1245
    %v4513 = vunpack.c.h.b16 %v1245
    %v4514 = vunpack.c.l.b16 %v1246
    %v4515 = vunpack.c.h.b16 %v1246
    %v4516 = vunpack.c.l.b16 %v1247
    %v4517 = vunpack.c.h.b16 %v1247
    %v4518 = vunpack.c.l.b16 %v1248
    %v4519 = vunpack.c.h.b16 %v1248
    %v4520 = vunpack.c.l.b16 %v1249
    %v4521 = vunpack.c.h.b16 %v1249
    %v4522 = vunpack.c.l.b16 %v1250
    %v4523 = vunpack.c.h.b16 %v1250
    %v4524 = vunpack.c.l.b16 %v1251
    %v4525 = vunpack.c.h.b16 %v1251
    %v4526 = vunpack.c.l.b16 %v1252
    %v4527 = vunpack.c.h.b16 %v1252
    %v4528 = vunpack.c.l.b16 %v1253
    %v4529 = vunpack.c.h.b16 %v1253
    %v4530 = vunpack.c.l.b16 %v1254
    %v4531 = vunpack.c.h.b16 %v1254
    %v4532 = vunpack.c.l.b16 %v1255
    %v4533 = vunpack.c.h.b16 %v1255
    %v4534 = vunpack.c.l.b16 %v1256
    %v4535 = vunpack.c.h.b16 %v1256
    %v4536 = vunpack.c.l.b16 %v1257
    %v4537 = vunpack.c.h.b16 %v1257
    %v4538 = vunpack.c.l.b16 %v1258
    %v4539 = vunpack.c.h.b16 %v1258
    %v4540 = vunpack.c.l.b16 %v1259
    %v4541 = vunpack.c.h.b16 %v1259
    %v4542 = vunpack.c.l.b16 %v1260
    %v4543 = vunpack.c.h.b16 %v1260
    %v4544 = vunpack.c.l.b16 %v1261
    %v4545 = vunpack.c.h.b16 %v1261
    %v4546 = vunpack.c.l.b16 %v1262
    %v4547 = vunpack.c.h.b16 %v1262
    %v4548 = vunpack.c.l.b16 %v1263
    %v4549 = vunpack.c.h.b16 %v1263
    %v4550 = vunpack.c.l.b16 %v1264
    %v4551 = vunpack.c.h.b16 %v1264
    %v4552 = vunpack.c.l.b16 %v1265
    %v4553 = vunpack.c.h.b16 %v1265
    %v4554 = vunpack.c.l.b16 %v1266
    %v4555 = vunpack.c.h.b16 %v1266
    %v4556 = vunpack.c.l.b16 %v1267
    %v4557 = vunpack.c.h.b16 %v1267
    %v4558 = vunpack.c.l.b16 %v1268
    %v4559 = vunpack.c.h.b16 %v1268
    %v4560 = vunpack.c.l.b16 %v1269
    %v4561 = vunpack.c.h.b16 %v1269
    %v4562 = vunpack.c.l.b16 %v1270
    %v4563 = vunpack.c.h.b16 %v1270
    %v4564 = vunpack.c.l.b16 %v1271
    %v4565 = vunpack.c.h.b16 %v1271
    %v4566 = vunpack.c.l.b16 %v1272
    %v4567 = vunpack.c.h.b16 %v1272
    %v4568 = vunpack.c.l.b16 %v1273
    %v4569 = vunpack.c.h.b16 %v1273
    %v4570 = vunpack.c.l.b16 %v1274
    %v4571 = vunpack.c.h.b16 %v1274
    %v4572 = vunpack.c.l.b16 %v1275
    %v4573 = vunpack.c.h.b16 %v1275
    %v4574 = vunpack.c.l.b16 %v1276
    %v4575 = vunpack.c.h.b16 %v1276
    %v4576 = vunpack.c.l.b16 %v1277
    %v4577 = vunpack.c.h.b16 %v1277
    %v4578 = vunpack.c.l.b16 %v1278
    %v4579 = vunpack.c.h.b16 %v1278
    %v4580 = vunpack.c.l.b16 %v1279
    %v4581 = vunpack.c.h.b16 %v1279
    %v4582 = vunpack.c.l.b16 %v1280
    %v4583 = vunpack.c.h.b16 %v1280
    %v4584 = vunpack.c.l.b16 %v1281
    %v4585 = vunpack.c.h.b16 %v1281
    %v4586 = vunpack.c.l.b16 %v1282
    %v4587 = vunpack.c.h.b16 %v1282
    %v4588 = vunpack.c.l.b16 %v1283
    %v4589 = vunpack.c.h.b16 %v1283
    %v4590 = vunpack.c.l.b16 %v1284
    %v4591 = vunpack.c.h.b16 %v1284
    %v4592 = vunpack.c.l.b16 %v1285
    %v4593 = vunpack.c.h.b16 %v1285
    %v4594 = vunpack.c.l.b16 %v1286
    %v4595 = vunpack.c.h.b16 %v1286
    %v4596 = vunpack.c.l.b16 %v1287
    %v4597 = vunpack.c.h.b16 %v1287
    %v4598 = vunpack.c.l.b16 %v1288
    %v4599 = vunpack.c.h.b16 %v1288
    %v4600 = vunpack.c.l.b16 %v1289
    %v4601 = vunpack.c.h.b16 %v1289
    %v4602 = vunpack.c.l.b16 %v1290
    %v4603 = vunpack.c.h.b16 %v1290
    %v4604 = vunpack.c.l.b16 %v1291
    %v4605 = vunpack.c.h.b16 %v1291
    %v4606 = vunpack.c.l.b16 %v1292
    %v4607 = vunpack.c.h.b16 %v1292
    %v4608 = vunpack.c.l.b16 %v1293
    %v4609 = vunpack.c.h.b16 %v1293
    %v4610 = vunpack.c.l.b16 %v1294
    %v4611 = vunpack.c.h.b16 %v1294
    %v4612 = vunpack.c.l.b16 %v1295
    %v4613 = vunpack.c.h.b16 %v1295
    %v4614 = vunpack.c.l.b16 %v1296
    %v4615 = vunpack.c.h.b16 %v1296
    %v4616 = vunpack.c.l.b16 %v1297
    %v4617 = vunpack.c.h.b16 %v1297
    %v4618 = vunpack.c.l.b16 %v1298
    %v4619 = vunpack.c.h.b16 %v1298
    %v4620 = vunpack.c.l.b16 %v1299
    %v4621 = vunpack.c.h.b16 %v1299
    %v4622 = vunpack.c.l.b16 %v1300
    %v4623 = vunpack.c.h.b16 %v1300
    %v4624 = vunpack.c.l.b16 %v1301
    %v4625 = vunpack.c.h.b16 %v1301
    %v4626 = vunpack.c.l.b16 %v1302
    %v4627 = vunpack.c.h.b16 %v1302
    %v4628 = vunpack.c.l.b16 %v1303
    %v4629 = vunpack.c.h.b16 %v1303
    %v4630 = vunpack.c.l.b16 %v1304
    %v4631 = vunpack.c.h.b16 %v1304
    %v4632 = vunpack.c.l.b16 %v1305
    %v4633 = vunpack.c.h.b16 %v1305
    %v4634 = vunpack.c.l.b16 %v1306
    %v4635 = vunpack.c.h.b16 %v1306
    %v4636 = vunpack.c.l.b16 %v1307
    %v4637 = vunpack.c.h.b16 %v1307
    %v4638 = vunpack.c.l.b16 %v1308
    %v4639 = vunpack.c.h.b16 %v1308
    %v4640 = vunpack.c.l.b16 %v1309
    %v4641 = vunpack.c.h.b16 %v1309
    %v4642 = vunpack.c.l.b16 %v1310
    %v4643 = vunpack.c.h.b16 %v1310
    %v4644 = vunpack.c.l.b16 %v1311
    %v4645 = vunpack.c.h.b16 %v1311
    %v4646 = vunpack.c.l.b16 %v1312
    %v4647 = vunpack.c.h.b16 %v1312
    %v4648 = vunpack.c.l.b16 %v1313
    %v4649 = vunpack.c.h.b16 %v1313
    %v4650 = vunpack.c.l.b16 %v1314
    %v4651 = vunpack.c.h.b16 %v1314
    %v4652 = vunpack.c.l.b16 %v1315
    %v4653 = vunpack.c.h.b16 %v1315
    %v4654 = vunpack.c.l.b16 %v1316
    %v4655 = vunpack.c.h.b16 %v1316
    %v4656 = vunpack.c.l.b16 %v1317
    %v4657 = vunpack.c.h.b16 %v1317
    %v4658 = vunpack.c.l.b16 %v1318
    %v4659 = vunpack.c.h.b16 %v1318
    %v4660 = vunpack.c.l.b16 %v1319
    %v4661 = vunpack.c.h.b16 %v1319
    %v4662 = vunpack.c.l.b16 %v1320
    %v4663 = vunpack.c.h.b16 %v1320
    %v4664 = vunpack.c.l.b16 %v1321
    %v4665 = vunpack.c.h.b16 %v1321
    %v4666 = vunpack.c.l.b16 %v1322
    %v4667 = vunpack.c.h.b16 %v1322
    %v4668 = vunpack.c.l.b16 %v1323
    %v4669 = vunpack.c.h.b16 %v1323
    %v4670 = vunpack.c.l.b16 %v1324
    %v4671 = vunpack.c.h.b16 %v1324
    %v4672 = vunpack.c.l.b16 %v1325
    %v4673 = vunpack.c.h.b16 %v1325
    %v4674 = vunpack.c.l.b16 %v1326
    %v4675 = vunpack.c.h.b16 %v1326
    %v4676 = vunpack.c.l.b16 %v1327
    %v4677 = vunpack.c.h.b16 %v1327
    %v4678 = vunpack.c.l.b16 %v1328
    %v4679 = vunpack.c.h.b16 %v1328
    %v4680 = vunpack.c.l.b16 %v1329
    %v4681 = vunpack.c.h.b16 %v1329
    %v4682 = vunpack.c.l.b16 %v1330
    %v4683 = vunpack.c.h.b16 %v1330
    %v4684 = vunpack.c.l.b16 %v1331
    %v4685 = vunpack.c.h.b16 %v1331
    %v4686 = vunpack.c.l.b16 %v1332
    %v4687 = vunpack.c.h.b16 %v1332
    %v4688 = vunpack.c.l.b16 %v1333
    %v4689 = vunpack.c.h.b16 %v1333
    %v4690 = vunpack.c.l.b16 %v1334
    %v4691 = vunpack.c.h.b16 %v1334
    %v4692 = vunpack.c.l.b16 %v1335
    %v4693 = vunpack.c.h.b16 %v1335
    %v4694 = vunpack.c.l.b16 %v1336
    %v4695 = vunpack.c.h.b16 %v1336
    %v4696 = vunpack.c.l.b16 %v1337
    %v4697 = vunpack.c.h.b16 %v1337
    %v4698 = vunpack.c.l.b16 %v1338
    %v4699 = vunpack.c.h.b16 %v1338
    %v4700 = vunpack.c.l.b16 %v1339
    %v4701 = vunpack.c.h.b16 %v1339
    %v4702 = vunpack.c.l.b16 %v1340
    %v4703 = vunpack.c.h.b16 %v1340
    %v4704 = vunpack.c.l.b16 %v1341
    %v4705 = vunpack.c.h.b16 %v1341
    %v4706 = vunpack.c.l.b16 %v1342
    %v4707 = vunpack.c.h.b16 %v1342
    %v4708 = vunpack.c.l.b16 %v1343
    %v4709 = vunpack.c.h.b16 %v1343
    %v4710 = vunpack.c.l.b16 %v1344
    %v4711 = vunpack.c.h.b16 %v1344
    %v4712 = vunpack.c.l.b16 %v1345
    %v4713 = vunpack.c.h.b16 %v1345
    %v4714 = vunpack.c.l.b16 %v1346
    %v4715 = vunpack.c.h.b16 %v1346
    %v4716 = vunpack.c.l.b16 %v1347
    %v4717 = vunpack.c.h.b16 %v1347
    %v4718 = vunpack.c.l.b16 %v1348
    %v4719 = vunpack.c.h.b16 %v1348
    %v4720 = vunpack.c.l.b16 %v1349
    %v4721 = vunpack.c.h.b16 %v1349
    %v4722 = vunpack.c.l.b16 %v1350
    %v4723 = vunpack.c.h.b16 %v1350
    %v4724 = vunpack.c.l.b16 %v1351
    %v4725 = vunpack.c.h.b16 %v1351
    %v4726 = vunpack.c.l.b16 %v1352
    %v4727 = vunpack.c.h.b16 %v1352
    %v4728 = vunpack.c.l.b16 %v1353
    %v4729 = vunpack.c.h.b16 %v1353
    %v4730 = vunpack.c.l.b16 %v1354
    %v4731 = vunpack.c.h.b16 %v1354
    %v4732 = vunpack.c.l.b16 %v1355
    %v4733 = vunpack.c.h.b16 %v1355
    %v4734 = vunpack.c.l.b16 %v1356
    %v4735 = vunpack.c.h.b16 %v1356
    %v4736 = vunpack.c.l.b16 %v1357
    %v4737 = vunpack.c.h.b16 %v1357
    %v4738 = vunpack.c.l.b16 %v1358
    %v4739 = vunpack.c.h.b16 %v1358
    %v4740 = vunpack.c.l.b16 %v1359
    %v4741 = vunpack.c.h.b16 %v1359
    %v4742 = vunpack.c.l.b16 %v1360
    %v4743 = vunpack.c.h.b16 %v1360
    %v4744 = vunpack.c.l.b16 %v1361
    %v4745 = vunpack.c.h.b16 %v1361
    %v4746 = vunpack.c.l.b16 %v1362
    %v4747 = vunpack.c.h.b16 %v1362
    %v4748 = vunpack.c.l.b16 %v1363
    %v4749 = vunpack.c.h.b16 %v1363
    %v4750 = vunpack.c.l.b16 %v1364
    %v4751 = vunpack.c.h.b16 %v1364
    %v4752 = vunpack.c.l.b16 %v1365
    %v4753 = vunpack.c.h.b16 %v1365
    %v4754 = vunpack.c.l.b16 %v1366
    %v4755 = vunpack.c.h.b16 %v1366
    %v4756 = vunpack.c.l.b16 %v1367
    %v4757 = vunpack.c.h.b16 %v1367
    %v4758 = vunpack.c.l.b16 %v1368
    %v4759 = vunpack.c.h.b16 %v1368
    %v4760 = vunpack.c.l.b16 %v1369
    %v4761 = vunpack.c.h.b16 %v1369
    %v4762 = vunpack.c.l.b16 %v1370
    %v4763 = vunpack.c.h.b16 %v1370
    %v4764 = vunpack.c.l.b16 %v1371
    %v4765 = vunpack.c.h.b16 %v1371
    %v4766 = vunpack.c.l.b16 %v1372
    %v4767 = vunpack.c.h.b16 %v1372
    %v4768 = vunpack.c.l.b16 %v1373
    %v4769 = vunpack.c.h.b16 %v1373
    %v4770 = vunpack.c.l.b16 %v1374
    %v4771 = vunpack.c.h.b16 %v1374
    %v4772 = vunpack.c.l.b16 %v1375
    %v4773 = vunpack.c.h.b16 %v1375
    %v4774 = vunpack.c.l.b16 %v1376
    %v4775 = vunpack.c.h.b16 %v1376
    %v4776 = vunpack.c.l.b16 %v1377
    %v4777 = vunpack.c.h.b16 %v1377
    %v4778 = vunpack.c.l.b16 %v1378
    %v4779 = vunpack.c.h.b16 %v1378
    %v4780 = vunpack.c.l.b16 %v1379
    %v4781 = vunpack.c.h.b16 %v1379
    %v4782 = vunpack.c.l.b16 %v1380
    %v4783 = vunpack.c.h.b16 %v1380
    %v4784 = vunpack.c.l.b16 %v1381
    %v4785 = vunpack.c.h.b16 %v1381
    %v4786 = vunpack.c.l.b16 %v1382
    %v4787 = vunpack.c.h.b16 %v1382
    %v4788 = vunpack.c.l.b16 %v1383
    %v4789 = vunpack.c.h.b16 %v1383
    %v4790 = vunpack.c.l.b16 %v1384
    %v4791 = vunpack.c.h.b16 %v1384
    %v4792 = vunpack.c.l.b16 %v1385
    %v4793 = vunpack.c.h.b16 %v1385
    %v4794 = vunpack.c.l.b16 %v1386
    %v4795 = vunpack.c.h.b16 %v1386
    %v4796 = vunpack.c.l.b16 %v1387
    %v4797 = vunpack.c.h.b16 %v1387
    %v4798 = vunpack.c.l.b16 %v1388
    %v4799 = vunpack.c.h.b16 %v1388
    %v4800 = vunpack.c.l.b16 %v1389
    %v4801 = vunpack.c.h.b16 %v1389
    %v4802 = vunpack.c.l.b16 %v1390
    %v4803 = vunpack.c.h.b16 %v1390
    %v4804 = vunpack.c.l.b16 %v1391
    %v4805 = vunpack.c.h.b16 %v1391
    %v4806 = vunpack.c.l.b16 %v1392
    %v4807 = vunpack.c.h.b16 %v1392
    %v4808 = vunpack.c.l.b16 %v1393
    %v4809 = vunpack.c.h.b16 %v1393
    %v4810 = vunpack.c.l.b16 %v1394
    %v4811 = vunpack.c.h.b16 %v1394
    %v4812 = vunpack.c.l.b16 %v1395
    %v4813 = vunpack.c.h.b16 %v1395
    %v4814 = vunpack.c.l.b16 %v1396
    %v4815 = vunpack.c.h.b16 %v1396
    %v4816 = vunpack.c.l.b16 %v1397
    %v4817 = vunpack.c.h.b16 %v1397
    %v4818 = vunpack.c.l.b16 %v1398
    %v4819 = vunpack.c.h.b16 %v1398
    %v4820 = vunpack.c.l.b16 %v1399
    %v4821 = vunpack.c.h.b16 %v1399
    %v4822 = vunpack.c.l.b16 %v1400
    %v4823 = vunpack.c.h.b16 %v1400
    %v4824 = vunpack.c.l.b16 %v1401
    %v4825 = vunpack.c.h.b16 %v1401
    %v4826 = vunpack.c.l.b16 %v1402
    %v4827 = vunpack.c.h.b16 %v1402
    %v4828 = vunpack.c.l.b16 %v1403
    %v4829 = vunpack.c.h.b16 %v1403
    %v4830 = vunpack.c.l.b16 %v1404
    %v4831 = vunpack.c.h.b16 %v1404
    %v4832 = vunpack.c.l.b16 %v1405
    %v4833 = vunpack.c.h.b16 %v1405
    %v4834 = vunpack.c.l.b16 %v1406
    %v4835 = vunpack.c.h.b16 %v1406
    %v4836 = vunpack.c.l.b16 %v1407
    %v4837 = vunpack.c.h.b16 %v1407
    %v4838 = vunpack.c.l.b16 %v1408
    %v4839 = vunpack.c.h.b16 %v1408
    %v4840 = vunpack.c.l.b16 %v1409
    %v4841 = vunpack.c.h.b16 %v1409
    %v4842 = vunpack.c.l.b16 %v1410
    %v4843 = vunpack.c.h.b16 %v1410
    %v4844 = vunpack.c.l.b16 %v1411
    %v4845 = vunpack.c.h.b16 %v1411
    %v4846 = vunpack.c.l.b16 %v1412
    %v4847 = vunpack.c.h.b16 %v1412
    %v4848 = vunpack.c.l.b16 %v1413
    %v4849 = vunpack.c.h.b16 %v1413
    %v4850 = vunpack.c.l.b16 %v1414
    %v4851 = vunpack.c.h.b16 %v1414
    %v4852 = vunpack.c.l.b16 %v1415
    %v4853 = vunpack.c.h.b16 %v1415
    %v4854 = vunpack.c.l.b16 %v1416
    %v4855 = vunpack.c.h.b16 %v1416
    %v4856 = vunpack.c.l.b16 %v1417
    %v4857 = vunpack.c.h.b16 %v1417
    %v4858 = vunpack.c.l.b16 %v1418
    %v4859 = vunpack.c.h.b16 %v1418
    %v4860 = vunpack.c.l.b16 %v1419
    %v4861 = vunpack.c.h.b16 %v1419
    %v4862 = vunpack.c.l.b16 %v1420
    %v4863 = vunpack.c.h.b16 %v1420
    %v4864 = vunpack.c.l.b16 %v1421
    %v4865 = vunpack.c.h.b16 %v1421
    %v4866 = vunpack.c.l.b16 %v1422
    %v4867 = vunpack.c.h.b16 %v1422
    %v4868 = vunpack.c.l.b16 %v1423
    %v4869 = vunpack.c.h.b16 %v1423
    %v4870 = vunpack.c.l.b16 %v1424
    %v4871 = vunpack.c.h.b16 %v1424
    %v4872 = vunpack.c.l.b16 %v1425
    %v4873 = vunpack.c.h.b16 %v1425
    %v4874 = vunpack.c.l.b16 %v1426
    %v4875 = vunpack.c.h.b16 %v1426
    %v4876 = vunpack.c.l.b16 %v1427
    %v4877 = vunpack.c.h.b16 %v1427
    %v4878 = vunpack.c.l.b16 %v1428
    %v4879 = vunpack.c.h.b16 %v1428
    %v4880 = vunpack.c.l.b16 %v1429
    %v4881 = vunpack.c.h.b16 %v1429
    %v4882 = vunpack.c.l.b16 %v1430
    %v4883 = vunpack.c.h.b16 %v1430
    %v4884 = vunpack.c.l.b16 %v1431
    %v4885 = vunpack.c.h.b16 %v1431
    %v4886 = vunpack.c.l.b16 %v1432
    %v4887 = vunpack.c.h.b16 %v1432
    %v4888 = vunpack.c.l.b16 %v1433
    %v4889 = vunpack.c.h.b16 %v1433
    %v4890 = vunpack.c.l.b16 %v1434
    %v4891 = vunpack.c.h.b16 %v1434
    %v4892 = vunpack.c.l.b16 %v1435
    %v4893 = vunpack.c.h.b16 %v1435
    %v4894 = vunpack.c.l.b16 %v1436
    %v4895 = vunpack.c.h.b16 %v1436
    %v4896 = vunpack.c.l.b16 %v1437
    %v4897 = vunpack.c.h.b16 %v1437
    %v4898 = vunpack.c.l.b16 %v1438
    %v4899 = vunpack.c.h.b16 %v1438
    %v4900 = vunpack.c.l.b16 %v1439
    %v4901 = vunpack.c.h.b16 %v1439
    %v4902 = vunpack.c.l.b16 %v1440
    %v4903 = vunpack.c.h.b16 %v1440
    %v4904 = vunpack.c.l.b16 %v1441
    %v4905 = vunpack.c.h.b16 %v1441
    %v4906 = vunpack.c.l.b16 %v1442
    %v4907 = vunpack.c.h.b16 %v1442
    %v4908 = vunpack.c.l.b16 %v1443
    %v4909 = vunpack.c.h.b16 %v1443
    %v4910 = vunpack.c.l.b16 %v1444
    %v4911 = vunpack.c.h.b16 %v1444
    %v4912 = vunpack.c.l.b16 %v1445
    %v4913 = vunpack.c.h.b16 %v1445
    %v4914 = vunpack.c.l.b16 %v1446
    %v4915 = vunpack.c.h.b16 %v1446
    %v4916 = vunpack.c.l.b16 %v1447
    %v4917 = vunpack.c.h.b16 %v1447
    %v4918 = vunpack.c.l.b16 %v1448
    %v4919 = vunpack.c.h.b16 %v1448
    %v4920 = vunpack.c.l.b16 %v1449
    %v4921 = vunpack.c.h.b16 %v1449
    %v4922 = vunpack.c.l.b16 %v1450
    %v4923 = vunpack.c.h.b16 %v1450
    %v4924 = vunpack.c.l.b16 %v1451
    %v4925 = vunpack.c.h.b16 %v1451
    %v4926 = vunpack.c.l.b16 %v1452
    %v4927 = vunpack.c.h.b16 %v1452
    %v4928 = vunpack.c.l.b16 %v1453
    %v4929 = vunpack.c.h.b16 %v1453
    %v4930 = vunpack.c.l.b16 %v1454
    %v4931 = vunpack.c.h.b16 %v1454
    %v4932 = vunpack.c.l.b16 %v1455
    %v4933 = vunpack.c.h.b16 %v1455
    %v4934 = vunpack.c.l.b16 %v1456
    %v4935 = vunpack.c.h.b16 %v1456
    %v4936 = vunpack.c.l.b16 %v1457
    %v4937 = vunpack.c.h.b16 %v1457
    %v4938 = vunpack.c.l.b16 %v1458
    %v4939 = vunpack.c.h.b16 %v1458
    %v4940 = vunpack.c.l.b16 %v1459
    %v4941 = vunpack.c.h.b16 %v1459
    %v4942 = vunpack.c.l.b16 %v1460
    %v4943 = vunpack.c.h.b16 %v1460
    %v4944 = vunpack.c.l.b16 %v1461
    %v4945 = vunpack.c.h.b16 %v1461
    %v4946 = vunpack.c.l.b16 %v1462
    %v4947 = vunpack.c.h.b16 %v1462
    %v4948 = vunpack.c.l.b16 %v1463
    %v4949 = vunpack.c.h.b16 %v1463
    %v4950 = vunpack.c.l.b16 %v1464
    %v4951 = vunpack.c.h.b16 %v1464
    %v4952 = vunpack.c.l.b16 %v1465
    %v4953 = vunpack.c.h.b16 %v1465
    %v4954 = vunpack.c.l.b16 %v1466
    %v4955 = vunpack.c.h.b16 %v1466
    %v4956 = vunpack.c.l.b16 %v1467
    %v4957 = vunpack.c.h.b16 %v1467
    %v4958 = vunpack.c.l.b16 %v1468
    %v4959 = vunpack.c.h.b16 %v1468
    %v4960 = vunpack.c.l.b16 %v1469
    %v4961 = vunpack.c.h.b16 %v1469
    %v4962 = vunpack.c.l.b16 %v1470
    %v4963 = vunpack.c.h.b16 %v1470
    %v4964 = vunpack.c.l.b16 %v1471
    %v4965 = vunpack.c.h.b16 %v1471
    %v4966 = vunpack.c.l.b16 %v1472
    %v4967 = vunpack.c.h.b16 %v1472
    %v4968 = vunpack.c.l.b16 %v1473
    %v4969 = vunpack.c.h.b16 %v1473
    %v4970 = vunpack.c.l.b16 %v1474
    %v4971 = vunpack.c.h.b16 %v1474
    %v4972 = vunpack.c.l.b16 %v1475
    %v4973 = vunpack.c.h.b16 %v1475
    %v4974 = vunpack.c.l.b16 %v1476
    %v4975 = vunpack.c.h.b16 %v1476
    %v4976 = vunpack.c.l.b16 %v1477
    %v4977 = vunpack.c.h.b16 %v1477
    %v4978 = vunpack.c.l.b16 %v1478
    %v4979 = vunpack.c.h.b16 %v1478
    %v4980 = vunpack.c.l.b16 %v1479
    %v4981 = vunpack.c.h.b16 %v1479
    %v4982 = vunpack.c.l.b16 %v1480
    %v4983 = vunpack.c.h.b16 %v1480
    %v4984 = vunpack.c.l.b16 %v1481
    %v4985 = vunpack.c.h.b16 %v1481
    %v4986 = vunpack.c.l.b16 %v1482
    %v4987 = vunpack.c.h.b16 %v1482
    %v4988 = vunpack.c.l.b16 %v1483
    %v4989 = vunpack.c.h.b16 %v1483
    %v4990 = vunpack.c.l.b16 %v1484
    %v4991 = vunpack.c.h.b16 %v1484
    %v4992 = vunpack.c.l.b16 %v1485
    %v4993 = vunpack.c.h.b16 %v1485
    %v4994 = vunpack.c.l.b16 %v1486
    %v4995 = vunpack.c.h.b16 %v1486
    %v4996 = vunpack.c.l.b16 %v1487
    %v4997 = vunpack.c.h.b16 %v1487
    %v4998 = vunpack.c.l.b16 %v1488
    %v4999 = vunpack.c.h.b16 %v1488
    %v5000 = vunpack.c.l.b16 %v1489
    %v5001 = vunpack.c.h.b16 %v1489
    %v5002 = vunpack.c.l.b16 %v1490
    %v5003 = vunpack.c.h.b16 %v1490
    %v5004 = vunpack.c.l.b16 %v1491
    %v5005 = vunpack.c.h.b16 %v1491
    %v5006 = vunpack.c.l.b16 %v1492
    %v5007 = vunpack.c.h.b16 %v1492
    %v5008 = vunpack.c.l.b16 %v1493
    %v5009 = vunpack.c.h.b16 %v1493
    %v5010 = vunpack.c.l.b16 %v1494
    %v5011 = vunpack.c.h.b16 %v1494
    %v5012 = vunpack.c.l.b16 %v1495
    %v5013 = vunpack.c.h.b16 %v1495
    %v5014 = vunpack.c.l.b16 %v1496
    %v5015 = vunpack.c.h.b16 %v1496
    %v5016 = vunpack.c.l.b16 %v1497
    %v5017 = vunpack.c.h.b16 %v1497
    %v5018 = vunpack.c.l.b16 %v1498
    %v5019 = vunpack.c.h.b16 %v1498
    %v5020 = vunpack.c.l.b16 %v1499
    %v5021 = vunpack.c.h.b16 %v1499
    %v5022 = vunpack.c.l.b16 %v1500
    %v5023 = vunpack.c.h.b16 %v1500
    %v5024 = vunpack.c.l.b16 %v1501
    %v5025 = vunpack.c.h.b16 %v1501
    %v5026 = vunpack.c.l.b16 %v1502
    %v5027 = vunpack.c.h.b16 %v1502
    %v5028 = vunpack.c.l.b16 %v1503
    %v5029 = vunpack.c.h.b16 %v1503
    %v5030 = vunpack.c.l.b16 %v1504
    %v5031 = vunpack.c.h.b16 %v1504
    %v5032 = vunpack.c.l.b16 %v1505
    %v5033 = vunpack.c.h.b16 %v1505
    %v5034 = vunpack.c.l.b16 %v1506
    %v5035 = vunpack.c.h.b16 %v1506
    %v5036 = vunpack.c.l.b16 %v1507
    %v5037 = vunpack.c.h.b16 %v1507
    %v5038 = vunpack.c.l.b16 %v1508
    %v5039 = vunpack.c.h.b16 %v1508
    %v5040 = vunpack.c.l.b16 %v1509
    %v5041 = vunpack.c.h.b16 %v1509
    %v5042 = vunpack.c.l.b16 %v1510
    %v5043 = vunpack.c.h.b16 %v1510
    %v5044 = vunpack.c.l.b16 %v1511
    %v5045 = vunpack.c.h.b16 %v1511
    %v5046 = vunpack.c.l.b16 %v1512
    %v5047 = vunpack.c.h.b16 %v1512
    %v5048 = vunpack.c.l.b16 %v1513
    %v5049 = vunpack.c.h.b16 %v1513
    %v5050 = vunpack.c.l.b16 %v1514
    %v5051 = vunpack.c.h.b16 %v1514
    %v5052 = vunpack.c.l.b16 %v1515
    %v5053 = vunpack.c.h.b16 %v1515
    %v5054 = vunpack.c.l.b16 %v1516
    %v5055 = vunpack.c.h.b16 %v1516
    %v5056 = vunpack.c.l.b16 %v1517
    %v5057 = vunpack.c.h.b16 %v1517
    %v5058 = vunpack.c.l.b16 %v1518
    %v5059 = vunpack.c.h.b16 %v1518
    %v5060 = vunpack.c.l.b16 %v1519
    %v5061 = vunpack.c.h.b16 %v1519
    %v5062 = vunpack.c.l.b16 %v1520
    %v5063 = vunpack.c.h.b16 %v1520
    %v5064 = vunpack.c.l.b16 %v1521
    %v5065 = vunpack.c.h.b16 %v1521
    %v5066 = vunpack.c.l.b16 %v1522
    %v5067 = vunpack.c.h.b16 %v1522
    %v5068 = vunpack.c.l.b16 %v1523
    %v5069 = vunpack.c.h.b16 %v1523
    %v5070 = vunpack.c.l.b16 %v1524
    %v5071 = vunpack.c.h.b16 %v1524
    %v5072 = vunpack.c.l.b16 %v1525
    %v5073 = vunpack.c.h.b16 %v1525
    %v5074 = vunpack.c.l.b16 %v1526
    %v5075 = vunpack.c.h.b16 %v1526
    %v5076 = vunpack.c.l.b16 %v1527
    %v5077 = vunpack.c.h.b16 %v1527
    %v5078 = vunpack.c.l.b16 %v1528
    %v5079 = vunpack.c.h.b16 %v1528
    %v5080 = vunpack.c.l.b16 %v1529
    %v5081 = vunpack.c.h.b16 %v1529
    %v5082 = vunpack.c.l.b16 %v1530
    %v5083 = vunpack.c.h.b16 %v1530
    %v5084 = vunpack.c.l.b16 %v1531
    %v5085 = vunpack.c.h.b16 %v1531
    %v5086 = vunpack.c.l.b16 %v1532
    %v5087 = vunpack.c.h.b16 %v1532
    %v5088 = vunpack.c.l.b16 %v1533
    %v5089 = vunpack.c.h.b16 %v1533
    %v5090 = vunpack.c.l.b16 %v1534
    %v5091 = vunpack.c.h.b16 %v1534
    %v5092 = vunpack.c.l.b16 %v1535
    %v5093 = vunpack.c.h.b16 %v1535
    %v5094 = vunpack.c.l.b16 %v1536
    %v5095 = vunpack.c.h.b16 %v1536
    %v5096 = vunpack.c.l.b16 %v1537
    %v5097 = vunpack.c.h.b16 %v1537
    %v5098 = vunpack.c.l.b16 %v1538
    %v5099 = vunpack.c.h.b16 %v1538
    %v5100 = vunpack.c.l.b16 %v1539
    %v5101 = vunpack.c.h.b16 %v1539
    %v5102 = vunpack.c.l.b16 %v1540
    %v5103 = vunpack.c.h.b16 %v1540
    %v5104 = vunpack.c.l.b16 %v1541
    %v5105 = vunpack.c.h.b16 %v1541
    %v5106 = vunpack.c.l.b16 %v1542
    %v5107 = vunpack.c.h.b16 %v1542
    %v5108 = vunpack.c.l.b16 %v1543
    %v5109 = vunpack.c.h.b16 %v1543
    %v5110 = vunpack.c.l.b16 %v1544
    %v5111 = vunpack.c.h.b16 %v1544
    %v5112 = vunpack.c.l.b16 %v1545
    %v5113 = vunpack.c.h.b16 %v1545
    %v5114 = vunpack.c.l.b16 %v1546
    %v5115 = vunpack.c.h.b16 %v1546
    %v5116 = vunpack.c.l.b16 %v1547
    %v5117 = vunpack.c.h.b16 %v1547
    %v5118 = vunpack.c.l.b16 %v1548
    %v5119 = vunpack.c.h.b16 %v1548
    %v5120 = vunpack.c.l.b16 %v1549
    %v5121 = vunpack.c.h.b16 %v1549
    %v5122 = vunpack.c.l.b16 %v1550
    %v5123 = vunpack.c.h.b16 %v1550
    %v5124 = vunpack.c.l.b16 %v1551
    %v5125 = vunpack.c.h.b16 %v1551
    %v5126 = vunpack.c.l.b16 %v1552
    %v5127 = vunpack.c.h.b16 %v1552
    %v5128 = vunpack.c.l.b16 %v1553
    %v5129 = vunpack.c.h.b16 %v1553
    %v5130 = vunpack.c.l.b16 %v1554
    %v5131 = vunpack.c.h.b16 %v1554
    %v5132 = vunpack.c.l.b16 %v1555
    %v5133 = vunpack.c.h.b16 %v1555
    %v5134 = vunpack.c.l.b16 %v1556
    %v5135 = vunpack.c.h.b16 %v1556
    %v5136 = vunpack.c.l.b16 %v1557
    %v5137 = vunpack.c.h.b16 %v1557
    %v5138 = vunpack.c.l.b16 %v1558
    %v5139 = vunpack.c.h.b16 %v1558
    %v5140 = vunpack.c.l.b16 %v1559
    %v5141 = vunpack.c.h.b16 %v1559
    %v5142 = vunpack.c.l.b16 %v1560
    %v5143 = vunpack.c.h.b16 %v1560
    %v5144 = vunpack.c.l.b16 %v1561
    %v5145 = vunpack.c.h.b16 %v1561
    %v5146 = vunpack.c.l.b16 %v1562
    %v5147 = vunpack.c.h.b16 %v1562
    %v5148 = vunpack.c.l.b16 %v1563
    %v5149 = vunpack.c.h.b16 %v1563
    %v5150 = vunpack.c.l.b16 %v1564
    %v5151 = vunpack.c.h.b16 %v1564
    %v5152 = vunpack.c.l.b16 %v1565
    %v5153 = vunpack.c.h.b16 %v1565
    %v5154 = vunpack.c.l.b16 %v1566
    %v5155 = vunpack.c.h.b16 %v1566
    %v5156 = vunpack.c.l.b16 %v1567
    %v5157 = vunpack.c.h.b16 %v1567
    %v5158 = vunpack.c.l.b16 %v1568
    %v5159 = vunpack.c.h.b16 %v1568
    %v5160 = vunpack.c.l.b16 %v1569
    %v5161 = vunpack.c.h.b16 %v1569
    %v5162 = vunpack.c.l.b16 %v1570
    %v5163 = vunpack.c.h.b16 %v1570
    %v5164 = vunpack.c.l.b16 %v1571
    %v5165 = vunpack.c.h.b16 %v1571
    %v5166 = vunpack.c.l.b16 %v1572
    %v5167 = vunpack.c.h.b16 %v1572
    %v5168 = vunpack.c.l.b16 %v1573
    %v5169 = vunpack.c.h.b16 %v1573
    %v5170 = vunpack.c.l.b16 %v1574
    %v5171 = vunpack.c.h.b16 %v1574
    %v5172 = vunpack.c.l.b16 %v1575
    %v5173 = vunpack.c.h.b16 %v1575
    %v5174 = vunpack.c.l.b16 %v1576
    %v5175 = vunpack.c.h.b16 %v1576
    %v5176 = vunpack.c.l.b16 %v1577
    %v5177 = vunpack.c.h.b16 %v1577
    %v5178 = vunpack.c.l.b16 %v1578
    %v5179 = vunpack.c.h.b16 %v1578
    %v5180 = vunpack.c.l.b16 %v1579
    %v5181 = vunpack.c.h.b16 %v1579
    %v5182 = vunpack.c.l.b16 %v1580
    %v5183 = vunpack.c.h.b16 %v1580
    %v5184 = vunpack.c.l.b16 %v1581
    %v5185 = vunpack.c.h.b16 %v1581
    %v5186 = vunpack.c.l.b16 %v1582
    %v5187 = vunpack.c.h.b16 %v1582
    %v5188 = vunpack.c.l.b16 %v1583
    %v5189 = vunpack.c.h.b16 %v1583
    %v5190 = vunpack.c.l.b16 %v1584
    %v5191 = vunpack.c.h.b16 %v1584
    %v5192 = vunpack.c.l.b16 %v1585
    %v5193 = vunpack.c.h.b16 %v1585
    %v5194 = vunpack.c.l.b16 %v1586
    %v5195 = vunpack.c.h.b16 %v1586
    %v5196 = vunpack.c.l.b16 %v1587
    %v5197 = vunpack.c.h.b16 %v1587
    %v5198 = vunpack.c.l.b16 %v1588
    %v5199 = vunpack.c.h.b16 %v1588
    %v5200 = vunpack.c.l.b16 %v1589
    %v5201 = vunpack.c.h.b16 %v1589
    %v5202 = vunpack.c.l.b16 %v1590
    %v5203 = vunpack.c.h.b16 %v1590
    %v5204 = vunpack.c.l.b16 %v1591
    %v5205 = vunpack.c.h.b16 %v1591
    %v5206 = vunpack.c.l.b16 %v1592
    %v5207 = vunpack.c.h.b16 %v1592
    %v5208 = vunpack.c.l.b16 %v1593
    %v5209 = vunpack.c.h.b16 %v1593
    %v5210 = vunpack.c.l.b16 %v1594
    %v5211 = vunpack.c.h.b16 %v1594
    %v5212 = vunpack.c.l.b16 %v1595
    %v5213 = vunpack.c.h.b16 %v1595
    %v5214 = vunpack.c.l.b16 %v1596
    %v5215 = vunpack.c.h.b16 %v1596
    %v5216 = vunpack.c.l.b16 %v1597
    %v5217 = vunpack.c.h.b16 %v1597
    %v5218 = vunpack.c.l.b16 %v1598
    %v5219 = vunpack.c.h.b16 %v1598
    %v5220 = vunpack.c.l.b16 %v1599
    %v5221 = vunpack.c.h.b16 %v1599
    %v5222 = vunpack.c.l.b16 %v1600
    %v5223 = vunpack.c.h.b16 %v1600
    %v5224 = vunpack.c.l.b16 %v1601
    %v5225 = vunpack.c.h.b16 %v1601
    %v5226 = vunpack.c.l.b16 %v1602
    %v5227 = vunpack.c.h.b16 %v1602
    %v5228 = vunpack.c.l.b16 %v1603
    %v5229 = vunpack.c.h.b16 %v1603
    %v5230 = vunpack.c.l.b16 %v1604
    %v5231 = vunpack.c.h.b16 %v1604
    %v5232 = vunpack.c.l.b16 %v1605
    %v5233 = vunpack.c.h.b16 %v1605
    %v5234 = vunpack.c.l.b16 %v1606
    %v5235 = vunpack.c.h.b16 %v1606
    %v5236 = vunpack.c.l.b16 %v1607
    %v5237 = vunpack.c.h.b16 %v1607
    %v5238 = vunpack.c.l.b16 %v1608
    %v5239 = vunpack.c.h.b16 %v1608
    %v5240 = vunpack.c.l.b16 %v1609
    %v5241 = vunpack.c.h.b16 %v1609
    %v5242 = vunpack.c.l.b16 %v1610
    %v5243 = vunpack.c.h.b16 %v1610
    %v5244 = vunpack.c.l.b16 %v1611
    %v5245 = vunpack.c.h.b16 %v1611
    %v5246 = vunpack.c.l.b16 %v1612
    %v5247 = vunpack.c.h.b16 %v1612
    %v5248 = vunpack.c.l.b16 %v1613
    %v5249 = vunpack.c.h.b16 %v1613
    %v5250 = vunpack.c.l.b16 %v1614
    %v5251 = vunpack.c.h.b16 %v1614
    %v5252 = vunpack.c.l.b16 %v1615
    %v5253 = vunpack.c.h.b16 %v1615
    %v5254 = vunpack.c.l.b16 %v1616
    %v5255 = vunpack.c.h.b16 %v1616
    %v5256 = vunpack.c.l.b16 %v1617
    %v5257 = vunpack.c.h.b16 %v1617
    %v5258 = vunpack.c.l.b16 %v1618
    %v5259 = vunpack.c.h.b16 %v1618
    %v5260 = vunpack.c.l.b16 %v1619
    %v5261 = vunpack.c.h.b16 %v1619
    %v5262 = vunpack.c.l.b16 %v1620
    %v5263 = vunpack.c.h.b16 %v1620
    %v5264 = vunpack.c.l.b16 %v1621
    %v5265 = vunpack.c.h.b16 %v1621
    %v5266 = vunpack.c.l.b16 %v1622
    %v5267 = vunpack.c.h.b16 %v1622
    %v5268 = vunpack.c.l.b16 %v1623
    %v5269 = vunpack.c.h.b16 %v1623
    %v5270 = vunpack.c.l.b16 %v1624
    %v5271 = vunpack.c.h.b16 %v1624
    %v5272 = vunpack.c.l.b16 %v1625
    %v5273 = vunpack.c.h.b16 %v1625
    %v5274 = vunpack.c.l.b16 %v1626
    %v5275 = vunpack.c.h.b16 %v1626
    %v5276 = vunpack.c.l.b16 %v1627
    %v5277 = vunpack.c.h.b16 %v1627
    %v5278 = vunpack.c.l.b16 %v1628
    %v5279 = vunpack.c.h.b16 %v1628
    %v5280 = vunpack.c.l.b16 %v1629
    %v5281 = vunpack.c.h.b16 %v1629
    %v5282 = vunpack.c.l.b16 %v1630
    %v5283 = vunpack.c.h.b16 %v1630
    %v5284 = vunpack.c.l.b16 %v1631
    %v5285 = vunpack.c.h.b16 %v1631
    %v5286 = vunpack.c.l.b16 %v1632
    %v5287 = vunpack.c.h.b16 %v1632
    %v5288 = vunpack.c.l.b16 %v1633
    %v5289 = vunpack.c.h.b16 %v1633
    %v5290 = vunpack.c.l.b16 %v1634
    %v5291 = vunpack.c.h.b16 %v1634
    %v5292 = vunpack.c.l.b16 %v1635
    %v5293 = vunpack.c.h.b16 %v1635
    %v5294 = vunpack.c.l.b16 %v1636
    %v5295 = vunpack.c.h.b16 %v1636
    %v5296 = vunpack.c.l.b16 %v1637
    %v5297 = vunpack.c.h.b16 %v1637
    %v5298 = vunpack.c.l.b16 %v1638
    %v5299 = vunpack.c.h.b16 %v1638
    %v5300 = vunpack.c.l.b16 %v1639
    %v5301 = vunpack.c.h.b16 %v1639
    %v5302 = vunpack.c.l.b16 %v1640
    %v5303 = vunpack.c.h.b16 %v1640
    %v5304 = vunpack.c.l.b16 %v1641
    %v5305 = vunpack.c.h.b16 %v1641
    %v5306 = vunpack.c.l.b16 %v1642
    %v5307 = vunpack.c.h.b16 %v1642
    %v5308 = vunpack.c.l.b16 %v1643
    %v5309 = vunpack.c.h.b16 %v1643
    %v5310 = vunpack.c.l.b16 %v1644
    %v5311 = vunpack.c.h.b16 %v1644
    %v5312 = vunpack.c.l.b16 %v1645
    %v5313 = vunpack.c.h.b16 %v1645
    %v5314 = vunpack.c.l.b16 %v1646
    %v5315 = vunpack.c.h.b16 %v1646
    %v5316 = vunpack.c.l.b16 %v1647
    %v5317 = vunpack.c.h.b16 %v1647
    %v5318 = vunpack.c.l.b16 %v1648
    %v5319 = vunpack.c.h.b16 %v1648
    %v5320 = vunpack.c.l.b16 %v1649
    %v5321 = vunpack.c.h.b16 %v1649
    %v5322 = vunpack.c.l.b16 %v1650
    %v5323 = vunpack.c.h.b16 %v1650
    %v5324 = vunpack.c.l.b16 %v1651
    %v5325 = vunpack.c.h.b16 %v1651
    %v5326 = vunpack.c.l.b16 %v1652
    %v5327 = vunpack.c.h.b16 %v1652
    %v5328 = vunpack.c.l.b16 %v1653
    %v5329 = vunpack.c.h.b16 %v1653
    %v5330 = vunpack.c.l.b16 %v1654
    %v5331 = vunpack.c.h.b16 %v1654
    %v5332 = vunpack.c.l.b16 %v1655
    %v5333 = vunpack.c.h.b16 %v1655
    %v5334 = vunpack.c.l.b16 %v1656
    %v5335 = vunpack.c.h.b16 %v1656
    %v5336 = vunpack.c.l.b16 %v1657
    %v5337 = vunpack.c.h.b16 %v1657
    %v5338 = vunpack.c.l.b16 %v1658
    %v5339 = vunpack.c.h.b16 %v1658
    %v5340 = vunpack.c.l.b16 %v1659
    %v5341 = vunpack.c.h.b16 %v1659
    %v5342 = vunpack.c.l.b16 %v1660
    %v5343 = vunpack.c.h.b16 %v1660
    %v5344 = vunpack.c.l.b16 %v1661
    %v5345 = vunpack.c.h.b16 %v1661
    %v5346 = vunpack.c.l.b16 %v1662
    %v5347 = vunpack.c.h.b16 %v1662
    %v5348 = vunpack.c.l.b16 %v1663
    %v5349 = vunpack.c.h.b16 %v1663
    %v5350 = vunpack.c.l.b16 %v1664
    %v5351 = vunpack.c.h.b16 %v1664
    %v5352 = vunpack.c.l.b16 %v1665
    %v5353 = vunpack.c.h.b16 %v1665
    %v5354 = vunpack.c.l.b16 %v1666
    %v5355 = vunpack.c.h.b16 %v1666
    %v5356 = vunpack.c.l.b16 %v1667
    %v5357 = vunpack.c.h.b16 %v1667
    %v5358 = vunpack.c.l.b16 %v1668
    %v5359 = vunpack.c.h.b16 %v1668
    %v5360 = vunpack.c.l.b16 %v1669
    %v5361 = vunpack.c.h.b16 %v1669
    %v5362 = vunpack.c.l.b16 %v1670
    %v5363 = vunpack.c.h.b16 %v1670
    %v5364 = vunpack.c.l.b16 %v1671
    %v5365 = vunpack.c.h.b16 %v1671
    %v5366 = vunpack.c.l.b16 %v1672
    %v5367 = vunpack.c.h.b16 %v1672
    %v5368 = vunpack.c.l.b16 %v1673
    %v5369 = vunpack.c.h.b16 %v1673
    %v5370 = vunpack.c.l.b16 %v1674
    %v5371 = vunpack.c.h.b16 %v1674
    %v5372 = vunpack.c.l.b16 %v1675
    %v5373 = vunpack.c.h.b16 %v1675
    %v5374 = vunpack.c.l.b16 %v1676
    %v5375 = vunpack.c.h.b16 %v1676
    %v5376 = vunpack.c.l.b16 %v1677
    %v5377 = vunpack.c.h.b16 %v1677
    %v5378 = vunpack.c.l.b16 %v1678
    %v5379 = vunpack.c.h.b16 %v1678
    %v5380 = vunpack.c.l.b16 %v1679
    %v5381 = vunpack.c.h.b16 %v1679
    %v5382 = vunpack.c.l.b16 %v1680
    %v5383 = vunpack.c.h.b16 %v1680
    %v5384 = vunpack.c.l.b16 %v1681
    %v5385 = vunpack.c.h.b16 %v1681
    %v5386 = vunpack.c.l.b16 %v1682
    %v5387 = vunpack.c.h.b16 %v1682
    %v5388 = vunpack.c.l.b16 %v1683
    %v5389 = vunpack.c.h.b16 %v1683
    %v5390 = vunpack.c.l.b16 %v1684
    %v5391 = vunpack.c.h.b16 %v1684
    %v5392 = vunpack.c.l.b16 %v1685
    %v5393 = vunpack.c.h.b16 %v1685
    %v5394 = vunpack.c.l.b16 %v1686
    %v5395 = vunpack.c.h.b16 %v1686
    %v5396 = vunpack.c.l.b16 %v1687
    %v5397 = vunpack.c.h.b16 %v1687
    %v5398 = vunpack.c.l.b16 %v1688
    %v5399 = vunpack.c.h.b16 %v1688
    %v5400 = vunpack.c.l.b16 %v1689
    %v5401 = vunpack.c.h.b16 %v1689
    %v5402 = vunpack.c.l.b16 %v1690
    %v5403 = vunpack.c.h.b16 %v1690
    %v5404 = vunpack.c.l.b16 %v1691
    %v5405 = vunpack.c.h.b16 %v1691
    %v5406 = vunpack.c.l.b16 %v1692
    %v5407 = vunpack.c.h.b16 %v1692
    %v5408 = vunpack.c.l.b16 %v1693
    %v5409 = vunpack.c.h.b16 %v1693
    %v5410 = vunpack.c.l.b16 %v1694
    %v5411 = vunpack.c.h.b16 %v1694
    %v5412 = vunpack.c.l.b16 %v1695
    %v5413 = vunpack.c.h.b16 %v1695
    %v5414 = vunpack.c.l.b16 %v1696
    %v5415 = vunpack.c.h.b16 %v1696
    %v5416 = vunpack.c.l.b16 %v1697
    %v5417 = vunpack.c.h.b16 %v1697
    %v5418 = vunpack.c.l.b16 %v1698
    %v5419 = vunpack.c.h.b16 %v1698
    %v5420 = vunpack.c.l.b16 %v1699
    %v5421 = vunpack.c.h.b16 %v1699
    %v5422 = vunpack.c.l.b16 %v1700
    %v5423 = vunpack.c.h.b16 %v1700
    %v5424 = vunpack.c.l.b16 %v1701
    %v5425 = vunpack.c.h.b16 %v1701
    %v5426 = vunpack.c.l.b16 %v1702
    %v5427 = vunpack.c.h.b16 %v1702
    %v5428 = vunpack.c.l.b16 %v1703
    %v5429 = vunpack.c.h.b16 %v1703
    %v5430 = vunpack.c.l.b16 %v1704
    %v5431 = vunpack.c.h.b16 %v1704
    %v5432 = vunpack.c.l.b16 %v1705
    %v5433 = vunpack.c.h.b16 %v1705
    %v5434 = vunpack.c.l.b16 %v1706
    %v5435 = vunpack.c.h.b16 %v1706
    %v5436 = vunpack.c.l.b16 %v1707
    %v5437 = vunpack.c.h.b16 %v1707
    %v5438 = vunpack.c.l.b16 %v1708
    %v5439 = vunpack.c.h.b16 %v1708
    %v5440 = vunpack.c.l.b16 %v1709
    %v5441 = vunpack.c.h.b16 %v1709
    %v5442 = vunpack.c.l.b16 %v1710
    %v5443 = vunpack.c.h.b16 %v1710
    %v5444 = vunpack.c.l.b16 %v1711
    %v5445 = vunpack.c.h.b16 %v1711
    %v5446 = vunpack.c.l.b16 %v1712
    %v5447 = vunpack.c.h.b16 %v1712
    %v5448 = vunpack.c.l.b16 %v1713
    %v5449 = vunpack.c.h.b16 %v1713
    %v5450 = vunpack.c.l.b16 %v1714
    %v5451 = vunpack.c.h.b16 %v1714
    %v5452 = vunpack.c.l.b16 %v1715
    %v5453 = vunpack.c.h.b16 %v1715
    %v5454 = vunpack.c.l.b16 %v1716
    %v5455 = vunpack.c.h.b16 %v1716
    %v5456 = vunpack.c.l.b16 %v1717
    %v5457 = vunpack.c.h.b16 %v1717
    %v5458 = vunpack.c.l.b16 %v1718
    %v5459 = vunpack.c.h.b16 %v1718
    %v5460 = vunpack.c.l.b16 %v1719
    %v5461 = vunpack.c.h.b16 %v1719
    %v5462 = vunpack.c.l.b16 %v1720
    %v5463 = vunpack.c.h.b16 %v1720
    %v5464 = vunpack.c.l.b16 %v1721
    %v5465 = vunpack.c.h.b16 %v1721
    %v5466 = vunpack.c.l.b16 %v1722
    %v5467 = vunpack.c.h.b16 %v1722
    %v5468 = vunpack.c.l.b16 %v1723
    %v5469 = vunpack.c.h.b16 %v1723
    %v5470 = vunpack.c.l.b16 %v1724
    %v5471 = vunpack.c.h.b16 %v1724
    %v5472 = vunpack.c.l.b16 %v1725
    %v5473 = vunpack.c.h.b16 %v1725
    %v5474 = vunpack.c.l.b16 %v1726
    %v5475 = vunpack.c.h.b16 %v1726
    %v5476 = vunpack.c.l.b16 %v1727
    %v5477 = vunpack.c.h.b16 %v1727
    %v5478 = vunpack.c.l.b16 %v1728
    %v5479 = vunpack.c.h.b16 %v1728
    %v5480 = vunpack.c.l.b16 %v1729
    %v5481 = vunpack.c.h.b16 %v1729
    %v5482 = vunpack.c.l.b16 %v1730
    %v5483 = vunpack.c.h.b16 %v1730
    %v5484 = vunpack.c.l.b16 %v1731
    %v5485 = vunpack.c.h.b16 %v1731
    %v5486 = vunpack.c.l.b16 %v1732
    %v5487 = vunpack.c.h.b16 %v1732
    %v5488 = vunpack.c.l.b16 %v1733
    %v5489 = vunpack.c.h.b16 %v1733
    %v5490 = vunpack.c.l.b16 %v1734
    %v5491 = vunpack.c.h.b16 %v1734
    %v5492 = vunpack.c.l.b16 %v1735
    %v5493 = vunpack.c.h.b16 %v1735
    %v5494 = vunpack.c.l.b16 %v1736
    %v5495 = vunpack.c.h.b16 %v1736
    %v5496 = vunpack.c.l.b16 %v1737
    %v5497 = vunpack.c.h.b16 %v1737
    %v5498 = vunpack.c.l.b16 %v1738
    %v5499 = vunpack.c.h.b16 %v1738
    %v5500 = vunpack.c.l.b16 %v1739
    %v5501 = vunpack.c.h.b16 %v1739
    %v5502 = vunpack.c.l.b16 %v1740
    %v5503 = vunpack.c.h.b16 %v1740
    %v5504 = vunpack.c.l.b16 %v1741
    %v5505 = vunpack.c.h.b16 %v1741
    %v5506 = vunpack.c.l.b16 %v1742
    %v5507 = vunpack.c.h.b16 %v1742
    %v5508 = vunpack.c.l.b16 %v1743
    %v5509 = vunpack.c.h.b16 %v1743
    %v5510 = vunpack.c.l.b16 %v1744
    %v5511 = vunpack.c.h.b16 %v1744
    %v5512 = vunpack.c.l.b16 %v1745
    %v5513 = vunpack.c.h.b16 %v1745
    %v5514 = vunpack.c.l.b16 %v1746
    %v5515 = vunpack.c.h.b16 %v1746
    %v5516 = vunpack.c.l.b16 %v1747
    %v5517 = vunpack.c.h.b16 %v1747
    %v5518 = vunpack.c.l.b16 %v1748
    %v5519 = vunpack.c.h.b16 %v1748
    %v5520 = vunpack.c.l.b16 %v1749
    %v5521 = vunpack.c.h.b16 %v1749
    %v5522 = vunpack.c.l.b16 %v1750
    %v5523 = vunpack.c.h.b16 %v1750
    %v5524 = vunpack.c.l.b16 %v1751
    %v5525 = vunpack.c.h.b16 %v1751
    %v5526 = vunpack.c.l.b16 %v1752
    %v5527 = vunpack.c.h.b16 %v1752
    %v5528 = vunpack.c.l.b16 %v1753
    %v5529 = vunpack.c.h.b16 %v1753
    %v5530 = vunpack.c.l.b16 %v1754
    %v5531 = vunpack.c.h.b16 %v1754
    %v5532 = vunpack.c.l.b16 %v1755
    %v5533 = vunpack.c.h.b16 %v1755
    %v5534 = vunpack.c.l.b16 %v1756
    %v5535 = vunpack.c.h.b16 %v1756
    %v5536 = vunpack.c.l.b16 %v1757
    %v5537 = vunpack.c.h.b16 %v1757
    %v5538 = vunpack.c.l.b16 %v1758
    %v5539 = vunpack.c.h.b16 %v1758
    %v5540 = vunpack.c.l.b16 %v1759
    %v5541 = vunpack.c.h.b16 %v1759
    %v5542 = vunpack.c.l.b16 %v1760
    %v5543 = vunpack.c.h.b16 %v1760
    %v5544 = vunpack.c.l.b16 %v1761
    %v5545 = vunpack.c.h.b16 %v1761
    %v5546 = vunpack.c.l.b16 %v1762
    %v5547 = vunpack.c.h.b16 %v1762
    %v5548 = vunpack.c.l.b16 %v1763
    %v5549 = vunpack.c.h.b16 %v1763
    %v5550 = vunpack.c.l.b16 %v1764
    %v5551 = vunpack.c.h.b16 %v1764
    %v5552 = vunpack.c.l.b16 %v1765
    %v5553 = vunpack.c.h.b16 %v1765
    %v5554 = vunpack.c.l.b16 %v1766
    %v5555 = vunpack.c.h.b16 %v1766
    %v5556 = vunpack.c.l.b16 %v1767
    %v5557 = vunpack.c.h.b16 %v1767
    %v5558 = vunpack.c.l.b16 %v1768
    %v5559 = vunpack.c.h.b16 %v1768
    %v5560 = vunpack.c.l.b16 %v1769
    %v5561 = vunpack.c.h.b16 %v1769
    %v5562 = vunpack.c.l.b16 %v1770
    %v5563 = vunpack.c.h.b16 %v1770
    %v5564 = vunpack.c.l.b16 %v1771
    %v5565 = vunpack.c.h.b16 %v1771
    %v5566 = vunpack.c.l.b16 %v1772
    %v5567 = vunpack.c.h.b16 %v1772
    %v5568 = vunpack.c.l.b16 %v1773
    %v5569 = vunpack.c.h.b16 %v1773
    %v5570 = vunpack.c.l.b16 %v1774
    %v5571 = vunpack.c.h.b16 %v1774
    %v5572 = vunpack.c.l.b16 %v1775
    %v5573 = vunpack.c.h.b16 %v1775
    %v5574 = vunpack.c.l.b16 %v1776
    %v5575 = vunpack.c.h.b16 %v1776
    %v5576 = vunpack.c.l.b16 %v1777
    %v5577 = vunpack.c.h.b16 %v1777
    %v5578 = vunpack.c.l.b16 %v1778
    %v5579 = vunpack.c.h.b16 %v1778
    %v5580 = vunpack.c.l.b16 %v1779
    %v5581 = vunpack.c.h.b16 %v1779
    %v5582 = vunpack.c.l.b16 %v1780
    %v5583 = vunpack.c.h.b16 %v1780
    %v5584 = vunpack.c.l.b16 %v1781
    %v5585 = vunpack.c.h.b16 %v1781
    %v5586 = vunpack.c.l.b16 %v1782
    %v5587 = vunpack.c.h.b16 %v1782
    %v5588 = vunpack.c.l.b16 %v1783
    %v5589 = vunpack.c.h.b16 %v1783
    %v5590 = vunpack.c.l.b16 %v1784
    %v5591 = vunpack.c.h.b16 %v1784
    %v5592 = vunpack.c.l.b16 %v1785
    %v5593 = vunpack.c.h.b16 %v1785
    %v5594 = vunpack.c.l.b16 %v1786
    %v5595 = vunpack.c.h.b16 %v1786
    %v5596 = vunpack.c.l.b16 %v1787
    %v5597 = vunpack.c.h.b16 %v1787
    %v5598 = vunpack.c.l.b16 %v1788
    %v5599 = vunpack.c.h.b16 %v1788
    %v5600 = vunpack.c.l.b16 %v1789
    %v5601 = vunpack.c.h.b16 %v1789
    %v5602 = vunpack.c.l.b16 %v1790
    %v5603 = vunpack.c.h.b16 %v1790
    %v5604 = vunpack.c.l.b16 %v1791
    %v5605 = vunpack.c.h.b16 %v1791
    %v5606 = vunpack.c.l.b16 %v1792
    %v5607 = vunpack.c.h.b16 %v1792
    %v5608 = vunpack.c.l.b16 %v1793
    %v5609 = vunpack.c.h.b16 %v1793
    %v5610 = vunpack.c.l.b16 %v1794
    %v5611 = vunpack.c.h.b16 %v1794
    %v5612 = vunpack.c.l.b16 %v1795
    %v5613 = vunpack.c.h.b16 %v1795
    %v5614 = vunpack.c.l.b16 %v1796
    %v5615 = vunpack.c.h.b16 %v1796
    %v5616 = vunpack.c.l.b16 %v1797
    %v5617 = vunpack.c.h.b16 %v1797
    %v5618 = vunpack.c.l.b16 %v1798
    %v5619 = vunpack.c.h.b16 %v1798
    %v5620 = vunpack.c.l.b16 %v1799
    %v5621 = vunpack.c.h.b16 %v1799
    %v5622 = vunpack.c.l.b16 %v1800
    %v5623 = vunpack.c.h.b16 %v1800
    %v5624 = vunpack.c.l.b16 %v1801
    %v5625 = vunpack.c.h.b16 %v1801
    %v5626 = vunpack.c.l.b16 %v1802
    %v5627 = vunpack.c.h.b16 %v1802
    %v5628 = vunpack.c.l.b16 %v1803
    %v5629 = vunpack.c.h.b16 %v1803
    %v5630 = vunpack.c.l.b16 %v1804
    %v5631 = vunpack.c.h.b16 %v1804
    %v5632 = vunpack.c.l.b16 %v1805
    %v5633 = vunpack.c.h.b16 %v1805
    %v5634 = vunpack.c.l.b16 %v1806
    %v5635 = vunpack.c.h.b16 %v1806
    %v5636 = vunpack.c.l.b16 %v1807
    %v5637 = vunpack.c.h.b16 %v1807
    %v5638 = vunpack.c.l.b16 %v1808
    %v5639 = vunpack.c.h.b16 %v1808
    %v5640 = vunpack.c.l.b16 %v1809
    %v5641 = vunpack.c.h.b16 %v1809
    %v5642 = vunpack.c.l.b16 %v1810
    %v5643 = vunpack.c.h.b16 %v1810
    %v5644 = vunpack.c.l.b16 %v1811
    %v5645 = vunpack.c.h.b16 %v1811
    %v5646 = vunpack.c.l.b16 %v1812
    %v5647 = vunpack.c.h.b16 %v1812
    %v5648 = vunpack.c.l.b16 %v1813
    %v5649 = vunpack.c.h.b16 %v1813
    %v5650 = vunpack.c.l.b16 %v1814
    %v5651 = vunpack.c.h.b16 %v1814
    %v5652 = vunpack.c.l.b16 %v1815
    %v5653 = vunpack.c.h.b16 %v1815
    %v5654 = vunpack.c.l.b16 %v1816
    %v5655 = vunpack.c.h.b16 %v1816
    %v5656 = vunpack.c.l.b16 %v1817
    %v5657 = vunpack.c.h.b16 %v1817
    %v5658 = vunpack.c.l.b16 %v1818
    %v5659 = vunpack.c.h.b16 %v1818
    %v5660 = vunpack.c.l.b16 %v1819
    %v5661 = vunpack.c.h.b16 %v1819
    %v5662 = vunpack.c.l.b16 %v1820
    %v5663 = vunpack.c.h.b16 %v1820
    %v5664 = vunpack.c.l.b16 %v1821
    %v5665 = vunpack.c.h.b16 %v1821
    %v5666 = vunpack.c.l.b16 %v1822
    %v5667 = vunpack.c.h.b16 %v1822
    %v5668 = vunpack.c.l.b16 %v1823
    %v5669 = vunpack.c.h.b16 %v1823
    %v5670 = vunpack.c.l.b16 %v1824
    %v5671 = vunpack.c.h.b16 %v1824
    %v5672 = vunpack.c.l.b16 %v1825
    %v5673 = vunpack.c.h.b16 %v1825
    %v5674 = vunpack.c.l.b16 %v1826
    %v5675 = vunpack.c.h.b16 %v1826
    %v5676 = vunpack.c.l.b16 %v1827
    %v5677 = vunpack.c.h.b16 %v1827
    %v5678 = vunpack.c.l.b16 %v1828
    %v5679 = vunpack.c.h.b16 %v1828
    %v5680 = vunpack.c.l.b16 %v1829
    %v5681 = vunpack.c.h.b16 %v1829
    %v5682 = vunpack.c.l.b16 %v1830
    %v5683 = vunpack.c.h.b16 %v1830
    %v5684 = vunpack.c.l.b16 %v1831
    %v5685 = vunpack.c.h.b16 %v1831
    %v5686 = vunpack.c.l.b16 %v1832
    %v5687 = vunpack.c.h.b16 %v1832
    %v5688 = vunpack.c.l.b16 %v1833
    %v5689 = vunpack.c.h.b16 %v1833
    %v5690 = vunpack.c.l.b16 %v1834
    %v5691 = vunpack.c.h.b16 %v1834
    %v5692 = vunpack.c.l.b16 %v1835
    %v5693 = vunpack.c.h.b16 %v1835
    %v5694 = vunpack.c.l.b16 %v1836
    %v5695 = vunpack.c.h.b16 %v1836
    %v5696 = vunpack.c.l.b16 %v1837
    %v5697 = vunpack.c.h.b16 %v1837
    %v5698 = vunpack.c.l.b16 %v1838
    %v5699 = vunpack.c.h.b16 %v1838
    %v5700 = vunpack.c.l.b16 %v1839
    %v5701 = vunpack.c.h.b16 %v1839
    %v5702 = vunpack.c.l.b16 %v1840
    %v5703 = vunpack.c.h.b16 %v1840
    %v5704 = vunpack.c.l.b16 %v1841
    %v5705 = vunpack.c.h.b16 %v1841
    %v5706 = vunpack.c.l.b16 %v1842
    %v5707 = vunpack.c.h.b16 %v1842
    %v5708 = vunpack.c.l.b16 %v1843
    %v5709 = vunpack.c.h.b16 %v1843
    %v5710 = vunpack.c.l.b16 %v1844
    %v5711 = vunpack.c.h.b16 %v1844
    %v5712 = vunpack.c.l.b16 %v1845
    %v5713 = vunpack.c.h.b16 %v1845
    %v5714 = vunpack.c.l.b16 %v1846
    %v5715 = vunpack.c.h.b16 %v1846
    %v5716 = vunpack.c.l.b16 %v1847
    %v5717 = vunpack.c.h.b16 %v1847
    %v5718 = vunpack.c.l.b16 %v1848
    %v5719 = vunpack.c.h.b16 %v1848
    %v5720 = vunpack.c.l.b16 %v1849
    %v5721 = vunpack.c.h.b16 %v1849
    %v5722 = vunpack.c.l.b16 %v1850
    %v5723 = vunpack.c.h.b16 %v1850
    %v5724 = vunpack.c.l.b16 %v1851
    %v5725 = vunpack.c.h.b16 %v1851
    %v5726 = vunpack.c.l.b16 %v1852
    %v5727 = vunpack.c.h.b16 %v1852
    %v5728 = vunpack.c.l.b16 %v1853
    %v5729 = vunpack.c.h.b16 %v1853
    %v5730 = vpack.c.b16 %v3186, %v3170
    %v5731 = vpack.c.b16 %v3187, %v3171
    %v5732 = vpack.c.b16 %v3188, %v3172
    %v5733 = vpack.c.b16 %v3189, %v3173
    %v5734 = vpack.c.b16 %v3190, %v3174
    %v5735 = vpack.c.b16 %v3191, %v3175
    %v5736 = vpack.c.b16 %v3192, %v3176
    %v5737 = vpack.c.b16 %v3193, %v3177
    %v5738 = vpack.c.b16 %v3194, %v3178
    %v5739 = vpack.c.b16 %v3195, %v3179
    %v5740 = vpack.c.b16 %v3196, %v3180
    %v5741 = vpack.c.b16 %v3197, %v3181
    %v5742 = vpack.c.b16 %v3198, %v3182
    %v5743 = vpack.c.b16 %v3199, %v3183
    %v5744 = vpack.c.b16 %v3200, %v3184
    %v5745 = vpack.c.b16 %v3201, %v3185
    %v5746 = vpack.c.b16 %v3218, %v3202
    %v5747 = vpack.c.b16 %v3219, %v3203
    %v5748 = vpack.c.b16 %v3220, %v3204
    %v5749 = vpack.c.b16 %v3221, %v3205
    %v5750 = vpack.c.b16 %v3222, %v3206
    %v5751 = vpack.c.b16 %v3223, %v3207
    %v5752 = vpack.c.b16 %v3224, %v3208
    %v5753 = vpack.c.b16 %v3225, %v3209
    %v5754 = vpack.c.b16 %v3226, %v3210
    %v5755 = vpack.c.b16 %v3227, %v3211
    %v5756 = vpack.c.b16 %v3228, %v3212
    %v5757 = vpack.c.b16 %v3229, %v3213
    %v5758 = vpack.c.b16 %v3230, %v3214
    %v5759 = vpack.c.b16 %v3231, %v3215
    %v5760 = vpack.c.b16 %v3232, %v3216
    %v5761 = vpack.c.b16 %v3233, %v3217
    %v5762 = vpack.c.b16 %v3250, %v3234
    %v5763 = vpack.c.b16 %v3251, %v3235
    %v5764 = vpack.c.b16 %v3252, %v3236
    %v5765 = vpack.c.b16 %v3253, %v3237
    %v5766 = vpack.c.b16 %v3254, %v3238
    %v5767 = vpack.c.b16 %v3255, %v3239
    %v5768 = vpack.c.b16 %v3256, %v3240
    %v5769 = vpack.c.b16 %v3257, %v3241
    %v5770 = vpack.c.b16 %v3258, %v3242
    %v5771 = vpack.c.b16 %v3259, %v3243
    %v5772 = vpack.c.b16 %v3260, %v3244
    %v5773 = vpack.c.b16 %v3261, %v3245
    %v5774 = vpack.c.b16 %v3262, %v3246
    %v5775 = vpack.c.b16 %v3263, %v3247
    %v5776 = vpack.c.b16 %v3264, %v3248
    %v5777 = vpack.c.b16 %v3265, %v3249
    %v5778 = vpack.c.b16 %v3282, %v3266
    %v5779 = vpack.c.b16 %v3283, %v3267
    %v5780 = vpack.c.b16 %v3284, %v3268
    %v5781 = vpack.c.b16 %v3285, %v3269
    %v5782 = vpack.c.b16 %v3286, %v3270
    %v5783 = vpack.c.b16 %v3287, %v3271
    %v5784 = vpack.c.b16 %v3288, %v3272
    %v5785 = vpack.c.b16 %v3289, %v3273
    %v5786 = vpack.c.b16 %v3290, %v3274
    %v5787 = vpack.c.b16 %v3291, %v3275
    %v5788 = vpack.c.b16 %v3292, %v3276
    %v5789 = vpack.c.b16 %v3293, %v3277
    %v5790 = vpack.c.b16 %v3294, %v3278
    %v5791 = vpack.c.b16 %v3295, %v3279
    %v5792 = vpack.c.b16 %v3296, %v3280
    %v5793 = vpack.c.b16 %v3297, %v3281
    %v5794 = vpack.c.b16 %v3314, %v3298
    %v5795 = vpack.c.b16 %v3315, %v3299
    %v5796 = vpack.c.b16 %v3316, %v3300
    %v5797 = vpack.c.b16 %v3317, %v3301
    %v5798 = vpack.c.b16 %v3318, %v3302
    %v5799 = vpack.c.b16 %v3319, %v3303
    %v5800 = vpack.c.b16 %v3320, %v3304
    %v5801 = vpack.c.b16 %v3321, %v3305
    %v5802 = vpack.c.b16 %v3322, %v3306
    %v5803 = vpack.c.b16 %v3323, %v3307
    %v5804 = vpack.c.b16 %v3324, %v3308
    %v5805 = vpack.c.b16 %v3325, %v3309
    %v5806 = vpack.c.b16 %v3326, %v3310
    %v5807 = vpack.c.b16 %v3327, %v3311
    %v5808 = vpack.c.b16 %v3328, %v3312
    %v5809 = vpack.c.b16 %v3329, %v3313
    %v5810 = vpack.c.b16 %v3346, %v3330
    %v5811 = vpack.c.b16 %v3347, %v3331
    %v5812 = vpack.c.b16 %v3348, %v3332
    %v5813 = vpack.c.b16 %v3349, %v3333
    %v5814 = vpack.c.b16 %v3350, %v3334
    %v5815 = vpack.c.b16 %v3351, %v3335
    %v5816 = vpack.c.b16 %v3352, %v3336
    %v5817 = vpack.c.b16 %v3353, %v3337
    %v5818 = vpack.c.b16 %v3354, %v3338
    %v5819 = vpack.c.b16 %v3355, %v3339
    %v5820 = vpack.c.b16 %v3356, %v3340
    %v5821 = vpack.c.b16 %v3357, %v3341
    %v5822 = vpack.c.b16 %v3358, %v3342
    %v5823 = vpack.c.b16 %v3359, %v3343
    %v5824 = vpack.c.b16 %v3360, %v3344
    %v5825 = vpack.c.b16 %v3361, %v3345
    %v5826 = vpack.c.b16 %v3378, %v3362
    %v5827 = vpack.c.b16 %v3379, %v3363
    %v5828 = vpack.c.b16 %v3380, %v3364
    %v5829 = vpack.c.b16 %v3381, %v3365
    %v5830 = vpack.c.b16 %v3382, %v3366
    %v5831 = vpack.c.b16 %v3383, %v3367
    %v5832 = vpack.c.b16 %v3384, %v3368
    %v5833 = vpack.c.b16 %v3385, %v3369
    %v5834 = vpack.c.b16 %v3386, %v3370
    %v5835 = vpack.c.b16 %v3387, %v3371
    %v5836 = vpack.c.b16 %v3388, %v3372
    %v5837 = vpack.c.b16 %v3389, %v3373
    %v5838 = vpack.c.b16 %v3390, %v3374
    %v5839 = vpack.c.b16 %v3391, %v3375
    %v5840 = vpack.c.b16 %v3392, %v3376
    %v5841 = vpack.c.b16 %v3393, %v3377
    %v5842 = vpack.c.b16 %v3410, %v3394
    %v5843 = vpack.c.b16 %v3411, %v3395
    %v5844 = vpack.c.b16 %v3412, %v3396
    %v5845 = vpack.c.b16 %v3413, %v3397
    %v5846 = vpack.c.b16 %v3414, %v3398
    %v5847 = vpack.c.b16 %v3415, %v3399
    %v5848 = vpack.c.b16 %v3416, %v3400
    %v5849 = vpack.c.b16 %v3417, %v3401
    %v5850 = vpack.c.b16 %v3418, %v3402
    %v5851 = vpack.c.b16 %v3419, %v3403
    %v5852 = vpack.c.b16 %v3420, %v3404
    %v5853 = vpack.c.b16 %v3421, %v3405
    %v5854 = vpack.c.b16 %v3422, %v3406
    %v5855 = vpack.c.b16 %v3423, %v3407
    %v5856 = vpack.c.b16 %v3424, %v3408
    %v5857 = vpack.c.b16 %v3425, %v3409
    %v5858 = vpack.c.b16 %v3442, %v3426
    %v5859 = vpack.c.b16 %v3443, %v3427
    %v5860 = vpack.c.b16 %v3444, %v3428
    %v5861 = vpack.c.b16 %v3445, %v3429
    %v5862 = vpack.c.b16 %v3446, %v3430
    %v5863 = vpack.c.b16 %v3447, %v3431
    %v5864 = vpack.c.b16 %v3448, %v3432
    %v5865 = vpack.c.b16 %v3449, %v3433
    %v5866 = vpack.c.b16 %v3450, %v3434
    %v5867 = vpack.c.b16 %v3451, %v3435
    %v5868 = vpack.c.b16 %v3452, %v3436
    %v5869 = vpack.c.b16 %v3453, %v3437
    %v5870 = vpack.c.b16 %v3454, %v3438
    %v5871 = vpack.c.b16 %v3455, %v3439
    %v5872 = vpack.c.b16 %v3456, %v3440
    %v5873 = vpack.c.b16 %v3457, %v3441
    %v5874 = vpack.c.b16 %v3474, %v3458
    %v5875 = vpack.c.b16 %v3475, %v3459
    %v5876 = vpack.c.b16 %v3476, %v3460
    %v5877 = vpack.c.b16 %v3477, %v3461
    %v5878 = vpack.c.b16 %v3478, %v3462
    %v5879 = vpack.c.b16 %v3479, %v3463
    %v5880 = vpack.c.b16 %v3480, %v3464
    %v5881 = vpack.c.b16 %v3481, %v3465
    %v5882 = vpack.c.b16 %v3482, %v3466
    %v5883 = vpack.c.b16 %v3483, %v3467
    %v5884 = vpack.c.b16 %v3484, %v3468
    %v5885 = vpack.c.b16 %v3485, %v3469
    %v5886 = vpack.c.b16 %v3486, %v3470
    %v5887 = vpack.c.b16 %v3487, %v3471
    %v5888 = vpack.c.b16 %v3488, %v3472
    %v5889 = vpack.c.b16 %v3489, %v3473
    %v5890 = vpack.c.b16 %v3506, %v3490
    %v5891 = vpack.c.b16 %v3507, %v3491
    %v5892 = vpack.c.b16 %v3508, %v3492
    %v5893 = vpack.c.b16 %v3509, %v3493
    %v5894 = vpack.c.b16 %v3510, %v3494
    %v5895 = vpack.c.b16 %v3511, %v3495
    %v5896 = vpack.c.b16 %v3512, %v3496
    %v5897 = vpack.c.b16 %v3513, %v3497
    %v5898 = vpack.c.b16 %v3514, %v3498
    %v5899 = vpack.c.b16 %v3515, %v3499
    %v5900 = vpack.c.b16 %v3516, %v3500
    %v5901 = vpack.c.b16 %v3517, %v3501
    %v5902 = vpack.c.b16 %v3518, %v3502
    %v5903 = vpack.c.b16 %v3519, %v3503
    %v5904 = vpack.c.b16 %v3520, %v3504
    %v5905 = vpack.c.b16 %v3521, %v3505
    %v5906 = vpack.c.b16 %v3538, %v3522
    %v5907 = vpack.c.b16 %v3539, %v3523
    %v5908 = vpack.c.b16 %v3540, %v3524
    %v5909 = vpack.c.b16 %v3541, %v3525
    %v5910 = vpack.c.b16 %v3542, %v3526
    %v5911 = vpack.c.b16 %v3543, %v3527
    %v5912 = vpack.c.b16 %v3544, %v3528
    %v5913 = vpack.c.b16 %v3545, %v3529
    %v5914 = vpack.c.b16 %v3546, %v3530
    %v5915 = vpack.c.b16 %v3547, %v3531
    %v5916 = vpack.c.b16 %v3548, %v3532
    %v5917 = vpack.c.b16 %v3549, %v3533
    %v5918 = vpack.c.b16 %v3550, %v3534
    %v5919 = vpack.c.b16 %v3551, %v3535
    %v5920 = vpack.c.b16 %v3552, %v3536
    %v5921 = vpack.c.b16 %v3553, %v3537
    %v5922 = vpack.c.b16 %v3570, %v3554
    %v5923 = vpack.c.b16 %v3571, %v3555
    %v5924 = vpack.c.b16 %v3572, %v3556
    %v5925 = vpack.c.b16 %v3573, %v3557
    %v5926 = vpack.c.b16 %v3574, %v3558
    %v5927 = vpack.c.b16 %v3575, %v3559
    %v5928 = vpack.c.b16 %v3576, %v3560
    %v5929 = vpack.c.b16 %v3577, %v3561
    %v5930 = vpack.c.b16 %v3578, %v3562
    %v5931 = vpack.c.b16 %v3579, %v3563
    %v5932 = vpack.c.b16 %v3580, %v3564
    %v5933 = vpack.c.b16 %v3581, %v3565
    %v5934 = vpack.c.b16 %v3582, %v3566
    %v5935 = vpack.c.b16 %v3583, %v3567
    %v5936 = vpack.c.b16 %v3584, %v3568
    %v5937 = vpack.c.b16 %v3585, %v3569
    %v5938 = vpack.c.b16 %v3602, %v3586
    %v5939 = vpack.c.b16 %v3603, %v3587
    %v5940 = vpack.c.b16 %v3604, %v3588
    %v5941 = vpack.c.b16 %v3605, %v3589
    %v5942 = vpack.c.b16 %v3606, %v3590
    %v5943 = vpack.c.b16 %v3607, %v3591
    %v5944 = vpack.c.b16 %v3608, %v3592
    %v5945 = vpack.c.b16 %v3609, %v3593
    %v5946 = vpack.c.b16 %v3610, %v3594
    %v5947 = vpack.c.b16 %v3611, %v3595
    %v5948 = vpack.c.b16 %v3612, %v3596
    %v5949 = vpack.c.b16 %v3613, %v3597
    %v5950 = vpack.c.b16 %v3614, %v3598
    %v5951 = vpack.c.b16 %v3615, %v3599
    %v5952 = vpack.c.b16 %v3616, %v3600
    %v5953 = vpack.c.b16 %v3617, %v3601
    %v5954 = vpack.c.b16 %v3634, %v3618
    %v5955 = vpack.c.b16 %v3635, %v3619
    %v5956 = vpack.c.b16 %v3636, %v3620
    %v5957 = vpack.c.b16 %v3637, %v3621
    %v5958 = vpack.c.b16 %v3638, %v3622
    %v5959 = vpack.c.b16 %v3639, %v3623
    %v5960 = vpack.c.b16 %v3640, %v3624
    %v5961 = vpack.c.b16 %v3641, %v3625
    %v5962 = vpack.c.b16 %v3642, %v3626
    %v5963 = vpack.c.b16 %v3643, %v3627
    %v5964 = vpack.c.b16 %v3644, %v3628
    %v5965 = vpack.c.b16 %v3645, %v3629
    %v5966 = vpack.c.b16 %v3646, %v3630
    %v5967 = vpack.c.b16 %v3647, %v3631
    %v5968 = vpack.c.b16 %v3648, %v3632
    %v5969 = vpack.c.b16 %v3649, %v3633
    %v5970 = vpack.c.b16 %v3666, %v3650
    %v5971 = vpack.c.b16 %v3667, %v3651
    %v5972 = vpack.c.b16 %v3668, %v3652
    %v5973 = vpack.c.b16 %v3669, %v3653
    %v5974 = vpack.c.b16 %v3670, %v3654
    %v5975 = vpack.c.b16 %v3671, %v3655
    %v5976 = vpack.c.b16 %v3672, %v3656
    %v5977 = vpack.c.b16 %v3673, %v3657
    %v5978 = vpack.c.b16 %v3674, %v3658
    %v5979 = vpack.c.b16 %v3675, %v3659
    %v5980 = vpack.c.b16 %v3676, %v3660
    %v5981 = vpack.c.b16 %v3677, %v3661
    %v5982 = vpack.c.b16 %v3678, %v3662
    %v5983 = vpack.c.b16 %v3679, %v3663
    %v5984 = vpack.c.b16 %v3680, %v3664
    %v5985 = vpack.c.b16 %v3681, %v3665
    %v5986 = vpack.c.b16 %v3698, %v3682
    %v5987 = vpack.c.b16 %v3699, %v3683
    %v5988 = vpack.c.b16 %v3700, %v3684
    %v5989 = vpack.c.b16 %v3701, %v3685
    %v5990 = vpack.c.b16 %v3702, %v3686
    %v5991 = vpack.c.b16 %v3703, %v3687
    %v5992 = vpack.c.b16 %v3704, %v3688
    %v5993 = vpack.c.b16 %v3705, %v3689
    %v5994 = vpack.c.b16 %v3706, %v3690
    %v5995 = vpack.c.b16 %v3707, %v3691
    %v5996 = vpack.c.b16 %v3708, %v3692
    %v5997 = vpack.c.b16 %v3709, %v3693
    %v5998 = vpack.c.b16 %v3710, %v3694
    %v5999 = vpack.c.b16 %v3711, %v3695
    %v6000 = vpack.c.b16 %v3712, %v3696
    %v6001 = vpack.c.b16 %v3713, %v3697
    %v6002 = vpack.c.b16 %v3730, %v3714
    %v6003 = vpack.c.b16 %v3731, %v3715
    %v6004 = vpack.c.b16 %v3732, %v3716
    %v6005 = vpack.c.b16 %v3733, %v3717
    %v6006 = vpack.c.b16 %v3734, %v3718
    %v6007 = vpack.c.b16 %v3735, %v3719
    %v6008 = vpack.c.b16 %v3736, %v3720
    %v6009 = vpack.c.b16 %v3737, %v3721
    %v6010 = vpack.c.b16 %v3738, %v3722
    %v6011 = vpack.c.b16 %v3739, %v3723
    %v6012 = vpack.c.b16 %v3740, %v3724
    %v6013 = vpack.c.b16 %v3741, %v3725
    %v6014 = vpack.c.b16 %v3742, %v3726
    %v6015 = vpack.c.b16 %v3743, %v3727
    %v6016 = vpack.c.b16 %v3744, %v3728
    %v6017 = vpack.c.b16 %v3745, %v3729
    %v6018 = vpack.c.b16 %v3762, %v3746
    %v6019 = vpack.c.b16 %v3763, %v3747
    %v6020 = vpack.c.b16 %v3764, %v3748
    %v6021 = vpack.c.b16 %v3765, %v3749
    %v6022 = vpack.c.b16 %v3766, %v3750
    %v6023 = vpack.c.b16 %v3767, %v3751
    %v6024 = vpack.c.b16 %v3768, %v3752
    %v6025 = vpack.c.b16 %v3769, %v3753
    %v6026 = vpack.c.b16 %v3770, %v3754
    %v6027 = vpack.c.b16 %v3771, %v3755
    %v6028 = vpack.c.b16 %v3772, %v3756
    %v6029 = vpack.c.b16 %v3773, %v3757
    %v6030 = vpack.c.b16 %v3774, %v3758
    %v6031 = vpack.c.b16 %v3775, %v3759
    %v6032 = vpack.c.b16 %v3776, %v3760
    %v6033 = vpack.c.b16 %v3777, %v3761
    %v6034 = vpack.c.b16 %v3794, %v3778
    %v6035 = vpack.c.b16 %v3795, %v3779
    %v6036 = vpack.c.b16 %v3796, %v3780
    %v6037 = vpack.c.b16 %v3797, %v3781
    %v6038 = vpack.c.b16 %v3798, %v3782
    %v6039 = vpack.c.b16 %v3799, %v3783
    %v6040 = vpack.c.b16 %v3800, %v3784
    %v6041 = vpack.c.b16 %v3801, %v3785
    %v6042 = vpack.c.b16 %v3802, %v3786
    %v6043 = vpack.c.b16 %v3803, %v3787
    %v6044 = vpack.c.b16 %v3804, %v3788
    %v6045 = vpack.c.b16 %v3805, %v3789
    %v6046 = vpack.c.b16 %v3806, %v3790
    %v6047 = vpack.c.b16 %v3807, %v3791
    %v6048 = vpack.c.b16 %v3808, %v3792
    %v6049 = vpack.c.b16 %v3809, %v3793
    %v6050 = vpack.c.b16 %v3826, %v3810
    %v6051 = vpack.c.b16 %v3827, %v3811
    %v6052 = vpack.c.b16 %v3828, %v3812
    %v6053 = vpack.c.b16 %v3829, %v3813
    %v6054 = vpack.c.b16 %v3830, %v3814
    %v6055 = vpack.c.b16 %v3831, %v3815
    %v6056 = vpack.c.b16 %v3832, %v3816
    %v6057 = vpack.c.b16 %v3833, %v3817
    %v6058 = vpack.c.b16 %v3834, %v3818
    %v6059 = vpack.c.b16 %v3835, %v3819
    %v6060 = vpack.c.b16 %v3836, %v3820
    %v6061 = vpack.c.b16 %v3837, %v3821
    %v6062 = vpack.c.b16 %v3838, %v3822
    %v6063 = vpack.c.b16 %v3839, %v3823
    %v6064 = vpack.c.b16 %v3840, %v3824
    %v6065 = vpack.c.b16 %v3841, %v3825
    %v6066 = vpack.c.b16 %v3858, %v3842
    %v6067 = vpack.c.b16 %v3859, %v3843
    %v6068 = vpack.c.b16 %v3860, %v3844
    %v6069 = vpack.c.b16 %v3861, %v3845
    %v6070 = vpack.c.b16 %v3862, %v3846
    %v6071 = vpack.c.b16 %v3863, %v3847
    %v6072 = vpack.c.b16 %v3864, %v3848
    %v6073 = vpack.c.b16 %v3865, %v3849
    %v6074 = vpack.c.b16 %v3866, %v3850
    %v6075 = vpack.c.b16 %v3867, %v3851
    %v6076 = vpack.c.b16 %v3868, %v3852
    %v6077 = vpack.c.b16 %v3869, %v3853
    %v6078 = vpack.c.b16 %v3870, %v3854
    %v6079 = vpack.c.b16 %v3871, %v3855
    %v6080 = vpack.c.b16 %v3872, %v3856
    %v6081 = vpack.c.b16 %v3873, %v3857
    %v6082 = vpack.c.b16 %v3890, %v3874
    %v6083 = vpack.c.b16 %v3891, %v3875
    %v6084 = vpack.c.b16 %v3892, %v3876
    %v6085 = vpack.c.b16 %v3893, %v3877
    %v6086 = vpack.c.b16 %v3894, %v3878
    %v6087 = vpack.c.b16 %v3895, %v3879
    %v6088 = vpack.c.b16 %v3896, %v3880
    %v6089 = vpack.c.b16 %v3897, %v3881
    %v6090 = vpack.c.b16 %v3898, %v3882
    %v6091 = vpack.c.b16 %v3899, %v3883
    %v6092 = vpack.c.b16 %v3900, %v3884
    %v6093 = vpack.c.b16 %v3901, %v3885
    %v6094 = vpack.c.b16 %v3902, %v3886
    %v6095 = vpack.c.b16 %v3903, %v3887
    %v6096 = vpack.c.b16 %v3904, %v3888
    %v6097 = vpack.c.b16 %v3905, %v3889
    %v6098 = vpack.c.b16 %v3922, %v3906
    %v6099 = vpack.c.b16 %v3923, %v3907
    %v6100 = vpack.c.b16 %v3924, %v3908
    %v6101 = vpack.c.b16 %v3925, %v3909
    %v6102 = vpack.c.b16 %v3926, %v3910
    %v6103 = vpack.c.b16 %v3927, %v3911
    %v6104 = vpack.c.b16 %v3928, %v3912
    %v6105 = vpack.c.b16 %v3929, %v3913
    %v6106 = vpack.c.b16 %v3930, %v3914
    %v6107 = vpack.c.b16 %v3931, %v3915
    %v6108 = vpack.c.b16 %v3932, %v3916
    %v6109 = vpack.c.b16 %v3933, %v3917
    %v6110 = vpack.c.b16 %v3934, %v3918
    %v6111 = vpack.c.b16 %v3935, %v3919
    %v6112 = vpack.c.b16 %v3936, %v3920
    %v6113 = vpack.c.b16 %v3937, %v3921
    %v6114 = vpack.c.b16 %v3954, %v3938
    %v6115 = vpack.c.b16 %v3955, %v3939
    %v6116 = vpack.c.b16 %v3956, %v3940
    %v6117 = vpack.c.b16 %v3957, %v3941
    %v6118 = vpack.c.b16 %v3958, %v3942
    %v6119 = vpack.c.b16 %v3959, %v3943
    %v6120 = vpack.c.b16 %v3960, %v3944
    %v6121 = vpack.c.b16 %v3961, %v3945
    %v6122 = vpack.c.b16 %v3962, %v3946
    %v6123 = vpack.c.b16 %v3963, %v3947
    %v6124 = vpack.c.b16 %v3964, %v3948
    %v6125 = vpack.c.b16 %v3965, %v3949
    %v6126 = vpack.c.b16 %v3966, %v3950
    %v6127 = vpack.c.b16 %v3967, %v3951
    %v6128 = vpack.c.b16 %v3968, %v3952
    %v6129 = vpack.c.b16 %v3969, %v3953
    %v6130 = vpack.c.b16 %v3986, %v3970
    %v6131 = vpack.c.b16 %v3987, %v3971
    %v6132 = vpack.c.b16 %v3988, %v3972
    %v6133 = vpack.c.b16 %v3989, %v3973
    %v6134 = vpack.c.b16 %v3990, %v3974
    %v6135 = vpack.c.b16 %v3991, %v3975
    %v6136 = vpack.c.b16 %v3992, %v3976
    %v6137 = vpack.c.b16 %v3993, %v3977
    %v6138 = vpack.c.b16 %v3994, %v3978
    %v6139 = vpack.c.b16 %v3995, %v3979
    %v6140 = vpack.c.b16 %v3996, %v3980
    %v6141 = vpack.c.b16 %v3997, %v3981
    %v6142 = vpack.c.b16 %v3998, %v3982
    %v6143 = vpack.c.b16 %v3999, %v3983
    %v6144 = vpack.c.b16 %v4000, %v3984
    %v6145 = vpack.c.b16 %v4001, %v3985
    %v6146 = vpack.c.b16 %v4018, %v4002
    %v6147 = vpack.c.b16 %v4019, %v4003
    %v6148 = vpack.c.b16 %v4020, %v4004
    %v6149 = vpack.c.b16 %v4021, %v4005
    %v6150 = vpack.c.b16 %v4022, %v4006
    %v6151 = vpack.c.b16 %v4023, %v4007
    %v6152 = vpack.c.b16 %v4024, %v4008
    %v6153 = vpack.c.b16 %v4025, %v4009
    %v6154 = vpack.c.b16 %v4026, %v4010
    %v6155 = vpack.c.b16 %v4027, %v4011
    %v6156 = vpack.c.b16 %v4028, %v4012
    %v6157 = vpack.c.b16 %v4029, %v4013
    %v6158 = vpack.c.b16 %v4030, %v4014
    %v6159 = vpack.c.b16 %v4031, %v4015
    %v6160 = vpack.c.b16 %v4032, %v4016
    %v6161 = vpack.c.b16 %v4033, %v4017
    %v6162 = vpack.c.b16 %v4050, %v4034
    %v6163 = vpack.c.b16 %v4051, %v4035
    %v6164 = vpack.c.b16 %v4052, %v4036
    %v6165 = vpack.c.b16 %v4053, %v4037
    %v6166 = vpack.c.b16 %v4054, %v4038
    %v6167 = vpack.c.b16 %v4055, %v4039
    %v6168 = vpack.c.b16 %v4056, %v4040
    %v6169 = vpack.c.b16 %v4057, %v4041
    %v6170 = vpack.c.b16 %v4058, %v4042
    %v6171 = vpack.c.b16 %v4059, %v4043
    %v6172 = vpack.c.b16 %v4060, %v4044
    %v6173 = vpack.c.b16 %v4061, %v4045
    %v6174 = vpack.c.b16 %v4062, %v4046
    %v6175 = vpack.c.b16 %v4063, %v4047
    %v6176 = vpack.c.b16 %v4064, %v4048
    %v6177 = vpack.c.b16 %v4065, %v4049
    %v6178 = vpack.c.b16 %v4082, %v4066
    %v6179 = vpack.c.b16 %v4083, %v4067
    %v6180 = vpack.c.b16 %v4084, %v4068
    %v6181 = vpack.c.b16 %v4085, %v4069
    %v6182 = vpack.c.b16 %v4086, %v4070
    %v6183 = vpack.c.b16 %v4087, %v4071
    %v6184 = vpack.c.b16 %v4088, %v4072
    %v6185 = vpack.c.b16 %v4089, %v4073
    %v6186 = vpack.c.b16 %v4090, %v4074
    %v6187 = vpack.c.b16 %v4091, %v4075
    %v6188 = vpack.c.b16 %v4092, %v4076
    %v6189 = vpack.c.b16 %v4093, %v4077
    %v6190 = vpack.c.b16 %v4094, %v4078
    %v6191 = vpack.c.b16 %v4095, %v4079
    %v6192 = vpack.c.b16 %v4096, %v4080
    %v6193 = vpack.c.b16 %v4097, %v4081
    %v6194 = vpack.c.b16 %v4114, %v4098
    %v6195 = vpack.c.b16 %v4115, %v4099
    %v6196 = vpack.c.b16 %v4116, %v4100
    %v6197 = vpack.c.b16 %v4117, %v4101
    %v6198 = vpack.c.b16 %v4118, %v4102
    %v6199 = vpack.c.b16 %v4119, %v4103
    %v6200 = vpack.c.b16 %v4120, %v4104
    %v6201 = vpack.c.b16 %v4121, %v4105
    %v6202 = vpack.c.b16 %v4122, %v4106
    %v6203 = vpack.c.b16 %v4123, %v4107
    %v6204 = vpack.c.b16 %v4124, %v4108
    %v6205 = vpack.c.b16 %v4125, %v4109
    %v6206 = vpack.c.b16 %v4126, %v4110
    %v6207 = vpack.c.b16 %v4127, %v4111
    %v6208 = vpack.c.b16 %v4128, %v4112
    %v6209 = vpack.c.b16 %v4129, %v4113
    %v6210 = vpack.c.b16 %v4146, %v4130
    %v6211 = vpack.c.b16 %v4147, %v4131
    %v6212 = vpack.c.b16 %v4148, %v4132
    %v6213 = vpack.c.b16 %v4149, %v4133
    %v6214 = vpack.c.b16 %v4150, %v4134
    %v6215 = vpack.c.b16 %v4151, %v4135
    %v6216 = vpack.c.b16 %v4152, %v4136
    %v6217 = vpack.c.b16 %v4153, %v4137
    %v6218 = vpack.c.b16 %v4154, %v4138
    %v6219 = vpack.c.b16 %v4155, %v4139
    %v6220 = vpack.c.b16 %v4156, %v4140
    %v6221 = vpack.c.b16 %v4157, %v4141
    %v6222 = vpack.c.b16 %v4158, %v4142
    %v6223 = vpack.c.b16 %v4159, %v4143
    %v6224 = vpack.c.b16 %v4160, %v4144
    %v6225 = vpack.c.b16 %v4161, %v4145
    %v6226 = vpack.c.b16 %v4178, %v4162
    %v6227 = vpack.c.b16 %v4179, %v4163
    %v6228 = vpack.c.b16 %v4180, %v4164
    %v6229 = vpack.c.b16 %v4181, %v4165
    %v6230 = vpack.c.b16 %v4182, %v4166
    %v6231 = vpack.c.b16 %v4183, %v4167
    %v6232 = vpack.c.b16 %v4184, %v4168
    %v6233 = vpack.c.b16 %v4185, %v4169
    %v6234 = vpack.c.b16 %v4186, %v4170
    %v6235 = vpack.c.b16 %v4187, %v4171
    %v6236 = vpack.c.b16 %v4188, %v4172
    %v6237 = vpack.c.b16 %v4189, %v4173
    %v6238 = vpack.c.b16 %v4190, %v4174
    %v6239 = vpack.c.b16 %v4191, %v4175
    %v6240 = vpack.c.b16 %v4192, %v4176
    %v6241 = vpack.c.b16 %v4193, %v4177
    %v6242 = vpack.c.b16 %v4210, %v4194
    %v6243 = vpack.c.b16 %v4211, %v4195
    %v6244 = vpack.c.b16 %v4212, %v4196
    %v6245 = vpack.c.b16 %v4213, %v4197
    %v6246 = vpack.c.b16 %v4214, %v4198
    %v6247 = vpack.c.b16 %v4215, %v4199
    %v6248 = vpack.c.b16 %v4216, %v4200
    %v6249 = vpack.c.b16 %v4217, %v4201
    %v6250 = vpack.c.b16 %v4218, %v4202
    %v6251 = vpack.c.b16 %v4219, %v4203
    %v6252 = vpack.c.b16 %v4220, %v4204
    %v6253 = vpack.c.b16 %v4221, %v4205
    %v6254 = vpack.c.b16 %v4222, %v4206
    %v6255 = vpack.c.b16 %v4223, %v4207
    %v6256 = vpack.c.b16 %v4224, %v4208
    %v6257 = vpack.c.b16 %v4225, %v4209
    %v6258 = vpack.c.b16 %v4242, %v4226
    %v6259 = vpack.c.b16 %v4243, %v4227
    %v6260 = vpack.c.b16 %v4244, %v4228
    %v6261 = vpack.c.b16 %v4245, %v4229
    %v6262 = vpack.c.b16 %v4246, %v4230
    %v6263 = vpack.c.b16 %v4247, %v4231
    %v6264 = vpack.c.b16 %v4248, %v4232
    %v6265 = vpack.c.b16 %v4249, %v4233
    %v6266 = vpack.c.b16 %v4250, %v4234
    %v6267 = vpack.c.b16 %v4251, %v4235
    %v6268 = vpack.c.b16 %v4252, %v4236
    %v6269 = vpack.c.b16 %v4253, %v4237
    %v6270 = vpack.c.b16 %v4254, %v4238
    %v6271 = vpack.c.b16 %v4255, %v4239
    %v6272 = vpack.c.b16 %v4256, %v4240
    %v6273 = vpack.c.b16 %v4257, %v4241
    %v6274 = vpack.c.b16 %v4274, %v4258
    %v6275 = vpack.c.b16 %v4275, %v4259
    %v6276 = vpack.c.b16 %v4276, %v4260
    %v6277 = vpack.c.b16 %v4277, %v4261
    %v6278 = vpack.c.b16 %v4278, %v4262
    %v6279 = vpack.c.b16 %v4279, %v4263
    %v6280 = vpack.c.b16 %v4280, %v4264
    %v6281 = vpack.c.b16 %v4281, %v4265
    %v6282 = vpack.c.b16 %v4282, %v4266
    %v6283 = vpack.c.b16 %v4283, %v4267
    %v6284 = vpack.c.b16 %v4284, %v4268
    %v6285 = vpack.c.b16 %v4285, %v4269
    %v6286 = vpack.c.b16 %v4286, %v4270
    %v6287 = vpack.c.b16 %v4287, %v4271
    %v6288 = vpack.c.b16 %v4288, %v4272
    %v6289 = vpack.c.b16 %v4289, %v4273
    %v6290 = vpack.c.b16 %v4306, %v4290
    %v6291 = vpack.c.b16 %v4307, %v4291
    %v6292 = vpack.c.b16 %v4308, %v4292
    %v6293 = vpack.c.b16 %v4309, %v4293
    %v6294 = vpack.c.b16 %v4310, %v4294
    %v6295 = vpack.c.b16 %v4311, %v4295
    %v6296 = vpack.c.b16 %v4312, %v4296
    %v6297 = vpack.c.b16 %v4313, %v4297
    %v6298 = vpack.c.b16 %v4314, %v4298
    %v6299 = vpack.c.b16 %v4315, %v4299
    %v6300 = vpack.c.b16 %v4316, %v4300
    %v6301 = vpack.c.b16 %v4317, %v4301
    %v6302 = vpack.c.b16 %v4318, %v4302
    %v6303 = vpack.c.b16 %v4319, %v4303
    %v6304 = vpack.c.b16 %v4320, %v4304
    %v6305 = vpack.c.b16 %v4321, %v4305
    %v6306 = vpack.c.b16 %v4338, %v4322
    %v6307 = vpack.c.b16 %v4339, %v4323
    %v6308 = vpack.c.b16 %v4340, %v4324
    %v6309 = vpack.c.b16 %v4341, %v4325
    %v6310 = vpack.c.b16 %v4342, %v4326
    %v6311 = vpack.c.b16 %v4343, %v4327
    %v6312 = vpack.c.b16 %v4344, %v4328
    %v6313 = vpack.c.b16 %v4345, %v4329
    %v6314 = vpack.c.b16 %v4346, %v4330
    %v6315 = vpack.c.b16 %v4347, %v4331
    %v6316 = vpack.c.b16 %v4348, %v4332
    %v6317 = vpack.c.b16 %v4349, %v4333
    %v6318 = vpack.c.b16 %v4350, %v4334
    %v6319 = vpack.c.b16 %v4351, %v4335
    %v6320 = vpack.c.b16 %v4352, %v4336
    %v6321 = vpack.c.b16 %v4353, %v4337
    %v6322 = vpack.c.b16 %v4370, %v4354
    %v6323 = vpack.c.b16 %v4371, %v4355
    %v6324 = vpack.c.b16 %v4372, %v4356
    %v6325 = vpack.c.b16 %v4373, %v4357
    %v6326 = vpack.c.b16 %v4374, %v4358
    %v6327 = vpack.c.b16 %v4375, %v4359
    %v6328 = vpack.c.b16 %v4376, %v4360
    %v6329 = vpack.c.b16 %v4377, %v4361
    %v6330 = vpack.c.b16 %v4378, %v4362
    %v6331 = vpack.c.b16 %v4379, %v4363
    %v6332 = vpack.c.b16 %v4380, %v4364
    %v6333 = vpack.c.b16 %v4381, %v4365
    %v6334 = vpack.c.b16 %v4382, %v4366
    %v6335 = vpack.c.b16 %v4383, %v4367
    %v6336 = vpack.c.b16 %v4384, %v4368
    %v6337 = vpack.c.b16 %v4385, %v4369
    %v6338 = vpack.c.b16 %v4402, %v4386
    %v6339 = vpack.c.b16 %v4403, %v4387
    %v6340 = vpack.c.b16 %v4404, %v4388
    %v6341 = vpack.c.b16 %v4405, %v4389
    %v6342 = vpack.c.b16 %v4406, %v4390
    %v6343 = vpack.c.b16 %v4407, %v4391
    %v6344 = vpack.c.b16 %v4408, %v4392
    %v6345 = vpack.c.b16 %v4409, %v4393
    %v6346 = vpack.c.b16 %v4410, %v4394
    %v6347 = vpack.c.b16 %v4411, %v4395
    %v6348 = vpack.c.b16 %v4412, %v4396
    %v6349 = vpack.c.b16 %v4413, %v4397
    %v6350 = vpack.c.b16 %v4414, %v4398
    %v6351 = vpack.c.b16 %v4415, %v4399
    %v6352 = vpack.c.b16 %v4416, %v4400
    %v6353 = vpack.c.b16 %v4417, %v4401
    %v6354 = vpack.c.b16 %v4434, %v4418
    %v6355 = vpack.c.b16 %v4435, %v4419
    %v6356 = vpack.c.b16 %v4436, %v4420
    %v6357 = vpack.c.b16 %v4437, %v4421
    %v6358 = vpack.c.b16 %v4438, %v4422
    %v6359 = vpack.c.b16 %v4439, %v4423
    %v6360 = vpack.c.b16 %v4440, %v4424
    %v6361 = vpack.c.b16 %v4441, %v4425
    %v6362 = vpack.c.b16 %v4442, %v4426
    %v6363 = vpack.c.b16 %v4443, %v4427
    %v6364 = vpack.c.b16 %v4444, %v4428
    %v6365 = vpack.c.b16 %v4445, %v4429
    %v6366 = vpack.c.b16 %v4446, %v4430
    %v6367 = vpack.c.b16 %v4447, %v4431
    %v6368 = vpack.c.b16 %v4448, %v4432
    %v6369 = vpack.c.b16 %v4449, %v4433
    %v6370 = vpack.c.b16 %v4466, %v4450
    %v6371 = vpack.c.b16 %v4467, %v4451
    %v6372 = vpack.c.b16 %v4468, %v4452
    %v6373 = vpack.c.b16 %v4469, %v4453
    %v6374 = vpack.c.b16 %v4470, %v4454
    %v6375 = vpack.c.b16 %v4471, %v4455
    %v6376 = vpack.c.b16 %v4472, %v4456
    %v6377 = vpack.c.b16 %v4473, %v4457
    %v6378 = vpack.c.b16 %v4474, %v4458
    %v6379 = vpack.c.b16 %v4475, %v4459
    %v6380 = vpack.c.b16 %v4476, %v4460
    %v6381 = vpack.c.b16 %v4477, %v4461
    %v6382 = vpack.c.b16 %v4478, %v4462
    %v6383 = vpack.c.b16 %v4479, %v4463
    %v6384 = vpack.c.b16 %v4480, %v4464
    %v6385 = vpack.c.b16 %v4481, %v4465
    %v6386 = vpack.c.b16 %v4498, %v4482
    %v6387 = vpack.c.b16 %v4499, %v4483
    %v6388 = vpack.c.b16 %v4500, %v4484
    %v6389 = vpack.c.b16 %v4501, %v4485
    %v6390 = vpack.c.b16 %v4502, %v4486
    %v6391 = vpack.c.b16 %v4503, %v4487
    %v6392 = vpack.c.b16 %v4504, %v4488
    %v6393 = vpack.c.b16 %v4505, %v4489
    %v6394 = vpack.c.b16 %v4506, %v4490
    %v6395 = vpack.c.b16 %v4507, %v4491
    %v6396 = vpack.c.b16 %v4508, %v4492
    %v6397 = vpack.c.b16 %v4509, %v4493
    %v6398 = vpack.c.b16 %v4510, %v4494
    %v6399 = vpack.c.b16 %v4511, %v4495
    %v6400 = vpack.c.b16 %v4512, %v4496
    %v6401 = vpack.c.b16 %v4513, %v4497
    %v6402 = vpack.c.b16 %v4530, %v4514
    %v6403 = vpack.c.b16 %v4531, %v4515
    %v6404 = vpack.c.b16 %v4532, %v4516
    %v6405 = vpack.c.b16 %v4533, %v4517
    %v6406 = vpack.c.b16 %v4534, %v4518
    %v6407 = vpack.c.b16 %v4535, %v4519
    %v6408 = vpack.c.b16 %v4536, %v4520
    %v6409 = vpack.c.b16 %v4537, %v4521
    %v6410 = vpack.c.b16 %v4538, %v4522
    %v6411 = vpack.c.b16 %v4539, %v4523
    %v6412 = vpack.c.b16 %v4540, %v4524
    %v6413 = vpack.c.b16 %v4541, %v4525
    %v6414 = vpack.c.b16 %v4542, %v4526
    %v6415 = vpack.c.b16 %v4543, %v4527
    %v6416 = vpack.c.b16 %v4544, %v4528
    %v6417 = vpack.c.b16 %v4545, %v4529
    %v6418 = vpack.c.b16 %v4562, %v4546
    %v6419 = vpack.c.b16 %v4563, %v4547
    %v6420 = vpack.c.b16 %v4564, %v4548
    %v6421 = vpack.c.b16 %v4565, %v4549
    %v6422 = vpack.c.b16 %v4566, %v4550
    %v6423 = vpack.c.b16 %v4567, %v4551
    %v6424 = vpack.c.b16 %v4568, %v4552
    %v6425 = vpack.c.b16 %v4569, %v4553
    %v6426 = vpack.c.b16 %v4570, %v4554
    %v6427 = vpack.c.b16 %v4571, %v4555
    %v6428 = vpack.c.b16 %v4572, %v4556
    %v6429 = vpack.c.b16 %v4573, %v4557
    %v6430 = vpack.c.b16 %v4574, %v4558
    %v6431 = vpack.c.b16 %v4575, %v4559
    %v6432 = vpack.c.b16 %v4576, %v4560
    %v6433 = vpack.c.b16 %v4577, %v4561
    %v6434 = vpack.c.b16 %v4594, %v4578
    %v6435 = vpack.c.b16 %v4595, %v4579
    %v6436 = vpack.c.b16 %v4596, %v4580
    %v6437 = vpack.c.b16 %v4597, %v4581
    %v6438 = vpack.c.b16 %v4598, %v4582
    %v6439 = vpack.c.b16 %v4599, %v4583
    %v6440 = vpack.c.b16 %v4600, %v4584
    %v6441 = vpack.c.b16 %v4601, %v4585
    %v6442 = vpack.c.b16 %v4602, %v4586
    %v6443 = vpack.c.b16 %v4603, %v4587
    %v6444 = vpack.c.b16 %v4604, %v4588
    %v6445 = vpack.c.b16 %v4605, %v4589
    %v6446 = vpack.c.b16 %v4606, %v4590
    %v6447 = vpack.c.b16 %v4607, %v4591
    %v6448 = vpack.c.b16 %v4608, %v4592
    %v6449 = vpack.c.b16 %v4609, %v4593
    %v6450 = vpack.c.b16 %v4626, %v4610
    %v6451 = vpack.c.b16 %v4627, %v4611
    %v6452 = vpack.c.b16 %v4628, %v4612
    %v6453 = vpack.c.b16 %v4629, %v4613
    %v6454 = vpack.c.b16 %v4630, %v4614
    %v6455 = vpack.c.b16 %v4631, %v4615
    %v6456 = vpack.c.b16 %v4632, %v4616
    %v6457 = vpack.c.b16 %v4633, %v4617
    %v6458 = vpack.c.b16 %v4634, %v4618
    %v6459 = vpack.c.b16 %v4635, %v4619
    %v6460 = vpack.c.b16 %v4636, %v4620
    %v6461 = vpack.c.b16 %v4637, %v4621
    %v6462 = vpack.c.b16 %v4638, %v4622
    %v6463 = vpack.c.b16 %v4639, %v4623
    %v6464 = vpack.c.b16 %v4640, %v4624
    %v6465 = vpack.c.b16 %v4641, %v4625
    %v6466 = vpack.c.b16 %v4658, %v4642
    %v6467 = vpack.c.b16 %v4659, %v4643
    %v6468 = vpack.c.b16 %v4660, %v4644
    %v6469 = vpack.c.b16 %v4661, %v4645
    %v6470 = vpack.c.b16 %v4662, %v4646
    %v6471 = vpack.c.b16 %v4663, %v4647
    %v6472 = vpack.c.b16 %v4664, %v4648
    %v6473 = vpack.c.b16 %v4665, %v4649
    %v6474 = vpack.c.b16 %v4666, %v4650
    %v6475 = vpack.c.b16 %v4667, %v4651
    %v6476 = vpack.c.b16 %v4668, %v4652
    %v6477 = vpack.c.b16 %v4669, %v4653
    %v6478 = vpack.c.b16 %v4670, %v4654
    %v6479 = vpack.c.b16 %v4671, %v4655
    %v6480 = vpack.c.b16 %v4672, %v4656
    %v6481 = vpack.c.b16 %v4673, %v4657
    %v6482 = vpack.c.b16 %v4690, %v4674
    %v6483 = vpack.c.b16 %v4691, %v4675
    %v6484 = vpack.c.b16 %v4692, %v4676
    %v6485 = vpack.c.b16 %v4693, %v4677
    %v6486 = vpack.c.b16 %v4694, %v4678
    %v6487 = vpack.c.b16 %v4695, %v4679
    %v6488 = vpack.c.b16 %v4696, %v4680
    %v6489 = vpack.c.b16 %v4697, %v4681
    %v6490 = vpack.c.b16 %v4698, %v4682
    %v6491 = vpack.c.b16 %v4699, %v4683
    %v6492 = vpack.c.b16 %v4700, %v4684
    %v6493 = vpack.c.b16 %v4701, %v4685
    %v6494 = vpack.c.b16 %v4702, %v4686
    %v6495 = vpack.c.b16 %v4703, %v4687
    %v6496 = vpack.c.b16 %v4704, %v4688
    %v6497 = vpack.c.b16 %v4705, %v4689
    %v6498 = vpack.c.b16 %v4722, %v4706
    %v6499 = vpack.c.b16 %v4723, %v4707
    %v6500 = vpack.c.b16 %v4724, %v4708
    %v6501 = vpack.c.b16 %v4725, %v4709
    %v6502 = vpack.c.b16 %v4726, %v4710
    %v6503 = vpack.c.b16 %v4727, %v4711
    %v6504 = vpack.c.b16 %v4728, %v4712
    %v6505 = vpack.c.b16 %v4729, %v4713
    %v6506 = vpack.c.b16 %v4730, %v4714
    %v6507 = vpack.c.b16 %v4731, %v4715
    %v6508 = vpack.c.b16 %v4732, %v4716
    %v6509 = vpack.c.b16 %v4733, %v4717
    %v6510 = vpack.c.b16 %v4734, %v4718
    %v6511 = vpack.c.b16 %v4735, %v4719
    %v6512 = vpack.c.b16 %v4736, %v4720
    %v6513 = vpack.c.b16 %v4737, %v4721
    %v6514 = vpack.c.b16 %v4754, %v4738
    %v6515 = vpack.c.b16 %v4755, %v4739
    %v6516 = vpack.c.b16 %v4756, %v4740
    %v6517 = vpack.c.b16 %v4757, %v4741
    %v6518 = vpack.c.b16 %v4758, %v4742
    %v6519 = vpack.c.b16 %v4759, %v4743
    %v6520 = vpack.c.b16 %v4760, %v4744
    %v6521 = vpack.c.b16 %v4761, %v4745
    %v6522 = vpack.c.b16 %v4762, %v4746
    %v6523 = vpack.c.b16 %v4763, %v4747
    %v6524 = vpack.c.b16 %v4764, %v4748
    %v6525 = vpack.c.b16 %v4765, %v4749
    %v6526 = vpack.c.b16 %v4766, %v4750
    %v6527 = vpack.c.b16 %v4767, %v4751
    %v6528 = vpack.c.b16 %v4768, %v4752
    %v6529 = vpack.c.b16 %v4769, %v4753
    %v6530 = vpack.c.b16 %v4786, %v4770
    %v6531 = vpack.c.b16 %v4787, %v4771
    %v6532 = vpack.c.b16 %v4788, %v4772
    %v6533 = vpack.c.b16 %v4789, %v4773
    %v6534 = vpack.c.b16 %v4790, %v4774
    %v6535 = vpack.c.b16 %v4791, %v4775
    %v6536 = vpack.c.b16 %v4792, %v4776
    %v6537 = vpack.c.b16 %v4793, %v4777
    %v6538 = vpack.c.b16 %v4794, %v4778
    %v6539 = vpack.c.b16 %v4795, %v4779
    %v6540 = vpack.c.b16 %v4796, %v4780
    %v6541 = vpack.c.b16 %v4797, %v4781
    %v6542 = vpack.c.b16 %v4798, %v4782
    %v6543 = vpack.c.b16 %v4799, %v4783
    %v6544 = vpack.c.b16 %v4800, %v4784
    %v6545 = vpack.c.b16 %v4801, %v4785
    %v6546 = vpack.c.b16 %v4818, %v4802
    %v6547 = vpack.c.b16 %v4819, %v4803
    %v6548 = vpack.c.b16 %v4820, %v4804
    %v6549 = vpack.c.b16 %v4821, %v4805
    %v6550 = vpack.c.b16 %v4822, %v4806
    %v6551 = vpack.c.b16 %v4823, %v4807
    %v6552 = vpack.c.b16 %v4824, %v4808
    %v6553 = vpack.c.b16 %v4825, %v4809
    %v6554 = vpack.c.b16 %v4826, %v4810
    %v6555 = vpack.c.b16 %v4827, %v4811
    %v6556 = vpack.c.b16 %v4828, %v4812
    %v6557 = vpack.c.b16 %v4829, %v4813
    %v6558 = vpack.c.b16 %v4830, %v4814
    %v6559 = vpack.c.b16 %v4831, %v4815
    %v6560 = vpack.c.b16 %v4832, %v4816
    %v6561 = vpack.c.b16 %v4833, %v4817
    %v6562 = vpack.c.b16 %v4850, %v4834
    %v6563 = vpack.c.b16 %v4851, %v4835
    %v6564 = vpack.c.b16 %v4852, %v4836
    %v6565 = vpack.c.b16 %v4853, %v4837
    %v6566 = vpack.c.b16 %v4854, %v4838
    %v6567 = vpack.c.b16 %v4855, %v4839
    %v6568 = vpack.c.b16 %v4856, %v4840
    %v6569 = vpack.c.b16 %v4857, %v4841
    %v6570 = vpack.c.b16 %v4858, %v4842
    %v6571 = vpack.c.b16 %v4859, %v4843
    %v6572 = vpack.c.b16 %v4860, %v4844
    %v6573 = vpack.c.b16 %v4861, %v4845
    %v6574 = vpack.c.b16 %v4862, %v4846
    %v6575 = vpack.c.b16 %v4863, %v4847
    %v6576 = vpack.c.b16 %v4864, %v4848
    %v6577 = vpack.c.b16 %v4865, %v4849
    %v6578 = vpack.c.b16 %v4882, %v4866
    %v6579 = vpack.c.b16 %v4883, %v4867
    %v6580 = vpack.c.b16 %v4884, %v4868
    %v6581 = vpack.c.b16 %v4885, %v4869
    %v6582 = vpack.c.b16 %v4886, %v4870
    %v6583 = vpack.c.b16 %v4887, %v4871
    %v6584 = vpack.c.b16 %v4888, %v4872
    %v6585 = vpack.c.b16 %v4889, %v4873
    %v6586 = vpack.c.b16 %v4890, %v4874
    %v6587 = vpack.c.b16 %v4891, %v4875
    %v6588 = vpack.c.b16 %v4892, %v4876
    %v6589 = vpack.c.b16 %v4893, %v4877
    %v6590 = vpack.c.b16 %v4894, %v4878
    %v6591 = vpack.c.b16 %v4895, %v4879
    %v6592 = vpack.c.b16 %v4896, %v4880
    %v6593 = vpack.c.b16 %v4897, %v4881
    %v6594 = vpack.c.b16 %v4914, %v4898
    %v6595 = vpack.c.b16 %v4915, %v4899
    %v6596 = vpack.c.b16 %v4916, %v4900
    %v6597 = vpack.c.b16 %v4917, %v4901
    %v6598 = vpack.c.b16 %v4918, %v4902
    %v6599 = vpack.c.b16 %v4919, %v4903
    %v6600 = vpack.c.b16 %v4920, %v4904
    %v6601 = vpack.c.b16 %v4921, %v4905
    %v6602 = vpack.c.b16 %v4922, %v4906
    %v6603 = vpack.c.b16 %v4923, %v4907
    %v6604 = vpack.c.b16 %v4924, %v4908
    %v6605 = vpack.c.b16 %v4925, %v4909
    %v6606 = vpack.c.b16 %v4926, %v4910
    %v6607 = vpack.c.b16 %v4927, %v4911
    %v6608 = vpack.c.b16 %v4928, %v4912
    %v6609 = vpack.c.b16 %v4929, %v4913
    %v6610 = vpack.c.b16 %v4946, %v4930
    %v6611 = vpack.c.b16 %v4947, %v4931
    %v6612 = vpack.c.b16 %v4948, %v4932
    %v6613 = vpack.c.b16 %v4949, %v4933
    %v6614 = vpack.c.b16 %v4950, %v4934
    %v6615 = vpack.c.b16 %v4951, %v4935
    %v6616 = vpack.c.b16 %v4952, %v4936
    %v6617 = vpack.c.b16 %v4953, %v4937
    %v6618 = vpack.c.b16 %v4954, %v4938
    %v6619 = vpack.c.b16 %v4955, %v4939
    %v6620 = vpack.c.b16 %v4956, %v4940
    %v6621 = vpack.c.b16 %v4957, %v4941
    %v6622 = vpack.c.b16 %v4958, %v4942
    %v6623 = vpack.c.b16 %v4959, %v4943
    %v6624 = vpack.c.b16 %v4960, %v4944
    %v6625 = vpack.c.b16 %v4961, %v4945
    %v6626 = vpack.c.b16 %v4978, %v4962
    %v6627 = vpack.c.b16 %v4979, %v4963
    %v6628 = vpack.c.b16 %v4980, %v4964
    %v6629 = vpack.c.b16 %v4981, %v4965
    %v6630 = vpack.c.b16 %v4982, %v4966
    %v6631 = vpack.c.b16 %v4983, %v4967
    %v6632 = vpack.c.b16 %v4984, %v4968
    %v6633 = vpack.c.b16 %v4985, %v4969
    %v6634 = vpack.c.b16 %v4986, %v4970
    %v6635 = vpack.c.b16 %v4987, %v4971
    %v6636 = vpack.c.b16 %v4988, %v4972
    %v6637 = vpack.c.b16 %v4989, %v4973
    %v6638 = vpack.c.b16 %v4990, %v4974
    %v6639 = vpack.c.b16 %v4991, %v4975
    %v6640 = vpack.c.b16 %v4992, %v4976
    %v6641 = vpack.c.b16 %v4993, %v4977
    %v6642 = vpack.c.b16 %v5010, %v4994
    %v6643 = vpack.c.b16 %v5011, %v4995
    %v6644 = vpack.c.b16 %v5012, %v4996
    %v6645 = vpack.c.b16 %v5013, %v4997
    %v6646 = vpack.c.b16 %v5014, %v4998
    %v6647 = vpack.c.b16 %v5015, %v4999
    %v6648 = vpack.c.b16 %v5016, %v5000
    %v6649 = vpack.c.b16 %v5017, %v5001
    %v6650 = vpack.c.b16 %v5018, %v5002
    %v6651 = vpack.c.b16 %v5019, %v5003
    %v6652 = vpack.c.b16 %v5020, %v5004
    %v6653 = vpack.c.b16 %v5021, %v5005
    %v6654 = vpack.c.b16 %v5022, %v5006
    %v6655 = vpack.c.b16 %v5023, %v5007
    %v6656 = vpack.c.b16 %v5024, %v5008
    %v6657 = vpack.c.b16 %v5025, %v5009
    %v6658 = vpack.c.b16 %v5042, %v5026
    %v6659 = vpack.c.b16 %v5043, %v5027
    %v6660 = vpack.c.b16 %v5044, %v5028
    %v6661 = vpack.c.b16 %v5045, %v5029
    %v6662 = vpack.c.b16 %v5046, %v5030
    %v6663 = vpack.c.b16 %v5047, %v5031
    %v6664 = vpack.c.b16 %v5048, %v5032
    %v6665 = vpack.c.b16 %v5049, %v5033
    %v6666 = vpack.c.b16 %v5050, %v5034
    %v6667 = vpack.c.b16 %v5051, %v5035
    %v6668 = vpack.c.b16 %v5052, %v5036
    %v6669 = vpack.c.b16 %v5053, %v5037
    %v6670 = vpack.c.b16 %v5054, %v5038
    %v6671 = vpack.c.b16 %v5055, %v5039
    %v6672 = vpack.c.b16 %v5056, %v5040
    %v6673 = vpack.c.b16 %v5057, %v5041
    %v6674 = vpack.c.b16 %v5074, %v5058
    %v6675 = vpack.c.b16 %v5075, %v5059
    %v6676 = vpack.c.b16 %v5076, %v5060
    %v6677 = vpack.c.b16 %v5077, %v5061
    %v6678 = vpack.c.b16 %v5078, %v5062
    %v6679 = vpack.c.b16 %v5079, %v5063
    %v6680 = vpack.c.b16 %v5080, %v5064
    %v6681 = vpack.c.b16 %v5081, %v5065
    %v6682 = vpack.c.b16 %v5082, %v5066
    %v6683 = vpack.c.b16 %v5083, %v5067
    %v6684 = vpack.c.b16 %v5084, %v5068
    %v6685 = vpack.c.b16 %v5085, %v5069
    %v6686 = vpack.c.b16 %v5086, %v5070
    %v6687 = vpack.c.b16 %v5087, %v5071
    %v6688 = vpack.c.b16 %v5088, %v5072
    %v6689 = vpack.c.b16 %v5089, %v5073
    %v6690 = vpack.c.b16 %v5106, %v5090
    %v6691 = vpack.c.b16 %v5107, %v5091
    %v6692 = vpack.c.b16 %v5108, %v5092
    %v6693 = vpack.c.b16 %v5109, %v5093
    %v6694 = vpack.c.b16 %v5110, %v5094
    %v6695 = vpack.c.b16 %v5111, %v5095
    %v6696 = vpack.c.b16 %v5112, %v5096
    %v6697 = vpack.c.b16 %v5113, %v5097
    %v6698 = vpack.c.b16 %v5114, %v5098
    %v6699 = vpack.c.b16 %v5115, %v5099
    %v6700 = vpack.c.b16 %v5116, %v5100
    %v6701 = vpack.c.b16 %v5117, %v5101
    %v6702 = vpack.c.b16 %v5118, %v5102
    %v6703 = vpack.c.b16 %v5119, %v5103
    %v6704 = vpack.c.b16 %v5120, %v5104
    %v6705 = vpack.c.b16 %v5121, %v5105
    %v6706 = vpack.c.b16 %v5138, %v5122
    %v6707 = vpack.c.b16 %v5139, %v5123
    %v6708 = vpack.c.b16 %v5140, %v5124
    %v6709 = vpack.c.b16 %v5141, %v5125
    %v6710 = vpack.c.b16 %v5142, %v5126
    %v6711 = vpack.c.b16 %v5143, %v5127
    %v6712 = vpack.c.b16 %v5144, %v5128
    %v6713 = vpack.c.b16 %v5145, %v5129
    %v6714 = vpack.c.b16 %v5146, %v5130
    %v6715 = vpack.c.b16 %v5147, %v5131
    %v6716 = vpack.c.b16 %v5148, %v5132
    %v6717 = vpack.c.b16 %v5149, %v5133
    %v6718 = vpack.c.b16 %v5150, %v5134
    %v6719 = vpack.c.b16 %v5151, %v5135
    %v6720 = vpack.c.b16 %v5152, %v5136
    %v6721 = vpack.c.b16 %v5153, %v5137
    %v6722 = vpack.c.b16 %v5170, %v5154
    %v6723 = vpack.c.b16 %v5171, %v5155
    %v6724 = vpack.c.b16 %v5172, %v5156
    %v6725 = vpack.c.b16 %v5173, %v5157
    %v6726 = vpack.c.b16 %v5174, %v5158
    %v6727 = vpack.c.b16 %v5175, %v5159
    %v6728 = vpack.c.b16 %v5176, %v5160
    %v6729 = vpack.c.b16 %v5177, %v5161
    %v6730 = vpack.c.b16 %v5178, %v5162
    %v6731 = vpack.c.b16 %v5179, %v5163
    %v6732 = vpack.c.b16 %v5180, %v5164
    %v6733 = vpack.c.b16 %v5181, %v5165
    %v6734 = vpack.c.b16 %v5182, %v5166
    %v6735 = vpack.c.b16 %v5183, %v5167
    %v6736 = vpack.c.b16 %v5184, %v5168
    %v6737 = vpack.c.b16 %v5185, %v5169
    %v6738 = vpack.c.b16 %v5202, %v5186
    %v6739 = vpack.c.b16 %v5203, %v5187
    %v6740 = vpack.c.b16 %v5204, %v5188
    %v6741 = vpack.c.b16 %v5205, %v5189
    %v6742 = vpack.c.b16 %v5206, %v5190
    %v6743 = vpack.c.b16 %v5207, %v5191
    %v6744 = vpack.c.b16 %v5208, %v5192
    %v6745 = vpack.c.b16 %v5209, %v5193
    %v6746 = vpack.c.b16 %v5210, %v5194
    %v6747 = vpack.c.b16 %v5211, %v5195
    %v6748 = vpack.c.b16 %v5212, %v5196
    %v6749 = vpack.c.b16 %v5213, %v5197
    %v6750 = vpack.c.b16 %v5214, %v5198
    %v6751 = vpack.c.b16 %v5215, %v5199
    %v6752 = vpack.c.b16 %v5216, %v5200
    %v6753 = vpack.c.b16 %v5217, %v5201
    %v6754 = vpack.c.b16 %v5234, %v5218
    %v6755 = vpack.c.b16 %v5235, %v5219
    %v6756 = vpack.c.b16 %v5236, %v5220
    %v6757 = vpack.c.b16 %v5237, %v5221
    %v6758 = vpack.c.b16 %v5238, %v5222
    %v6759 = vpack.c.b16 %v5239, %v5223
    %v6760 = vpack.c.b16 %v5240, %v5224
    %v6761 = vpack.c.b16 %v5241, %v5225
    %v6762 = vpack.c.b16 %v5242, %v5226
    %v6763 = vpack.c.b16 %v5243, %v5227
    %v6764 = vpack.c.b16 %v5244, %v5228
    %v6765 = vpack.c.b16 %v5245, %v5229
    %v6766 = vpack.c.b16 %v5246, %v5230
    %v6767 = vpack.c.b16 %v5247, %v5231
    %v6768 = vpack.c.b16 %v5248, %v5232
    %v6769 = vpack.c.b16 %v5249, %v5233
    %v6770 = vpack.c.b16 %v5266, %v5250
    %v6771 = vpack.c.b16 %v5267, %v5251
    %v6772 = vpack.c.b16 %v5268, %v5252
    %v6773 = vpack.c.b16 %v5269, %v5253
    %v6774 = vpack.c.b16 %v5270, %v5254
    %v6775 = vpack.c.b16 %v5271, %v5255
    %v6776 = vpack.c.b16 %v5272, %v5256
    %v6777 = vpack.c.b16 %v5273, %v5257
    %v6778 = vpack.c.b16 %v5274, %v5258
    %v6779 = vpack.c.b16 %v5275, %v5259
    %v6780 = vpack.c.b16 %v5276, %v5260
    %v6781 = vpack.c.b16 %v5277, %v5261
    %v6782 = vpack.c.b16 %v5278, %v5262
    %v6783 = vpack.c.b16 %v5279, %v5263
    %v6784 = vpack.c.b16 %v5280, %v5264
    %v6785 = vpack.c.b16 %v5281, %v5265
    %v6786 = vpack.c.b16 %v5298, %v5282
    %v6787 = vpack.c.b16 %v5299, %v5283
    %v6788 = vpack.c.b16 %v5300, %v5284
    %v6789 = vpack.c.b16 %v5301, %v5285
    %v6790 = vpack.c.b16 %v5302, %v5286
    %v6791 = vpack.c.b16 %v5303, %v5287
    %v6792 = vpack.c.b16 %v5304, %v5288
    %v6793 = vpack.c.b16 %v5305, %v5289
    %v6794 = vpack.c.b16 %v5306, %v5290
    %v6795 = vpack.c.b16 %v5307, %v5291
    %v6796 = vpack.c.b16 %v5308, %v5292
    %v6797 = vpack.c.b16 %v5309, %v5293
    %v6798 = vpack.c.b16 %v5310, %v5294
    %v6799 = vpack.c.b16 %v5311, %v5295
    %v6800 = vpack.c.b16 %v5312, %v5296
    %v6801 = vpack.c.b16 %v5313, %v5297
    %v6802 = vpack.c.b16 %v5330, %v5314
    %v6803 = vpack.c.b16 %v5331, %v5315
    %v6804 = vpack.c.b16 %v5332, %v5316
    %v6805 = vpack.c.b16 %v5333, %v5317
    %v6806 = vpack.c.b16 %v5334, %v5318
    %v6807 = vpack.c.b16 %v5335, %v5319
    %v6808 = vpack.c.b16 %v5336, %v5320
    %v6809 = vpack.c.b16 %v5337, %v5321
    %v6810 = vpack.c.b16 %v5338, %v5322
    %v6811 = vpack.c.b16 %v5339, %v5323
    %v6812 = vpack.c.b16 %v5340, %v5324
    %v6813 = vpack.c.b16 %v5341, %v5325
    %v6814 = vpack.c.b16 %v5342, %v5326
    %v6815 = vpack.c.b16 %v5343, %v5327
    %v6816 = vpack.c.b16 %v5344, %v5328
    %v6817 = vpack.c.b16 %v5345, %v5329
    %v6818 = vpack.c.b16 %v5362, %v5346
    %v6819 = vpack.c.b16 %v5363, %v5347
    %v6820 = vpack.c.b16 %v5364, %v5348
    %v6821 = vpack.c.b16 %v5365, %v5349
    %v6822 = vpack.c.b16 %v5366, %v5350
    %v6823 = vpack.c.b16 %v5367, %v5351
    %v6824 = vpack.c.b16 %v5368, %v5352
    %v6825 = vpack.c.b16 %v5369, %v5353
    %v6826 = vpack.c.b16 %v5370, %v5354
    %v6827 = vpack.c.b16 %v5371, %v5355
    %v6828 = vpack.c.b16 %v5372, %v5356
    %v6829 = vpack.c.b16 %v5373, %v5357
    %v6830 = vpack.c.b16 %v5374, %v5358
    %v6831 = vpack.c.b16 %v5375, %v5359
    %v6832 = vpack.c.b16 %v5376, %v5360
    %v6833 = vpack.c.b16 %v5377, %v5361
    %v6834 = vpack.c.b16 %v5394, %v5378
    %v6835 = vpack.c.b16 %v5395, %v5379
    %v6836 = vpack.c.b16 %v5396, %v5380
    %v6837 = vpack.c.b16 %v5397, %v5381
    %v6838 = vpack.c.b16 %v5398, %v5382
    %v6839 = vpack.c.b16 %v5399, %v5383
    %v6840 = vpack.c.b16 %v5400, %v5384
    %v6841 = vpack.c.b16 %v5401, %v5385
    %v6842 = vpack.c.b16 %v5402, %v5386
    %v6843 = vpack.c.b16 %v5403, %v5387
    %v6844 = vpack.c.b16 %v5404, %v5388
    %v6845 = vpack.c.b16 %v5405, %v5389
    %v6846 = vpack.c.b16 %v5406, %v5390
    %v6847 = vpack.c.b16 %v5407, %v5391
    %v6848 = vpack.c.b16 %v5408, %v5392
    %v6849 = vpack.c.b16 %v5409, %v5393
    %v6850 = vpack.c.b16 %v5426, %v5410
    %v6851 = vpack.c.b16 %v5427, %v5411
    %v6852 = vpack.c.b16 %v5428, %v5412
    %v6853 = vpack.c.b16 %v5429, %v5413
    %v6854 = vpack.c.b16 %v5430, %v5414
    %v6855 = vpack.c.b16 %v5431, %v5415
    %v6856 = vpack.c.b16 %v5432, %v5416
    %v6857 = vpack.c.b16 %v5433, %v5417
    %v6858 = vpack.c.b16 %v5434, %v5418
    %v6859 = vpack.c.b16 %v5435, %v5419
    %v6860 = vpack.c.b16 %v5436, %v5420
    %v6861 = vpack.c.b16 %v5437, %v5421
    %v6862 = vpack.c.b16 %v5438, %v5422
    %v6863 = vpack.c.b16 %v5439, %v5423
    %v6864 = vpack.c.b16 %v5440, %v5424
    %v6865 = vpack.c.b16 %v5441, %v5425
    %v6866 = vpack.c.b16 %v5458, %v5442
    %v6867 = vpack.c.b16 %v5459, %v5443
    %v6868 = vpack.c.b16 %v5460, %v5444
    %v6869 = vpack.c.b16 %v5461, %v5445
    %v6870 = vpack.c.b16 %v5462, %v5446
    %v6871 = vpack.c.b16 %v5463, %v5447
    %v6872 = vpack.c.b16 %v5464, %v5448
    %v6873 = vpack.c.b16 %v5465, %v5449
    %v6874 = vpack.c.b16 %v5466, %v5450
    %v6875 = vpack.c.b16 %v5467, %v5451
    %v6876 = vpack.c.b16 %v5468, %v5452
    %v6877 = vpack.c.b16 %v5469, %v5453
    %v6878 = vpack.c.b16 %v5470, %v5454
    %v6879 = vpack.c.b16 %v5471, %v5455
    %v6880 = vpack.c.b16 %v5472, %v5456
    %v6881 = vpack.c.b16 %v5473, %v5457
    %v6882 = vpack.c.b16 %v5490, %v5474
    %v6883 = vpack.c.b16 %v5491, %v5475
    %v6884 = vpack.c.b16 %v5492, %v5476
    %v6885 = vpack.c.b16 %v5493, %v5477
    %v6886 = vpack.c.b16 %v5494, %v5478
    %v6887 = vpack.c.b16 %v5495, %v5479
    %v6888 = vpack.c.b16 %v5496, %v5480
    %v6889 = vpack.c.b16 %v5497, %v5481
    %v6890 = vpack.c.b16 %v5498, %v5482
    %v6891 = vpack.c.b16 %v5499, %v5483
    %v6892 = vpack.c.b16 %v5500, %v5484
    %v6893 = vpack.c.b16 %v5501, %v5485
    %v6894 = vpack.c.b16 %v5502, %v5486
    %v6895 = vpack.c.b16 %v5503, %v5487
    %v6896 = vpack.c.b16 %v5504, %v5488
    %v6897 = vpack.c.b16 %v5505, %v5489
    %v6898 = vpack.c.b16 %v5522, %v5506
    %v6899 = vpack.c.b16 %v5523, %v5507
    %v6900 = vpack.c.b16 %v5524, %v5508
    %v6901 = vpack.c.b16 %v5525, %v5509
    %v6902 = vpack.c.b16 %v5526, %v5510
    %v6903 = vpack.c.b16 %v5527, %v5511
    %v6904 = vpack.c.b16 %v5528, %v5512
    %v6905 = vpack.c.b16 %v5529, %v5513
    %v6906 = vpack.c.b16 %v5530, %v5514
    %v6907 = vpack.c.b16 %v5531, %v5515
    %v6908 = vpack.c.b16 %v5532, %v5516
    %v6909 = vpack.c.b16 %v5533, %v5517
    %v6910 = vpack.c.b16 %v5534, %v5518
    %v6911 = vpack.c.b16 %v5535, %v5519
    %v6912 = vpack.c.b16 %v5536, %v5520
    %v6913 = vpack.c.b16 %v5537, %v5521
    %v6914 = vpack.c.b16 %v5554, %v5538
    %v6915 = vpack.c.b16 %v5555, %v5539
    %v6916 = vpack.c.b16 %v5556, %v5540
    %v6917 = vpack.c.b16 %v5557, %v5541
    %v6918 = vpack.c.b16 %v5558, %v5542
    %v6919 = vpack.c.b16 %v5559, %v5543
    %v6920 = vpack.c.b16 %v5560, %v5544
    %v6921 = vpack.c.b16 %v5561, %v5545
    %v6922 = vpack.c.b16 %v5562, %v5546
    %v6923 = vpack.c.b16 %v5563, %v5547
    %v6924 = vpack.c.b16 %v5564, %v5548
    %v6925 = vpack.c.b16 %v5565, %v5549
    %v6926 = vpack.c.b16 %v5566, %v5550
    %v6927 = vpack.c.b16 %v5567, %v5551
    %v6928 = vpack.c.b16 %v5568, %v5552
    %v6929 = vpack.c.b16 %v5569, %v5553
    %v6930 = vpack.c.b16 %v5586, %v5570
    %v6931 = vpack.c.b16 %v5587, %v5571
    %v6932 = vpack.c.b16 %v5588, %v5572
    %v6933 = vpack.c.b16 %v5589, %v5573
    %v6934 = vpack.c.b16 %v5590, %v5574
    %v6935 = vpack.c.b16 %v5591, %v5575
    %v6936 = vpack.c.b16 %v5592, %v5576
    %v6937 = vpack.c.b16 %v5593, %v5577
    %v6938 = vpack.c.b16 %v5594, %v5578
    %v6939 = vpack.c.b16 %v5595, %v5579
    %v6940 = vpack.c.b16 %v5596, %v5580
    %v6941 = vpack.c.b16 %v5597, %v5581
    %v6942 = vpack.c.b16 %v5598, %v5582
    %v6943 = vpack.c.b16 %v5599, %v5583
    %v6944 = vpack.c.b16 %v5600, %v5584
    %v6945 = vpack.c.b16 %v5601, %v5585
    %v6946 = vpack.c.b16 %v5618, %v5602
    %v6947 = vpack.c.b16 %v5619, %v5603
    %v6948 = vpack.c.b16 %v5620, %v5604
    %v6949 = vpack.c.b16 %v5621, %v5605
    %v6950 = vpack.c.b16 %v5622, %v5606
    %v6951 = vpack.c.b16 %v5623, %v5607
    %v6952 = vpack.c.b16 %v5624, %v5608
    %v6953 = vpack.c.b16 %v5625, %v5609
    %v6954 = vpack.c.b16 %v5626, %v5610
    %v6955 = vpack.c.b16 %v5627, %v5611
    %v6956 = vpack.c.b16 %v5628, %v5612
    %v6957 = vpack.c.b16 %v5629, %v5613
    %v6958 = vpack.c.b16 %v5630, %v5614
    %v6959 = vpack.c.b16 %v5631, %v5615
    %v6960 = vpack.c.b16 %v5632, %v5616
    %v6961 = vpack.c.b16 %v5633, %v5617
    %v6962 = vpack.c.b16 %v5650, %v5634
    %v6963 = vpack.c.b16 %v5651, %v5635
    %v6964 = vpack.c.b16 %v5652, %v5636
    %v6965 = vpack.c.b16 %v5653, %v5637
    %v6966 = vpack.c.b16 %v5654, %v5638
    %v6967 = vpack.c.b16 %v5655, %v5639
    %v6968 = vpack.c.b16 %v5656, %v5640
    %v6969 = vpack.c.b16 %v5657, %v5641
    %v6970 = vpack.c.b16 %v5658, %v5642
    %v6971 = vpack.c.b16 %v5659, %v5643
    %v6972 = vpack.c.b16 %v5660, %v5644
    %v6973 = vpack.c.b16 %v5661, %v5645
    %v6974 = vpack.c.b16 %v5662, %v5646
    %v6975 = vpack.c.b16 %v5663, %v5647
    %v6976 = vpack.c.b16 %v5664, %v5648
    %v6977 = vpack.c.b16 %v5665, %v5649
    %v6978 = vpack.c.b16 %v5682, %v5666
    %v6979 = vpack.c.b16 %v5683, %v5667
    %v6980 = vpack.c.b16 %v5684, %v5668
    %v6981 = vpack.c.b16 %v5685, %v5669
    %v6982 = vpack.c.b16 %v5686, %v5670
    %v6983 = vpack.c.b16 %v5687, %v5671
    %v6984 = vpack.c.b16 %v5688, %v5672
    %v6985 = vpack.c.b16 %v5689, %v5673
    %v6986 = vpack.c.b16 %v5690, %v5674
    %v6987 = vpack.c.b16 %v5691, %v5675
    %v6988 = vpack.c.b16 %v5692, %v5676
    %v6989 = vpack.c.b16 %v5693, %v5677
    %v6990 = vpack.c.b16 %v5694, %v5678
    %v6991 = vpack.c.b16 %v5695, %v5679
    %v6992 = vpack.c.b16 %v5696, %v5680
    %v6993 = vpack.c.b16 %v5697, %v5681
    %v6994 = vpack.c.b16 %v5714, %v5698
    %v6995 = vpack.c.b16 %v5715, %v5699
    %v6996 = vpack.c.b16 %v5716, %v5700
    %v6997 = vpack.c.b16 %v5717, %v5701
    %v6998 = vpack.c.b16 %v5718, %v5702
    %v6999 = vpack.c.b16 %v5719, %v5703
    %v7000 = vpack.c.b16 %v5720, %v5704
    %v7001 = vpack.c.b16 %v5721, %v5705
    %v7002 = vpack.c.b16 %v5722, %v5706
    %v7003 = vpack.c.b16 %v5723, %v5707
    %v7004 = vpack.c.b16 %v5724, %v5708
    %v7005 = vpack.c.b16 %v5725, %v5709
    %v7006 = vpack.c.b16 %v5726, %v5710
    %v7007 = vpack.c.b16 %v5727, %v5711
    %v7008 = vpack.c.b16 %v5728, %v5712
    %v7009 = vpack.c.b16 %v5729, %v5713
    %8290 = vmatpush.bf16.msra.mxu0 %v5842
    %8291 = vmatpush.bf16.msra.mxu0 %v5826
    %8292 = vmatpush.bf16.msra.mxu0 %v5810
    %8293 = vmatpush.bf16.msra.mxu0 %v5794
    %8294 = vmatpush.bf16.msra.mxu0 %v5778
    %8295 = vmatpush.bf16.msra.mxu0 %v5762
    %8296 = vmatpush.bf16.msra.mxu0 %v5746
    %8297 = vmatpush.bf16.msra.mxu0 %v5730
    %8298 = vmatmul.bf16.gmra.mxu0 %v564
    %v8299 = vpop.f32.mrf.mxu0
    %v8300 = vadd.f32 %v1858, %v8299
    %v8301 = vpop.f32.mrf.mxu0
    %8302 = vdwg.mxu0
    %8303 = vmatpush.bf16.msra.mxu0 %v5970
    %8304 = vmatpush.bf16.msra.mxu0 %v5954
    %8305 = vmatpush.bf16.msra.mxu0 %v5938
    %8306 = vmatpush.bf16.msra.mxu0 %v5922
    %8307 = vmatpush.bf16.msra.mxu0 %v5906
    %8308 = vmatpush.bf16.msra.mxu0 %v5890
    %8309 = vmatpush.bf16.msra.mxu0 %v5874
    %8310 = vmatpush.bf16.msra.mxu0 %v5858
    %8311 = vmatmul.bf16.gmra.mxu0 %v565
    %v8312 = vpop.f32.mrf.mxu0
    %v8313 = vadd.f32 %v8300, %v8312
    %v8314 = vpop.f32.mrf.mxu0
    %8315 = vdwg.mxu0
    %8316 = vmatpush.bf16.msra.mxu0 %v6098
    %8317 = vmatpush.bf16.msra.mxu0 %v6082
    %8318 = vmatpush.bf16.msra.mxu0 %v6066
    %8319 = vmatpush.bf16.msra.mxu0 %v6050
    %8320 = vmatpush.bf16.msra.mxu0 %v6034
    %8321 = vmatpush.bf16.msra.mxu0 %v6018
    %8322 = vmatpush.bf16.msra.mxu0 %v6002
    %8323 = vmatpush.bf16.msra.mxu0 %v5986
    %8324 = vmatmul.bf16.gmra.mxu0 %v566
    %v8325 = vpop.f32.mrf.mxu0
    %v8326 = vadd.f32 %v8313, %v8325
    %v8327 = vpop.f32.mrf.mxu0
    %8328 = vdwg.mxu0
    %8329 = vmatpush.bf16.msra.mxu0 %v6226
    %8330 = vmatpush.bf16.msra.mxu0 %v6210
    %8331 = vmatpush.bf16.msra.mxu0 %v6194
    %8332 = vmatpush.bf16.msra.mxu0 %v6178
    %8333 = vmatpush.bf16.msra.mxu0 %v6162
    %8334 = vmatpush.bf16.msra.mxu0 %v6146
    %8335 = vmatpush.bf16.msra.mxu0 %v6130
    %8336 = vmatpush.bf16.msra.mxu0 %v6114
    %8337 = vmatmul.bf16.gmra.mxu0 %v567
    %v8338 = vpop.f32.mrf.mxu0
    %v8339 = vadd.f32 %v8326, %v8338
    %v8340 = vpop.f32.mrf.mxu0
    %8341 = vdwg.mxu0
    %8342 = vmatpush.bf16.msra.mxu0 %v6354
    %8343 = vmatpush.bf16.msra.mxu0 %v6338
    %8344 = vmatpush.bf16.msra.mxu0 %v6322
    %8345 = vmatpush.bf16.msra.mxu0 %v6306
    %8346 = vmatpush.bf16.msra.mxu0 %v6290
    %8347 = vmatpush.bf16.msra.mxu0 %v6274
    %8348 = vmatpush.bf16.msra.mxu0 %v6258
    %8349 = vmatpush.bf16.msra.mxu0 %v6242
    %8350 = vmatmul.bf16.gmra.mxu0 %v568
    %v8351 = vpop.f32.mrf.mxu0
    %v8352 = vadd.f32 %v8339, %v8351
    %v8353 = vpop.f32.mrf.mxu0
    %8354 = vdwg.mxu0
    %8355 = vmatpush.bf16.msra.mxu0 %v6482
    %8356 = vmatpush.bf16.msra.mxu0 %v6466
    %8357 = vmatpush.bf16.msra.mxu0 %v6450
    %8358 = vmatpush.bf16.msra.mxu0 %v6434
    %8359 = vmatpush.bf16.msra.mxu0 %v6418
    %8360 = vmatpush.bf16.msra.mxu0 %v6402
    %8361 = vmatpush.bf16.msra.mxu0 %v6386
    %8362 = vmatpush.bf16.msra.mxu0 %v6370
    %8363 = vmatmul.bf16.gmra.mxu0 %v569
    %v8364 = vpop.f32.mrf.mxu0
    %v8365 = vadd.f32 %v8352, %v8364
    %v8366 = vpop.f32.mrf.mxu0
    %8367 = vdwg.mxu0
    %8368 = vmatpush.bf16.msra.mxu0 %v6610
    %8369 = vmatpush.bf16.msra.mxu0 %v6594
    %8370 = vmatpush.bf16.msra.mxu0 %v6578
    %8371 = vmatpush.bf16.msra.mxu0 %v6562
    %8372 = vmatpush.bf16.msra.mxu0 %v6546
    %8373 = vmatpush.bf16.msra.mxu0 %v6530
    %8374 = vmatpush.bf16.msra.mxu0 %v6514
    %8375 = vmatpush.bf16.msra.mxu0 %v6498
    %8376 = vmatmul.bf16.gmra.mxu0 %v570
    %v8377 = vpop.f32.mrf.mxu0
    %v8378 = vadd.f32 %v8365, %v8377
    %v8379 = vpop.f32.mrf.mxu0
    %8380 = vdwg.mxu0
    %8381 = vmatpush.bf16.msra.mxu0 %v6738
    %8382 = vmatpush.bf16.msra.mxu0 %v6722
    %8383 = vmatpush.bf16.msra.mxu0 %v6706
    %8384 = vmatpush.bf16.msra.mxu0 %v6690
    %8385 = vmatpush.bf16.msra.mxu0 %v6674
    %8386 = vmatpush.bf16.msra.mxu0 %v6658
    %8387 = vmatpush.bf16.msra.mxu0 %v6642
    %8388 = vmatpush.bf16.msra.mxu0 %v6626
    %8389 = vmatmul.bf16.gmra.mxu0 %v571
    %v8390 = vpop.f32.mrf.mxu0
    %v8391 = vadd.f32 %v8378, %v8390
    %v8392 = vpop.f32.mrf.mxu0
    %8393 = vdwg.mxu0
    %8394 = vmatpush.bf16.msra.mxu0 %v6866
    %8395 = vmatpush.bf16.msra.mxu0 %v6850
    %8396 = vmatpush.bf16.msra.mxu0 %v6834
    %8397 = vmatpush.bf16.msra.mxu0 %v6818
    %8398 = vmatpush.bf16.msra.mxu0 %v6802
    %8399 = vmatpush.bf16.msra.mxu0 %v6786
    %8400 = vmatpush.bf16.msra.mxu0 %v6770
    %8401 = vmatpush.bf16.msra.mxu0 %v6754
    %8402 = vmatmul.bf16.gmra.mxu0 %v572
    %v8403 = vpop.f32.mrf.mxu0
    %v8404 = vadd.f32 %v8391, %v8403
    %v8405 = vpop.f32.mrf.mxu0
    %8406 = vdwg.mxu0
    %8407 = vmatpush.bf16.msra.mxu0 %v6994
    %8408 = vmatpush.bf16.msra.mxu0 %v6978
    %8409 = vmatpush.bf16.msra.mxu0 %v6962
    %8410 = vmatpush.bf16.msra.mxu0 %v6946
    %8411 = vmatpush.bf16.msra.mxu0 %v6930
    %8412 = vmatpush.bf16.msra.mxu0 %v6914
    %8413 = vmatpush.bf16.msra.mxu0 %v6898
    %8414 = vmatpush.bf16.msra.mxu0 %v6882
    %8415 = vmatmul.bf16.gmra.mxu0 %v573
    %v8416 = vpop.f32.mrf.mxu0
    %v8417 = vadd.f32 %v8404, %v8416
    %v8418 = vpop.f32.mrf.mxu0
    %8419 = vdwg.mxu0
    %8420 = vmatpush.bf16.msra.mxu0 %v5843
    %8421 = vmatpush.bf16.msra.mxu0 %v5827
    %8422 = vmatpush.bf16.msra.mxu0 %v5811
    %8423 = vmatpush.bf16.msra.mxu0 %v5795
    %8424 = vmatpush.bf16.msra.mxu0 %v5779
    %8425 = vmatpush.bf16.msra.mxu0 %v5763
    %8426 = vmatpush.bf16.msra.mxu0 %v5747
    %8427 = vmatpush.bf16.msra.mxu0 %v5731
    %8428 = vmatmul.bf16.gmra.mxu0 %v564
    %v8429 = vpop.f32.mrf.mxu0
    %v8430 = vadd.f32 %v1859, %v8429
    %v8431 = vpop.f32.mrf.mxu0
    %8432 = vdwg.mxu0
    %8433 = vmatpush.bf16.msra.mxu0 %v5971
    %8434 = vmatpush.bf16.msra.mxu0 %v5955
    %8435 = vmatpush.bf16.msra.mxu0 %v5939
    %8436 = vmatpush.bf16.msra.mxu0 %v5923
    %8437 = vmatpush.bf16.msra.mxu0 %v5907
    %8438 = vmatpush.bf16.msra.mxu0 %v5891
    %8439 = vmatpush.bf16.msra.mxu0 %v5875
    %8440 = vmatpush.bf16.msra.mxu0 %v5859
    %8441 = vmatmul.bf16.gmra.mxu0 %v565
    %v8442 = vpop.f32.mrf.mxu0
    %v8443 = vadd.f32 %v8430, %v8442
    %v8444 = vpop.f32.mrf.mxu0
    %8445 = vdwg.mxu0
    %8446 = vmatpush.bf16.msra.mxu0 %v6099
    %8447 = vmatpush.bf16.msra.mxu0 %v6083
    %8448 = vmatpush.bf16.msra.mxu0 %v6067
    %8449 = vmatpush.bf16.msra.mxu0 %v6051
    %8450 = vmatpush.bf16.msra.mxu0 %v6035
    %8451 = vmatpush.bf16.msra.mxu0 %v6019
    %8452 = vmatpush.bf16.msra.mxu0 %v6003
    %8453 = vmatpush.bf16.msra.mxu0 %v5987
    %8454 = vmatmul.bf16.gmra.mxu0 %v566
    %v8455 = vpop.f32.mrf.mxu0
    %v8456 = vadd.f32 %v8443, %v8455
    %v8457 = vpop.f32.mrf.mxu0
    %8458 = vdwg.mxu0
    %8459 = vmatpush.bf16.msra.mxu0 %v6227
    %8460 = vmatpush.bf16.msra.mxu0 %v6211
    %8461 = vmatpush.bf16.msra.mxu0 %v6195
    %8462 = vmatpush.bf16.msra.mxu0 %v6179
    %8463 = vmatpush.bf16.msra.mxu0 %v6163
    %8464 = vmatpush.bf16.msra.mxu0 %v6147
    %8465 = vmatpush.bf16.msra.mxu0 %v6131
    %8466 = vmatpush.bf16.msra.mxu0 %v6115
    %8467 = vmatmul.bf16.gmra.mxu0 %v567
    %v8468 = vpop.f32.mrf.mxu0
    %v8469 = vadd.f32 %v8456, %v8468
    %v8470 = vpop.f32.mrf.mxu0
    %8471 = vdwg.mxu0
    %8472 = vmatpush.bf16.msra.mxu0 %v6355
    %8473 = vmatpush.bf16.msra.mxu0 %v6339
    %8474 = vmatpush.bf16.msra.mxu0 %v6323
    %8475 = vmatpush.bf16.msra.mxu0 %v6307
    %8476 = vmatpush.bf16.msra.mxu0 %v6291
    %8477 = vmatpush.bf16.msra.mxu0 %v6275
    %8478 = vmatpush.bf16.msra.mxu0 %v6259
    %8479 = vmatpush.bf16.msra.mxu0 %v6243
    %8480 = vmatmul.bf16.gmra.mxu0 %v568
    %v8481 = vpop.f32.mrf.mxu0
    %v8482 = vadd.f32 %v8469, %v8481
    %v8483 = vpop.f32.mrf.mxu0
    %8484 = vdwg.mxu0
    %8485 = vmatpush.bf16.msra.mxu0 %v6483
    %8486 = vmatpush.bf16.msra.mxu0 %v6467
    %8487 = vmatpush.bf16.msra.mxu0 %v6451
    %8488 = vmatpush.bf16.msra.mxu0 %v6435
    %8489 = vmatpush.bf16.msra.mxu0 %v6419
    %8490 = vmatpush.bf16.msra.mxu0 %v6403
    %8491 = vmatpush.bf16.msra.mxu0 %v6387
    %8492 = vmatpush.bf16.msra.mxu0 %v6371
    %8493 = vmatmul.bf16.gmra.mxu0 %v569
    %v8494 = vpop.f32.mrf.mxu0
    %v8495 = vadd.f32 %v8482, %v8494
    %v8496 = vpop.f32.mrf.mxu0
    %8497 = vdwg.mxu0
    %8498 = vmatpush.bf16.msra.mxu0 %v6611
    %8499 = vmatpush.bf16.msra.mxu0 %v6595
    %8500 = vmatpush.bf16.msra.mxu0 %v6579
    %8501 = vmatpush.bf16.msra.mxu0 %v6563
    %8502 = vmatpush.bf16.msra.mxu0 %v6547
    %8503 = vmatpush.bf16.msra.mxu0 %v6531
    %8504 = vmatpush.bf16.msra.mxu0 %v6515
    %8505 = vmatpush.bf16.msra.mxu0 %v6499
    %8506 = vmatmul.bf16.gmra.mxu0 %v570
    %v8507 = vpop.f32.mrf.mxu0
    %v8508 = vadd.f32 %v8495, %v8507
    %v8509 = vpop.f32.mrf.mxu0
    %8510 = vdwg.mxu0
    %8511 = vmatpush.bf16.msra.mxu0 %v6739
    %8512 = vmatpush.bf16.msra.mxu0 %v6723
    %8513 = vmatpush.bf16.msra.mxu0 %v6707
    %8514 = vmatpush.bf16.msra.mxu0 %v6691
    %8515 = vmatpush.bf16.msra.mxu0 %v6675
    %8516 = vmatpush.bf16.msra.mxu0 %v6659
    %8517 = vmatpush.bf16.msra.mxu0 %v6643
    %8518 = vmatpush.bf16.msra.mxu0 %v6627
    %8519 = vmatmul.bf16.gmra.mxu0 %v571
    %v8520 = vpop.f32.mrf.mxu0
    %v8521 = vadd.f32 %v8508, %v8520
    %v8522 = vpop.f32.mrf.mxu0
    %8523 = vdwg.mxu0
    %8524 = vmatpush.bf16.msra.mxu0 %v6867
    %8525 = vmatpush.bf16.msra.mxu0 %v6851
    %8526 = vmatpush.bf16.msra.mxu0 %v6835
    %8527 = vmatpush.bf16.msra.mxu0 %v6819
    %8528 = vmatpush.bf16.msra.mxu0 %v6803
    %8529 = vmatpush.bf16.msra.mxu0 %v6787
    %8530 = vmatpush.bf16.msra.mxu0 %v6771
    %8531 = vmatpush.bf16.msra.mxu0 %v6755
    %8532 = vmatmul.bf16.gmra.mxu0 %v572
    %v8533 = vpop.f32.mrf.mxu0
    %v8534 = vadd.f32 %v8521, %v8533
    %v8535 = vpop.f32.mrf.mxu0
    %8536 = vdwg.mxu0
    %8537 = vmatpush.bf16.msra.mxu0 %v6995
    %8538 = vmatpush.bf16.msra.mxu0 %v6979
    %8539 = vmatpush.bf16.msra.mxu0 %v6963
    %8540 = vmatpush.bf16.msra.mxu0 %v6947
    %8541 = vmatpush.bf16.msra.mxu0 %v6931
    %8542 = vmatpush.bf16.msra.mxu0 %v6915
    %8543 = vmatpush.bf16.msra.mxu0 %v6899
    %8544 = vmatpush.bf16.msra.mxu0 %v6883
    %8545 = vmatmul.bf16.gmra.mxu0 %v573
    %v8546 = vpop.f32.mrf.mxu0
    %v8547 = vadd.f32 %v8534, %v8546
    %v8548 = vpop.f32.mrf.mxu0
    %8549 = vdwg.mxu0
    %8550 = vmatpush.bf16.msra.mxu0 %v5844
    %8551 = vmatpush.bf16.msra.mxu0 %v5828
    %8552 = vmatpush.bf16.msra.mxu0 %v5812
    %8553 = vmatpush.bf16.msra.mxu0 %v5796
    %8554 = vmatpush.bf16.msra.mxu0 %v5780
    %8555 = vmatpush.bf16.msra.mxu0 %v5764
    %8556 = vmatpush.bf16.msra.mxu0 %v5748
    %8557 = vmatpush.bf16.msra.mxu0 %v5732
    %8558 = vmatmul.bf16.gmra.mxu0 %v564
    %v8559 = vpop.f32.mrf.mxu0
    %v8560 = vadd.f32 %v1860, %v8559
    %v8561 = vpop.f32.mrf.mxu0
    %8562 = vdwg.mxu0
    %8563 = vmatpush.bf16.msra.mxu0 %v5972
    %8564 = vmatpush.bf16.msra.mxu0 %v5956
    %8565 = vmatpush.bf16.msra.mxu0 %v5940
    %8566 = vmatpush.bf16.msra.mxu0 %v5924
    %8567 = vmatpush.bf16.msra.mxu0 %v5908
    %8568 = vmatpush.bf16.msra.mxu0 %v5892
    %8569 = vmatpush.bf16.msra.mxu0 %v5876
    %8570 = vmatpush.bf16.msra.mxu0 %v5860
    %8571 = vmatmul.bf16.gmra.mxu0 %v565
    %v8572 = vpop.f32.mrf.mxu0
    %v8573 = vadd.f32 %v8560, %v8572
    %v8574 = vpop.f32.mrf.mxu0
    %8575 = vdwg.mxu0
    %8576 = vmatpush.bf16.msra.mxu0 %v6100
    %8577 = vmatpush.bf16.msra.mxu0 %v6084
    %8578 = vmatpush.bf16.msra.mxu0 %v6068
    %8579 = vmatpush.bf16.msra.mxu0 %v6052
    %8580 = vmatpush.bf16.msra.mxu0 %v6036
    %8581 = vmatpush.bf16.msra.mxu0 %v6020
    %8582 = vmatpush.bf16.msra.mxu0 %v6004
    %8583 = vmatpush.bf16.msra.mxu0 %v5988
    %8584 = vmatmul.bf16.gmra.mxu0 %v566
    %v8585 = vpop.f32.mrf.mxu0
    %v8586 = vadd.f32 %v8573, %v8585
    %v8587 = vpop.f32.mrf.mxu0
    %8588 = vdwg.mxu0
    %8589 = vmatpush.bf16.msra.mxu0 %v6228
    %8590 = vmatpush.bf16.msra.mxu0 %v6212
    %8591 = vmatpush.bf16.msra.mxu0 %v6196
    %8592 = vmatpush.bf16.msra.mxu0 %v6180
    %8593 = vmatpush.bf16.msra.mxu0 %v6164
    %8594 = vmatpush.bf16.msra.mxu0 %v6148
    %8595 = vmatpush.bf16.msra.mxu0 %v6132
    %8596 = vmatpush.bf16.msra.mxu0 %v6116
    %8597 = vmatmul.bf16.gmra.mxu0 %v567
    %v8598 = vpop.f32.mrf.mxu0
    %v8599 = vadd.f32 %v8586, %v8598
    %v8600 = vpop.f32.mrf.mxu0
    %8601 = vdwg.mxu0
    %8602 = vmatpush.bf16.msra.mxu0 %v6356
    %8603 = vmatpush.bf16.msra.mxu0 %v6340
    %8604 = vmatpush.bf16.msra.mxu0 %v6324
    %8605 = vmatpush.bf16.msra.mxu0 %v6308
    %8606 = vmatpush.bf16.msra.mxu0 %v6292
    %8607 = vmatpush.bf16.msra.mxu0 %v6276
    %8608 = vmatpush.bf16.msra.mxu0 %v6260
    %8609 = vmatpush.bf16.msra.mxu0 %v6244
    %8610 = vmatmul.bf16.gmra.mxu0 %v568
    %v8611 = vpop.f32.mrf.mxu0
    %v8612 = vadd.f32 %v8599, %v8611
    %v8613 = vpop.f32.mrf.mxu0
    %8614 = vdwg.mxu0
    %8615 = vmatpush.bf16.msra.mxu0 %v6484
    %8616 = vmatpush.bf16.msra.mxu0 %v6468
    %8617 = vmatpush.bf16.msra.mxu0 %v6452
    %8618 = vmatpush.bf16.msra.mxu0 %v6436
    %8619 = vmatpush.bf16.msra.mxu0 %v6420
    %8620 = vmatpush.bf16.msra.mxu0 %v6404
    %8621 = vmatpush.bf16.msra.mxu0 %v6388
    %8622 = vmatpush.bf16.msra.mxu0 %v6372
    %8623 = vmatmul.bf16.gmra.mxu0 %v569
    %v8624 = vpop.f32.mrf.mxu0
    %v8625 = vadd.f32 %v8612, %v8624
    %v8626 = vpop.f32.mrf.mxu0
    %8627 = vdwg.mxu0
    %8628 = vmatpush.bf16.msra.mxu0 %v6612
    %8629 = vmatpush.bf16.msra.mxu0 %v6596
    %8630 = vmatpush.bf16.msra.mxu0 %v6580
    %8631 = vmatpush.bf16.msra.mxu0 %v6564
    %8632 = vmatpush.bf16.msra.mxu0 %v6548
    %8633 = vmatpush.bf16.msra.mxu0 %v6532
    %8634 = vmatpush.bf16.msra.mxu0 %v6516
    %8635 = vmatpush.bf16.msra.mxu0 %v6500
    %8636 = vmatmul.bf16.gmra.mxu0 %v570
    %v8637 = vpop.f32.mrf.mxu0
    %v8638 = vadd.f32 %v8625, %v8637
    %v8639 = vpop.f32.mrf.mxu0
    %8640 = vdwg.mxu0
    %8641 = vmatpush.bf16.msra.mxu0 %v6740
    %8642 = vmatpush.bf16.msra.mxu0 %v6724
    %8643 = vmatpush.bf16.msra.mxu0 %v6708
    %8644 = vmatpush.bf16.msra.mxu0 %v6692
    %8645 = vmatpush.bf16.msra.mxu0 %v6676
    %8646 = vmatpush.bf16.msra.mxu0 %v6660
    %8647 = vmatpush.bf16.msra.mxu0 %v6644
    %8648 = vmatpush.bf16.msra.mxu0 %v6628
    %8649 = vmatmul.bf16.gmra.mxu0 %v571
    %v8650 = vpop.f32.mrf.mxu0
    %v8651 = vadd.f32 %v8638, %v8650
    %v8652 = vpop.f32.mrf.mxu0
    %8653 = vdwg.mxu0
    %8654 = vmatpush.bf16.msra.mxu0 %v6868
    %8655 = vmatpush.bf16.msra.mxu0 %v6852
    %8656 = vmatpush.bf16.msra.mxu0 %v6836
    %8657 = vmatpush.bf16.msra.mxu0 %v6820
    %8658 = vmatpush.bf16.msra.mxu0 %v6804
    %8659 = vmatpush.bf16.msra.mxu0 %v6788
    %8660 = vmatpush.bf16.msra.mxu0 %v6772
    %8661 = vmatpush.bf16.msra.mxu0 %v6756
    %8662 = vmatmul.bf16.gmra.mxu0 %v572
    %v8663 = vpop.f32.mrf.mxu0
    %v8664 = vadd.f32 %v8651, %v8663
    %v8665 = vpop.f32.mrf.mxu0
    %8666 = vdwg.mxu0
    %8667 = vmatpush.bf16.msra.mxu0 %v6996
    %8668 = vmatpush.bf16.msra.mxu0 %v6980
    %8669 = vmatpush.bf16.msra.mxu0 %v6964
    %8670 = vmatpush.bf16.msra.mxu0 %v6948
    %8671 = vmatpush.bf16.msra.mxu0 %v6932
    %8672 = vmatpush.bf16.msra.mxu0 %v6916
    %8673 = vmatpush.bf16.msra.mxu0 %v6900
    %8674 = vmatpush.bf16.msra.mxu0 %v6884
    %8675 = vmatmul.bf16.gmra.mxu0 %v573
    %v8676 = vpop.f32.mrf.mxu0
    %v8677 = vadd.f32 %v8664, %v8676
    %v8678 = vpop.f32.mrf.mxu0
    %8679 = vdwg.mxu0
    %8680 = vmatpush.bf16.msra.mxu0 %v5845
    %8681 = vmatpush.bf16.msra.mxu0 %v5829
    %8682 = vmatpush.bf16.msra.mxu0 %v5813
    %8683 = vmatpush.bf16.msra.mxu0 %v5797
    %8684 = vmatpush.bf16.msra.mxu0 %v5781
    %8685 = vmatpush.bf16.msra.mxu0 %v5765
    %8686 = vmatpush.bf16.msra.mxu0 %v5749
    %8687 = vmatpush.bf16.msra.mxu0 %v5733
    %8688 = vmatmul.bf16.gmra.mxu0 %v564
    %v8689 = vpop.f32.mrf.mxu0
    %v8690 = vadd.f32 %v1861, %v8689
    %v8691 = vpop.f32.mrf.mxu0
    %8692 = vdwg.mxu0
    %8693 = vmatpush.bf16.msra.mxu0 %v5973
    %8694 = vmatpush.bf16.msra.mxu0 %v5957
    %8695 = vmatpush.bf16.msra.mxu0 %v5941
    %8696 = vmatpush.bf16.msra.mxu0 %v5925
    %8697 = vmatpush.bf16.msra.mxu0 %v5909
    %8698 = vmatpush.bf16.msra.mxu0 %v5893
    %8699 = vmatpush.bf16.msra.mxu0 %v5877
    %8700 = vmatpush.bf16.msra.mxu0 %v5861
    %8701 = vmatmul.bf16.gmra.mxu0 %v565
    %v8702 = vpop.f32.mrf.mxu0
    %v8703 = vadd.f32 %v8690, %v8702
    %v8704 = vpop.f32.mrf.mxu0
    %8705 = vdwg.mxu0
    %8706 = vmatpush.bf16.msra.mxu0 %v6101
    %8707 = vmatpush.bf16.msra.mxu0 %v6085
    %8708 = vmatpush.bf16.msra.mxu0 %v6069
    %8709 = vmatpush.bf16.msra.mxu0 %v6053
    %8710 = vmatpush.bf16.msra.mxu0 %v6037
    %8711 = vmatpush.bf16.msra.mxu0 %v6021
    %8712 = vmatpush.bf16.msra.mxu0 %v6005
    %8713 = vmatpush.bf16.msra.mxu0 %v5989
    %8714 = vmatmul.bf16.gmra.mxu0 %v566
    %v8715 = vpop.f32.mrf.mxu0
    %v8716 = vadd.f32 %v8703, %v8715
    %v8717 = vpop.f32.mrf.mxu0
    %8718 = vdwg.mxu0
    %8719 = vmatpush.bf16.msra.mxu0 %v6229
    %8720 = vmatpush.bf16.msra.mxu0 %v6213
    %8721 = vmatpush.bf16.msra.mxu0 %v6197
    %8722 = vmatpush.bf16.msra.mxu0 %v6181
    %8723 = vmatpush.bf16.msra.mxu0 %v6165
    %8724 = vmatpush.bf16.msra.mxu0 %v6149
    %8725 = vmatpush.bf16.msra.mxu0 %v6133
    %8726 = vmatpush.bf16.msra.mxu0 %v6117
    %8727 = vmatmul.bf16.gmra.mxu0 %v567
    %v8728 = vpop.f32.mrf.mxu0
    %v8729 = vadd.f32 %v8716, %v8728
    %v8730 = vpop.f32.mrf.mxu0
    %8731 = vdwg.mxu0
    %8732 = vmatpush.bf16.msra.mxu0 %v6357
    %8733 = vmatpush.bf16.msra.mxu0 %v6341
    %8734 = vmatpush.bf16.msra.mxu0 %v6325
    %8735 = vmatpush.bf16.msra.mxu0 %v6309
    %8736 = vmatpush.bf16.msra.mxu0 %v6293
    %8737 = vmatpush.bf16.msra.mxu0 %v6277
    %8738 = vmatpush.bf16.msra.mxu0 %v6261
    %8739 = vmatpush.bf16.msra.mxu0 %v6245
    %8740 = vmatmul.bf16.gmra.mxu0 %v568
    %v8741 = vpop.f32.mrf.mxu0
    %v8742 = vadd.f32 %v8729, %v8741
    %v8743 = vpop.f32.mrf.mxu0
    %8744 = vdwg.mxu0
    %8745 = vmatpush.bf16.msra.mxu0 %v6485
    %8746 = vmatpush.bf16.msra.mxu0 %v6469
    %8747 = vmatpush.bf16.msra.mxu0 %v6453
    %8748 = vmatpush.bf16.msra.mxu0 %v6437
    %8749 = vmatpush.bf16.msra.mxu0 %v6421
    %8750 = vmatpush.bf16.msra.mxu0 %v6405
    %8751 = vmatpush.bf16.msra.mxu0 %v6389
    %8752 = vmatpush.bf16.msra.mxu0 %v6373
    %8753 = vmatmul.bf16.gmra.mxu0 %v569
    %v8754 = vpop.f32.mrf.mxu0
    %v8755 = vadd.f32 %v8742, %v8754
    %v8756 = vpop.f32.mrf.mxu0
    %8757 = vdwg.mxu0
    %8758 = vmatpush.bf16.msra.mxu0 %v6613
    %8759 = vmatpush.bf16.msra.mxu0 %v6597
    %8760 = vmatpush.bf16.msra.mxu0 %v6581
    %8761 = vmatpush.bf16.msra.mxu0 %v6565
    %8762 = vmatpush.bf16.msra.mxu0 %v6549
    %8763 = vmatpush.bf16.msra.mxu0 %v6533
    %8764 = vmatpush.bf16.msra.mxu0 %v6517
    %8765 = vmatpush.bf16.msra.mxu0 %v6501
    %8766 = vmatmul.bf16.gmra.mxu0 %v570
    %v8767 = vpop.f32.mrf.mxu0
    %v8768 = vadd.f32 %v8755, %v8767
    %v8769 = vpop.f32.mrf.mxu0
    %8770 = vdwg.mxu0
    %8771 = vmatpush.bf16.msra.mxu0 %v6741
    %8772 = vmatpush.bf16.msra.mxu0 %v6725
    %8773 = vmatpush.bf16.msra.mxu0 %v6709
    %8774 = vmatpush.bf16.msra.mxu0 %v6693
    %8775 = vmatpush.bf16.msra.mxu0 %v6677
    %8776 = vmatpush.bf16.msra.mxu0 %v6661
    %8777 = vmatpush.bf16.msra.mxu0 %v6645
    %8778 = vmatpush.bf16.msra.mxu0 %v6629
    %8779 = vmatmul.bf16.gmra.mxu0 %v571
    %v8780 = vpop.f32.mrf.mxu0
    %v8781 = vadd.f32 %v8768, %v8780
    %v8782 = vpop.f32.mrf.mxu0
    %8783 = vdwg.mxu0
    %8784 = vmatpush.bf16.msra.mxu0 %v6869
    %8785 = vmatpush.bf16.msra.mxu0 %v6853
    %8786 = vmatpush.bf16.msra.mxu0 %v6837
    %8787 = vmatpush.bf16.msra.mxu0 %v6821
    %8788 = vmatpush.bf16.msra.mxu0 %v6805
    %8789 = vmatpush.bf16.msra.mxu0 %v6789
    %8790 = vmatpush.bf16.msra.mxu0 %v6773
    %8791 = vmatpush.bf16.msra.mxu0 %v6757
    %8792 = vmatmul.bf16.gmra.mxu0 %v572
    %v8793 = vpop.f32.mrf.mxu0
    %v8794 = vadd.f32 %v8781, %v8793
    %v8795 = vpop.f32.mrf.mxu0
    %8796 = vdwg.mxu0
    %8797 = vmatpush.bf16.msra.mxu0 %v6997
    %8798 = vmatpush.bf16.msra.mxu0 %v6981
    %8799 = vmatpush.bf16.msra.mxu0 %v6965
    %8800 = vmatpush.bf16.msra.mxu0 %v6949
    %8801 = vmatpush.bf16.msra.mxu0 %v6933
    %8802 = vmatpush.bf16.msra.mxu0 %v6917
    %8803 = vmatpush.bf16.msra.mxu0 %v6901
    %8804 = vmatpush.bf16.msra.mxu0 %v6885
    %8805 = vmatmul.bf16.gmra.mxu0 %v573
    %v8806 = vpop.f32.mrf.mxu0
    %v8807 = vadd.f32 %v8794, %v8806
    %v8808 = vpop.f32.mrf.mxu0
    %8809 = vdwg.mxu0
    %8810 = vmatpush.bf16.msra.mxu0 %v5846
    %8811 = vmatpush.bf16.msra.mxu0 %v5830
    %8812 = vmatpush.bf16.msra.mxu0 %v5814
    %8813 = vmatpush.bf16.msra.mxu0 %v5798
    %8814 = vmatpush.bf16.msra.mxu0 %v5782
    %8815 = vmatpush.bf16.msra.mxu0 %v5766
    %8816 = vmatpush.bf16.msra.mxu0 %v5750
    %8817 = vmatpush.bf16.msra.mxu0 %v5734
    %8818 = vmatmul.bf16.gmra.mxu0 %v564
    %v8819 = vpop.f32.mrf.mxu0
    %v8820 = vadd.f32 %v1862, %v8819
    %v8821 = vpop.f32.mrf.mxu0
    %8822 = vdwg.mxu0
    %8823 = vmatpush.bf16.msra.mxu0 %v5974
    %8824 = vmatpush.bf16.msra.mxu0 %v5958
    %8825 = vmatpush.bf16.msra.mxu0 %v5942
    %8826 = vmatpush.bf16.msra.mxu0 %v5926
    %8827 = vmatpush.bf16.msra.mxu0 %v5910
    %8828 = vmatpush.bf16.msra.mxu0 %v5894
    %8829 = vmatpush.bf16.msra.mxu0 %v5878
    %8830 = vmatpush.bf16.msra.mxu0 %v5862
    %8831 = vmatmul.bf16.gmra.mxu0 %v565
    %v8832 = vpop.f32.mrf.mxu0
    %v8833 = vadd.f32 %v8820, %v8832
    %v8834 = vpop.f32.mrf.mxu0
    %8835 = vdwg.mxu0
    %8836 = vmatpush.bf16.msra.mxu0 %v6102
    %8837 = vmatpush.bf16.msra.mxu0 %v6086
    %8838 = vmatpush.bf16.msra.mxu0 %v6070
    %8839 = vmatpush.bf16.msra.mxu0 %v6054
    %8840 = vmatpush.bf16.msra.mxu0 %v6038
    %8841 = vmatpush.bf16.msra.mxu0 %v6022
    %8842 = vmatpush.bf16.msra.mxu0 %v6006
    %8843 = vmatpush.bf16.msra.mxu0 %v5990
    %8844 = vmatmul.bf16.gmra.mxu0 %v566
    %v8845 = vpop.f32.mrf.mxu0
    %v8846 = vadd.f32 %v8833, %v8845
    %v8847 = vpop.f32.mrf.mxu0
    %8848 = vdwg.mxu0
    %8849 = vmatpush.bf16.msra.mxu0 %v6230
    %8850 = vmatpush.bf16.msra.mxu0 %v6214
    %8851 = vmatpush.bf16.msra.mxu0 %v6198
    %8852 = vmatpush.bf16.msra.mxu0 %v6182
    %8853 = vmatpush.bf16.msra.mxu0 %v6166
    %8854 = vmatpush.bf16.msra.mxu0 %v6150
    %8855 = vmatpush.bf16.msra.mxu0 %v6134
    %8856 = vmatpush.bf16.msra.mxu0 %v6118
    %8857 = vmatmul.bf16.gmra.mxu0 %v567
    %v8858 = vpop.f32.mrf.mxu0
    %v8859 = vadd.f32 %v8846, %v8858
    %v8860 = vpop.f32.mrf.mxu0
    %8861 = vdwg.mxu0
    %8862 = vmatpush.bf16.msra.mxu0 %v6358
    %8863 = vmatpush.bf16.msra.mxu0 %v6342
    %8864 = vmatpush.bf16.msra.mxu0 %v6326
    %8865 = vmatpush.bf16.msra.mxu0 %v6310
    %8866 = vmatpush.bf16.msra.mxu0 %v6294
    %8867 = vmatpush.bf16.msra.mxu0 %v6278
    %8868 = vmatpush.bf16.msra.mxu0 %v6262
    %8869 = vmatpush.bf16.msra.mxu0 %v6246
    %8870 = vmatmul.bf16.gmra.mxu0 %v568
    %v8871 = vpop.f32.mrf.mxu0
    %v8872 = vadd.f32 %v8859, %v8871
    %v8873 = vpop.f32.mrf.mxu0
    %8874 = vdwg.mxu0
    %8875 = vmatpush.bf16.msra.mxu0 %v6486
    %8876 = vmatpush.bf16.msra.mxu0 %v6470
    %8877 = vmatpush.bf16.msra.mxu0 %v6454
    %8878 = vmatpush.bf16.msra.mxu0 %v6438
    %8879 = vmatpush.bf16.msra.mxu0 %v6422
    %8880 = vmatpush.bf16.msra.mxu0 %v6406
    %8881 = vmatpush.bf16.msra.mxu0 %v6390
    %8882 = vmatpush.bf16.msra.mxu0 %v6374
    %8883 = vmatmul.bf16.gmra.mxu0 %v569
    %v8884 = vpop.f32.mrf.mxu0
    %v8885 = vadd.f32 %v8872, %v8884
    %v8886 = vpop.f32.mrf.mxu0
    %8887 = vdwg.mxu0
    %8888 = vmatpush.bf16.msra.mxu0 %v6614
    %8889 = vmatpush.bf16.msra.mxu0 %v6598
    %8890 = vmatpush.bf16.msra.mxu0 %v6582
    %8891 = vmatpush.bf16.msra.mxu0 %v6566
    %8892 = vmatpush.bf16.msra.mxu0 %v6550
    %8893 = vmatpush.bf16.msra.mxu0 %v6534
    %8894 = vmatpush.bf16.msra.mxu0 %v6518
    %8895 = vmatpush.bf16.msra.mxu0 %v6502
    %8896 = vmatmul.bf16.gmra.mxu0 %v570
    %v8897 = vpop.f32.mrf.mxu0
    %v8898 = vadd.f32 %v8885, %v8897
    %v8899 = vpop.f32.mrf.mxu0
    %8900 = vdwg.mxu0
    %8901 = vmatpush.bf16.msra.mxu0 %v6742
    %8902 = vmatpush.bf16.msra.mxu0 %v6726
    %8903 = vmatpush.bf16.msra.mxu0 %v6710
    %8904 = vmatpush.bf16.msra.mxu0 %v6694
    %8905 = vmatpush.bf16.msra.mxu0 %v6678
    %8906 = vmatpush.bf16.msra.mxu0 %v6662
    %8907 = vmatpush.bf16.msra.mxu0 %v6646
    %8908 = vmatpush.bf16.msra.mxu0 %v6630
    %8909 = vmatmul.bf16.gmra.mxu0 %v571
    %v8910 = vpop.f32.mrf.mxu0
    %v8911 = vadd.f32 %v8898, %v8910
    %v8912 = vpop.f32.mrf.mxu0
    %8913 = vdwg.mxu0
    %8914 = vmatpush.bf16.msra.mxu0 %v6870
    %8915 = vmatpush.bf16.msra.mxu0 %v6854
    %8916 = vmatpush.bf16.msra.mxu0 %v6838
    %8917 = vmatpush.bf16.msra.mxu0 %v6822
    %8918 = vmatpush.bf16.msra.mxu0 %v6806
    %8919 = vmatpush.bf16.msra.mxu0 %v6790
    %8920 = vmatpush.bf16.msra.mxu0 %v6774
    %8921 = vmatpush.bf16.msra.mxu0 %v6758
    %8922 = vmatmul.bf16.gmra.mxu0 %v572
    %v8923 = vpop.f32.mrf.mxu0
    %v8924 = vadd.f32 %v8911, %v8923
    %v8925 = vpop.f32.mrf.mxu0
    %8926 = vdwg.mxu0
    %8927 = vmatpush.bf16.msra.mxu0 %v6998
    %8928 = vmatpush.bf16.msra.mxu0 %v6982
    %8929 = vmatpush.bf16.msra.mxu0 %v6966
    %8930 = vmatpush.bf16.msra.mxu0 %v6950
    %8931 = vmatpush.bf16.msra.mxu0 %v6934
    %8932 = vmatpush.bf16.msra.mxu0 %v6918
    %8933 = vmatpush.bf16.msra.mxu0 %v6902
    %8934 = vmatpush.bf16.msra.mxu0 %v6886
    %8935 = vmatmul.bf16.gmra.mxu0 %v573
    %v8936 = vpop.f32.mrf.mxu0
    %v8937 = vadd.f32 %v8924, %v8936
    %v8938 = vpop.f32.mrf.mxu0
    %8939 = vdwg.mxu0
    %8940 = vmatpush.bf16.msra.mxu0 %v5847
    %8941 = vmatpush.bf16.msra.mxu0 %v5831
    %8942 = vmatpush.bf16.msra.mxu0 %v5815
    %8943 = vmatpush.bf16.msra.mxu0 %v5799
    %8944 = vmatpush.bf16.msra.mxu0 %v5783
    %8945 = vmatpush.bf16.msra.mxu0 %v5767
    %8946 = vmatpush.bf16.msra.mxu0 %v5751
    %8947 = vmatpush.bf16.msra.mxu0 %v5735
    %8948 = vmatmul.bf16.gmra.mxu0 %v564
    %v8949 = vpop.f32.mrf.mxu0
    %v8950 = vadd.f32 %v1863, %v8949
    %v8951 = vpop.f32.mrf.mxu0
    %8952 = vdwg.mxu0
    %8953 = vmatpush.bf16.msra.mxu0 %v5975
    %8954 = vmatpush.bf16.msra.mxu0 %v5959
    %8955 = vmatpush.bf16.msra.mxu0 %v5943
    %8956 = vmatpush.bf16.msra.mxu0 %v5927
    %8957 = vmatpush.bf16.msra.mxu0 %v5911
    %8958 = vmatpush.bf16.msra.mxu0 %v5895
    %8959 = vmatpush.bf16.msra.mxu0 %v5879
    %8960 = vmatpush.bf16.msra.mxu0 %v5863
    %8961 = vmatmul.bf16.gmra.mxu0 %v565
    %v8962 = vpop.f32.mrf.mxu0
    %v8963 = vadd.f32 %v8950, %v8962
    %v8964 = vpop.f32.mrf.mxu0
    %8965 = vdwg.mxu0
    %8966 = vmatpush.bf16.msra.mxu0 %v6103
    %8967 = vmatpush.bf16.msra.mxu0 %v6087
    %8968 = vmatpush.bf16.msra.mxu0 %v6071
    %8969 = vmatpush.bf16.msra.mxu0 %v6055
    %8970 = vmatpush.bf16.msra.mxu0 %v6039
    %8971 = vmatpush.bf16.msra.mxu0 %v6023
    %8972 = vmatpush.bf16.msra.mxu0 %v6007
    %8973 = vmatpush.bf16.msra.mxu0 %v5991
    %8974 = vmatmul.bf16.gmra.mxu0 %v566
    %v8975 = vpop.f32.mrf.mxu0
    %v8976 = vadd.f32 %v8963, %v8975
    %v8977 = vpop.f32.mrf.mxu0
    %8978 = vdwg.mxu0
    %8979 = vmatpush.bf16.msra.mxu0 %v6231
    %8980 = vmatpush.bf16.msra.mxu0 %v6215
    %8981 = vmatpush.bf16.msra.mxu0 %v6199
    %8982 = vmatpush.bf16.msra.mxu0 %v6183
    %8983 = vmatpush.bf16.msra.mxu0 %v6167
    %8984 = vmatpush.bf16.msra.mxu0 %v6151
    %8985 = vmatpush.bf16.msra.mxu0 %v6135
    %8986 = vmatpush.bf16.msra.mxu0 %v6119
    %8987 = vmatmul.bf16.gmra.mxu0 %v567
    %v8988 = vpop.f32.mrf.mxu0
    %v8989 = vadd.f32 %v8976, %v8988
    %v8990 = vpop.f32.mrf.mxu0
    %8991 = vdwg.mxu0
    %8992 = vmatpush.bf16.msra.mxu0 %v6359
    %8993 = vmatpush.bf16.msra.mxu0 %v6343
    %8994 = vmatpush.bf16.msra.mxu0 %v6327
    %8995 = vmatpush.bf16.msra.mxu0 %v6311
    %8996 = vmatpush.bf16.msra.mxu0 %v6295
    %8997 = vmatpush.bf16.msra.mxu0 %v6279
    %8998 = vmatpush.bf16.msra.mxu0 %v6263
    %8999 = vmatpush.bf16.msra.mxu0 %v6247
    %9000 = vmatmul.bf16.gmra.mxu0 %v568
    %v9001 = vpop.f32.mrf.mxu0
    %v9002 = vadd.f32 %v8989, %v9001
    %v9003 = vpop.f32.mrf.mxu0
    %9004 = vdwg.mxu0
    %9005 = vmatpush.bf16.msra.mxu0 %v6487
    %9006 = vmatpush.bf16.msra.mxu0 %v6471
    %9007 = vmatpush.bf16.msra.mxu0 %v6455
    %9008 = vmatpush.bf16.msra.mxu0 %v6439
    %9009 = vmatpush.bf16.msra.mxu0 %v6423
    %9010 = vmatpush.bf16.msra.mxu0 %v6407
    %9011 = vmatpush.bf16.msra.mxu0 %v6391
    %9012 = vmatpush.bf16.msra.mxu0 %v6375
    %9013 = vmatmul.bf16.gmra.mxu0 %v569
    %v9014 = vpop.f32.mrf.mxu0
    %v9015 = vadd.f32 %v9002, %v9014
    %v9016 = vpop.f32.mrf.mxu0
    %9017 = vdwg.mxu0
    %9018 = vmatpush.bf16.msra.mxu0 %v6615
    %9019 = vmatpush.bf16.msra.mxu0 %v6599
    %9020 = vmatpush.bf16.msra.mxu0 %v6583
    %9021 = vmatpush.bf16.msra.mxu0 %v6567
    %9022 = vmatpush.bf16.msra.mxu0 %v6551
    %9023 = vmatpush.bf16.msra.mxu0 %v6535
    %9024 = vmatpush.bf16.msra.mxu0 %v6519
    %9025 = vmatpush.bf16.msra.mxu0 %v6503
    %9026 = vmatmul.bf16.gmra.mxu0 %v570
    %v9027 = vpop.f32.mrf.mxu0
    %v9028 = vadd.f32 %v9015, %v9027
    %v9029 = vpop.f32.mrf.mxu0
    %9030 = vdwg.mxu0
    %9031 = vmatpush.bf16.msra.mxu0 %v6743
    %9032 = vmatpush.bf16.msra.mxu0 %v6727
    %9033 = vmatpush.bf16.msra.mxu0 %v6711
    %9034 = vmatpush.bf16.msra.mxu0 %v6695
    %9035 = vmatpush.bf16.msra.mxu0 %v6679
    %9036 = vmatpush.bf16.msra.mxu0 %v6663
    %9037 = vmatpush.bf16.msra.mxu0 %v6647
    %9038 = vmatpush.bf16.msra.mxu0 %v6631
    %9039 = vmatmul.bf16.gmra.mxu0 %v571
    %v9040 = vpop.f32.mrf.mxu0
    %v9041 = vadd.f32 %v9028, %v9040
    %v9042 = vpop.f32.mrf.mxu0
    %9043 = vdwg.mxu0
    %9044 = vmatpush.bf16.msra.mxu0 %v6871
    %9045 = vmatpush.bf16.msra.mxu0 %v6855
    %9046 = vmatpush.bf16.msra.mxu0 %v6839
    %9047 = vmatpush.bf16.msra.mxu0 %v6823
    %9048 = vmatpush.bf16.msra.mxu0 %v6807
    %9049 = vmatpush.bf16.msra.mxu0 %v6791
    %9050 = vmatpush.bf16.msra.mxu0 %v6775
    %9051 = vmatpush.bf16.msra.mxu0 %v6759
    %9052 = vmatmul.bf16.gmra.mxu0 %v572
    %v9053 = vpop.f32.mrf.mxu0
    %v9054 = vadd.f32 %v9041, %v9053
    %v9055 = vpop.f32.mrf.mxu0
    %9056 = vdwg.mxu0
    %9057 = vmatpush.bf16.msra.mxu0 %v6999
    %9058 = vmatpush.bf16.msra.mxu0 %v6983
    %9059 = vmatpush.bf16.msra.mxu0 %v6967
    %9060 = vmatpush.bf16.msra.mxu0 %v6951
    %9061 = vmatpush.bf16.msra.mxu0 %v6935
    %9062 = vmatpush.bf16.msra.mxu0 %v6919
    %9063 = vmatpush.bf16.msra.mxu0 %v6903
    %9064 = vmatpush.bf16.msra.mxu0 %v6887
    %9065 = vmatmul.bf16.gmra.mxu0 %v573
    %v9066 = vpop.f32.mrf.mxu0
    %v9067 = vadd.f32 %v9054, %v9066
    %v9068 = vpop.f32.mrf.mxu0
    %9069 = vdwg.mxu0
    %9070 = vmatpush.bf16.msra.mxu0 %v5848
    %9071 = vmatpush.bf16.msra.mxu0 %v5832
    %9072 = vmatpush.bf16.msra.mxu0 %v5816
    %9073 = vmatpush.bf16.msra.mxu0 %v5800
    %9074 = vmatpush.bf16.msra.mxu0 %v5784
    %9075 = vmatpush.bf16.msra.mxu0 %v5768
    %9076 = vmatpush.bf16.msra.mxu0 %v5752
    %9077 = vmatpush.bf16.msra.mxu0 %v5736
    %9078 = vmatmul.bf16.gmra.mxu0 %v564
    %v9079 = vpop.f32.mrf.mxu0
    %v9080 = vadd.f32 %v1864, %v9079
    %v9081 = vpop.f32.mrf.mxu0
    %9082 = vdwg.mxu0
    %9083 = vmatpush.bf16.msra.mxu0 %v5976
    %9084 = vmatpush.bf16.msra.mxu0 %v5960
    %9085 = vmatpush.bf16.msra.mxu0 %v5944
    %9086 = vmatpush.bf16.msra.mxu0 %v5928
    %9087 = vmatpush.bf16.msra.mxu0 %v5912
    %9088 = vmatpush.bf16.msra.mxu0 %v5896
    %9089 = vmatpush.bf16.msra.mxu0 %v5880
    %9090 = vmatpush.bf16.msra.mxu0 %v5864
    %9091 = vmatmul.bf16.gmra.mxu0 %v565
    %v9092 = vpop.f32.mrf.mxu0
    %v9093 = vadd.f32 %v9080, %v9092
    %v9094 = vpop.f32.mrf.mxu0
    %9095 = vdwg.mxu0
    %9096 = vmatpush.bf16.msra.mxu0 %v6104
    %9097 = vmatpush.bf16.msra.mxu0 %v6088
    %9098 = vmatpush.bf16.msra.mxu0 %v6072
    %9099 = vmatpush.bf16.msra.mxu0 %v6056
    %9100 = vmatpush.bf16.msra.mxu0 %v6040
    %9101 = vmatpush.bf16.msra.mxu0 %v6024
    %9102 = vmatpush.bf16.msra.mxu0 %v6008
    %9103 = vmatpush.bf16.msra.mxu0 %v5992
    %9104 = vmatmul.bf16.gmra.mxu0 %v566
    %v9105 = vpop.f32.mrf.mxu0
    %v9106 = vadd.f32 %v9093, %v9105
    %v9107 = vpop.f32.mrf.mxu0
    %9108 = vdwg.mxu0
    %9109 = vmatpush.bf16.msra.mxu0 %v6232
    %9110 = vmatpush.bf16.msra.mxu0 %v6216
    %9111 = vmatpush.bf16.msra.mxu0 %v6200
    %9112 = vmatpush.bf16.msra.mxu0 %v6184
    %9113 = vmatpush.bf16.msra.mxu0 %v6168
    %9114 = vmatpush.bf16.msra.mxu0 %v6152
    %9115 = vmatpush.bf16.msra.mxu0 %v6136
    %9116 = vmatpush.bf16.msra.mxu0 %v6120
    %9117 = vmatmul.bf16.gmra.mxu0 %v567
    %v9118 = vpop.f32.mrf.mxu0
    %v9119 = vadd.f32 %v9106, %v9118
    %v9120 = vpop.f32.mrf.mxu0
    %9121 = vdwg.mxu0
    %9122 = vmatpush.bf16.msra.mxu0 %v6360
    %9123 = vmatpush.bf16.msra.mxu0 %v6344
    %9124 = vmatpush.bf16.msra.mxu0 %v6328
    %9125 = vmatpush.bf16.msra.mxu0 %v6312
    %9126 = vmatpush.bf16.msra.mxu0 %v6296
    %9127 = vmatpush.bf16.msra.mxu0 %v6280
    %9128 = vmatpush.bf16.msra.mxu0 %v6264
    %9129 = vmatpush.bf16.msra.mxu0 %v6248
    %9130 = vmatmul.bf16.gmra.mxu0 %v568
    %v9131 = vpop.f32.mrf.mxu0
    %v9132 = vadd.f32 %v9119, %v9131
    %v9133 = vpop.f32.mrf.mxu0
    %9134 = vdwg.mxu0
    %9135 = vmatpush.bf16.msra.mxu0 %v6488
    %9136 = vmatpush.bf16.msra.mxu0 %v6472
    %9137 = vmatpush.bf16.msra.mxu0 %v6456
    %9138 = vmatpush.bf16.msra.mxu0 %v6440
    %9139 = vmatpush.bf16.msra.mxu0 %v6424
    %9140 = vmatpush.bf16.msra.mxu0 %v6408
    %9141 = vmatpush.bf16.msra.mxu0 %v6392
    %9142 = vmatpush.bf16.msra.mxu0 %v6376
    %9143 = vmatmul.bf16.gmra.mxu0 %v569
    %v9144 = vpop.f32.mrf.mxu0
    %v9145 = vadd.f32 %v9132, %v9144
    %v9146 = vpop.f32.mrf.mxu0
    %9147 = vdwg.mxu0
    %9148 = vmatpush.bf16.msra.mxu0 %v6616
    %9149 = vmatpush.bf16.msra.mxu0 %v6600
    %9150 = vmatpush.bf16.msra.mxu0 %v6584
    %9151 = vmatpush.bf16.msra.mxu0 %v6568
    %9152 = vmatpush.bf16.msra.mxu0 %v6552
    %9153 = vmatpush.bf16.msra.mxu0 %v6536
    %9154 = vmatpush.bf16.msra.mxu0 %v6520
    %9155 = vmatpush.bf16.msra.mxu0 %v6504
    %9156 = vmatmul.bf16.gmra.mxu0 %v570
    %v9157 = vpop.f32.mrf.mxu0
    %v9158 = vadd.f32 %v9145, %v9157
    %v9159 = vpop.f32.mrf.mxu0
    %9160 = vdwg.mxu0
    %9161 = vmatpush.bf16.msra.mxu0 %v6744
    %9162 = vmatpush.bf16.msra.mxu0 %v6728
    %9163 = vmatpush.bf16.msra.mxu0 %v6712
    %9164 = vmatpush.bf16.msra.mxu0 %v6696
    %9165 = vmatpush.bf16.msra.mxu0 %v6680
    %9166 = vmatpush.bf16.msra.mxu0 %v6664
    %9167 = vmatpush.bf16.msra.mxu0 %v6648
    %9168 = vmatpush.bf16.msra.mxu0 %v6632
    %9169 = vmatmul.bf16.gmra.mxu0 %v571
    %v9170 = vpop.f32.mrf.mxu0
    %v9171 = vadd.f32 %v9158, %v9170
    %v9172 = vpop.f32.mrf.mxu0
    %9173 = vdwg.mxu0
    %9174 = vmatpush.bf16.msra.mxu0 %v6872
    %9175 = vmatpush.bf16.msra.mxu0 %v6856
    %9176 = vmatpush.bf16.msra.mxu0 %v6840
    %9177 = vmatpush.bf16.msra.mxu0 %v6824
    %9178 = vmatpush.bf16.msra.mxu0 %v6808
    %9179 = vmatpush.bf16.msra.mxu0 %v6792
    %9180 = vmatpush.bf16.msra.mxu0 %v6776
    %9181 = vmatpush.bf16.msra.mxu0 %v6760
    %9182 = vmatmul.bf16.gmra.mxu0 %v572
    %v9183 = vpop.f32.mrf.mxu0
    %v9184 = vadd.f32 %v9171, %v9183
    %v9185 = vpop.f32.mrf.mxu0
    %9186 = vdwg.mxu0
    %9187 = vmatpush.bf16.msra.mxu0 %v7000
    %9188 = vmatpush.bf16.msra.mxu0 %v6984
    %9189 = vmatpush.bf16.msra.mxu0 %v6968
    %9190 = vmatpush.bf16.msra.mxu0 %v6952
    %9191 = vmatpush.bf16.msra.mxu0 %v6936
    %9192 = vmatpush.bf16.msra.mxu0 %v6920
    %9193 = vmatpush.bf16.msra.mxu0 %v6904
    %9194 = vmatpush.bf16.msra.mxu0 %v6888
    %9195 = vmatmul.bf16.gmra.mxu0 %v573
    %v9196 = vpop.f32.mrf.mxu0
    %v9197 = vadd.f32 %v9184, %v9196
    %v9198 = vpop.f32.mrf.mxu0
    %9199 = vdwg.mxu0
    %9200 = vmatpush.bf16.msra.mxu0 %v5849
    %9201 = vmatpush.bf16.msra.mxu0 %v5833
    %9202 = vmatpush.bf16.msra.mxu0 %v5817
    %9203 = vmatpush.bf16.msra.mxu0 %v5801
    %9204 = vmatpush.bf16.msra.mxu0 %v5785
    %9205 = vmatpush.bf16.msra.mxu0 %v5769
    %9206 = vmatpush.bf16.msra.mxu0 %v5753
    %9207 = vmatpush.bf16.msra.mxu0 %v5737
    %9208 = vmatmul.bf16.gmra.mxu0 %v564
    %v9209 = vpop.f32.mrf.mxu0
    %v9210 = vadd.f32 %v1865, %v9209
    %v9211 = vpop.f32.mrf.mxu0
    %9212 = vdwg.mxu0
    %9213 = vmatpush.bf16.msra.mxu0 %v5977
    %9214 = vmatpush.bf16.msra.mxu0 %v5961
    %9215 = vmatpush.bf16.msra.mxu0 %v5945
    %9216 = vmatpush.bf16.msra.mxu0 %v5929
    %9217 = vmatpush.bf16.msra.mxu0 %v5913
    %9218 = vmatpush.bf16.msra.mxu0 %v5897
    %9219 = vmatpush.bf16.msra.mxu0 %v5881
    %9220 = vmatpush.bf16.msra.mxu0 %v5865
    %9221 = vmatmul.bf16.gmra.mxu0 %v565
    %v9222 = vpop.f32.mrf.mxu0
    %v9223 = vadd.f32 %v9210, %v9222
    %v9224 = vpop.f32.mrf.mxu0
    %9225 = vdwg.mxu0
    %9226 = vmatpush.bf16.msra.mxu0 %v6105
    %9227 = vmatpush.bf16.msra.mxu0 %v6089
    %9228 = vmatpush.bf16.msra.mxu0 %v6073
    %9229 = vmatpush.bf16.msra.mxu0 %v6057
    %9230 = vmatpush.bf16.msra.mxu0 %v6041
    %9231 = vmatpush.bf16.msra.mxu0 %v6025
    %9232 = vmatpush.bf16.msra.mxu0 %v6009
    %9233 = vmatpush.bf16.msra.mxu0 %v5993
    %9234 = vmatmul.bf16.gmra.mxu0 %v566
    %v9235 = vpop.f32.mrf.mxu0
    %v9236 = vadd.f32 %v9223, %v9235
    %v9237 = vpop.f32.mrf.mxu0
    %9238 = vdwg.mxu0
    %9239 = vmatpush.bf16.msra.mxu0 %v6233
    %9240 = vmatpush.bf16.msra.mxu0 %v6217
    %9241 = vmatpush.bf16.msra.mxu0 %v6201
    %9242 = vmatpush.bf16.msra.mxu0 %v6185
    %9243 = vmatpush.bf16.msra.mxu0 %v6169
    %9244 = vmatpush.bf16.msra.mxu0 %v6153
    %9245 = vmatpush.bf16.msra.mxu0 %v6137
    %9246 = vmatpush.bf16.msra.mxu0 %v6121
    %9247 = vmatmul.bf16.gmra.mxu0 %v567
    %v9248 = vpop.f32.mrf.mxu0
    %v9249 = vadd.f32 %v9236, %v9248
    %v9250 = vpop.f32.mrf.mxu0
    %9251 = vdwg.mxu0
    %9252 = vmatpush.bf16.msra.mxu0 %v6361
    %9253 = vmatpush.bf16.msra.mxu0 %v6345
    %9254 = vmatpush.bf16.msra.mxu0 %v6329
    %9255 = vmatpush.bf16.msra.mxu0 %v6313
    %9256 = vmatpush.bf16.msra.mxu0 %v6297
    %9257 = vmatpush.bf16.msra.mxu0 %v6281
    %9258 = vmatpush.bf16.msra.mxu0 %v6265
    %9259 = vmatpush.bf16.msra.mxu0 %v6249
    %9260 = vmatmul.bf16.gmra.mxu0 %v568
    %v9261 = vpop.f32.mrf.mxu0
    %v9262 = vadd.f32 %v9249, %v9261
    %v9263 = vpop.f32.mrf.mxu0
    %9264 = vdwg.mxu0
    %9265 = vmatpush.bf16.msra.mxu0 %v6489
    %9266 = vmatpush.bf16.msra.mxu0 %v6473
    %9267 = vmatpush.bf16.msra.mxu0 %v6457
    %9268 = vmatpush.bf16.msra.mxu0 %v6441
    %9269 = vmatpush.bf16.msra.mxu0 %v6425
    %9270 = vmatpush.bf16.msra.mxu0 %v6409
    %9271 = vmatpush.bf16.msra.mxu0 %v6393
    %9272 = vmatpush.bf16.msra.mxu0 %v6377
    %9273 = vmatmul.bf16.gmra.mxu0 %v569
    %v9274 = vpop.f32.mrf.mxu0
    %v9275 = vadd.f32 %v9262, %v9274
    %v9276 = vpop.f32.mrf.mxu0
    %9277 = vdwg.mxu0
    %9278 = vmatpush.bf16.msra.mxu0 %v6617
    %9279 = vmatpush.bf16.msra.mxu0 %v6601
    %9280 = vmatpush.bf16.msra.mxu0 %v6585
    %9281 = vmatpush.bf16.msra.mxu0 %v6569
    %9282 = vmatpush.bf16.msra.mxu0 %v6553
    %9283 = vmatpush.bf16.msra.mxu0 %v6537
    %9284 = vmatpush.bf16.msra.mxu0 %v6521
    %9285 = vmatpush.bf16.msra.mxu0 %v6505
    %9286 = vmatmul.bf16.gmra.mxu0 %v570
    %v9287 = vpop.f32.mrf.mxu0
    %v9288 = vadd.f32 %v9275, %v9287
    %v9289 = vpop.f32.mrf.mxu0
    %9290 = vdwg.mxu0
    %9291 = vmatpush.bf16.msra.mxu0 %v6745
    %9292 = vmatpush.bf16.msra.mxu0 %v6729
    %9293 = vmatpush.bf16.msra.mxu0 %v6713
    %9294 = vmatpush.bf16.msra.mxu0 %v6697
    %9295 = vmatpush.bf16.msra.mxu0 %v6681
    %9296 = vmatpush.bf16.msra.mxu0 %v6665
    %9297 = vmatpush.bf16.msra.mxu0 %v6649
    %9298 = vmatpush.bf16.msra.mxu0 %v6633
    %9299 = vmatmul.bf16.gmra.mxu0 %v571
    %v9300 = vpop.f32.mrf.mxu0
    %v9301 = vadd.f32 %v9288, %v9300
    %v9302 = vpop.f32.mrf.mxu0
    %9303 = vdwg.mxu0
    %9304 = vmatpush.bf16.msra.mxu0 %v6873
    %9305 = vmatpush.bf16.msra.mxu0 %v6857
    %9306 = vmatpush.bf16.msra.mxu0 %v6841
    %9307 = vmatpush.bf16.msra.mxu0 %v6825
    %9308 = vmatpush.bf16.msra.mxu0 %v6809
    %9309 = vmatpush.bf16.msra.mxu0 %v6793
    %9310 = vmatpush.bf16.msra.mxu0 %v6777
    %9311 = vmatpush.bf16.msra.mxu0 %v6761
    %9312 = vmatmul.bf16.gmra.mxu0 %v572
    %v9313 = vpop.f32.mrf.mxu0
    %v9314 = vadd.f32 %v9301, %v9313
    %v9315 = vpop.f32.mrf.mxu0
    %9316 = vdwg.mxu0
    %9317 = vmatpush.bf16.msra.mxu0 %v7001
    %9318 = vmatpush.bf16.msra.mxu0 %v6985
    %9319 = vmatpush.bf16.msra.mxu0 %v6969
    %9320 = vmatpush.bf16.msra.mxu0 %v6953
    %9321 = vmatpush.bf16.msra.mxu0 %v6937
    %9322 = vmatpush.bf16.msra.mxu0 %v6921
    %9323 = vmatpush.bf16.msra.mxu0 %v6905
    %9324 = vmatpush.bf16.msra.mxu0 %v6889
    %9325 = vmatmul.bf16.gmra.mxu0 %v573
    %v9326 = vpop.f32.mrf.mxu0
    %v9327 = vadd.f32 %v9314, %v9326
    %v9328 = vpop.f32.mrf.mxu0
    %9329 = vdwg.mxu0
    %9330 = vmatpush.bf16.msra.mxu0 %v5850
    %9331 = vmatpush.bf16.msra.mxu0 %v5834
    %9332 = vmatpush.bf16.msra.mxu0 %v5818
    %9333 = vmatpush.bf16.msra.mxu0 %v5802
    %9334 = vmatpush.bf16.msra.mxu0 %v5786
    %9335 = vmatpush.bf16.msra.mxu0 %v5770
    %9336 = vmatpush.bf16.msra.mxu0 %v5754
    %9337 = vmatpush.bf16.msra.mxu0 %v5738
    %9338 = vmatmul.bf16.gmra.mxu0 %v564
    %v9339 = vpop.f32.mrf.mxu0
    %v9340 = vadd.f32 %v1866, %v9339
    %v9341 = vpop.f32.mrf.mxu0
    %9342 = vdwg.mxu0
    %9343 = vmatpush.bf16.msra.mxu0 %v5978
    %9344 = vmatpush.bf16.msra.mxu0 %v5962
    %9345 = vmatpush.bf16.msra.mxu0 %v5946
    %9346 = vmatpush.bf16.msra.mxu0 %v5930
    %9347 = vmatpush.bf16.msra.mxu0 %v5914
    %9348 = vmatpush.bf16.msra.mxu0 %v5898
    %9349 = vmatpush.bf16.msra.mxu0 %v5882
    %9350 = vmatpush.bf16.msra.mxu0 %v5866
    %9351 = vmatmul.bf16.gmra.mxu0 %v565
    %v9352 = vpop.f32.mrf.mxu0
    %v9353 = vadd.f32 %v9340, %v9352
    %v9354 = vpop.f32.mrf.mxu0
    %9355 = vdwg.mxu0
    %9356 = vmatpush.bf16.msra.mxu0 %v6106
    %9357 = vmatpush.bf16.msra.mxu0 %v6090
    %9358 = vmatpush.bf16.msra.mxu0 %v6074
    %9359 = vmatpush.bf16.msra.mxu0 %v6058
    %9360 = vmatpush.bf16.msra.mxu0 %v6042
    %9361 = vmatpush.bf16.msra.mxu0 %v6026
    %9362 = vmatpush.bf16.msra.mxu0 %v6010
    %9363 = vmatpush.bf16.msra.mxu0 %v5994
    %9364 = vmatmul.bf16.gmra.mxu0 %v566
    %v9365 = vpop.f32.mrf.mxu0
    %v9366 = vadd.f32 %v9353, %v9365
    %v9367 = vpop.f32.mrf.mxu0
    %9368 = vdwg.mxu0
    %9369 = vmatpush.bf16.msra.mxu0 %v6234
    %9370 = vmatpush.bf16.msra.mxu0 %v6218
    %9371 = vmatpush.bf16.msra.mxu0 %v6202
    %9372 = vmatpush.bf16.msra.mxu0 %v6186
    %9373 = vmatpush.bf16.msra.mxu0 %v6170
    %9374 = vmatpush.bf16.msra.mxu0 %v6154
    %9375 = vmatpush.bf16.msra.mxu0 %v6138
    %9376 = vmatpush.bf16.msra.mxu0 %v6122
    %9377 = vmatmul.bf16.gmra.mxu0 %v567
    %v9378 = vpop.f32.mrf.mxu0
    %v9379 = vadd.f32 %v9366, %v9378
    %v9380 = vpop.f32.mrf.mxu0
    %9381 = vdwg.mxu0
    %9382 = vmatpush.bf16.msra.mxu0 %v6362
    %9383 = vmatpush.bf16.msra.mxu0 %v6346
    %9384 = vmatpush.bf16.msra.mxu0 %v6330
    %9385 = vmatpush.bf16.msra.mxu0 %v6314
    %9386 = vmatpush.bf16.msra.mxu0 %v6298
    %9387 = vmatpush.bf16.msra.mxu0 %v6282
    %9388 = vmatpush.bf16.msra.mxu0 %v6266
    %9389 = vmatpush.bf16.msra.mxu0 %v6250
    %9390 = vmatmul.bf16.gmra.mxu0 %v568
    %v9391 = vpop.f32.mrf.mxu0
    %v9392 = vadd.f32 %v9379, %v9391
    %v9393 = vpop.f32.mrf.mxu0
    %9394 = vdwg.mxu0
    %9395 = vmatpush.bf16.msra.mxu0 %v6490
    %9396 = vmatpush.bf16.msra.mxu0 %v6474
    %9397 = vmatpush.bf16.msra.mxu0 %v6458
    %9398 = vmatpush.bf16.msra.mxu0 %v6442
    %9399 = vmatpush.bf16.msra.mxu0 %v6426
    %9400 = vmatpush.bf16.msra.mxu0 %v6410
    %9401 = vmatpush.bf16.msra.mxu0 %v6394
    %9402 = vmatpush.bf16.msra.mxu0 %v6378
    %9403 = vmatmul.bf16.gmra.mxu0 %v569
    %v9404 = vpop.f32.mrf.mxu0
    %v9405 = vadd.f32 %v9392, %v9404
    %v9406 = vpop.f32.mrf.mxu0
    %9407 = vdwg.mxu0
    %9408 = vmatpush.bf16.msra.mxu0 %v6618
    %9409 = vmatpush.bf16.msra.mxu0 %v6602
    %9410 = vmatpush.bf16.msra.mxu0 %v6586
    %9411 = vmatpush.bf16.msra.mxu0 %v6570
    %9412 = vmatpush.bf16.msra.mxu0 %v6554
    %9413 = vmatpush.bf16.msra.mxu0 %v6538
    %9414 = vmatpush.bf16.msra.mxu0 %v6522
    %9415 = vmatpush.bf16.msra.mxu0 %v6506
    %9416 = vmatmul.bf16.gmra.mxu0 %v570
    %v9417 = vpop.f32.mrf.mxu0
    %v9418 = vadd.f32 %v9405, %v9417
    %v9419 = vpop.f32.mrf.mxu0
    %9420 = vdwg.mxu0
    %9421 = vmatpush.bf16.msra.mxu0 %v6746
    %9422 = vmatpush.bf16.msra.mxu0 %v6730
    %9423 = vmatpush.bf16.msra.mxu0 %v6714
    %9424 = vmatpush.bf16.msra.mxu0 %v6698
    %9425 = vmatpush.bf16.msra.mxu0 %v6682
    %9426 = vmatpush.bf16.msra.mxu0 %v6666
    %9427 = vmatpush.bf16.msra.mxu0 %v6650
    %9428 = vmatpush.bf16.msra.mxu0 %v6634
    %9429 = vmatmul.bf16.gmra.mxu0 %v571
    %v9430 = vpop.f32.mrf.mxu0
    %v9431 = vadd.f32 %v9418, %v9430
    %v9432 = vpop.f32.mrf.mxu0
    %9433 = vdwg.mxu0
    %9434 = vmatpush.bf16.msra.mxu0 %v6874
    %9435 = vmatpush.bf16.msra.mxu0 %v6858
    %9436 = vmatpush.bf16.msra.mxu0 %v6842
    %9437 = vmatpush.bf16.msra.mxu0 %v6826
    %9438 = vmatpush.bf16.msra.mxu0 %v6810
    %9439 = vmatpush.bf16.msra.mxu0 %v6794
    %9440 = vmatpush.bf16.msra.mxu0 %v6778
    %9441 = vmatpush.bf16.msra.mxu0 %v6762
    %9442 = vmatmul.bf16.gmra.mxu0 %v572
    %v9443 = vpop.f32.mrf.mxu0
    %v9444 = vadd.f32 %v9431, %v9443
    %v9445 = vpop.f32.mrf.mxu0
    %9446 = vdwg.mxu0
    %9447 = vmatpush.bf16.msra.mxu0 %v7002
    %9448 = vmatpush.bf16.msra.mxu0 %v6986
    %9449 = vmatpush.bf16.msra.mxu0 %v6970
    %9450 = vmatpush.bf16.msra.mxu0 %v6954
    %9451 = vmatpush.bf16.msra.mxu0 %v6938
    %9452 = vmatpush.bf16.msra.mxu0 %v6922
    %9453 = vmatpush.bf16.msra.mxu0 %v6906
    %9454 = vmatpush.bf16.msra.mxu0 %v6890
    %9455 = vmatmul.bf16.gmra.mxu0 %v573
    %v9456 = vpop.f32.mrf.mxu0
    %v9457 = vadd.f32 %v9444, %v9456
    %v9458 = vpop.f32.mrf.mxu0
    %9459 = vdwg.mxu0
    %9460 = vmatpush.bf16.msra.mxu0 %v5851
    %9461 = vmatpush.bf16.msra.mxu0 %v5835
    %9462 = vmatpush.bf16.msra.mxu0 %v5819
    %9463 = vmatpush.bf16.msra.mxu0 %v5803
    %9464 = vmatpush.bf16.msra.mxu0 %v5787
    %9465 = vmatpush.bf16.msra.mxu0 %v5771
    %9466 = vmatpush.bf16.msra.mxu0 %v5755
    %9467 = vmatpush.bf16.msra.mxu0 %v5739
    %9468 = vmatmul.bf16.gmra.mxu0 %v564
    %v9469 = vpop.f32.mrf.mxu0
    %v9470 = vadd.f32 %v1867, %v9469
    %v9471 = vpop.f32.mrf.mxu0
    %9472 = vdwg.mxu0
    %9473 = vmatpush.bf16.msra.mxu0 %v5979
    %9474 = vmatpush.bf16.msra.mxu0 %v5963
    %9475 = vmatpush.bf16.msra.mxu0 %v5947
    %9476 = vmatpush.bf16.msra.mxu0 %v5931
    %9477 = vmatpush.bf16.msra.mxu0 %v5915
    %9478 = vmatpush.bf16.msra.mxu0 %v5899
    %9479 = vmatpush.bf16.msra.mxu0 %v5883
    %9480 = vmatpush.bf16.msra.mxu0 %v5867
    %9481 = vmatmul.bf16.gmra.mxu0 %v565
    %v9482 = vpop.f32.mrf.mxu0
    %v9483 = vadd.f32 %v9470, %v9482
    %v9484 = vpop.f32.mrf.mxu0
    %9485 = vdwg.mxu0
    %9486 = vmatpush.bf16.msra.mxu0 %v6107
    %9487 = vmatpush.bf16.msra.mxu0 %v6091
    %9488 = vmatpush.bf16.msra.mxu0 %v6075
    %9489 = vmatpush.bf16.msra.mxu0 %v6059
    %9490 = vmatpush.bf16.msra.mxu0 %v6043
    %9491 = vmatpush.bf16.msra.mxu0 %v6027
    %9492 = vmatpush.bf16.msra.mxu0 %v6011
    %9493 = vmatpush.bf16.msra.mxu0 %v5995
    %9494 = vmatmul.bf16.gmra.mxu0 %v566
    %v9495 = vpop.f32.mrf.mxu0
    %v9496 = vadd.f32 %v9483, %v9495
    %v9497 = vpop.f32.mrf.mxu0
    %9498 = vdwg.mxu0
    %9499 = vmatpush.bf16.msra.mxu0 %v6235
    %9500 = vmatpush.bf16.msra.mxu0 %v6219
    %9501 = vmatpush.bf16.msra.mxu0 %v6203
    %9502 = vmatpush.bf16.msra.mxu0 %v6187
    %9503 = vmatpush.bf16.msra.mxu0 %v6171
    %9504 = vmatpush.bf16.msra.mxu0 %v6155
    %9505 = vmatpush.bf16.msra.mxu0 %v6139
    %9506 = vmatpush.bf16.msra.mxu0 %v6123
    %9507 = vmatmul.bf16.gmra.mxu0 %v567
    %v9508 = vpop.f32.mrf.mxu0
    %v9509 = vadd.f32 %v9496, %v9508
    %v9510 = vpop.f32.mrf.mxu0
    %9511 = vdwg.mxu0
    %9512 = vmatpush.bf16.msra.mxu0 %v6363
    %9513 = vmatpush.bf16.msra.mxu0 %v6347
    %9514 = vmatpush.bf16.msra.mxu0 %v6331
    %9515 = vmatpush.bf16.msra.mxu0 %v6315
    %9516 = vmatpush.bf16.msra.mxu0 %v6299
    %9517 = vmatpush.bf16.msra.mxu0 %v6283
    %9518 = vmatpush.bf16.msra.mxu0 %v6267
    %9519 = vmatpush.bf16.msra.mxu0 %v6251
    %9520 = vmatmul.bf16.gmra.mxu0 %v568
    %v9521 = vpop.f32.mrf.mxu0
    %v9522 = vadd.f32 %v9509, %v9521
    %v9523 = vpop.f32.mrf.mxu0
    %9524 = vdwg.mxu0
    %9525 = vmatpush.bf16.msra.mxu0 %v6491
    %9526 = vmatpush.bf16.msra.mxu0 %v6475
    %9527 = vmatpush.bf16.msra.mxu0 %v6459
    %9528 = vmatpush.bf16.msra.mxu0 %v6443
    %9529 = vmatpush.bf16.msra.mxu0 %v6427
    %9530 = vmatpush.bf16.msra.mxu0 %v6411
    %9531 = vmatpush.bf16.msra.mxu0 %v6395
    %9532 = vmatpush.bf16.msra.mxu0 %v6379
    %9533 = vmatmul.bf16.gmra.mxu0 %v569
    %v9534 = vpop.f32.mrf.mxu0
    %v9535 = vadd.f32 %v9522, %v9534
    %v9536 = vpop.f32.mrf.mxu0
    %9537 = vdwg.mxu0
    %9538 = vmatpush.bf16.msra.mxu0 %v6619
    %9539 = vmatpush.bf16.msra.mxu0 %v6603
    %9540 = vmatpush.bf16.msra.mxu0 %v6587
    %9541 = vmatpush.bf16.msra.mxu0 %v6571
    %9542 = vmatpush.bf16.msra.mxu0 %v6555
    %9543 = vmatpush.bf16.msra.mxu0 %v6539
    %9544 = vmatpush.bf16.msra.mxu0 %v6523
    %9545 = vmatpush.bf16.msra.mxu0 %v6507
    %9546 = vmatmul.bf16.gmra.mxu0 %v570
    %v9547 = vpop.f32.mrf.mxu0
    %v9548 = vadd.f32 %v9535, %v9547
    %v9549 = vpop.f32.mrf.mxu0
    %9550 = vdwg.mxu0
    %9551 = vmatpush.bf16.msra.mxu0 %v6747
    %9552 = vmatpush.bf16.msra.mxu0 %v6731
    %9553 = vmatpush.bf16.msra.mxu0 %v6715
    %9554 = vmatpush.bf16.msra.mxu0 %v6699
    %9555 = vmatpush.bf16.msra.mxu0 %v6683
    %9556 = vmatpush.bf16.msra.mxu0 %v6667
    %9557 = vmatpush.bf16.msra.mxu0 %v6651
    %9558 = vmatpush.bf16.msra.mxu0 %v6635
    %9559 = vmatmul.bf16.gmra.mxu0 %v571
    %v9560 = vpop.f32.mrf.mxu0
    %v9561 = vadd.f32 %v9548, %v9560
    %v9562 = vpop.f32.mrf.mxu0
    %9563 = vdwg.mxu0
    %9564 = vmatpush.bf16.msra.mxu0 %v6875
    %9565 = vmatpush.bf16.msra.mxu0 %v6859
    %9566 = vmatpush.bf16.msra.mxu0 %v6843
    %9567 = vmatpush.bf16.msra.mxu0 %v6827
    %9568 = vmatpush.bf16.msra.mxu0 %v6811
    %9569 = vmatpush.bf16.msra.mxu0 %v6795
    %9570 = vmatpush.bf16.msra.mxu0 %v6779
    %9571 = vmatpush.bf16.msra.mxu0 %v6763
    %9572 = vmatmul.bf16.gmra.mxu0 %v572
    %v9573 = vpop.f32.mrf.mxu0
    %v9574 = vadd.f32 %v9561, %v9573
    %v9575 = vpop.f32.mrf.mxu0
    %9576 = vdwg.mxu0
    %9577 = vmatpush.bf16.msra.mxu0 %v7003
    %9578 = vmatpush.bf16.msra.mxu0 %v6987
    %9579 = vmatpush.bf16.msra.mxu0 %v6971
    %9580 = vmatpush.bf16.msra.mxu0 %v6955
    %9581 = vmatpush.bf16.msra.mxu0 %v6939
    %9582 = vmatpush.bf16.msra.mxu0 %v6923
    %9583 = vmatpush.bf16.msra.mxu0 %v6907
    %9584 = vmatpush.bf16.msra.mxu0 %v6891
    %9585 = vmatmul.bf16.gmra.mxu0 %v573
    %v9586 = vpop.f32.mrf.mxu0
    %v9587 = vadd.f32 %v9574, %v9586
    %v9588 = vpop.f32.mrf.mxu0
    %9589 = vdwg.mxu0
    %9590 = vmatpush.bf16.msra.mxu0 %v5852
    %9591 = vmatpush.bf16.msra.mxu0 %v5836
    %9592 = vmatpush.bf16.msra.mxu0 %v5820
    %9593 = vmatpush.bf16.msra.mxu0 %v5804
    %9594 = vmatpush.bf16.msra.mxu0 %v5788
    %9595 = vmatpush.bf16.msra.mxu0 %v5772
    %9596 = vmatpush.bf16.msra.mxu0 %v5756
    %9597 = vmatpush.bf16.msra.mxu0 %v5740
    %9598 = vmatmul.bf16.gmra.mxu0 %v564
    %v9599 = vpop.f32.mrf.mxu0
    %v9600 = vadd.f32 %v1868, %v9599
    %v9601 = vpop.f32.mrf.mxu0
    %9602 = vdwg.mxu0
    %9603 = vmatpush.bf16.msra.mxu0 %v5980
    %9604 = vmatpush.bf16.msra.mxu0 %v5964
    %9605 = vmatpush.bf16.msra.mxu0 %v5948
    %9606 = vmatpush.bf16.msra.mxu0 %v5932
    %9607 = vmatpush.bf16.msra.mxu0 %v5916
    %9608 = vmatpush.bf16.msra.mxu0 %v5900
    %9609 = vmatpush.bf16.msra.mxu0 %v5884
    %9610 = vmatpush.bf16.msra.mxu0 %v5868
    %9611 = vmatmul.bf16.gmra.mxu0 %v565
    %v9612 = vpop.f32.mrf.mxu0
    %v9613 = vadd.f32 %v9600, %v9612
    %v9614 = vpop.f32.mrf.mxu0
    %9615 = vdwg.mxu0
    %9616 = vmatpush.bf16.msra.mxu0 %v6108
    %9617 = vmatpush.bf16.msra.mxu0 %v6092
    %9618 = vmatpush.bf16.msra.mxu0 %v6076
    %9619 = vmatpush.bf16.msra.mxu0 %v6060
    %9620 = vmatpush.bf16.msra.mxu0 %v6044
    %9621 = vmatpush.bf16.msra.mxu0 %v6028
    %9622 = vmatpush.bf16.msra.mxu0 %v6012
    %9623 = vmatpush.bf16.msra.mxu0 %v5996
    %9624 = vmatmul.bf16.gmra.mxu0 %v566
    %v9625 = vpop.f32.mrf.mxu0
    %v9626 = vadd.f32 %v9613, %v9625
    %v9627 = vpop.f32.mrf.mxu0
    %9628 = vdwg.mxu0
    %9629 = vmatpush.bf16.msra.mxu0 %v6236
    %9630 = vmatpush.bf16.msra.mxu0 %v6220
    %9631 = vmatpush.bf16.msra.mxu0 %v6204
    %9632 = vmatpush.bf16.msra.mxu0 %v6188
    %9633 = vmatpush.bf16.msra.mxu0 %v6172
    %9634 = vmatpush.bf16.msra.mxu0 %v6156
    %9635 = vmatpush.bf16.msra.mxu0 %v6140
    %9636 = vmatpush.bf16.msra.mxu0 %v6124
    %9637 = vmatmul.bf16.gmra.mxu0 %v567
    %v9638 = vpop.f32.mrf.mxu0
    %v9639 = vadd.f32 %v9626, %v9638
    %v9640 = vpop.f32.mrf.mxu0
    %9641 = vdwg.mxu0
    %9642 = vmatpush.bf16.msra.mxu0 %v6364
    %9643 = vmatpush.bf16.msra.mxu0 %v6348
    %9644 = vmatpush.bf16.msra.mxu0 %v6332
    %9645 = vmatpush.bf16.msra.mxu0 %v6316
    %9646 = vmatpush.bf16.msra.mxu0 %v6300
    %9647 = vmatpush.bf16.msra.mxu0 %v6284
    %9648 = vmatpush.bf16.msra.mxu0 %v6268
    %9649 = vmatpush.bf16.msra.mxu0 %v6252
    %9650 = vmatmul.bf16.gmra.mxu0 %v568
    %v9651 = vpop.f32.mrf.mxu0
    %v9652 = vadd.f32 %v9639, %v9651
    %v9653 = vpop.f32.mrf.mxu0
    %9654 = vdwg.mxu0
    %9655 = vmatpush.bf16.msra.mxu0 %v6492
    %9656 = vmatpush.bf16.msra.mxu0 %v6476
    %9657 = vmatpush.bf16.msra.mxu0 %v6460
    %9658 = vmatpush.bf16.msra.mxu0 %v6444
    %9659 = vmatpush.bf16.msra.mxu0 %v6428
    %9660 = vmatpush.bf16.msra.mxu0 %v6412
    %9661 = vmatpush.bf16.msra.mxu0 %v6396
    %9662 = vmatpush.bf16.msra.mxu0 %v6380
    %9663 = vmatmul.bf16.gmra.mxu0 %v569
    %v9664 = vpop.f32.mrf.mxu0
    %v9665 = vadd.f32 %v9652, %v9664
    %v9666 = vpop.f32.mrf.mxu0
    %9667 = vdwg.mxu0
    %9668 = vmatpush.bf16.msra.mxu0 %v6620
    %9669 = vmatpush.bf16.msra.mxu0 %v6604
    %9670 = vmatpush.bf16.msra.mxu0 %v6588
    %9671 = vmatpush.bf16.msra.mxu0 %v6572
    %9672 = vmatpush.bf16.msra.mxu0 %v6556
    %9673 = vmatpush.bf16.msra.mxu0 %v6540
    %9674 = vmatpush.bf16.msra.mxu0 %v6524
    %9675 = vmatpush.bf16.msra.mxu0 %v6508
    %9676 = vmatmul.bf16.gmra.mxu0 %v570
    %v9677 = vpop.f32.mrf.mxu0
    %v9678 = vadd.f32 %v9665, %v9677
    %v9679 = vpop.f32.mrf.mxu0
    %9680 = vdwg.mxu0
    %9681 = vmatpush.bf16.msra.mxu0 %v6748
    %9682 = vmatpush.bf16.msra.mxu0 %v6732
    %9683 = vmatpush.bf16.msra.mxu0 %v6716
    %9684 = vmatpush.bf16.msra.mxu0 %v6700
    %9685 = vmatpush.bf16.msra.mxu0 %v6684
    %9686 = vmatpush.bf16.msra.mxu0 %v6668
    %9687 = vmatpush.bf16.msra.mxu0 %v6652
    %9688 = vmatpush.bf16.msra.mxu0 %v6636
    %9689 = vmatmul.bf16.gmra.mxu0 %v571
    %v9690 = vpop.f32.mrf.mxu0
    %v9691 = vadd.f32 %v9678, %v9690
    %v9692 = vpop.f32.mrf.mxu0
    %9693 = vdwg.mxu0
    %9694 = vmatpush.bf16.msra.mxu0 %v6876
    %9695 = vmatpush.bf16.msra.mxu0 %v6860
    %9696 = vmatpush.bf16.msra.mxu0 %v6844
    %9697 = vmatpush.bf16.msra.mxu0 %v6828
    %9698 = vmatpush.bf16.msra.mxu0 %v6812
    %9699 = vmatpush.bf16.msra.mxu0 %v6796
    %9700 = vmatpush.bf16.msra.mxu0 %v6780
    %9701 = vmatpush.bf16.msra.mxu0 %v6764
    %9702 = vmatmul.bf16.gmra.mxu0 %v572
    %v9703 = vpop.f32.mrf.mxu0
    %v9704 = vadd.f32 %v9691, %v9703
    %v9705 = vpop.f32.mrf.mxu0
    %9706 = vdwg.mxu0
    %9707 = vmatpush.bf16.msra.mxu0 %v7004
    %9708 = vmatpush.bf16.msra.mxu0 %v6988
    %9709 = vmatpush.bf16.msra.mxu0 %v6972
    %9710 = vmatpush.bf16.msra.mxu0 %v6956
    %9711 = vmatpush.bf16.msra.mxu0 %v6940
    %9712 = vmatpush.bf16.msra.mxu0 %v6924
    %9713 = vmatpush.bf16.msra.mxu0 %v6908
    %9714 = vmatpush.bf16.msra.mxu0 %v6892
    %9715 = vmatmul.bf16.gmra.mxu0 %v573
    %v9716 = vpop.f32.mrf.mxu0
    %v9717 = vadd.f32 %v9704, %v9716
    %v9718 = vpop.f32.mrf.mxu0
    %9719 = vdwg.mxu0
    %9720 = vmatpush.bf16.msra.mxu0 %v5853
    %9721 = vmatpush.bf16.msra.mxu0 %v5837
    %9722 = vmatpush.bf16.msra.mxu0 %v5821
    %9723 = vmatpush.bf16.msra.mxu0 %v5805
    %9724 = vmatpush.bf16.msra.mxu0 %v5789
    %9725 = vmatpush.bf16.msra.mxu0 %v5773
    %9726 = vmatpush.bf16.msra.mxu0 %v5757
    %9727 = vmatpush.bf16.msra.mxu0 %v5741
    %9728 = vmatmul.bf16.gmra.mxu0 %v564
    %v9729 = vpop.f32.mrf.mxu0
    %v9730 = vadd.f32 %v1869, %v9729
    %v9731 = vpop.f32.mrf.mxu0
    %9732 = vdwg.mxu0
    %9733 = vmatpush.bf16.msra.mxu0 %v5981
    %9734 = vmatpush.bf16.msra.mxu0 %v5965
    %9735 = vmatpush.bf16.msra.mxu0 %v5949
    %9736 = vmatpush.bf16.msra.mxu0 %v5933
    %9737 = vmatpush.bf16.msra.mxu0 %v5917
    %9738 = vmatpush.bf16.msra.mxu0 %v5901
    %9739 = vmatpush.bf16.msra.mxu0 %v5885
    %9740 = vmatpush.bf16.msra.mxu0 %v5869
    %9741 = vmatmul.bf16.gmra.mxu0 %v565
    %v9742 = vpop.f32.mrf.mxu0
    %v9743 = vadd.f32 %v9730, %v9742
    %v9744 = vpop.f32.mrf.mxu0
    %9745 = vdwg.mxu0
    %9746 = vmatpush.bf16.msra.mxu0 %v6109
    %9747 = vmatpush.bf16.msra.mxu0 %v6093
    %9748 = vmatpush.bf16.msra.mxu0 %v6077
    %9749 = vmatpush.bf16.msra.mxu0 %v6061
    %9750 = vmatpush.bf16.msra.mxu0 %v6045
    %9751 = vmatpush.bf16.msra.mxu0 %v6029
    %9752 = vmatpush.bf16.msra.mxu0 %v6013
    %9753 = vmatpush.bf16.msra.mxu0 %v5997
    %9754 = vmatmul.bf16.gmra.mxu0 %v566
    %v9755 = vpop.f32.mrf.mxu0
    %v9756 = vadd.f32 %v9743, %v9755
    %v9757 = vpop.f32.mrf.mxu0
    %9758 = vdwg.mxu0
    %9759 = vmatpush.bf16.msra.mxu0 %v6237
    %9760 = vmatpush.bf16.msra.mxu0 %v6221
    %9761 = vmatpush.bf16.msra.mxu0 %v6205
    %9762 = vmatpush.bf16.msra.mxu0 %v6189
    %9763 = vmatpush.bf16.msra.mxu0 %v6173
    %9764 = vmatpush.bf16.msra.mxu0 %v6157
    %9765 = vmatpush.bf16.msra.mxu0 %v6141
    %9766 = vmatpush.bf16.msra.mxu0 %v6125
    %9767 = vmatmul.bf16.gmra.mxu0 %v567
    %v9768 = vpop.f32.mrf.mxu0
    %v9769 = vadd.f32 %v9756, %v9768
    %v9770 = vpop.f32.mrf.mxu0
    %9771 = vdwg.mxu0
    %9772 = vmatpush.bf16.msra.mxu0 %v6365
    %9773 = vmatpush.bf16.msra.mxu0 %v6349
    %9774 = vmatpush.bf16.msra.mxu0 %v6333
    %9775 = vmatpush.bf16.msra.mxu0 %v6317
    %9776 = vmatpush.bf16.msra.mxu0 %v6301
    %9777 = vmatpush.bf16.msra.mxu0 %v6285
    %9778 = vmatpush.bf16.msra.mxu0 %v6269
    %9779 = vmatpush.bf16.msra.mxu0 %v6253
    %9780 = vmatmul.bf16.gmra.mxu0 %v568
    %v9781 = vpop.f32.mrf.mxu0
    %v9782 = vadd.f32 %v9769, %v9781
    %v9783 = vpop.f32.mrf.mxu0
    %9784 = vdwg.mxu0
    %9785 = vmatpush.bf16.msra.mxu0 %v6493
    %9786 = vmatpush.bf16.msra.mxu0 %v6477
    %9787 = vmatpush.bf16.msra.mxu0 %v6461
    %9788 = vmatpush.bf16.msra.mxu0 %v6445
    %9789 = vmatpush.bf16.msra.mxu0 %v6429
    %9790 = vmatpush.bf16.msra.mxu0 %v6413
    %9791 = vmatpush.bf16.msra.mxu0 %v6397
    %9792 = vmatpush.bf16.msra.mxu0 %v6381
    %9793 = vmatmul.bf16.gmra.mxu0 %v569
    %v9794 = vpop.f32.mrf.mxu0
    %v9795 = vadd.f32 %v9782, %v9794
    %v9796 = vpop.f32.mrf.mxu0
    %9797 = vdwg.mxu0
    %9798 = vmatpush.bf16.msra.mxu0 %v6621
    %9799 = vmatpush.bf16.msra.mxu0 %v6605
    %9800 = vmatpush.bf16.msra.mxu0 %v6589
    %9801 = vmatpush.bf16.msra.mxu0 %v6573
    %9802 = vmatpush.bf16.msra.mxu0 %v6557
    %9803 = vmatpush.bf16.msra.mxu0 %v6541
    %9804 = vmatpush.bf16.msra.mxu0 %v6525
    %9805 = vmatpush.bf16.msra.mxu0 %v6509
    %9806 = vmatmul.bf16.gmra.mxu0 %v570
    %v9807 = vpop.f32.mrf.mxu0
    %v9808 = vadd.f32 %v9795, %v9807
    %v9809 = vpop.f32.mrf.mxu0
    %9810 = vdwg.mxu0
    %9811 = vmatpush.bf16.msra.mxu0 %v6749
    %9812 = vmatpush.bf16.msra.mxu0 %v6733
    %9813 = vmatpush.bf16.msra.mxu0 %v6717
    %9814 = vmatpush.bf16.msra.mxu0 %v6701
    %9815 = vmatpush.bf16.msra.mxu0 %v6685
    %9816 = vmatpush.bf16.msra.mxu0 %v6669
    %9817 = vmatpush.bf16.msra.mxu0 %v6653
    %9818 = vmatpush.bf16.msra.mxu0 %v6637
    %9819 = vmatmul.bf16.gmra.mxu0 %v571
    %v9820 = vpop.f32.mrf.mxu0
    %v9821 = vadd.f32 %v9808, %v9820
    %v9822 = vpop.f32.mrf.mxu0
    %9823 = vdwg.mxu0
    %9824 = vmatpush.bf16.msra.mxu0 %v6877
    %9825 = vmatpush.bf16.msra.mxu0 %v6861
    %9826 = vmatpush.bf16.msra.mxu0 %v6845
    %9827 = vmatpush.bf16.msra.mxu0 %v6829
    %9828 = vmatpush.bf16.msra.mxu0 %v6813
    %9829 = vmatpush.bf16.msra.mxu0 %v6797
    %9830 = vmatpush.bf16.msra.mxu0 %v6781
    %9831 = vmatpush.bf16.msra.mxu0 %v6765
    %9832 = vmatmul.bf16.gmra.mxu0 %v572
    %v9833 = vpop.f32.mrf.mxu0
    %v9834 = vadd.f32 %v9821, %v9833
    %v9835 = vpop.f32.mrf.mxu0
    %9836 = vdwg.mxu0
    %9837 = vmatpush.bf16.msra.mxu0 %v7005
    %9838 = vmatpush.bf16.msra.mxu0 %v6989
    %9839 = vmatpush.bf16.msra.mxu0 %v6973
    %9840 = vmatpush.bf16.msra.mxu0 %v6957
    %9841 = vmatpush.bf16.msra.mxu0 %v6941
    %9842 = vmatpush.bf16.msra.mxu0 %v6925
    %9843 = vmatpush.bf16.msra.mxu0 %v6909
    %9844 = vmatpush.bf16.msra.mxu0 %v6893
    %9845 = vmatmul.bf16.gmra.mxu0 %v573
    %v9846 = vpop.f32.mrf.mxu0
    %v9847 = vadd.f32 %v9834, %v9846
    %v9848 = vpop.f32.mrf.mxu0
    %9849 = vdwg.mxu0
    %9850 = vmatpush.bf16.msra.mxu0 %v5854
    %9851 = vmatpush.bf16.msra.mxu0 %v5838
    %9852 = vmatpush.bf16.msra.mxu0 %v5822
    %9853 = vmatpush.bf16.msra.mxu0 %v5806
    %9854 = vmatpush.bf16.msra.mxu0 %v5790
    %9855 = vmatpush.bf16.msra.mxu0 %v5774
    %9856 = vmatpush.bf16.msra.mxu0 %v5758
    %9857 = vmatpush.bf16.msra.mxu0 %v5742
    %9858 = vmatmul.bf16.gmra.mxu0 %v564
    %v9859 = vpop.f32.mrf.mxu0
    %v9860 = vadd.f32 %v1870, %v9859
    %v9861 = vpop.f32.mrf.mxu0
    %9862 = vdwg.mxu0
    %9863 = vmatpush.bf16.msra.mxu0 %v5982
    %9864 = vmatpush.bf16.msra.mxu0 %v5966
    %9865 = vmatpush.bf16.msra.mxu0 %v5950
    %9866 = vmatpush.bf16.msra.mxu0 %v5934
    %9867 = vmatpush.bf16.msra.mxu0 %v5918
    %9868 = vmatpush.bf16.msra.mxu0 %v5902
    %9869 = vmatpush.bf16.msra.mxu0 %v5886
    %9870 = vmatpush.bf16.msra.mxu0 %v5870
    %9871 = vmatmul.bf16.gmra.mxu0 %v565
    %v9872 = vpop.f32.mrf.mxu0
    %v9873 = vadd.f32 %v9860, %v9872
    %v9874 = vpop.f32.mrf.mxu0
    %9875 = vdwg.mxu0
    %9876 = vmatpush.bf16.msra.mxu0 %v6110
    %9877 = vmatpush.bf16.msra.mxu0 %v6094
    %9878 = vmatpush.bf16.msra.mxu0 %v6078
    %9879 = vmatpush.bf16.msra.mxu0 %v6062
    %9880 = vmatpush.bf16.msra.mxu0 %v6046
    %9881 = vmatpush.bf16.msra.mxu0 %v6030
    %9882 = vmatpush.bf16.msra.mxu0 %v6014
    %9883 = vmatpush.bf16.msra.mxu0 %v5998
    %9884 = vmatmul.bf16.gmra.mxu0 %v566
    %v9885 = vpop.f32.mrf.mxu0
    %v9886 = vadd.f32 %v9873, %v9885
    %v9887 = vpop.f32.mrf.mxu0
    %9888 = vdwg.mxu0
    %9889 = vmatpush.bf16.msra.mxu0 %v6238
    %9890 = vmatpush.bf16.msra.mxu0 %v6222
    %9891 = vmatpush.bf16.msra.mxu0 %v6206
    %9892 = vmatpush.bf16.msra.mxu0 %v6190
    %9893 = vmatpush.bf16.msra.mxu0 %v6174
    %9894 = vmatpush.bf16.msra.mxu0 %v6158
    %9895 = vmatpush.bf16.msra.mxu0 %v6142
    %9896 = vmatpush.bf16.msra.mxu0 %v6126
    %9897 = vmatmul.bf16.gmra.mxu0 %v567
    %v9898 = vpop.f32.mrf.mxu0
    %v9899 = vadd.f32 %v9886, %v9898
    %v9900 = vpop.f32.mrf.mxu0
    %9901 = vdwg.mxu0
    %9902 = vmatpush.bf16.msra.mxu0 %v6366
    %9903 = vmatpush.bf16.msra.mxu0 %v6350
    %9904 = vmatpush.bf16.msra.mxu0 %v6334
    %9905 = vmatpush.bf16.msra.mxu0 %v6318
    %9906 = vmatpush.bf16.msra.mxu0 %v6302
    %9907 = vmatpush.bf16.msra.mxu0 %v6286
    %9908 = vmatpush.bf16.msra.mxu0 %v6270
    %9909 = vmatpush.bf16.msra.mxu0 %v6254
    %9910 = vmatmul.bf16.gmra.mxu0 %v568
    %v9911 = vpop.f32.mrf.mxu0
    %v9912 = vadd.f32 %v9899, %v9911
    %v9913 = vpop.f32.mrf.mxu0
    %9914 = vdwg.mxu0
    %9915 = vmatpush.bf16.msra.mxu0 %v6494
    %9916 = vmatpush.bf16.msra.mxu0 %v6478
    %9917 = vmatpush.bf16.msra.mxu0 %v6462
    %9918 = vmatpush.bf16.msra.mxu0 %v6446
    %9919 = vmatpush.bf16.msra.mxu0 %v6430
    %9920 = vmatpush.bf16.msra.mxu0 %v6414
    %9921 = vmatpush.bf16.msra.mxu0 %v6398
    %9922 = vmatpush.bf16.msra.mxu0 %v6382
    %9923 = vmatmul.bf16.gmra.mxu0 %v569
    %v9924 = vpop.f32.mrf.mxu0
    %v9925 = vadd.f32 %v9912, %v9924
    %v9926 = vpop.f32.mrf.mxu0
    %9927 = vdwg.mxu0
    %9928 = vmatpush.bf16.msra.mxu0 %v6622
    %9929 = vmatpush.bf16.msra.mxu0 %v6606
    %9930 = vmatpush.bf16.msra.mxu0 %v6590
    %9931 = vmatpush.bf16.msra.mxu0 %v6574
    %9932 = vmatpush.bf16.msra.mxu0 %v6558
    %9933 = vmatpush.bf16.msra.mxu0 %v6542
    %9934 = vmatpush.bf16.msra.mxu0 %v6526
    %9935 = vmatpush.bf16.msra.mxu0 %v6510
    %9936 = vmatmul.bf16.gmra.mxu0 %v570
    %v9937 = vpop.f32.mrf.mxu0
    %v9938 = vadd.f32 %v9925, %v9937
    %v9939 = vpop.f32.mrf.mxu0
    %9940 = vdwg.mxu0
    %9941 = vmatpush.bf16.msra.mxu0 %v6750
    %9942 = vmatpush.bf16.msra.mxu0 %v6734
    %9943 = vmatpush.bf16.msra.mxu0 %v6718
    %9944 = vmatpush.bf16.msra.mxu0 %v6702
    %9945 = vmatpush.bf16.msra.mxu0 %v6686
    %9946 = vmatpush.bf16.msra.mxu0 %v6670
    %9947 = vmatpush.bf16.msra.mxu0 %v6654
    %9948 = vmatpush.bf16.msra.mxu0 %v6638
    %9949 = vmatmul.bf16.gmra.mxu0 %v571
    %v9950 = vpop.f32.mrf.mxu0
    %v9951 = vadd.f32 %v9938, %v9950
    %v9952 = vpop.f32.mrf.mxu0
    %9953 = vdwg.mxu0
    %9954 = vmatpush.bf16.msra.mxu0 %v6878
    %9955 = vmatpush.bf16.msra.mxu0 %v6862
    %9956 = vmatpush.bf16.msra.mxu0 %v6846
    %9957 = vmatpush.bf16.msra.mxu0 %v6830
    %9958 = vmatpush.bf16.msra.mxu0 %v6814
    %9959 = vmatpush.bf16.msra.mxu0 %v6798
    %9960 = vmatpush.bf16.msra.mxu0 %v6782
    %9961 = vmatpush.bf16.msra.mxu0 %v6766
    %9962 = vmatmul.bf16.gmra.mxu0 %v572
    %v9963 = vpop.f32.mrf.mxu0
    %v9964 = vadd.f32 %v9951, %v9963
    %v9965 = vpop.f32.mrf.mxu0
    %9966 = vdwg.mxu0
    %9967 = vmatpush.bf16.msra.mxu0 %v7006
    %9968 = vmatpush.bf16.msra.mxu0 %v6990
    %9969 = vmatpush.bf16.msra.mxu0 %v6974
    %9970 = vmatpush.bf16.msra.mxu0 %v6958
    %9971 = vmatpush.bf16.msra.mxu0 %v6942
    %9972 = vmatpush.bf16.msra.mxu0 %v6926
    %9973 = vmatpush.bf16.msra.mxu0 %v6910
    %9974 = vmatpush.bf16.msra.mxu0 %v6894
    %9975 = vmatmul.bf16.gmra.mxu0 %v573
    %v9976 = vpop.f32.mrf.mxu0
    %v9977 = vadd.f32 %v9964, %v9976
    %v9978 = vpop.f32.mrf.mxu0
    %9979 = vdwg.mxu0
    %9980 = vmatpush.bf16.msra.mxu0 %v5855
    %9981 = vmatpush.bf16.msra.mxu0 %v5839
    %9982 = vmatpush.bf16.msra.mxu0 %v5823
    %9983 = vmatpush.bf16.msra.mxu0 %v5807
    %9984 = vmatpush.bf16.msra.mxu0 %v5791
    %9985 = vmatpush.bf16.msra.mxu0 %v5775
    %9986 = vmatpush.bf16.msra.mxu0 %v5759
    %9987 = vmatpush.bf16.msra.mxu0 %v5743
    %9988 = vmatmul.bf16.gmra.mxu0 %v564
    %v9989 = vpop.f32.mrf.mxu0
    %v9990 = vadd.f32 %v1871, %v9989
    %v9991 = vpop.f32.mrf.mxu0
    %9992 = vdwg.mxu0
    %9993 = vmatpush.bf16.msra.mxu0 %v5983
    %9994 = vmatpush.bf16.msra.mxu0 %v5967
    %9995 = vmatpush.bf16.msra.mxu0 %v5951
    %9996 = vmatpush.bf16.msra.mxu0 %v5935
    %9997 = vmatpush.bf16.msra.mxu0 %v5919
    %9998 = vmatpush.bf16.msra.mxu0 %v5903
    %9999 = vmatpush.bf16.msra.mxu0 %v5887
    %10000 = vmatpush.bf16.msra.mxu0 %v5871
    %10001 = vmatmul.bf16.gmra.mxu0 %v565
    %v10002 = vpop.f32.mrf.mxu0
    %v10003 = vadd.f32 %v9990, %v10002
    %v10004 = vpop.f32.mrf.mxu0
    %10005 = vdwg.mxu0
    %10006 = vmatpush.bf16.msra.mxu0 %v6111
    %10007 = vmatpush.bf16.msra.mxu0 %v6095
    %10008 = vmatpush.bf16.msra.mxu0 %v6079
    %10009 = vmatpush.bf16.msra.mxu0 %v6063
    %10010 = vmatpush.bf16.msra.mxu0 %v6047
    %10011 = vmatpush.bf16.msra.mxu0 %v6031
    %10012 = vmatpush.bf16.msra.mxu0 %v6015
    %10013 = vmatpush.bf16.msra.mxu0 %v5999
    %10014 = vmatmul.bf16.gmra.mxu0 %v566
    %v10015 = vpop.f32.mrf.mxu0
    %v10016 = vadd.f32 %v10003, %v10015
    %v10017 = vpop.f32.mrf.mxu0
    %10018 = vdwg.mxu0
    %10019 = vmatpush.bf16.msra.mxu0 %v6239
    %10020 = vmatpush.bf16.msra.mxu0 %v6223
    %10021 = vmatpush.bf16.msra.mxu0 %v6207
    %10022 = vmatpush.bf16.msra.mxu0 %v6191
    %10023 = vmatpush.bf16.msra.mxu0 %v6175
    %10024 = vmatpush.bf16.msra.mxu0 %v6159
    %10025 = vmatpush.bf16.msra.mxu0 %v6143
    %10026 = vmatpush.bf16.msra.mxu0 %v6127
    %10027 = vmatmul.bf16.gmra.mxu0 %v567
    %v10028 = vpop.f32.mrf.mxu0
    %v10029 = vadd.f32 %v10016, %v10028
    %v10030 = vpop.f32.mrf.mxu0
    %10031 = vdwg.mxu0
    %10032 = vmatpush.bf16.msra.mxu0 %v6367
    %10033 = vmatpush.bf16.msra.mxu0 %v6351
    %10034 = vmatpush.bf16.msra.mxu0 %v6335
    %10035 = vmatpush.bf16.msra.mxu0 %v6319
    %10036 = vmatpush.bf16.msra.mxu0 %v6303
    %10037 = vmatpush.bf16.msra.mxu0 %v6287
    %10038 = vmatpush.bf16.msra.mxu0 %v6271
    %10039 = vmatpush.bf16.msra.mxu0 %v6255
    %10040 = vmatmul.bf16.gmra.mxu0 %v568
    %v10041 = vpop.f32.mrf.mxu0
    %v10042 = vadd.f32 %v10029, %v10041
    %v10043 = vpop.f32.mrf.mxu0
    %10044 = vdwg.mxu0
    %10045 = vmatpush.bf16.msra.mxu0 %v6495
    %10046 = vmatpush.bf16.msra.mxu0 %v6479
    %10047 = vmatpush.bf16.msra.mxu0 %v6463
    %10048 = vmatpush.bf16.msra.mxu0 %v6447
    %10049 = vmatpush.bf16.msra.mxu0 %v6431
    %10050 = vmatpush.bf16.msra.mxu0 %v6415
    %10051 = vmatpush.bf16.msra.mxu0 %v6399
    %10052 = vmatpush.bf16.msra.mxu0 %v6383
    %10053 = vmatmul.bf16.gmra.mxu0 %v569
    %v10054 = vpop.f32.mrf.mxu0
    %v10055 = vadd.f32 %v10042, %v10054
    %v10056 = vpop.f32.mrf.mxu0
    %10057 = vdwg.mxu0
    %10058 = vmatpush.bf16.msra.mxu0 %v6623
    %10059 = vmatpush.bf16.msra.mxu0 %v6607
    %10060 = vmatpush.bf16.msra.mxu0 %v6591
    %10061 = vmatpush.bf16.msra.mxu0 %v6575
    %10062 = vmatpush.bf16.msra.mxu0 %v6559
    %10063 = vmatpush.bf16.msra.mxu0 %v6543
    %10064 = vmatpush.bf16.msra.mxu0 %v6527
    %10065 = vmatpush.bf16.msra.mxu0 %v6511
    %10066 = vmatmul.bf16.gmra.mxu0 %v570
    %v10067 = vpop.f32.mrf.mxu0
    %v10068 = vadd.f32 %v10055, %v10067
    %v10069 = vpop.f32.mrf.mxu0
    %10070 = vdwg.mxu0
    %10071 = vmatpush.bf16.msra.mxu0 %v6751
    %10072 = vmatpush.bf16.msra.mxu0 %v6735
    %10073 = vmatpush.bf16.msra.mxu0 %v6719
    %10074 = vmatpush.bf16.msra.mxu0 %v6703
    %10075 = vmatpush.bf16.msra.mxu0 %v6687
    %10076 = vmatpush.bf16.msra.mxu0 %v6671
    %10077 = vmatpush.bf16.msra.mxu0 %v6655
    %10078 = vmatpush.bf16.msra.mxu0 %v6639
    %10079 = vmatmul.bf16.gmra.mxu0 %v571
    %v10080 = vpop.f32.mrf.mxu0
    %v10081 = vadd.f32 %v10068, %v10080
    %v10082 = vpop.f32.mrf.mxu0
    %10083 = vdwg.mxu0
    %10084 = vmatpush.bf16.msra.mxu0 %v6879
    %10085 = vmatpush.bf16.msra.mxu0 %v6863
    %10086 = vmatpush.bf16.msra.mxu0 %v6847
    %10087 = vmatpush.bf16.msra.mxu0 %v6831
    %10088 = vmatpush.bf16.msra.mxu0 %v6815
    %10089 = vmatpush.bf16.msra.mxu0 %v6799
    %10090 = vmatpush.bf16.msra.mxu0 %v6783
    %10091 = vmatpush.bf16.msra.mxu0 %v6767
    %10092 = vmatmul.bf16.gmra.mxu0 %v572
    %v10093 = vpop.f32.mrf.mxu0
    %v10094 = vadd.f32 %v10081, %v10093
    %v10095 = vpop.f32.mrf.mxu0
    %10096 = vdwg.mxu0
    %10097 = vmatpush.bf16.msra.mxu0 %v7007
    %10098 = vmatpush.bf16.msra.mxu0 %v6991
    %10099 = vmatpush.bf16.msra.mxu0 %v6975
    %10100 = vmatpush.bf16.msra.mxu0 %v6959
    %10101 = vmatpush.bf16.msra.mxu0 %v6943
    %10102 = vmatpush.bf16.msra.mxu0 %v6927
    %10103 = vmatpush.bf16.msra.mxu0 %v6911
    %10104 = vmatpush.bf16.msra.mxu0 %v6895
    %10105 = vmatmul.bf16.gmra.mxu0 %v573
    %v10106 = vpop.f32.mrf.mxu0
    %v10107 = vadd.f32 %v10094, %v10106
    %v10108 = vpop.f32.mrf.mxu0
    %10109 = vdwg.mxu0
    %10110 = vmatpush.bf16.msra.mxu0 %v5856
    %10111 = vmatpush.bf16.msra.mxu0 %v5840
    %10112 = vmatpush.bf16.msra.mxu0 %v5824
    %10113 = vmatpush.bf16.msra.mxu0 %v5808
    %10114 = vmatpush.bf16.msra.mxu0 %v5792
    %10115 = vmatpush.bf16.msra.mxu0 %v5776
    %10116 = vmatpush.bf16.msra.mxu0 %v5760
    %10117 = vmatpush.bf16.msra.mxu0 %v5744
    %10118 = vmatmul.bf16.gmra.mxu0 %v564
    %v10119 = vpop.f32.mrf.mxu0
    %v10120 = vadd.f32 %v1872, %v10119
    %v10121 = vpop.f32.mrf.mxu0
    %10122 = vdwg.mxu0
    %10123 = vmatpush.bf16.msra.mxu0 %v5984
    %10124 = vmatpush.bf16.msra.mxu0 %v5968
    %10125 = vmatpush.bf16.msra.mxu0 %v5952
    %10126 = vmatpush.bf16.msra.mxu0 %v5936
    %10127 = vmatpush.bf16.msra.mxu0 %v5920
    %10128 = vmatpush.bf16.msra.mxu0 %v5904
    %10129 = vmatpush.bf16.msra.mxu0 %v5888
    %10130 = vmatpush.bf16.msra.mxu0 %v5872
    %10131 = vmatmul.bf16.gmra.mxu0 %v565
    %v10132 = vpop.f32.mrf.mxu0
    %v10133 = vadd.f32 %v10120, %v10132
    %v10134 = vpop.f32.mrf.mxu0
    %10135 = vdwg.mxu0
    %10136 = vmatpush.bf16.msra.mxu0 %v6112
    %10137 = vmatpush.bf16.msra.mxu0 %v6096
    %10138 = vmatpush.bf16.msra.mxu0 %v6080
    %10139 = vmatpush.bf16.msra.mxu0 %v6064
    %10140 = vmatpush.bf16.msra.mxu0 %v6048
    %10141 = vmatpush.bf16.msra.mxu0 %v6032
    %10142 = vmatpush.bf16.msra.mxu0 %v6016
    %10143 = vmatpush.bf16.msra.mxu0 %v6000
    %10144 = vmatmul.bf16.gmra.mxu0 %v566
    %v10145 = vpop.f32.mrf.mxu0
    %v10146 = vadd.f32 %v10133, %v10145
    %v10147 = vpop.f32.mrf.mxu0
    %10148 = vdwg.mxu0
    %10149 = vmatpush.bf16.msra.mxu0 %v6240
    %10150 = vmatpush.bf16.msra.mxu0 %v6224
    %10151 = vmatpush.bf16.msra.mxu0 %v6208
    %10152 = vmatpush.bf16.msra.mxu0 %v6192
    %10153 = vmatpush.bf16.msra.mxu0 %v6176
    %10154 = vmatpush.bf16.msra.mxu0 %v6160
    %10155 = vmatpush.bf16.msra.mxu0 %v6144
    %10156 = vmatpush.bf16.msra.mxu0 %v6128
    %10157 = vmatmul.bf16.gmra.mxu0 %v567
    %v10158 = vpop.f32.mrf.mxu0
    %v10159 = vadd.f32 %v10146, %v10158
    %v10160 = vpop.f32.mrf.mxu0
    %10161 = vdwg.mxu0
    %10162 = vmatpush.bf16.msra.mxu0 %v6368
    %10163 = vmatpush.bf16.msra.mxu0 %v6352
    %10164 = vmatpush.bf16.msra.mxu0 %v6336
    %10165 = vmatpush.bf16.msra.mxu0 %v6320
    %10166 = vmatpush.bf16.msra.mxu0 %v6304
    %10167 = vmatpush.bf16.msra.mxu0 %v6288
    %10168 = vmatpush.bf16.msra.mxu0 %v6272
    %10169 = vmatpush.bf16.msra.mxu0 %v6256
    %10170 = vmatmul.bf16.gmra.mxu0 %v568
    %v10171 = vpop.f32.mrf.mxu0
    %v10172 = vadd.f32 %v10159, %v10171
    %v10173 = vpop.f32.mrf.mxu0
    %10174 = vdwg.mxu0
    %10175 = vmatpush.bf16.msra.mxu0 %v6496
    %10176 = vmatpush.bf16.msra.mxu0 %v6480
    %10177 = vmatpush.bf16.msra.mxu0 %v6464
    %10178 = vmatpush.bf16.msra.mxu0 %v6448
    %10179 = vmatpush.bf16.msra.mxu0 %v6432
    %10180 = vmatpush.bf16.msra.mxu0 %v6416
    %10181 = vmatpush.bf16.msra.mxu0 %v6400
    %10182 = vmatpush.bf16.msra.mxu0 %v6384
    %10183 = vmatmul.bf16.gmra.mxu0 %v569
    %v10184 = vpop.f32.mrf.mxu0
    %v10185 = vadd.f32 %v10172, %v10184
    %v10186 = vpop.f32.mrf.mxu0
    %10187 = vdwg.mxu0
    %10188 = vmatpush.bf16.msra.mxu0 %v6624
    %10189 = vmatpush.bf16.msra.mxu0 %v6608
    %10190 = vmatpush.bf16.msra.mxu0 %v6592
    %10191 = vmatpush.bf16.msra.mxu0 %v6576
    %10192 = vmatpush.bf16.msra.mxu0 %v6560
    %10193 = vmatpush.bf16.msra.mxu0 %v6544
    %10194 = vmatpush.bf16.msra.mxu0 %v6528
    %10195 = vmatpush.bf16.msra.mxu0 %v6512
    %10196 = vmatmul.bf16.gmra.mxu0 %v570
    %v10197 = vpop.f32.mrf.mxu0
    %v10198 = vadd.f32 %v10185, %v10197
    %v10199 = vpop.f32.mrf.mxu0
    %10200 = vdwg.mxu0
    %10201 = vmatpush.bf16.msra.mxu0 %v6752
    %10202 = vmatpush.bf16.msra.mxu0 %v6736
    %10203 = vmatpush.bf16.msra.mxu0 %v6720
    %10204 = vmatpush.bf16.msra.mxu0 %v6704
    %10205 = vmatpush.bf16.msra.mxu0 %v6688
    %10206 = vmatpush.bf16.msra.mxu0 %v6672
    %10207 = vmatpush.bf16.msra.mxu0 %v6656
    %10208 = vmatpush.bf16.msra.mxu0 %v6640
    %10209 = vmatmul.bf16.gmra.mxu0 %v571
    %v10210 = vpop.f32.mrf.mxu0
    %v10211 = vadd.f32 %v10198, %v10210
    %v10212 = vpop.f32.mrf.mxu0
    %10213 = vdwg.mxu0
    %10214 = vmatpush.bf16.msra.mxu0 %v6880
    %10215 = vmatpush.bf16.msra.mxu0 %v6864
    %10216 = vmatpush.bf16.msra.mxu0 %v6848
    %10217 = vmatpush.bf16.msra.mxu0 %v6832
    %10218 = vmatpush.bf16.msra.mxu0 %v6816
    %10219 = vmatpush.bf16.msra.mxu0 %v6800
    %10220 = vmatpush.bf16.msra.mxu0 %v6784
    %10221 = vmatpush.bf16.msra.mxu0 %v6768
    %10222 = vmatmul.bf16.gmra.mxu0 %v572
    %v10223 = vpop.f32.mrf.mxu0
    %v10224 = vadd.f32 %v10211, %v10223
    %v10225 = vpop.f32.mrf.mxu0
    %10226 = vdwg.mxu0
    %10227 = vmatpush.bf16.msra.mxu0 %v7008
    %10228 = vmatpush.bf16.msra.mxu0 %v6992
    %10229 = vmatpush.bf16.msra.mxu0 %v6976
    %10230 = vmatpush.bf16.msra.mxu0 %v6960
    %10231 = vmatpush.bf16.msra.mxu0 %v6944
    %10232 = vmatpush.bf16.msra.mxu0 %v6928
    %10233 = vmatpush.bf16.msra.mxu0 %v6912
    %10234 = vmatpush.bf16.msra.mxu0 %v6896
    %10235 = vmatmul.bf16.gmra.mxu0 %v573
    %v10236 = vpop.f32.mrf.mxu0
    %v10237 = vadd.f32 %v10224, %v10236
    %v10238 = vpop.f32.mrf.mxu0
    %10239 = vdwg.mxu0
    %10240 = vmatpush.bf16.msra.mxu0 %v5857
    %10241 = vmatpush.bf16.msra.mxu0 %v5841
    %10242 = vmatpush.bf16.msra.mxu0 %v5825
    %10243 = vmatpush.bf16.msra.mxu0 %v5809
    %10244 = vmatpush.bf16.msra.mxu0 %v5793
    %10245 = vmatpush.bf16.msra.mxu0 %v5777
    %10246 = vmatpush.bf16.msra.mxu0 %v5761
    %10247 = vmatpush.bf16.msra.mxu0 %v5745
    %10248 = vmatmul.bf16.gmra.mxu0 %v564
    %v10249 = vpop.f32.mrf.mxu0
    %v10250 = vadd.f32 %v1873, %v10249
    %v10251 = vpop.f32.mrf.mxu0
    %10252 = vdwg.mxu0
    %10253 = vmatpush.bf16.msra.mxu0 %v5985
    %10254 = vmatpush.bf16.msra.mxu0 %v5969
    %10255 = vmatpush.bf16.msra.mxu0 %v5953
    %10256 = vmatpush.bf16.msra.mxu0 %v5937
    %10257 = vmatpush.bf16.msra.mxu0 %v5921
    %10258 = vmatpush.bf16.msra.mxu0 %v5905
    %10259 = vmatpush.bf16.msra.mxu0 %v5889
    %10260 = vmatpush.bf16.msra.mxu0 %v5873
    %10261 = vmatmul.bf16.gmra.mxu0 %v565
    %v10262 = vpop.f32.mrf.mxu0
    %v10263 = vadd.f32 %v10250, %v10262
    %v10264 = vpop.f32.mrf.mxu0
    %10265 = vdwg.mxu0
    %10266 = vmatpush.bf16.msra.mxu0 %v6113
    %10267 = vmatpush.bf16.msra.mxu0 %v6097
    %10268 = vmatpush.bf16.msra.mxu0 %v6081
    %10269 = vmatpush.bf16.msra.mxu0 %v6065
    %10270 = vmatpush.bf16.msra.mxu0 %v6049
    %10271 = vmatpush.bf16.msra.mxu0 %v6033
    %10272 = vmatpush.bf16.msra.mxu0 %v6017
    %10273 = vmatpush.bf16.msra.mxu0 %v6001
    %10274 = vmatmul.bf16.gmra.mxu0 %v566
    %v10275 = vpop.f32.mrf.mxu0
    %v10276 = vadd.f32 %v10263, %v10275
    %v10277 = vpop.f32.mrf.mxu0
    %10278 = vdwg.mxu0
    %10279 = vmatpush.bf16.msra.mxu0 %v6241
    %10280 = vmatpush.bf16.msra.mxu0 %v6225
    %10281 = vmatpush.bf16.msra.mxu0 %v6209
    %10282 = vmatpush.bf16.msra.mxu0 %v6193
    %10283 = vmatpush.bf16.msra.mxu0 %v6177
    %10284 = vmatpush.bf16.msra.mxu0 %v6161
    %10285 = vmatpush.bf16.msra.mxu0 %v6145
    %10286 = vmatpush.bf16.msra.mxu0 %v6129
    %10287 = vmatmul.bf16.gmra.mxu0 %v567
    %v10288 = vpop.f32.mrf.mxu0
    %v10289 = vadd.f32 %v10276, %v10288
    %v10290 = vpop.f32.mrf.mxu0
    %10291 = vdwg.mxu0
    %10292 = vmatpush.bf16.msra.mxu0 %v6369
    %10293 = vmatpush.bf16.msra.mxu0 %v6353
    %10294 = vmatpush.bf16.msra.mxu0 %v6337
    %10295 = vmatpush.bf16.msra.mxu0 %v6321
    %10296 = vmatpush.bf16.msra.mxu0 %v6305
    %10297 = vmatpush.bf16.msra.mxu0 %v6289
    %10298 = vmatpush.bf16.msra.mxu0 %v6273
    %10299 = vmatpush.bf16.msra.mxu0 %v6257
    %10300 = vmatmul.bf16.gmra.mxu0 %v568
    %v10301 = vpop.f32.mrf.mxu0
    %v10302 = vadd.f32 %v10289, %v10301
    %v10303 = vpop.f32.mrf.mxu0
    %10304 = vdwg.mxu0
    %10305 = vmatpush.bf16.msra.mxu0 %v6497
    %10306 = vmatpush.bf16.msra.mxu0 %v6481
    %10307 = vmatpush.bf16.msra.mxu0 %v6465
    %10308 = vmatpush.bf16.msra.mxu0 %v6449
    %10309 = vmatpush.bf16.msra.mxu0 %v6433
    %10310 = vmatpush.bf16.msra.mxu0 %v6417
    %10311 = vmatpush.bf16.msra.mxu0 %v6401
    %10312 = vmatpush.bf16.msra.mxu0 %v6385
    %10313 = vmatmul.bf16.gmra.mxu0 %v569
    %v10314 = vpop.f32.mrf.mxu0
    %v10315 = vadd.f32 %v10302, %v10314
    %v10316 = vpop.f32.mrf.mxu0
    %10317 = vdwg.mxu0
    %10318 = vmatpush.bf16.msra.mxu0 %v6625
    %10319 = vmatpush.bf16.msra.mxu0 %v6609
    %10320 = vmatpush.bf16.msra.mxu0 %v6593
    %10321 = vmatpush.bf16.msra.mxu0 %v6577
    %10322 = vmatpush.bf16.msra.mxu0 %v6561
    %10323 = vmatpush.bf16.msra.mxu0 %v6545
    %10324 = vmatpush.bf16.msra.mxu0 %v6529
    %10325 = vmatpush.bf16.msra.mxu0 %v6513
    %10326 = vmatmul.bf16.gmra.mxu0 %v570
    %v10327 = vpop.f32.mrf.mxu0
    %v10328 = vadd.f32 %v10315, %v10327
    %v10329 = vpop.f32.mrf.mxu0
    %10330 = vdwg.mxu0
    %10331 = vmatpush.bf16.msra.mxu0 %v6753
    %10332 = vmatpush.bf16.msra.mxu0 %v6737
    %10333 = vmatpush.bf16.msra.mxu0 %v6721
    %10334 = vmatpush.bf16.msra.mxu0 %v6705
    %10335 = vmatpush.bf16.msra.mxu0 %v6689
    %10336 = vmatpush.bf16.msra.mxu0 %v6673
    %10337 = vmatpush.bf16.msra.mxu0 %v6657
    %10338 = vmatpush.bf16.msra.mxu0 %v6641
    %10339 = vmatmul.bf16.gmra.mxu0 %v571
    %v10340 = vpop.f32.mrf.mxu0
    %v10341 = vadd.f32 %v10328, %v10340
    %v10342 = vpop.f32.mrf.mxu0
    %10343 = vdwg.mxu0
    %10344 = vmatpush.bf16.msra.mxu0 %v6881
    %10345 = vmatpush.bf16.msra.mxu0 %v6865
    %10346 = vmatpush.bf16.msra.mxu0 %v6849
    %10347 = vmatpush.bf16.msra.mxu0 %v6833
    %10348 = vmatpush.bf16.msra.mxu0 %v6817
    %10349 = vmatpush.bf16.msra.mxu0 %v6801
    %10350 = vmatpush.bf16.msra.mxu0 %v6785
    %10351 = vmatpush.bf16.msra.mxu0 %v6769
    %10352 = vmatmul.bf16.gmra.mxu0 %v572
    %v10353 = vpop.f32.mrf.mxu0
    %v10354 = vadd.f32 %v10341, %v10353
    %v10355 = vpop.f32.mrf.mxu0
    %10356 = vdwg.mxu0
    %10357 = vmatpush.bf16.msra.mxu0 %v7009
    %10358 = vmatpush.bf16.msra.mxu0 %v6993
    %10359 = vmatpush.bf16.msra.mxu0 %v6977
    %10360 = vmatpush.bf16.msra.mxu0 %v6961
    %10361 = vmatpush.bf16.msra.mxu0 %v6945
    %10362 = vmatpush.bf16.msra.mxu0 %v6929
    %10363 = vmatpush.bf16.msra.mxu0 %v6913
    %10364 = vmatpush.bf16.msra.mxu0 %v6897
    %10365 = vmatmul.bf16.gmra.mxu0 %v573
    %v10366 = vpop.f32.mrf.mxu0
    %v10367 = vadd.f32 %v10354, %v10366
    %v10368 = vpop.f32.mrf.mxu0
    %10369 = vdwg.mxu0
    %v10370 = vpack.c.bf16 %v8547, %v8417
    %v10371 = vpack.c.bf16 %v8807, %v8677
    %v10372 = vpack.c.bf16 %v9067, %v8937
    %v10373 = vpack.c.bf16 %v9327, %v9197
    %v10374 = vpack.c.bf16 %v9587, %v9457
    %v10375 = vpack.c.bf16 %v9847, %v9717
    %v10376 = vpack.c.bf16 %v10107, %v9977
    %v10377 = vpack.c.bf16 %v10367, %v10237
    %v10378 = vunpack.c.l.bf16 %v10370
    %v10379 = vunpack.c.h.bf16 %v10370
    %v10380 = vunpack.c.l.bf16 %v10371
    %v10381 = vunpack.c.h.bf16 %v10371
    %v10382 = vunpack.c.l.bf16 %v10372
    %v10383 = vunpack.c.h.bf16 %v10372
    %v10384 = vunpack.c.l.bf16 %v10373
    %v10385 = vunpack.c.h.bf16 %v10373
    %v10386 = vunpack.c.l.bf16 %v10374
    %v10387 = vunpack.c.h.bf16 %v10374
    %v10388 = vunpack.c.l.bf16 %v10375
    %v10389 = vunpack.c.h.bf16 %v10375
    %v10390 = vunpack.c.l.bf16 %v10376
    %v10391 = vunpack.c.h.bf16 %v10376
    %v10392 = vunpack.c.l.bf16 %v10377
    %v10393 = vunpack.c.h.bf16 %v10377
    %v10394 = vmul.f32 %v10378, 0.010009766
    %v10395 = vmul.f32 %v10379, 0.010009766
    %v10396 = vmul.f32 %v10380, 0.010009766
    %v10397 = vmul.f32 %v10381, 0.010009766
    %v10398 = vmul.f32 %v10382, 0.010009766
    %v10399 = vmul.f32 %v10383, 0.010009766
    %v10400 = vmul.f32 %v10384, 0.010009766
    %v10401 = vmul.f32 %v10385, 0.010009766
    %v10402 = vmul.f32 %v10386, 0.010009766
    %v10403 = vmul.f32 %v10387, 0.010009766
    %v10404 = vmul.f32 %v10388, 0.010009766
    %v10405 = vmul.f32 %v10389, 0.010009766
    %v10406 = vmul.f32 %v10390, 0.010009766
    %v10407 = vmul.f32 %v10391, 0.010009766
    %v10408 = vmul.f32 %v10392, 0.010009766
    %v10409 = vmul.f32 %v10393, 0.010009766
    %v10410 = vpack.c.bf16 %v10395, %v10394
    %v10411 = vpack.c.bf16 %v10397, %v10396
    %v10412 = vpack.c.bf16 %v10399, %v10398
    %v10413 = vpack.c.bf16 %v10401, %v10400
    %v10414 = vpack.c.bf16 %v10403, %v10402
    %v10415 = vpack.c.bf16 %v10405, %v10404
    %v10416 = vpack.c.bf16 %v10407, %v10406
    %v10417 = vpack.c.bf16 %v10409, %v10408
    %v10418 = vunpack.c.l.bf16 %v10410
    %v10419 = vunpack.c.h.bf16 %v10410
    %v10420 = vunpack.c.l.bf16 %v10411
    %v10421 = vunpack.c.h.bf16 %v10411
    %v10422 = vunpack.c.l.bf16 %v10412
    %v10423 = vunpack.c.h.bf16 %v10412
    %v10424 = vunpack.c.l.bf16 %v10413
    %v10425 = vunpack.c.h.bf16 %v10413
    %v10426 = vunpack.c.l.bf16 %v10414
    %v10427 = vunpack.c.h.bf16 %v10414
    %v10428 = vunpack.c.l.bf16 %v10415
    %v10429 = vunpack.c.h.bf16 %v10415
    %v10430 = vunpack.c.l.bf16 %v10416
    %v10431 = vunpack.c.h.bf16 %v10416
    %v10432 = vunpack.c.l.bf16 %v10417
    %v10433 = vunpack.c.h.bf16 %v10417
    %v10434 = vmax.f32 %v10378, %v10418
    %v10435 = vmax.f32 %v10379, %v10419
    %v10436 = vmax.f32 %v10380, %v10420
    %v10437 = vmax.f32 %v10381, %v10421
    %v10438 = vmax.f32 %v10382, %v10422
    %v10439 = vmax.f32 %v10383, %v10423
    %v10440 = vmax.f32 %v10384, %v10424
    %v10441 = vmax.f32 %v10385, %v10425
    %v10442 = vmax.f32 %v10386, %v10426
    %v10443 = vmax.f32 %v10387, %v10427
    %v10444 = vmax.f32 %v10388, %v10428
    %v10445 = vmax.f32 %v10389, %v10429
    %v10446 = vmax.f32 %v10390, %v10430
    %v10447 = vmax.f32 %v10391, %v10431
    %v10448 = vmax.f32 %v10392, %v10432
    %v10449 = vmax.f32 %v10393, %v10433
    %v10450 = vpack.c.bf16 %v10434, %v10434
    %v10451 = vpack.c.bf16 %v10435, %v10435
    %v10452 = vpack.c.bf16 %v10436, %v10436
    %v10453 = vpack.c.bf16 %v10437, %v10437
    %v10454 = vpack.c.bf16 %v10438, %v10438
    %v10455 = vpack.c.bf16 %v10439, %v10439
    %v10456 = vpack.c.bf16 %v10440, %v10440
    %v10457 = vpack.c.bf16 %v10441, %v10441
    %v10458 = vpack.c.bf16 %v10442, %v10442
    %v10459 = vpack.c.bf16 %v10443, %v10443
    %v10460 = vpack.c.bf16 %v10444, %v10444
    %v10461 = vpack.c.bf16 %v10445, %v10445
    %v10462 = vpack.c.bf16 %v10446, %v10446
    %v10463 = vpack.c.bf16 %v10447, %v10447
    %v10464 = vpack.c.bf16 %v10448, %v10448
    %v10465 = vpack.c.bf16 %v10449, %v10449
    %v10466 = vld [vmem:[#allocation9] sm:$0xf]
    %v10467 = vld [vmem:[#allocation9 + $0x4] sm:$0xf]
    %v10468 = vld [vmem:[#allocation9 + $0x8] sm:$0xf]
    %v10469 = vld [vmem:[#allocation9 + $0xc] sm:$0xf]
    %v10470 = vld [vmem:[#allocation9 + $0x10] sm:$0xf]
    %v10471 = vld [vmem:[#allocation9 + $0x14] sm:$0xf]
    %v10472 = vld [vmem:[#allocation9 + $0x18] sm:$0xf]
    %v10473 = vld [vmem:[#allocation9 + $0x1c] sm:$0xf]
    %v10474 = vld [vmem:[#allocation9 + $0x20] sm:$0xf]
    %v10475 = vld [vmem:[#allocation9 + $0x24] sm:$0xf]
    %v10476 = vld [vmem:[#allocation9 + $0x28] sm:$0xf]
    %v10477 = vld [vmem:[#allocation9 + $0x2c] sm:$0xf]
    %v10478 = vld [vmem:[#allocation9 + $0x30] sm:$0xf]
    %v10479 = vld [vmem:[#allocation9 + $0x34] sm:$0xf]
    %v10480 = vld [vmem:[#allocation9 + $0x38] sm:$0xf]
    %v10481 = vld [vmem:[#allocation9 + $0x3c] sm:$0xf]
    %v10482 = vld [vmem:[#allocation9 + $0x40] sm:$0xf]
    %v10483 = vld [vmem:[#allocation9 + $0x44] sm:$0xf]
    %v10484 = vld [vmem:[#allocation9 + $0x48] sm:$0xf]
    %v10485 = vld [vmem:[#allocation9 + $0x4c] sm:$0xf]
    %v10486 = vld [vmem:[#allocation9 + $0x50] sm:$0xf]
    %v10487 = vld [vmem:[#allocation9 + $0x54] sm:$0xf]
    %v10488 = vld [vmem:[#allocation9 + $0x58] sm:$0xf]
    %v10489 = vld [vmem:[#allocation9 + $0x5c] sm:$0xf]
    %v10490 = vld [vmem:[#allocation9 + $0x60] sm:$0xf]
    %v10491 = vld [vmem:[#allocation9 + $0x64] sm:$0xf]
    %v10492 = vld [vmem:[#allocation9 + $0x68] sm:$0xf]
    %v10493 = vld [vmem:[#allocation9 + $0x6c] sm:$0xf]
    %v10494 = vld [vmem:[#allocation9 + $0x70] sm:$0xf]
    %v10495 = vld [vmem:[#allocation9 + $0x74] sm:$0xf]
    %v10496 = vld [vmem:[#allocation9 + $0x78] sm:$0xf]
    %v10497 = vld [vmem:[#allocation9 + $0x7c] sm:$0xf]
    %v10498 = vld [vmem:[#allocation9 + $0x80] sm:$0xf]
    %v10499 = vld [vmem:[#allocation9 + $0x84] sm:$0xf]
    %v10500 = vld [vmem:[#allocation9 + $0x88] sm:$0xf]
    %v10501 = vld [vmem:[#allocation9 + $0x8c] sm:$0xf]
    %v10502 = vld [vmem:[#allocation9 + $0x90] sm:$0xf]
    %v10503 = vld [vmem:[#allocation9 + $0x94] sm:$0xf]
    %v10504 = vld [vmem:[#allocation9 + $0x98] sm:$0xf]
    %v10505 = vld [vmem:[#allocation9 + $0x9c] sm:$0xf]
    %v10506 = vld [vmem:[#allocation9 + $0xa0] sm:$0xf]
    %v10507 = vld [vmem:[#allocation9 + $0xa4] sm:$0xf]
    %v10508 = vld [vmem:[#allocation9 + $0xa8] sm:$0xf]
    %v10509 = vld [vmem:[#allocation9 + $0xac] sm:$0xf]
    %v10510 = vld [vmem:[#allocation9 + $0xb0] sm:$0xf]
    %v10511 = vld [vmem:[#allocation9 + $0xb4] sm:$0xf]
    %v10512 = vld [vmem:[#allocation9 + $0xb8] sm:$0xf]
    %v10513 = vld [vmem:[#allocation9 + $0xbc] sm:$0xf]
    %v10514 = vld [vmem:[#allocation9 + $0xc0] sm:$0xf]
    %v10515 = vld [vmem:[#allocation9 + $0xc4] sm:$0xf]
    %v10516 = vld [vmem:[#allocation9 + $0xc8] sm:$0xf]
    %v10517 = vld [vmem:[#allocation9 + $0xcc] sm:$0xf]
    %v10518 = vld [vmem:[#allocation9 + $0xd0] sm:$0xf]
    %v10519 = vld [vmem:[#allocation9 + $0xd4] sm:$0xf]
    %v10520 = vld [vmem:[#allocation9 + $0xd8] sm:$0xf]
    %v10521 = vld [vmem:[#allocation9 + $0xdc] sm:$0xf]
    %v10522 = vld [vmem:[#allocation9 + $0xe0] sm:$0xf]
    %v10523 = vld [vmem:[#allocation9 + $0xe4] sm:$0xf]
    %v10524 = vld [vmem:[#allocation9 + $0xe8] sm:$0xf]
    %v10525 = vld [vmem:[#allocation9 + $0xec] sm:$0xf]
    %v10526 = vld [vmem:[#allocation9 + $0xf0] sm:$0xf]
    %v10527 = vld [vmem:[#allocation9 + $0xf4] sm:$0xf]
    %v10528 = vld [vmem:[#allocation9 + $0xf8] sm:$0xf]
    %v10529 = vld [vmem:[#allocation9 + $0xfc] sm:$0xf]
    %v10530 = vld [vmem:[#allocation9 + $0x100] sm:$0xf]
    %v10531 = vld [vmem:[#allocation9 + $0x104] sm:$0xf]
    %v10532 = vld [vmem:[#allocation9 + $0x108] sm:$0xf]
    %v10533 = vld [vmem:[#allocation9 + $0x10c] sm:$0xf]
    %v10534 = vld [vmem:[#allocation9 + $0x110] sm:$0xf]
    %v10535 = vld [vmem:[#allocation9 + $0x114] sm:$0xf]
    %v10536 = vld [vmem:[#allocation9 + $0x118] sm:$0xf]
    %v10537 = vld [vmem:[#allocation9 + $0x11c] sm:$0xf]
    %v10538 = vld [vmem:[#allocation9 + $0x120] sm:$0xf]
    %v10539 = vld [vmem:[#allocation9 + $0x124] sm:$0xf]
    %v10540 = vld [vmem:[#allocation9 + $0x128] sm:$0xf]
    %v10541 = vld [vmem:[#allocation9 + $0x12c] sm:$0xf]
    %v10542 = vld [vmem:[#allocation9 + $0x130] sm:$0xf]
    %v10543 = vld [vmem:[#allocation9 + $0x134] sm:$0xf]
    %v10544 = vld [vmem:[#allocation9 + $0x138] sm:$0xf]
    %v10545 = vld [vmem:[#allocation9 + $0x13c] sm:$0xf]
    %v10546 = vld [vmem:[#allocation9 + $0x140] sm:$0xf]
    %v10547 = vld [vmem:[#allocation9 + $0x144] sm:$0xf]
    %v10548 = vld [vmem:[#allocation9 + $0x148] sm:$0xf]
    %v10549 = vld [vmem:[#allocation9 + $0x14c] sm:$0xf]
    %v10550 = vld [vmem:[#allocation9 + $0x150] sm:$0xf]
    %v10551 = vld [vmem:[#allocation9 + $0x154] sm:$0xf]
    %v10552 = vld [vmem:[#allocation9 + $0x158] sm:$0xf]
    %v10553 = vld [vmem:[#allocation9 + $0x15c] sm:$0xf]
    %v10554 = vld [vmem:[#allocation9 + $0x160] sm:$0xf]
    %v10555 = vld [vmem:[#allocation9 + $0x164] sm:$0xf]
    %v10556 = vld [vmem:[#allocation9 + $0x168] sm:$0xf]
    %v10557 = vld [vmem:[#allocation9 + $0x16c] sm:$0xf]
    %v10558 = vld [vmem:[#allocation9 + $0x170] sm:$0xf]
    %v10559 = vld [vmem:[#allocation9 + $0x174] sm:$0xf]
    %v10560 = vld [vmem:[#allocation9 + $0x178] sm:$0xf]
    %v10561 = vld [vmem:[#allocation9 + $0x17c] sm:$0xf]
    %v10562 = vld [vmem:[#allocation9 + $0x180] sm:$0xf]
    %v10563 = vld [vmem:[#allocation9 + $0x184] sm:$0xf]
    %v10564 = vld [vmem:[#allocation9 + $0x188] sm:$0xf]
    %v10565 = vld [vmem:[#allocation9 + $0x18c] sm:$0xf]
    %v10566 = vld [vmem:[#allocation9 + $0x190] sm:$0xf]
    %v10567 = vld [vmem:[#allocation9 + $0x194] sm:$0xf]
    %v10568 = vld [vmem:[#allocation9 + $0x198] sm:$0xf]
    %v10569 = vld [vmem:[#allocation9 + $0x19c] sm:$0xf]
    %v10570 = vld [vmem:[#allocation9 + $0x1a0] sm:$0xf]
    %v10571 = vld [vmem:[#allocation9 + $0x1a4] sm:$0xf]
    %v10572 = vld [vmem:[#allocation9 + $0x1a8] sm:$0xf]
    %v10573 = vld [vmem:[#allocation9 + $0x1ac] sm:$0xf]
    %v10574 = vld [vmem:[#allocation9 + $0x1b0] sm:$0xf]
    %v10575 = vld [vmem:[#allocation9 + $0x1b4] sm:$0xf]
    %v10576 = vld [vmem:[#allocation9 + $0x1b8] sm:$0xf]
    %v10577 = vld [vmem:[#allocation9 + $0x1bc] sm:$0xf]
    %v10578 = vld [vmem:[#allocation9 + $0x1c0] sm:$0xf]
    %v10579 = vld [vmem:[#allocation9 + $0x1c4] sm:$0xf]
    %v10580 = vld [vmem:[#allocation9 + $0x1c8] sm:$0xf]
    %v10581 = vld [vmem:[#allocation9 + $0x1cc] sm:$0xf]
    %v10582 = vld [vmem:[#allocation9 + $0x1d0] sm:$0xf]
    %v10583 = vld [vmem:[#allocation9 + $0x1d4] sm:$0xf]
    %v10584 = vld [vmem:[#allocation9 + $0x1d8] sm:$0xf]
    %v10585 = vld [vmem:[#allocation9 + $0x1dc] sm:$0xf]
    %v10586 = vld [vmem:[#allocation9 + $0x1e0] sm:$0xf]
    %v10587 = vld [vmem:[#allocation9 + $0x1e4] sm:$0xf]
    %v10588 = vld [vmem:[#allocation9 + $0x1e8] sm:$0xf]
    %v10589 = vld [vmem:[#allocation9 + $0x1ec] sm:$0xf]
    %v10590 = vld [vmem:[#allocation9 + $0x1f0] sm:$0xf]
    %v10591 = vld [vmem:[#allocation9 + $0x1f4] sm:$0xf]
    %v10592 = vld [vmem:[#allocation9 + $0x1f8] sm:$0xf]
    %v10593 = vld [vmem:[#allocation9 + $0x1fc] sm:$0xf]
    %v10594 = vld [vmem:[#allocation9 + $0x200] sm:$0xf]
    %v10595 = vld [vmem:[#allocation9 + $0x204] sm:$0xf]
    %v10596 = vld [vmem:[#allocation9 + $0x208] sm:$0xf]
    %v10597 = vld [vmem:[#allocation9 + $0x20c] sm:$0xf]
    %v10598 = vld [vmem:[#allocation9 + $0x210] sm:$0xf]
    %v10599 = vld [vmem:[#allocation9 + $0x214] sm:$0xf]
    %v10600 = vld [vmem:[#allocation9 + $0x218] sm:$0xf]
    %v10601 = vld [vmem:[#allocation9 + $0x21c] sm:$0xf]
    %v10602 = vld [vmem:[#allocation9 + $0x220] sm:$0xf]
    %v10603 = vld [vmem:[#allocation9 + $0x224] sm:$0xf]
    %v10604 = vld [vmem:[#allocation9 + $0x228] sm:$0xf]
    %v10605 = vld [vmem:[#allocation9 + $0x22c] sm:$0xf]
    %v10606 = vld [vmem:[#allocation9 + $0x230] sm:$0xf]
    %v10607 = vld [vmem:[#allocation9 + $0x234] sm:$0xf]
    %v10608 = vld [vmem:[#allocation9 + $0x238] sm:$0xf]
    %v10609 = vld [vmem:[#allocation9 + $0x23c] sm:$0xf]
    %v10610 = vld [vmem:[#allocation9 + $0x240] sm:$0xf]
    %v10611 = vld [vmem:[#allocation9 + $0x244] sm:$0xf]
    %v10612 = vld [vmem:[#allocation9 + $0x248] sm:$0xf]
    %v10613 = vld [vmem:[#allocation9 + $0x24c] sm:$0xf]
    %v10614 = vld [vmem:[#allocation9 + $0x250] sm:$0xf]
    %v10615 = vld [vmem:[#allocation9 + $0x254] sm:$0xf]
    %v10616 = vld [vmem:[#allocation9 + $0x258] sm:$0xf]
    %v10617 = vld [vmem:[#allocation9 + $0x25c] sm:$0xf]
    %v10618 = vld [vmem:[#allocation9 + $0x260] sm:$0xf]
    %v10619 = vld [vmem:[#allocation9 + $0x264] sm:$0xf]
    %v10620 = vld [vmem:[#allocation9 + $0x268] sm:$0xf]
    %v10621 = vld [vmem:[#allocation9 + $0x26c] sm:$0xf]
    %v10622 = vld [vmem:[#allocation9 + $0x270] sm:$0xf]
    %v10623 = vld [vmem:[#allocation9 + $0x274] sm:$0xf]
    %v10624 = vld [vmem:[#allocation9 + $0x278] sm:$0xf]
    %v10625 = vld [vmem:[#allocation9 + $0x27c] sm:$0xf]
    %v10626 = vld [vmem:[#allocation9 + $0x280] sm:$0xf]
    %v10627 = vld [vmem:[#allocation9 + $0x284] sm:$0xf]
    %v10628 = vld [vmem:[#allocation9 + $0x288] sm:$0xf]
    %v10629 = vld [vmem:[#allocation9 + $0x28c] sm:$0xf]
    %v10630 = vld [vmem:[#allocation9 + $0x290] sm:$0xf]
    %v10631 = vld [vmem:[#allocation9 + $0x294] sm:$0xf]
    %v10632 = vld [vmem:[#allocation9 + $0x298] sm:$0xf]
    %v10633 = vld [vmem:[#allocation9 + $0x29c] sm:$0xf]
    %v10634 = vld [vmem:[#allocation9 + $0x2a0] sm:$0xf]
    %v10635 = vld [vmem:[#allocation9 + $0x2a4] sm:$0xf]
    %v10636 = vld [vmem:[#allocation9 + $0x2a8] sm:$0xf]
    %v10637 = vld [vmem:[#allocation9 + $0x2ac] sm:$0xf]
    %v10638 = vld [vmem:[#allocation9 + $0x2b0] sm:$0xf]
    %v10639 = vld [vmem:[#allocation9 + $0x2b4] sm:$0xf]
    %v10640 = vld [vmem:[#allocation9 + $0x2b8] sm:$0xf]
    %v10641 = vld [vmem:[#allocation9 + $0x2bc] sm:$0xf]
    %v10642 = vld [vmem:[#allocation9 + $0x2c0] sm:$0xf]
    %v10643 = vld [vmem:[#allocation9 + $0x2c4] sm:$0xf]
    %v10644 = vld [vmem:[#allocation9 + $0x2c8] sm:$0xf]
    %v10645 = vld [vmem:[#allocation9 + $0x2cc] sm:$0xf]
    %v10646 = vld [vmem:[#allocation9 + $0x2d0] sm:$0xf]
    %v10647 = vld [vmem:[#allocation9 + $0x2d4] sm:$0xf]
    %v10648 = vld [vmem:[#allocation9 + $0x2d8] sm:$0xf]
    %v10649 = vld [vmem:[#allocation9 + $0x2dc] sm:$0xf]
    %v10650 = vld [vmem:[#allocation9 + $0x2e0] sm:$0xf]
    %v10651 = vld [vmem:[#allocation9 + $0x2e4] sm:$0xf]
    %v10652 = vld [vmem:[#allocation9 + $0x2e8] sm:$0xf]
    %v10653 = vld [vmem:[#allocation9 + $0x2ec] sm:$0xf]
    %v10654 = vld [vmem:[#allocation9 + $0x2f0] sm:$0xf]
    %v10655 = vld [vmem:[#allocation9 + $0x2f4] sm:$0xf]
    %v10656 = vld [vmem:[#allocation9 + $0x2f8] sm:$0xf]
    %v10657 = vld [vmem:[#allocation9 + $0x2fc] sm:$0xf]
    %v10658 = vld [vmem:[#allocation9 + $0x300] sm:$0xf]
    %v10659 = vld [vmem:[#allocation9 + $0x304] sm:$0xf]
    %v10660 = vld [vmem:[#allocation9 + $0x308] sm:$0xf]
    %v10661 = vld [vmem:[#allocation9 + $0x30c] sm:$0xf]
    %v10662 = vld [vmem:[#allocation9 + $0x310] sm:$0xf]
    %v10663 = vld [vmem:[#allocation9 + $0x314] sm:$0xf]
    %v10664 = vld [vmem:[#allocation9 + $0x318] sm:$0xf]
    %v10665 = vld [vmem:[#allocation9 + $0x31c] sm:$0xf]
    %v10666 = vld [vmem:[#allocation9 + $0x320] sm:$0xf]
    %v10667 = vld [vmem:[#allocation9 + $0x324] sm:$0xf]
    %v10668 = vld [vmem:[#allocation9 + $0x328] sm:$0xf]
    %v10669 = vld [vmem:[#allocation9 + $0x32c] sm:$0xf]
    %v10670 = vld [vmem:[#allocation9 + $0x330] sm:$0xf]
    %v10671 = vld [vmem:[#allocation9 + $0x334] sm:$0xf]
    %v10672 = vld [vmem:[#allocation9 + $0x338] sm:$0xf]
    %v10673 = vld [vmem:[#allocation9 + $0x33c] sm:$0xf]
    %v10674 = vld [vmem:[#allocation9 + $0x340] sm:$0xf]
    %v10675 = vld [vmem:[#allocation9 + $0x344] sm:$0xf]
    %v10676 = vld [vmem:[#allocation9 + $0x348] sm:$0xf]
    %v10677 = vld [vmem:[#allocation9 + $0x34c] sm:$0xf]
    %v10678 = vld [vmem:[#allocation9 + $0x350] sm:$0xf]
    %v10679 = vld [vmem:[#allocation9 + $0x354] sm:$0xf]
    %v10680 = vld [vmem:[#allocation9 + $0x358] sm:$0xf]
    %v10681 = vld [vmem:[#allocation9 + $0x35c] sm:$0xf]
    %v10682 = vld [vmem:[#allocation9 + $0x360] sm:$0xf]
    %v10683 = vld [vmem:[#allocation9 + $0x364] sm:$0xf]
    %v10684 = vld [vmem:[#allocation9 + $0x368] sm:$0xf]
    %v10685 = vld [vmem:[#allocation9 + $0x36c] sm:$0xf]
    %v10686 = vld [vmem:[#allocation9 + $0x370] sm:$0xf]
    %v10687 = vld [vmem:[#allocation9 + $0x374] sm:$0xf]
    %v10688 = vld [vmem:[#allocation9 + $0x378] sm:$0xf]
    %v10689 = vld [vmem:[#allocation9 + $0x37c] sm:$0xf]
    %v10690 = vld [vmem:[#allocation9 + $0x380] sm:$0xf]
    %v10691 = vld [vmem:[#allocation9 + $0x384] sm:$0xf]
    %v10692 = vld [vmem:[#allocation9 + $0x388] sm:$0xf]
    %v10693 = vld [vmem:[#allocation9 + $0x38c] sm:$0xf]
    %v10694 = vld [vmem:[#allocation9 + $0x390] sm:$0xf]
    %v10695 = vld [vmem:[#allocation9 + $0x394] sm:$0xf]
    %v10696 = vld [vmem:[#allocation9 + $0x398] sm:$0xf]
    %v10697 = vld [vmem:[#allocation9 + $0x39c] sm:$0xf]
    %v10698 = vld [vmem:[#allocation9 + $0x3a0] sm:$0xf]
    %v10699 = vld [vmem:[#allocation9 + $0x3a4] sm:$0xf]
    %v10700 = vld [vmem:[#allocation9 + $0x3a8] sm:$0xf]
    %v10701 = vld [vmem:[#allocation9 + $0x3ac] sm:$0xf]
    %v10702 = vld [vmem:[#allocation9 + $0x3b0] sm:$0xf]
    %v10703 = vld [vmem:[#allocation9 + $0x3b4] sm:$0xf]
    %v10704 = vld [vmem:[#allocation9 + $0x3b8] sm:$0xf]
    %v10705 = vld [vmem:[#allocation9 + $0x3bc] sm:$0xf]
    %v10706 = vld [vmem:[#allocation9 + $0x3c0] sm:$0xf]
    %v10707 = vld [vmem:[#allocation9 + $0x3c4] sm:$0xf]
    %v10708 = vld [vmem:[#allocation9 + $0x3c8] sm:$0xf]
    %v10709 = vld [vmem:[#allocation9 + $0x3cc] sm:$0xf]
    %v10710 = vld [vmem:[#allocation9 + $0x3d0] sm:$0xf]
    %v10711 = vld [vmem:[#allocation9 + $0x3d4] sm:$0xf]
    %v10712 = vld [vmem:[#allocation9 + $0x3d8] sm:$0xf]
    %v10713 = vld [vmem:[#allocation9 + $0x3dc] sm:$0xf]
    %v10714 = vld [vmem:[#allocation9 + $0x3e0] sm:$0xf]
    %v10715 = vld [vmem:[#allocation9 + $0x3e4] sm:$0xf]
    %v10716 = vld [vmem:[#allocation9 + $0x3e8] sm:$0xf]
    %v10717 = vld [vmem:[#allocation9 + $0x3ec] sm:$0xf]
    %v10718 = vld [vmem:[#allocation9 + $0x3f0] sm:$0xf]
    %v10719 = vld [vmem:[#allocation9 + $0x3f4] sm:$0xf]
    %v10720 = vld [vmem:[#allocation9 + $0x3f8] sm:$0xf]
    %v10721 = vld [vmem:[#allocation9 + $0x3fc] sm:$0xf]
    %v10722 = vld [vmem:[#allocation10] sm:$0x1]
    %v10724 = vperm.slane %v10722, 0
    %v10982 = vunpack.c.l.b16 %v10466
    %v10983 = vunpack.c.l.b16 %v10467
    %v10984 = vunpack.c.l.b16 %v10468
    %v10985 = vunpack.c.l.b16 %v10469
    %v10986 = vunpack.c.l.b16 %v10470
    %v10987 = vunpack.c.l.b16 %v10471
    %v10988 = vunpack.c.l.b16 %v10472
    %v10989 = vunpack.c.l.b16 %v10473
    %v10990 = vunpack.c.l.b16 %v10474
    %v10991 = vunpack.c.l.b16 %v10475
    %v10992 = vunpack.c.l.b16 %v10476
    %v10993 = vunpack.c.l.b16 %v10477
    %v10994 = vunpack.c.l.b16 %v10478
    %v10995 = vunpack.c.l.b16 %v10479
    %v10996 = vunpack.c.l.b16 %v10480
    %v10997 = vunpack.c.l.b16 %v10481
    %v10998 = vunpack.c.l.b16 %v10482
    %v10999 = vunpack.c.l.b16 %v10483
    %v11000 = vunpack.c.l.b16 %v10484
    %v11001 = vunpack.c.l.b16 %v10485
    %v11002 = vunpack.c.l.b16 %v10486
    %v11003 = vunpack.c.l.b16 %v10487
    %v11004 = vunpack.c.l.b16 %v10488
    %v11005 = vunpack.c.l.b16 %v10489
    %v11006 = vunpack.c.l.b16 %v10490
    %v11007 = vunpack.c.l.b16 %v10491
    %v11008 = vunpack.c.l.b16 %v10492
    %v11009 = vunpack.c.l.b16 %v10493
    %v11010 = vunpack.c.l.b16 %v10494
    %v11011 = vunpack.c.l.b16 %v10495
    %v11012 = vunpack.c.l.b16 %v10496
    %v11013 = vunpack.c.l.b16 %v10497
    %v11014 = vunpack.c.l.b16 %v10498
    %v11015 = vunpack.c.l.b16 %v10499
    %v11016 = vunpack.c.l.b16 %v10500
    %v11017 = vunpack.c.l.b16 %v10501
    %v11018 = vunpack.c.l.b16 %v10502
    %v11019 = vunpack.c.l.b16 %v10503
    %v11020 = vunpack.c.l.b16 %v10504
    %v11021 = vunpack.c.l.b16 %v10505
    %v11022 = vunpack.c.l.b16 %v10506
    %v11023 = vunpack.c.l.b16 %v10507
    %v11024 = vunpack.c.l.b16 %v10508
    %v11025 = vunpack.c.l.b16 %v10509
    %v11026 = vunpack.c.l.b16 %v10510
    %v11027 = vunpack.c.l.b16 %v10511
    %v11028 = vunpack.c.l.b16 %v10512
    %v11029 = vunpack.c.l.b16 %v10513
    %v11030 = vunpack.c.l.b16 %v10514
    %v11031 = vunpack.c.l.b16 %v10515
    %v11032 = vunpack.c.l.b16 %v10516
    %v11033 = vunpack.c.l.b16 %v10517
    %v11034 = vunpack.c.l.b16 %v10518
    %v11035 = vunpack.c.l.b16 %v10519
    %v11036 = vunpack.c.l.b16 %v10520
    %v11037 = vunpack.c.l.b16 %v10521
    %v11038 = vunpack.c.l.b16 %v10522
    %v11039 = vunpack.c.l.b16 %v10523
    %v11040 = vunpack.c.l.b16 %v10524
    %v11041 = vunpack.c.l.b16 %v10525
    %v11042 = vunpack.c.l.b16 %v10526
    %v11043 = vunpack.c.l.b16 %v10527
    %v11044 = vunpack.c.l.b16 %v10528
    %v11045 = vunpack.c.l.b16 %v10529
    %v11046 = vunpack.c.l.b16 %v10530
    %v11047 = vunpack.c.l.b16 %v10531
    %v11048 = vunpack.c.l.b16 %v10532
    %v11049 = vunpack.c.l.b16 %v10533
    %v11050 = vunpack.c.l.b16 %v10534
    %v11051 = vunpack.c.l.b16 %v10535
    %v11052 = vunpack.c.l.b16 %v10536
    %v11053 = vunpack.c.l.b16 %v10537
    %v11054 = vunpack.c.l.b16 %v10538
    %v11055 = vunpack.c.l.b16 %v10539
    %v11056 = vunpack.c.l.b16 %v10540
    %v11057 = vunpack.c.l.b16 %v10541
    %v11058 = vunpack.c.l.b16 %v10542
    %v11059 = vunpack.c.l.b16 %v10543
    %v11060 = vunpack.c.l.b16 %v10544
    %v11061 = vunpack.c.l.b16 %v10545
    %v11062 = vunpack.c.l.b16 %v10546
    %v11063 = vunpack.c.l.b16 %v10547
    %v11064 = vunpack.c.l.b16 %v10548
    %v11065 = vunpack.c.l.b16 %v10549
    %v11066 = vunpack.c.l.b16 %v10550
    %v11067 = vunpack.c.l.b16 %v10551
    %v11068 = vunpack.c.l.b16 %v10552
    %v11069 = vunpack.c.l.b16 %v10553
    %v11070 = vunpack.c.l.b16 %v10554
    %v11071 = vunpack.c.l.b16 %v10555
    %v11072 = vunpack.c.l.b16 %v10556
    %v11073 = vunpack.c.l.b16 %v10557
    %v11074 = vunpack.c.l.b16 %v10558
    %v11075 = vunpack.c.l.b16 %v10559
    %v11076 = vunpack.c.l.b16 %v10560
    %v11077 = vunpack.c.l.b16 %v10561
    %v11078 = vunpack.c.l.b16 %v10562
    %v11079 = vunpack.c.l.b16 %v10563
    %v11080 = vunpack.c.l.b16 %v10564
    %v11081 = vunpack.c.l.b16 %v10565
    %v11082 = vunpack.c.l.b16 %v10566
    %v11083 = vunpack.c.l.b16 %v10567
    %v11084 = vunpack.c.l.b16 %v10568
    %v11085 = vunpack.c.l.b16 %v10569
    %v11086 = vunpack.c.l.b16 %v10570
    %v11087 = vunpack.c.l.b16 %v10571
    %v11088 = vunpack.c.l.b16 %v10572
    %v11089 = vunpack.c.l.b16 %v10573
    %v11090 = vunpack.c.l.b16 %v10574
    %v11091 = vunpack.c.l.b16 %v10575
    %v11092 = vunpack.c.l.b16 %v10576
    %v11093 = vunpack.c.l.b16 %v10577
    %v11094 = vunpack.c.l.b16 %v10578
    %v11095 = vunpack.c.l.b16 %v10579
    %v11096 = vunpack.c.l.b16 %v10580
    %v11097 = vunpack.c.l.b16 %v10581
    %v11098 = vunpack.c.l.b16 %v10582
    %v11099 = vunpack.c.l.b16 %v10583
    %v11100 = vunpack.c.l.b16 %v10584
    %v11101 = vunpack.c.l.b16 %v10585
    %v11102 = vunpack.c.l.b16 %v10586
    %v11103 = vunpack.c.l.b16 %v10587
    %v11104 = vunpack.c.l.b16 %v10588
    %v11105 = vunpack.c.l.b16 %v10589
    %v11106 = vunpack.c.l.b16 %v10590
    %v11107 = vunpack.c.l.b16 %v10591
    %v11108 = vunpack.c.l.b16 %v10592
    %v11109 = vunpack.c.l.b16 %v10593
    %v11110 = vunpack.c.l.b16 %v10594
    %v11111 = vunpack.c.l.b16 %v10595
    %v11112 = vunpack.c.l.b16 %v10596
    %v11113 = vunpack.c.l.b16 %v10597
    %v11114 = vunpack.c.l.b16 %v10598
    %v11115 = vunpack.c.l.b16 %v10599
    %v11116 = vunpack.c.l.b16 %v10600
    %v11117 = vunpack.c.l.b16 %v10601
    %v11118 = vunpack.c.l.b16 %v10602
    %v11119 = vunpack.c.l.b16 %v10603
    %v11120 = vunpack.c.l.b16 %v10604
    %v11121 = vunpack.c.l.b16 %v10605
    %v11122 = vunpack.c.l.b16 %v10606
    %v11123 = vunpack.c.l.b16 %v10607
    %v11124 = vunpack.c.l.b16 %v10608
    %v11125 = vunpack.c.l.b16 %v10609
    %v11126 = vunpack.c.l.b16 %v10610
    %v11127 = vunpack.c.l.b16 %v10611
    %v11128 = vunpack.c.l.b16 %v10612
    %v11129 = vunpack.c.l.b16 %v10613
    %v11130 = vunpack.c.l.b16 %v10614
    %v11131 = vunpack.c.l.b16 %v10615
    %v11132 = vunpack.c.l.b16 %v10616
    %v11133 = vunpack.c.l.b16 %v10617
    %v11134 = vunpack.c.l.b16 %v10618
    %v11135 = vunpack.c.l.b16 %v10619
    %v11136 = vunpack.c.l.b16 %v10620
    %v11137 = vunpack.c.l.b16 %v10621
    %v11138 = vunpack.c.l.b16 %v10622
    %v11139 = vunpack.c.l.b16 %v10623
    %v11140 = vunpack.c.l.b16 %v10624
    %v11141 = vunpack.c.l.b16 %v10625
    %v11142 = vunpack.c.l.b16 %v10626
    %v11143 = vunpack.c.l.b16 %v10627
    %v11144 = vunpack.c.l.b16 %v10628
    %v11145 = vunpack.c.l.b16 %v10629
    %v11146 = vunpack.c.l.b16 %v10630
    %v11147 = vunpack.c.l.b16 %v10631
    %v11148 = vunpack.c.l.b16 %v10632
    %v11149 = vunpack.c.l.b16 %v10633
    %v11150 = vunpack.c.l.b16 %v10634
    %v11151 = vunpack.c.l.b16 %v10635
    %v11152 = vunpack.c.l.b16 %v10636
    %v11153 = vunpack.c.l.b16 %v10637
    %v11154 = vunpack.c.l.b16 %v10638
    %v11155 = vunpack.c.l.b16 %v10639
    %v11156 = vunpack.c.l.b16 %v10640
    %v11157 = vunpack.c.l.b16 %v10641
    %v11158 = vunpack.c.l.b16 %v10642
    %v11159 = vunpack.c.l.b16 %v10643
    %v11160 = vunpack.c.l.b16 %v10644
    %v11161 = vunpack.c.l.b16 %v10645
    %v11162 = vunpack.c.l.b16 %v10646
    %v11163 = vunpack.c.l.b16 %v10647
    %v11164 = vunpack.c.l.b16 %v10648
    %v11165 = vunpack.c.l.b16 %v10649
    %v11166 = vunpack.c.l.b16 %v10650
    %v11167 = vunpack.c.l.b16 %v10651
    %v11168 = vunpack.c.l.b16 %v10652
    %v11169 = vunpack.c.l.b16 %v10653
    %v11170 = vunpack.c.l.b16 %v10654
    %v11171 = vunpack.c.l.b16 %v10655
    %v11172 = vunpack.c.l.b16 %v10656
    %v11173 = vunpack.c.l.b16 %v10657
    %v11174 = vunpack.c.l.b16 %v10658
    %v11175 = vunpack.c.l.b16 %v10659
    %v11176 = vunpack.c.l.b16 %v10660
    %v11177 = vunpack.c.l.b16 %v10661
    %v11178 = vunpack.c.l.b16 %v10662
    %v11179 = vunpack.c.l.b16 %v10663
    %v11180 = vunpack.c.l.b16 %v10664
    %v11181 = vunpack.c.l.b16 %v10665
    %v11182 = vunpack.c.l.b16 %v10666
    %v11183 = vunpack.c.l.b16 %v10667
    %v11184 = vunpack.c.l.b16 %v10668
    %v11185 = vunpack.c.l.b16 %v10669
    %v11186 = vunpack.c.l.b16 %v10670
    %v11187 = vunpack.c.l.b16 %v10671
    %v11188 = vunpack.c.l.b16 %v10672
    %v11189 = vunpack.c.l.b16 %v10673
    %v11190 = vunpack.c.l.b16 %v10674
    %v11191 = vunpack.c.l.b16 %v10675
    %v11192 = vunpack.c.l.b16 %v10676
    %v11193 = vunpack.c.l.b16 %v10677
    %v11194 = vunpack.c.l.b16 %v10678
    %v11195 = vunpack.c.l.b16 %v10679
    %v11196 = vunpack.c.l.b16 %v10680
    %v11197 = vunpack.c.l.b16 %v10681
    %v11198 = vunpack.c.l.b16 %v10682
    %v11199 = vunpack.c.l.b16 %v10683
    %v11200 = vunpack.c.l.b16 %v10684
    %v11201 = vunpack.c.l.b16 %v10685
    %v11202 = vunpack.c.l.b16 %v10686
    %v11203 = vunpack.c.l.b16 %v10687
    %v11204 = vunpack.c.l.b16 %v10688
    %v11205 = vunpack.c.l.b16 %v10689
    %v11206 = vunpack.c.l.b16 %v10690
    %v11207 = vunpack.c.l.b16 %v10691
    %v11208 = vunpack.c.l.b16 %v10692
    %v11209 = vunpack.c.l.b16 %v10693
    %v11210 = vunpack.c.l.b16 %v10694
    %v11211 = vunpack.c.l.b16 %v10695
    %v11212 = vunpack.c.l.b16 %v10696
    %v11213 = vunpack.c.l.b16 %v10697
    %v11214 = vunpack.c.l.b16 %v10698
    %v11215 = vunpack.c.l.b16 %v10699
    %v11216 = vunpack.c.l.b16 %v10700
    %v11217 = vunpack.c.l.b16 %v10701
    %v11218 = vunpack.c.l.b16 %v10702
    %v11219 = vunpack.c.l.b16 %v10703
    %v11220 = vunpack.c.l.b16 %v10704
    %v11221 = vunpack.c.l.b16 %v10705
    %v11222 = vunpack.c.l.b16 %v10706
    %v11223 = vunpack.c.l.b16 %v10707
    %v11224 = vunpack.c.l.b16 %v10708
    %v11225 = vunpack.c.l.b16 %v10709
    %v11226 = vunpack.c.l.b16 %v10710
    %v11227 = vunpack.c.l.b16 %v10711
    %v11228 = vunpack.c.l.b16 %v10712
    %v11229 = vunpack.c.l.b16 %v10713
    %v11230 = vunpack.c.l.b16 %v10714
    %v11231 = vunpack.c.l.b16 %v10715
    %v11232 = vunpack.c.l.b16 %v10716
    %v11233 = vunpack.c.l.b16 %v10717
    %v11234 = vunpack.c.l.b16 %v10718
    %v11235 = vunpack.c.l.b16 %v10719
    %v11236 = vunpack.c.l.b16 %v10720
    %v11237 = vunpack.c.l.b16 %v10721
    %v11238 = vpack.c.b16 %v10983, %v10982
    %v11239 = vpack.c.b16 %v10985, %v10984
    %v11240 = vpack.c.b16 %v10987, %v10986
    %v11241 = vpack.c.b16 %v10989, %v10988
    %v11242 = vpack.c.b16 %v10991, %v10990
    %v11243 = vpack.c.b16 %v10993, %v10992
    %v11244 = vpack.c.b16 %v10995, %v10994
    %v11245 = vpack.c.b16 %v10997, %v10996
    %v11246 = vpack.c.b16 %v10999, %v10998
    %v11247 = vpack.c.b16 %v11001, %v11000
    %v11248 = vpack.c.b16 %v11003, %v11002
    %v11249 = vpack.c.b16 %v11005, %v11004
    %v11250 = vpack.c.b16 %v11007, %v11006
    %v11251 = vpack.c.b16 %v11009, %v11008
    %v11252 = vpack.c.b16 %v11011, %v11010
    %v11253 = vpack.c.b16 %v11013, %v11012
    %v11254 = vpack.c.b16 %v11015, %v11014
    %v11255 = vpack.c.b16 %v11017, %v11016
    %v11256 = vpack.c.b16 %v11019, %v11018
    %v11257 = vpack.c.b16 %v11021, %v11020
    %v11258 = vpack.c.b16 %v11023, %v11022
    %v11259 = vpack.c.b16 %v11025, %v11024
    %v11260 = vpack.c.b16 %v11027, %v11026
    %v11261 = vpack.c.b16 %v11029, %v11028
    %v11262 = vpack.c.b16 %v11031, %v11030
    %v11263 = vpack.c.b16 %v11033, %v11032
    %v11264 = vpack.c.b16 %v11035, %v11034
    %v11265 = vpack.c.b16 %v11037, %v11036
    %v11266 = vpack.c.b16 %v11039, %v11038
    %v11267 = vpack.c.b16 %v11041, %v11040
    %v11268 = vpack.c.b16 %v11043, %v11042
    %v11269 = vpack.c.b16 %v11045, %v11044
    %v11270 = vpack.c.b16 %v11047, %v11046
    %v11271 = vpack.c.b16 %v11049, %v11048
    %v11272 = vpack.c.b16 %v11051, %v11050
    %v11273 = vpack.c.b16 %v11053, %v11052
    %v11274 = vpack.c.b16 %v11055, %v11054
    %v11275 = vpack.c.b16 %v11057, %v11056
    %v11276 = vpack.c.b16 %v11059, %v11058
    %v11277 = vpack.c.b16 %v11061, %v11060
    %v11278 = vpack.c.b16 %v11063, %v11062
    %v11279 = vpack.c.b16 %v11065, %v11064
    %v11280 = vpack.c.b16 %v11067, %v11066
    %v11281 = vpack.c.b16 %v11069, %v11068
    %v11282 = vpack.c.b16 %v11071, %v11070
    %v11283 = vpack.c.b16 %v11073, %v11072
    %v11284 = vpack.c.b16 %v11075, %v11074
    %v11285 = vpack.c.b16 %v11077, %v11076
    %v11286 = vpack.c.b16 %v11079, %v11078
    %v11287 = vpack.c.b16 %v11081, %v11080
    %v11288 = vpack.c.b16 %v11083, %v11082
    %v11289 = vpack.c.b16 %v11085, %v11084
    %v11290 = vpack.c.b16 %v11087, %v11086
    %v11291 = vpack.c.b16 %v11089, %v11088
    %v11292 = vpack.c.b16 %v11091, %v11090
    %v11293 = vpack.c.b16 %v11093, %v11092
    %v11294 = vpack.c.b16 %v11095, %v11094
    %v11295 = vpack.c.b16 %v11097, %v11096
    %v11296 = vpack.c.b16 %v11099, %v11098
    %v11297 = vpack.c.b16 %v11101, %v11100
    %v11298 = vpack.c.b16 %v11103, %v11102
    %v11299 = vpack.c.b16 %v11105, %v11104
    %v11300 = vpack.c.b16 %v11107, %v11106
    %v11301 = vpack.c.b16 %v11109, %v11108
    %v11302 = vpack.c.b16 %v11111, %v11110
    %v11303 = vpack.c.b16 %v11113, %v11112
    %v11304 = vpack.c.b16 %v11115, %v11114
    %v11305 = vpack.c.b16 %v11117, %v11116
    %v11306 = vpack.c.b16 %v11119, %v11118
    %v11307 = vpack.c.b16 %v11121, %v11120
    %v11308 = vpack.c.b16 %v11123, %v11122
    %v11309 = vpack.c.b16 %v11125, %v11124
    %v11310 = vpack.c.b16 %v11127, %v11126
    %v11311 = vpack.c.b16 %v11129, %v11128
    %v11312 = vpack.c.b16 %v11131, %v11130
    %v11313 = vpack.c.b16 %v11133, %v11132
    %v11314 = vpack.c.b16 %v11135, %v11134
    %v11315 = vpack.c.b16 %v11137, %v11136
    %v11316 = vpack.c.b16 %v11139, %v11138
    %v11317 = vpack.c.b16 %v11141, %v11140
    %v11318 = vpack.c.b16 %v11143, %v11142
    %v11319 = vpack.c.b16 %v11145, %v11144
    %v11320 = vpack.c.b16 %v11147, %v11146
    %v11321 = vpack.c.b16 %v11149, %v11148
    %v11322 = vpack.c.b16 %v11151, %v11150
    %v11323 = vpack.c.b16 %v11153, %v11152
    %v11324 = vpack.c.b16 %v11155, %v11154
    %v11325 = vpack.c.b16 %v11157, %v11156
    %v11326 = vpack.c.b16 %v11159, %v11158
    %v11327 = vpack.c.b16 %v11161, %v11160
    %v11328 = vpack.c.b16 %v11163, %v11162
    %v11329 = vpack.c.b16 %v11165, %v11164
    %v11330 = vpack.c.b16 %v11167, %v11166
    %v11331 = vpack.c.b16 %v11169, %v11168
    %v11332 = vpack.c.b16 %v11171, %v11170
    %v11333 = vpack.c.b16 %v11173, %v11172
    %v11334 = vpack.c.b16 %v11175, %v11174
    %v11335 = vpack.c.b16 %v11177, %v11176
    %v11336 = vpack.c.b16 %v11179, %v11178
    %v11337 = vpack.c.b16 %v11181, %v11180
    %v11338 = vpack.c.b16 %v11183, %v11182
    %v11339 = vpack.c.b16 %v11185, %v11184
    %v11340 = vpack.c.b16 %v11187, %v11186
    %v11341 = vpack.c.b16 %v11189, %v11188
    %v11342 = vpack.c.b16 %v11191, %v11190
    %v11343 = vpack.c.b16 %v11193, %v11192
    %v11344 = vpack.c.b16 %v11195, %v11194
    %v11345 = vpack.c.b16 %v11197, %v11196
    %v11346 = vpack.c.b16 %v11199, %v11198
    %v11347 = vpack.c.b16 %v11201, %v11200
    %v11348 = vpack.c.b16 %v11203, %v11202
    %v11349 = vpack.c.b16 %v11205, %v11204
    %v11350 = vpack.c.b16 %v11207, %v11206
    %v11351 = vpack.c.b16 %v11209, %v11208
    %v11352 = vpack.c.b16 %v11211, %v11210
    %v11353 = vpack.c.b16 %v11213, %v11212
    %v11354 = vpack.c.b16 %v11215, %v11214
    %v11355 = vpack.c.b16 %v11217, %v11216
    %v11356 = vpack.c.b16 %v11219, %v11218
    %v11357 = vpack.c.b16 %v11221, %v11220
    %v11358 = vpack.c.b16 %v11223, %v11222
    %v11359 = vpack.c.b16 %v11225, %v11224
    %v11360 = vpack.c.b16 %v11227, %v11226
    %v11361 = vpack.c.b16 %v11229, %v11228
    %v11362 = vpack.c.b16 %v11231, %v11230
    %v11363 = vpack.c.b16 %v11233, %v11232
    %v11364 = vpack.c.b16 %v11235, %v11234
    %v11365 = vpack.c.b16 %v11237, %v11236
    %11494 = vmatpush.bf16.msra.mxu0 %v11245
    %11495 = vmatpush.bf16.msra.mxu0 %v11244
    %11496 = vmatpush.bf16.msra.mxu0 %v11243
    %11497 = vmatpush.bf16.msra.mxu0 %v11242
    %11498 = vmatpush.bf16.msra.mxu0 %v11241
    %11499 = vmatpush.bf16.msra.mxu0 %v11240
    %11500 = vmatpush.bf16.msra.mxu0 %v11239
    %11501 = vmatpush.bf16.msra.mxu0 %v11238
    %11502 = vmatmul.bf16.gmra.mxu0 %v10450
    %v11503 = vpop.f32.mrf.mxu0
    %v11504 = vadd.f32 %v10724, %v11503
    %v11505 = vpop.f32.mrf.mxu0
    %11506 = vdwg.mxu0
    %11507 = vmatpush.bf16.msra.mxu0 %v11253
    %11508 = vmatpush.bf16.msra.mxu0 %v11252
    %11509 = vmatpush.bf16.msra.mxu0 %v11251
    %11510 = vmatpush.bf16.msra.mxu0 %v11250
    %11511 = vmatpush.bf16.msra.mxu0 %v11249
    %11512 = vmatpush.bf16.msra.mxu0 %v11248
    %11513 = vmatpush.bf16.msra.mxu0 %v11247
    %11514 = vmatpush.bf16.msra.mxu0 %v11246
    %11515 = vmatmul.bf16.gmra.mxu0 %v10451
    %v11516 = vpop.f32.mrf.mxu0
    %v11517 = vadd.f32 %v11504, %v11516
    %v11518 = vpop.f32.mrf.mxu0
    %11519 = vdwg.mxu0
    %11520 = vmatpush.bf16.msra.mxu0 %v11261
    %11521 = vmatpush.bf16.msra.mxu0 %v11260
    %11522 = vmatpush.bf16.msra.mxu0 %v11259
    %11523 = vmatpush.bf16.msra.mxu0 %v11258
    %11524 = vmatpush.bf16.msra.mxu0 %v11257
    %11525 = vmatpush.bf16.msra.mxu0 %v11256
    %11526 = vmatpush.bf16.msra.mxu0 %v11255
    %11527 = vmatpush.bf16.msra.mxu0 %v11254
    %11528 = vmatmul.bf16.gmra.mxu0 %v10452
    %v11529 = vpop.f32.mrf.mxu0
    %v11530 = vadd.f32 %v11517, %v11529
    %v11531 = vpop.f32.mrf.mxu0
    %11532 = vdwg.mxu0
    %11533 = vmatpush.bf16.msra.mxu0 %v11269
    %11534 = vmatpush.bf16.msra.mxu0 %v11268
    %11535 = vmatpush.bf16.msra.mxu0 %v11267
    %11536 = vmatpush.bf16.msra.mxu0 %v11266
    %11537 = vmatpush.bf16.msra.mxu0 %v11265
    %11538 = vmatpush.bf16.msra.mxu0 %v11264
    %11539 = vmatpush.bf16.msra.mxu0 %v11263
    %11540 = vmatpush.bf16.msra.mxu0 %v11262
    %11541 = vmatmul.bf16.gmra.mxu0 %v10453
    %v11542 = vpop.f32.mrf.mxu0
    %v11543 = vadd.f32 %v11530, %v11542
    %v11544 = vpop.f32.mrf.mxu0
    %11545 = vdwg.mxu0
    %11546 = vmatpush.bf16.msra.mxu0 %v11277
    %11547 = vmatpush.bf16.msra.mxu0 %v11276
    %11548 = vmatpush.bf16.msra.mxu0 %v11275
    %11549 = vmatpush.bf16.msra.mxu0 %v11274
    %11550 = vmatpush.bf16.msra.mxu0 %v11273
    %11551 = vmatpush.bf16.msra.mxu0 %v11272
    %11552 = vmatpush.bf16.msra.mxu0 %v11271
    %11553 = vmatpush.bf16.msra.mxu0 %v11270
    %11554 = vmatmul.bf16.gmra.mxu0 %v10454
    %v11555 = vpop.f32.mrf.mxu0
    %v11556 = vadd.f32 %v11543, %v11555
    %v11557 = vpop.f32.mrf.mxu0
    %11558 = vdwg.mxu0
    %11559 = vmatpush.bf16.msra.mxu0 %v11285
    %11560 = vmatpush.bf16.msra.mxu0 %v11284
    %11561 = vmatpush.bf16.msra.mxu0 %v11283
    %11562 = vmatpush.bf16.msra.mxu0 %v11282
    %11563 = vmatpush.bf16.msra.mxu0 %v11281
    %11564 = vmatpush.bf16.msra.mxu0 %v11280
    %11565 = vmatpush.bf16.msra.mxu0 %v11279
    %11566 = vmatpush.bf16.msra.mxu0 %v11278
    %11567 = vmatmul.bf16.gmra.mxu0 %v10455
    %v11568 = vpop.f32.mrf.mxu0
    %v11569 = vadd.f32 %v11556, %v11568
    %v11570 = vpop.f32.mrf.mxu0
    %11571 = vdwg.mxu0
    %11572 = vmatpush.bf16.msra.mxu0 %v11293
    %11573 = vmatpush.bf16.msra.mxu0 %v11292
    %11574 = vmatpush.bf16.msra.mxu0 %v11291
    %11575 = vmatpush.bf16.msra.mxu0 %v11290
    %11576 = vmatpush.bf16.msra.mxu0 %v11289
    %11577 = vmatpush.bf16.msra.mxu0 %v11288
    %11578 = vmatpush.bf16.msra.mxu0 %v11287
    %11579 = vmatpush.bf16.msra.mxu0 %v11286
    %11580 = vmatmul.bf16.gmra.mxu0 %v10456
    %v11581 = vpop.f32.mrf.mxu0
    %v11582 = vadd.f32 %v11569, %v11581
    %v11583 = vpop.f32.mrf.mxu0
    %11584 = vdwg.mxu0
    %11585 = vmatpush.bf16.msra.mxu0 %v11301
    %11586 = vmatpush.bf16.msra.mxu0 %v11300
    %11587 = vmatpush.bf16.msra.mxu0 %v11299
    %11588 = vmatpush.bf16.msra.mxu0 %v11298
    %11589 = vmatpush.bf16.msra.mxu0 %v11297
    %11590 = vmatpush.bf16.msra.mxu0 %v11296
    %11591 = vmatpush.bf16.msra.mxu0 %v11295
    %11592 = vmatpush.bf16.msra.mxu0 %v11294
    %11593 = vmatmul.bf16.gmra.mxu0 %v10457
    %v11594 = vpop.f32.mrf.mxu0
    %v11595 = vadd.f32 %v11582, %v11594
    %v11596 = vpop.f32.mrf.mxu0
    %11597 = vdwg.mxu0
    %11598 = vmatpush.bf16.msra.mxu0 %v11309
    %11599 = vmatpush.bf16.msra.mxu0 %v11308
    %11600 = vmatpush.bf16.msra.mxu0 %v11307
    %11601 = vmatpush.bf16.msra.mxu0 %v11306
    %11602 = vmatpush.bf16.msra.mxu0 %v11305
    %11603 = vmatpush.bf16.msra.mxu0 %v11304
    %11604 = vmatpush.bf16.msra.mxu0 %v11303
    %11605 = vmatpush.bf16.msra.mxu0 %v11302
    %11606 = vmatmul.bf16.gmra.mxu0 %v10458
    %v11607 = vpop.f32.mrf.mxu0
    %v11608 = vadd.f32 %v11595, %v11607
    %v11609 = vpop.f32.mrf.mxu0
    %11610 = vdwg.mxu0
    %11611 = vmatpush.bf16.msra.mxu0 %v11317
    %11612 = vmatpush.bf16.msra.mxu0 %v11316
    %11613 = vmatpush.bf16.msra.mxu0 %v11315
    %11614 = vmatpush.bf16.msra.mxu0 %v11314
    %11615 = vmatpush.bf16.msra.mxu0 %v11313
    %11616 = vmatpush.bf16.msra.mxu0 %v11312
    %11617 = vmatpush.bf16.msra.mxu0 %v11311
    %11618 = vmatpush.bf16.msra.mxu0 %v11310
    %11619 = vmatmul.bf16.gmra.mxu0 %v10459
    %v11620 = vpop.f32.mrf.mxu0
    %v11621 = vadd.f32 %v11608, %v11620
    %v11622 = vpop.f32.mrf.mxu0
    %11623 = vdwg.mxu0
    %11624 = vmatpush.bf16.msra.mxu0 %v11325
    %11625 = vmatpush.bf16.msra.mxu0 %v11324
    %11626 = vmatpush.bf16.msra.mxu0 %v11323
    %11627 = vmatpush.bf16.msra.mxu0 %v11322
    %11628 = vmatpush.bf16.msra.mxu0 %v11321
    %11629 = vmatpush.bf16.msra.mxu0 %v11320
    %11630 = vmatpush.bf16.msra.mxu0 %v11319
    %11631 = vmatpush.bf16.msra.mxu0 %v11318
    %11632 = vmatmul.bf16.gmra.mxu0 %v10460
    %v11633 = vpop.f32.mrf.mxu0
    %v11634 = vadd.f32 %v11621, %v11633
    %v11635 = vpop.f32.mrf.mxu0
    %11636 = vdwg.mxu0
    %11637 = vmatpush.bf16.msra.mxu0 %v11333
    %11638 = vmatpush.bf16.msra.mxu0 %v11332
    %11639 = vmatpush.bf16.msra.mxu0 %v11331
    %11640 = vmatpush.bf16.msra.mxu0 %v11330
    %11641 = vmatpush.bf16.msra.mxu0 %v11329
    %11642 = vmatpush.bf16.msra.mxu0 %v11328
    %11643 = vmatpush.bf16.msra.mxu0 %v11327
    %11644 = vmatpush.bf16.msra.mxu0 %v11326
    %11645 = vmatmul.bf16.gmra.mxu0 %v10461
    %v11646 = vpop.f32.mrf.mxu0
    %v11647 = vadd.f32 %v11634, %v11646
    %v11648 = vpop.f32.mrf.mxu0
    %11649 = vdwg.mxu0
    %11650 = vmatpush.bf16.msra.mxu0 %v11341
    %11651 = vmatpush.bf16.msra.mxu0 %v11340
    %11652 = vmatpush.bf16.msra.mxu0 %v11339
    %11653 = vmatpush.bf16.msra.mxu0 %v11338
    %11654 = vmatpush.bf16.msra.mxu0 %v11337
    %11655 = vmatpush.bf16.msra.mxu0 %v11336
    %11656 = vmatpush.bf16.msra.mxu0 %v11335
    %11657 = vmatpush.bf16.msra.mxu0 %v11334
    %11658 = vmatmul.bf16.gmra.mxu0 %v10462
    %v11659 = vpop.f32.mrf.mxu0
    %v11660 = vadd.f32 %v11647, %v11659
    %v11661 = vpop.f32.mrf.mxu0
    %11662 = vdwg.mxu0
    %11663 = vmatpush.bf16.msra.mxu0 %v11349
    %11664 = vmatpush.bf16.msra.mxu0 %v11348
    %11665 = vmatpush.bf16.msra.mxu0 %v11347
    %11666 = vmatpush.bf16.msra.mxu0 %v11346
    %11667 = vmatpush.bf16.msra.mxu0 %v11345
    %11668 = vmatpush.bf16.msra.mxu0 %v11344
    %11669 = vmatpush.bf16.msra.mxu0 %v11343
    %11670 = vmatpush.bf16.msra.mxu0 %v11342
    %11671 = vmatmul.bf16.gmra.mxu0 %v10463
    %v11672 = vpop.f32.mrf.mxu0
    %v11673 = vadd.f32 %v11660, %v11672
    %v11674 = vpop.f32.mrf.mxu0
    %11675 = vdwg.mxu0
    %11676 = vmatpush.bf16.msra.mxu0 %v11357
    %11677 = vmatpush.bf16.msra.mxu0 %v11356
    %11678 = vmatpush.bf16.msra.mxu0 %v11355
    %11679 = vmatpush.bf16.msra.mxu0 %v11354
    %11680 = vmatpush.bf16.msra.mxu0 %v11353
    %11681 = vmatpush.bf16.msra.mxu0 %v11352
    %11682 = vmatpush.bf16.msra.mxu0 %v11351
    %11683 = vmatpush.bf16.msra.mxu0 %v11350
    %11684 = vmatmul.bf16.gmra.mxu0 %v10464
    %v11685 = vpop.f32.mrf.mxu0
    %v11686 = vadd.f32 %v11673, %v11685
    %v11687 = vpop.f32.mrf.mxu0
    %11688 = vdwg.mxu0
    %11689 = vmatpush.bf16.msra.mxu0 %v11365
    %11690 = vmatpush.bf16.msra.mxu0 %v11364
    %11691 = vmatpush.bf16.msra.mxu0 %v11363
    %11692 = vmatpush.bf16.msra.mxu0 %v11362
    %11693 = vmatpush.bf16.msra.mxu0 %v11361
    %11694 = vmatpush.bf16.msra.mxu0 %v11360
    %11695 = vmatpush.bf16.msra.mxu0 %v11359
    %11696 = vmatpush.bf16.msra.mxu0 %v11358
    %11697 = vmatmul.bf16.gmra.mxu0 %v10465
    %v11698 = vpop.f32.mrf.mxu0
    %v11699 = vadd.f32 %v11686, %v11698
    %v11700 = vpop.f32.mrf.mxu0
    %11701 = vdwg.mxu0
    %v11702 = vxor.u32 %v11699, 2147483648
    %v11703 = vmul.f32 %v11702, 1.442695
    %v11704 = vpow.pop %v11703
    %v11705 = vadd.f32 %v11704, 1.0
    %v11706 = vrcp.pop %v11705
    %v11707 = vmul.f32 %v11705, %v11706
    %v11708 = vsub.f32 1.0, %v11707
    %v11709 = vmul.f32 %v11706, %v11708
    %v11710 = vadd.f32 %v11706, %v11709
    %vm11711 = vweird.f32 %v11705
    %vm11712 = vweird.f32 %v11706
    %vm11713 = vmor %vm11711, %vm11712
    %v11714 = vsel %vm11713, %v11706, %v11710
    %v11715 = vand.u32 2147483647, %v11705
    %vm11716 = vcmp.eq.f32.partialorder %v11715, 8.507059e+37
    %v11717 = vand.u32 %v11705, 2147483648
    %v11718 = vor.u32 1.1754944e-38, %v11717
    %v11719 = vsel %vm11716, %v11718, %v11714
    %v11720 = vmul.f32 1.0, %v11719
    %11721 = vst [vmem:[%s7] sm:$0xff] %v11720
    // Predicated region
    $region54: #{disc_two_forward.1} parent=1 // pred_check
      _
    $region55: #{disc_two_forward.1} parent=1 // pred_check_branch
      %11723 = sbr.rel (0) target = $region57
    $region56: #{disc_two_forward.1} parent=1 // pred_region
      _
    $region57: #{disc_two_forward.1} parent=1 // pred_fallthru
      _
    // Predicated region
    $region58: #{disc_two_forward.1} parent=1 // pred_check
      _
    $region59: #{disc_two_forward.1} parent=1 // pred_check_branch
      %11725 = sbr.rel (0) target = $region61
    $region60: #{disc_two_forward.1} parent=1 // pred_region
      _
    $region61: #{disc_two_forward.1} parent=1 // pred_fallthru
      _
    %11726 = vsyncpa [#allocation3], 1
    %11727 = vsyncpa [#allocation5], 1
    %11728 = vsyncpa [#allocation8], 1
    %11729 = vsyncpa [#allocation11], 1

</llo_original>
